<compile_context>
chip_gen: v7x
topology: tpu7x:2x2x1
jax: 0.10.0
libtpu: 0.0.40
codegen_flags: <defaults>
</compile_context>

<pallas_src>
import functools
import numpy as np
import jax
import jax.numpy as jnp
from jax.experimental import pallas as pl
from jax.experimental.pallas import tpu as pltpu

INV_SQRT2 = 0.7071067811865476
TWO_PI = 2.0 * np.pi


def _gelu(x):
    # exact (erf) GELU, matching torch.nn.functional.gelu default
    return 0.5 * x * (1.0 + jax.lax.erf(x * INV_SQRT2))


def _round_up(n, m):
    return ((n + m - 1) // m) * m


# ----------------------------- Pallas kernel ------------------------------ #
def _calm_kernel(kcnt_ref, edist_ref, dist_ref, xexp_ref, modw_ref, modo_ref,
                 brff_ref, w1s_ref, w1c_ref, b1_ref, w2t_ref, filt_ref,
                 sel_ref, bias_ref, wm1t_ref, bm1_ref, wm2t_ref, bm2_ref,
                 out_ref, *, softmax_temp, eps):
    TQ, K = edist_ref.shape                    # static query tile / neighbour slots
    B = xexp_ref.shape[0]
    R = TQ * K
    D = brff_ref.shape[0]
    CC = w2t_ref.shape[1]                      # c_in * c_out (= 128 lanes)
    c_out = sel_ref.shape[1]

    # ---- masked distance softmax over the K neighbour slots (lane-major) ----
    kcnt = kcnt_ref[0]                                           # actual neighbourhood
    col = jax.lax.broadcasted_iota(jnp.int32, (TQ, K), 1)
    valid = col < kcnt
    e = edist_ref[...]                                           # (TQ, K)
    e_min = jnp.min(jnp.where(valid, e, jnp.inf), axis=-1, keepdims=True)
    e_max = jnp.max(jnp.where(valid, e, -jnp.inf), axis=-1, keepdims=True)
    neg_scale = (-1.0 / softmax_temp) / (e_max - e_min + eps)    # (TQ, 1)
    logits = jnp.where(valid, (e - e_min) * neg_scale, -jnp.inf)
    m = jnp.max(logits, axis=-1, keepdims=True)
    p = jnp.where(valid, jnp.exp(logits - m), 0.0)
    kd = p * pl.reciprocal(jnp.sum(p, axis=-1, keepdims=True), approx=True)  # (TQ, K)

    # ---- random Fourier features: D VPU FMAs (2*pi already folded into brff) ----
    d = dist_ref[...]                                            # (R, D)
    proj = d[:, 0:1] * brff_ref[0:1, :]
    for i in range(1, D):
        proj = proj + d[:, i:i+1] * brff_ref[i:i+1, :]           # (R, F)

    # ---- kernel MLP on flattened rows; split-W1 form of concat([sin, cos]) @ W1^T ----
    h = (jnp.dot(jnp.sin(proj), w1s_ref[...], preferred_element_type=jnp.float32)
         + jnp.dot(jnp.cos(proj), w1c_ref[...], preferred_element_type=jnp.float32)
         + b1_ref[...])                                          # (R, H)
    h = _gelu(h * modw_ref[...] + modo_ref[...])                 # row-expanded modulation
    kmat = (jnp.dot(h, w2t_ref[...], preferred_element_type=jnp.float32)
            + filt_ref[...])                                     # (R, CC)
    # distance weighting (invalid neighbour slots get kd = 0 -> zero contribution)
    kmat = (kmat.reshape(TQ, K, CC) * kd[:, :, None]).reshape(R, CC)

    # ---- neighbour/channel contraction on the VPU (no per-query tiny matmuls) ----
    prod = xexp_ref[...] * kmat[None, :, :]                      # (B, R, CC)
    s = prod.reshape(B * TQ, K, CC).sum(axis=1)                  # (B*TQ, CC)
    y = jnp.dot(s, sel_ref[...], preferred_element_type=jnp.float32)  # (B*TQ, c_out)
    y = _gelu(y + bias_ref[...])

    # ---- point-wise MLP (Linear -> GELU -> Linear) + residual (dropout p=0) ----
    h1 = _gelu(jnp.dot(y, wm1t_ref[...], preferred_element_type=jnp.float32)
               + bm1_ref[...])
    out = (jnp.dot(h1, wm2t_ref[...], preferred_element_type=jnp.float32)
           + bm2_ref[...] + y)                                   # (B*TQ, c_out)
    out_ref[...] = out.reshape(B, TQ, c_out)


def _pick_query_tile(q_total, query_tile):
    # Default: single grid step (best on 1-TC v5e/v6e; fills 256 MXU rows).
    # Provide query_tile (multiple of 8 dividing Q) to split queries into >=2
    # "parallel" steps for v7x megacore sharding.
    if (query_tile is not None and query_tile < q_total
            and q_total % query_tile == 0 and query_tile % 8 == 0):
        return query_tile
    return q_total


def _calm_pallas(k_count, edist_sel, dist_rows, x_exp, modw_rows, modo_rows,
                 params, *, softmax_temp, eps, tq):
    Q, K = edist_sel.shape
    D = dist_rows.shape[-1]
    B, _, CC = x_exp.shape
    c_out = params['bias'].shape[0]
    c_in = CC // c_out
    F = params['B'].shape[1]                 # RFF feature count (16)
    H = params['W1'].shape[0]                # kernel-MLP hidden (32)

    brff = TWO_PI * params['B']              # fold 2*pi into the RFF matrix
    w1t = params['W1'].T                     # (2F, H)
    w1sin = w1t[:F]                          # (F, H)
    w1cos = w1t[F:]                          # (F, H)
    b1 = params['b1'][None, :]               # (1, H)
    w2t = params['W2'].T                     # (H, CC)
    filt = params['filter'][None, :]         # (1, CC)
    sel = jnp.tile(jnp.eye(c_out, dtype=jnp.float32), (c_in, 1))   # (CC, c_out)
    bias = params['bias'][None, :]           # (1, c_out)
    wm1t = params['Wm1'].T                   # (c_out, 4*c_out)
    bm1 = params['bm1'][None, :]             # (1, 4*c_out)
    wm2t = params['Wm2'].T                   # (4*c_out, c_out)
    bm2 = params['bm2'][None, :]             # (1, c_out)

    kernel = functools.partial(_calm_kernel, softmax_temp=softmax_temp, eps=eps)

    grid_spec = pltpu.PrefetchScalarGridSpec(
        num_scalar_prefetch=1,               # k_count lands in SMEM
        grid=(Q // tq,),
        in_specs=[
            pl.BlockSpec((tq, K), lambda t, kc: (t, 0)),              # edist_sel
            pl.BlockSpec((tq * K, D), lambda t, kc: (t, 0)),          # dist rows
            pl.BlockSpec((B, tq * K, CC), lambda t, kc: (0, t, 0)),   # x lane-expanded
            pl.BlockSpec((tq * K, H), lambda t, kc: (t, 0)),          # mod weight rows
            pl.BlockSpec((tq * K, H), lambda t, kc: (t, 0)),          # mod offset rows
            pl.BlockSpec((D, F), lambda t, kc: (0, 0)),               # 2*pi*B (RFF)
            pl.BlockSpec((F, H), lambda t, kc: (0, 0)),               # W1^T (sin half)
            pl.BlockSpec((F, H), lambda t, kc: (0, 0)),               # W1^T (cos half)
            pl.BlockSpec((1, H), lambda t, kc: (0, 0)),               # b1
            pl.BlockSpec((H, CC), lambda t, kc: (0, 0)),              # W2^T
            pl.BlockSpec((1, CC), lambda t, kc: (0, 0)),              # filter
            pl.BlockSpec((CC, c_out), lambda t, kc: (0, 0)),          # channel-sum sel
            pl.BlockSpec((1, c_out), lambda t, kc: (0, 0)),           # bias
            pl.BlockSpec((c_out, 4 * c_out), lambda t, kc: (0, 0)),   # Wm1^T
            pl.BlockSpec((1, 4 * c_out), lambda t, kc: (0, 0)),       # bm1
            pl.BlockSpec((4 * c_out, c_out), lambda t, kc: (0, 0)),   # Wm2^T
            pl.BlockSpec((1, c_out), lambda t, kc: (0, 0)),           # bm2
        ],
        out_specs=pl.BlockSpec((B, tq, c_out), lambda t, kc: (0, t, 0)),
    )

    out = pl.pallas_call(
        kernel,
        out_shape=jax.ShapeDtypeStruct((B, Q, c_out), jnp.float32),
        grid_spec=grid_spec,
        compiler_params=pltpu.CompilerParams(dimension_semantics=("parallel",)),
    )(k_count, edist_sel, dist_rows, x_exp, modw_rows, modo_rows,
      brff, w1sin, w1cos, b1, w2t, filt, sel, bias, wm1t, bm1, wm2t, bm2)
    return out                               # (B, Q, c_out)


# ------------------------- forward (glue + kernel) ------------------------- #
def calm_encoder_forward(x, pos, params, *, receptive_field, softmax_temp,
                         eps=1e-8, is_periodic=True, query_tile=None):
    q = params['query_pos']                              # (Q, D)
    Q, D = q.shape
    B, V, c_in = x.shape
    c_out = params['bias'].shape[0]

    dist = q[:, None, :] - pos[None, ...]                # (Q, V, D)
    if is_periodic:
        dist = jnp.mod(dist + 0.5, 1.0) - 0.5
    edist = jnp.sum(dist ** 2, axis=-1)                  # (Q, V)

    # Static neighbourhood size: upper bound on the per-query quantile count (no ties),
    # rounded up to a multiple of 8.  The actual count is traced (no host sync) and
    # passed to the kernel, which masks the unused neighbour slots.
    K = min(V, _round_up(int(np.floor(receptive_field * (V - 1))) + 1, 8))
    thr = jnp.quantile(edist, receptive_field, axis=-1, keepdims=True)
    k_count = jnp.minimum(jnp.max(jnp.sum(edist <= thr, axis=-1)), K)
    # TODO(synk): if distance ties ever push the true count above the static K bound,
    # the extra (tied) neighbours are dropped here; measure-zero for continuous inputs.
    k_count = k_count.astype(jnp.int32).reshape((1,))

    _, ind = jax.lax.top_k(-edist, K)                    # (Q, K) static-shape gather
    dist_sel = jnp.take_along_axis(dist, ind[..., None], axis=1)   # (Q, K, D)
    edist_sel = jnp.take_along_axis(edist, ind, axis=1)            # (Q, K)
    dist_rows = dist_sel.reshape(Q * K, D)               # rows r = q*K + v

    # first Linear on x, gather neighbours, expand channels across the c_out lane
    # groups (lane index = c*c_out + d) so the kernel contraction is a pure VPU op
    x_lin = x @ params['W_lin'].T + params['b_lin']      # (B, V, c_in)
    x_sel = x_lin[:, ind, :].reshape(B, Q * K, c_in)     # (B, Q*K, c_in)
    x_exp = jnp.repeat(x_sel, c_out, axis=-1)            # (B, Q*K, c_in*c_out)

    # per-query modulation expanded to rows (one row per (q, v))
    modw_rows = jnp.repeat(params['query_modulation_weight'], K, axis=0)   # (Q*K, 32)
    modo_rows = jnp.repeat(params['query_modulation_offset'], K, axis=0)   # (Q*K, 32)

    tq = _pick_query_tile(Q, query_tile)
    y = _calm_pallas(k_count, edist_sel, dist_rows, x_exp, modw_rows, modo_rows,
                     params, softmax_temp=softmax_temp, eps=eps, tq=tq)    # (B, Q, c_out)
    return y, q


# ------------------------------ pure-JAX ref ------------------------------- #
def reference_forward(x, pos, params, *, receptive_field, softmax_temp,
                      eps=1e-8, is_periodic=True):
    q = params['query_pos']
    c_in = x.shape[-1]
    c_out = params['bias'].shape[0]
    dist = q[:, None, :] - pos[None, ...]
    if is_periodic:
        dist = jnp.mod(dist + 0.5, 1.0) - 0.5
    edist = jnp.sum(dist ** 2, axis=-1)
    thr = jnp.quantile(edist, receptive_field, axis=-1, keepdims=True)
    K = int(jnp.max(jnp.sum(edist <= thr, axis=-1)))     # host sync: reference only
    _, ind = jax.lax.top_k(-edist, K)
    dist_s = jnp.take_along_axis(dist, ind[..., None], axis=1)
    edist_s = jnp.take_along_axis(edist, ind, axis=1)[..., None]
    edist_s = edist_s - jnp.min(edist_s, axis=-2, keepdims=True)
    edist_s = edist_s / (jnp.max(edist_s, axis=-2, keepdims=True) + eps)
    kd = jax.nn.softmax(-edist_s / softmax_temp, axis=-2)
    proj = TWO_PI * dist_s @ params['B']
    feat = jnp.concatenate([jnp.sin(proj), jnp.cos(proj)], axis=-1)
    h = feat @ params['W1'].T + params['b1']
    h = _gelu(h * params['query_modulation_weight'][:, None, :]
              + params['query_modulation_offset'][:, None, :])
    k = h @ params['W2'].T + params['filter'][None, None, :]
    k = k * kd
    k = k.reshape(q.shape[0], K, c_in, c_out)
    xl = x @ params['W_lin'].T + params['b_lin']
    xs = xl[:, ind, :]                                   # (B, Q, K, c_in)
    y = jnp.einsum('qvcd,bqvc->bqd', k, xs)
    y = _gelu(y + params['bias'])
    y = _gelu(y @ params['Wm1'].T + params['bm1']) @ params['Wm2'].T \
        + params['bm2'] + y
    return y, q


# ---------------------------------- main ----------------------------------- #
if __name__ == "__main__":
    B, V, C_in, C_out, Q, D = 2, 64, 8, 16, 16, 2
    receptive_field = 0.2        # actual neighbourhood = 13, static K = 16 (mask used)
    softmax_temp = 1.0
    rff_std = 6.0

    key = jax.random.PRNGKey(0)
    ks = jax.random.split(key, 16)

    def lin_init(kw, kb, fan_out, fan_in):
        bound = 1.0 / np.sqrt(fan_in)
        w = jax.random.uniform(kw, (fan_out, fan_in), jnp.float32, -bound, bound)
        b = jax.random.uniform(kb, (fan_out,), jnp.float32, -bound, bound)
        return w, b

    W_lin, b_lin = lin_init(ks[2], ks[3], C_in, C_in)
    W1, b1 = lin_init(ks[4], ks[5], 32, 32)
    W2 = jax.random.uniform(ks[6], (C_in * C_out, 32), jnp.float32,
                            -1.0 / np.sqrt(32), 1.0 / np.sqrt(32))
    Wm1, bm1 = lin_init(ks[7], ks[8], 4 * C_out, C_out)
    Wm2, bm2 = lin_init(ks[9], ks[10], C_out, 4 * C_out)

    params = {
        'query_pos': jax.random.uniform(ks[0], (Q, D), jnp.float32),
        'query_modulation_weight': jax.random.uniform(ks[1], (Q, 32), jnp.float32),
        'query_modulation_offset': jnp.zeros((Q, 32), jnp.float32),
        'W_lin': W_lin, 'b_lin': b_lin,
        'W1': W1, 'b1': b1,
        'W2': W2,
        'filter': jax.random.uniform(ks[11], (C_in * C_out,), jnp.float32,
                                     -np.sqrt(3.0 / C_in), np.sqrt(3.0 / C_in)),
        'B': rff_std * jax.random.normal(ks[12], (D, 16), jnp.float32),
        'bias': jnp.zeros((C_out,), jnp.float32),
        'Wm1': Wm1, 'bm1': bm1, 'Wm2': Wm2, 'bm2': bm2,
    }

    pos = jax.random.uniform(ks[13], (V, D), jnp.float32)          # (V, D) in [0,1)
    x = jax.random.normal(ks[14], (B, V, C_in), jnp.float32)       # (B, V, C_in)

    # whole forward (including glue) is jittable: K is static, the actual count is traced
    fwd = jax.jit(functools.partial(calm_encoder_forward,
                                    receptive_field=receptive_field,
                                    softmax_temp=softmax_temp,
                                    is_periodic=True))
    y, qpos = fwd(x, pos, params)
    y = jax.block_until_ready(y)
    assert y.shape == (B, Q, C_out) and qpos.shape == (Q, D)

    y_ref, _ = reference_forward(x, pos, params,
                                 receptive_field=receptive_field,
                                 softmax_temp=softmax_temp,
                                 is_periodic=True)
    # all f32 in-kernel now; only the approx softmax reciprocal loosens tolerance
    np.testing.assert_allclose(np.asarray(y), np.asarray(y_ref),
                               rtol=2e-3, atol=2e-3)
    print("KERNEL_OK")
</pallas_src>

<mosaic_0001>
module attributes {stable_mosaic.version = 11 : i64} {
  func.func @_calm_kernel(%arg0: i32, %arg1: memref<1xi32, #tpu.memory_space<smem>>, %arg2: memref<16x16xf32, #tpu.memory_space<vmem>>, %arg3: memref<256x2xf32, #tpu.memory_space<vmem>>, %arg4: memref<2x256x128xf32, #tpu.memory_space<vmem>>, %arg5: memref<256x32xf32, #tpu.memory_space<vmem>>, %arg6: memref<256x32xf32, #tpu.memory_space<vmem>>, %arg7: memref<2x16xf32, #tpu.memory_space<vmem>>, %arg8: memref<16x32xf32, #tpu.memory_space<vmem>>, %arg9: memref<16x32xf32, #tpu.memory_space<vmem>>, %arg10: memref<1x32xf32, #tpu.memory_space<vmem>>, %arg11: memref<32x128xf32, #tpu.memory_space<vmem>>, %arg12: memref<1x128xf32, #tpu.memory_space<vmem>>, %arg13: memref<128x16xf32, #tpu.memory_space<vmem>>, %arg14: memref<1x16xf32, #tpu.memory_space<vmem>>, %arg15: memref<16x64xf32, #tpu.memory_space<vmem>>, %arg16: memref<1x64xf32, #tpu.memory_space<vmem>>, %arg17: memref<64x16xf32, #tpu.memory_space<vmem>>, %arg18: memref<1x16xf32, #tpu.memory_space<vmem>>, %arg19: memref<2x16x16xf32, #tpu.memory_space<vmem>>) attributes {dimension_semantics = [#tpu.dimension_semantics<parallel>], iteration_bounds = array<i64: 1>, scalar_prefetch = 1 : i64, scratch_operands = 0 : i64, tpu.core_type = #tpu.core_type<tc>, window_params = [{transform_indices = @transform_0, window_bounds = array<i64: 16, 16>}, {transform_indices = @transform_1, window_bounds = array<i64: 256, 2>}, {transform_indices = @transform_2, window_bounds = array<i64: 2, 256, 128>}, {transform_indices = @transform_3, window_bounds = array<i64: 256, 32>}, {transform_indices = @transform_4, window_bounds = array<i64: 256, 32>}, {pipeline_mode = #tpu.pipeline_mode<synchronous>, transform_indices = @transform_5, window_bounds = array<i64: 2, 16>}, {pipeline_mode = #tpu.pipeline_mode<synchronous>, transform_indices = @transform_6, window_bounds = array<i64: 16, 32>}, {pipeline_mode = #tpu.pipeline_mode<synchronous>, transform_indices = @transform_7, window_bounds = array<i64: 16, 32>}, {pipeline_mode = #tpu.pipeline_mode<synchronous>, transform_indices = @transform_8, window_bounds = array<i64: 1, 32>}, {pipeline_mode = #tpu.pipeline_mode<synchronous>, transform_indices = @transform_9, window_bounds = array<i64: 32, 128>}, {pipeline_mode = #tpu.pipeline_mode<synchronous>, transform_indices = @transform_10, window_bounds = array<i64: 1, 128>}, {pipeline_mode = #tpu.pipeline_mode<synchronous>, transform_indices = @transform_11, window_bounds = array<i64: 128, 16>}, {pipeline_mode = #tpu.pipeline_mode<synchronous>, transform_indices = @transform_12, window_bounds = array<i64: 1, 16>}, {pipeline_mode = #tpu.pipeline_mode<synchronous>, transform_indices = @transform_13, window_bounds = array<i64: 16, 64>}, {pipeline_mode = #tpu.pipeline_mode<synchronous>, transform_indices = @transform_14, window_bounds = array<i64: 1, 64>}, {pipeline_mode = #tpu.pipeline_mode<synchronous>, transform_indices = @transform_15, window_bounds = array<i64: 64, 16>}, {pipeline_mode = #tpu.pipeline_mode<synchronous>, transform_indices = @transform_16, window_bounds = array<i64: 1, 16>}, {transform_indices = @transform_17, window_bounds = array<i64: 2, 16, 16>}]} {
    %c0 = arith.constant 0 : index
    %0 = memref.load %arg1[%c0] : memref<1xi32, #tpu.memory_space<smem>>
    %1 = tpu.iota {dimensions = array<i32: 1>} : vector<16x16xi32>
    %2 = vector.broadcast %0 : i32 to vector<16x16xi32>
    %3 = arith.cmpi slt, %1, %2 : vector<16x16xi32>
    %c0_0 = arith.constant 0 : index
    %c0_1 = arith.constant 0 : index
    %4 = vector.load %arg2[%c0_0, %c0_1] : memref<16x16xf32, #tpu.memory_space<vmem>>, vector<16x16xf32>
    %cst = arith.constant 0x7F800000 : f32
    %5 = vector.broadcast %cst : f32 to vector<16x16xf32>
    %6 = arith.select %3, %4, %5 : vector<16x16xi1>, vector<16x16xf32>
    %cst_2 = arith.constant dense<0x7F800000> : vector<16xf32>
    %7 = vector.multi_reduction <minimumf>, %6, %cst_2 [1] : vector<16x16xf32> to vector<16xf32>
    %8 = vector.shape_cast %7 : vector<16xf32> to vector<16x1xf32>
    %cst_3 = arith.constant 0xFF800000 : f32
    %9 = vector.broadcast %cst_3 : f32 to vector<16x16xf32>
    %10 = arith.select %3, %4, %9 : vector<16x16xi1>, vector<16x16xf32>
    %cst_4 = arith.constant dense<0xFF800000> : vector<16xf32>
    %11 = vector.multi_reduction <maximumf>, %10, %cst_4 [1] : vector<16x16xf32> to vector<16xf32>
    %12 = vector.shape_cast %11 : vector<16xf32> to vector<16x1xf32>
    %13 = arith.subf %12, %8 : vector<16x1xf32>
    %cst_5 = arith.constant 9.99999993E-9 : f32
    %14 = vector.broadcast %cst_5 : f32 to vector<16x1xf32>
    %15 = arith.addf %13, %14 : vector<16x1xf32>
    %cst_6 = arith.constant -1.000000e+00 : f32
    %16 = vector.broadcast %cst_6 : f32 to vector<16x1xf32>
    %17 = arith.divf %16, %15 : vector<16x1xf32>
    %18 = vector.broadcast %8 : vector<16x1xf32> to vector<16x16xf32>
    %19 = arith.subf %4, %18 : vector<16x16xf32>
    %20 = vector.broadcast %17 : vector<16x1xf32> to vector<16x16xf32>
    %21 = arith.mulf %19, %20 : vector<16x16xf32>
    %cst_7 = arith.constant 0xFF800000 : f32
    %22 = vector.broadcast %cst_7 : f32 to vector<16x16xf32>
    %23 = arith.select %3, %21, %22 : vector<16x16xi1>, vector<16x16xf32>
    %cst_8 = arith.constant dense<0xFF800000> : vector<16xf32>
    %24 = vector.multi_reduction <maximumf>, %23, %cst_8 [1] : vector<16x16xf32> to vector<16xf32>
    %25 = vector.shape_cast %24 : vector<16xf32> to vector<16x1xf32>
    %26 = vector.broadcast %25 : vector<16x1xf32> to vector<16x16xf32>
    %27 = arith.subf %23, %26 : vector<16x16xf32>
    %28 = math.exp %27 : vector<16x16xf32>
    %cst_9 = arith.constant 0.000000e+00 : f32
    %29 = vector.broadcast %cst_9 : f32 to vector<16x16xf32>
    %30 = arith.select %3, %28, %29 : vector<16x16xi1>, vector<16x16xf32>
    %cst_10 = arith.constant dense<0.000000e+00> : vector<16xf32>
    %31 = vector.multi_reduction <add>, %30, %cst_10 [1] : vector<16x16xf32> to vector<16xf32>
    %32 = vector.shape_cast %31 : vector<16xf32> to vector<16x1xf32>
    %33 = tpu.reciprocal %32 {approx = true} : vector<16x1xf32> -> vector<16x1xf32>
    %34 = vector.broadcast %33 : vector<16x1xf32> to vector<16x16xf32>
    %35 = arith.mulf %30, %34 : vector<16x16xf32>
    %c0_11 = arith.constant 0 : index
    %c0_12 = arith.constant 0 : index
    %36 = vector.load %arg3[%c0_11, %c0_12] : memref<256x2xf32, #tpu.memory_space<vmem>>, vector<256x2xf32>
    %37 = vector.extract_strided_slice %36 {offsets = [0, 0], sizes = [256, 1], strides = [1, 1]} : vector<256x2xf32> to vector<256x1xf32>
    %c0_13 = arith.constant 0 : index
    %c0_14 = arith.constant 0 : index
    %38 = vector.load %arg7[%c0_13, %c0_14] : memref<2x16xf32, #tpu.memory_space<vmem>>, vector<1x16xf32>
    %39 = vector.broadcast %37 : vector<256x1xf32> to vector<256x16xf32>
    %40 = vector.broadcast %38 : vector<1x16xf32> to vector<256x16xf32>
    %41 = arith.mulf %39, %40 : vector<256x16xf32>
    %42 = vector.extract_strided_slice %36 {offsets = [0, 1], sizes = [256, 1], strides = [1, 1]} : vector<256x2xf32> to vector<256x1xf32>
    %c1 = arith.constant 1 : index
    %c0_15 = arith.constant 0 : index
    %43 = vector.load %arg7[%c1, %c0_15] : memref<2x16xf32, #tpu.memory_space<vmem>>, vector<1x16xf32>
    %44 = vector.broadcast %42 : vector<256x1xf32> to vector<256x16xf32>
    %45 = vector.broadcast %43 : vector<1x16xf32> to vector<256x16xf32>
    %46 = arith.mulf %44, %45 : vector<256x16xf32>
    %47 = arith.addf %41, %46 : vector<256x16xf32>
    %48 = math.sin %47 : vector<256x16xf32>
    %c0_16 = arith.constant 0 : index
    %c0_17 = arith.constant 0 : index
    %49 = vector.load %arg8[%c0_16, %c0_17] : memref<16x32xf32, #tpu.memory_space<vmem>>, vector<16x32xf32>
    %cst_18 = arith.constant dense<0.000000e+00> : vector<256x32xf32>
    %50 = tpu.matmul %48, %49, %cst_18 {dimension_numbers = #tpu.dot_dimension_numbers<[1], [0], [0], [1], [0, 0, 1, 1], [], []>} : vector<256x16xf32>, vector<16x32xf32>, vector<256x32xf32> -> vector<256x32xf32>
    %51 = math.cos %47 : vector<256x16xf32>
    %c0_19 = arith.constant 0 : index
    %c0_20 = arith.constant 0 : index
    %52 = vector.load %arg9[%c0_19, %c0_20] : memref<16x32xf32, #tpu.memory_space<vmem>>, vector<16x32xf32>
    %cst_21 = arith.constant dense<0.000000e+00> : vector<256x32xf32>
    %53 = tpu.matmul %51, %52, %cst_21 {dimension_numbers = #tpu.dot_dimension_numbers<[1], [0], [0], [1], [0, 0, 1, 1], [], []>} : vector<256x16xf32>, vector<16x32xf32>, vector<256x32xf32> -> vector<256x32xf32>
    %54 = arith.addf %50, %53 : vector<256x32xf32>
    %c0_22 = arith.constant 0 : index
    %c0_23 = arith.constant 0 : index
    %55 = vector.load %arg10[%c0_22, %c0_23] : memref<1x32xf32, #tpu.memory_space<vmem>>, vector<1x32xf32>
    %56 = vector.broadcast %55 : vector<1x32xf32> to vector<256x32xf32>
    %57 = arith.addf %54, %56 : vector<256x32xf32>
    %c0_24 = arith.constant 0 : index
    %c0_25 = arith.constant 0 : index
    %58 = vector.load %arg5[%c0_24, %c0_25] : memref<256x32xf32, #tpu.memory_space<vmem>>, vector<256x32xf32>
    %59 = arith.mulf %57, %58 : vector<256x32xf32>
    %c0_26 = arith.constant 0 : index
    %c0_27 = arith.constant 0 : index
    %60 = vector.load %arg6[%c0_26, %c0_27] : memref<256x32xf32, #tpu.memory_space<vmem>>, vector<256x32xf32>
    %61 = arith.addf %59, %60 : vector<256x32xf32>
    %cst_28 = arith.constant 5.000000e-01 : f32
    %62 = vector.broadcast %cst_28 : f32 to vector<256x32xf32>
    %63 = arith.mulf %62, %61 : vector<256x32xf32>
    %cst_29 = arith.constant 0.707106769 : f32
    %64 = vector.broadcast %cst_29 : f32 to vector<256x32xf32>
    %65 = arith.mulf %61, %64 : vector<256x32xf32>
    %66 = math.erf %65 : vector<256x32xf32>
    %cst_30 = arith.constant 1.000000e+00 : f32
    %67 = vector.broadcast %cst_30 : f32 to vector<256x32xf32>
    %68 = arith.addf %67, %66 : vector<256x32xf32>
    %69 = arith.mulf %63, %68 : vector<256x32xf32>
    %c0_31 = arith.constant 0 : index
    %c0_32 = arith.constant 0 : index
    %70 = vector.load %arg11[%c0_31, %c0_32] : memref<32x128xf32, #tpu.memory_space<vmem>>, vector<32x128xf32>
    %cst_33 = arith.constant dense<0.000000e+00> : vector<256x128xf32>
    %71 = tpu.matmul %69, %70, %cst_33 {dimension_numbers = #tpu.dot_dimension_numbers<[1], [0], [0], [1], [0, 0, 1, 1], [], []>} : vector<256x32xf32>, vector<32x128xf32>, vector<256x128xf32> -> vector<256x128xf32>
    %c0_34 = arith.constant 0 : index
    %c0_35 = arith.constant 0 : index
    %72 = vector.load %arg12[%c0_34, %c0_35] : memref<1x128xf32, #tpu.memory_space<vmem>>, vector<1x128xf32>
    %73 = vector.broadcast %72 : vector<1x128xf32> to vector<256x128xf32>
    %74 = arith.addf %71, %73 : vector<256x128xf32>
    %75 = vector.shape_cast %74 : vector<256x128xf32> to vector<16x16x128xf32>
    %76 = vector.shape_cast %35 : vector<16x16xf32> to vector<16x16x1xf32>
    %77 = vector.broadcast %76 : vector<16x16x1xf32> to vector<16x16x128xf32>
    %78 = arith.mulf %75, %77 : vector<16x16x128xf32>
    %79 = vector.shape_cast %78 : vector<16x16x128xf32> to vector<256x128xf32>
    %c0_36 = arith.constant 0 : index
    %c0_37 = arith.constant 0 : index
    %c0_38 = arith.constant 0 : index
    %80 = vector.load %arg4[%c0_36, %c0_37, %c0_38] : memref<2x256x128xf32, #tpu.memory_space<vmem>>, vector<2x256x128xf32>
    %81 = vector.shape_cast %79 : vector<256x128xf32> to vector<1x256x128xf32>
    %82 = vector.broadcast %81 : vector<1x256x128xf32> to vector<2x256x128xf32>
    %83 = arith.mulf %80, %82 : vector<2x256x128xf32>
    %84 = vector.shape_cast %83 : vector<2x256x128xf32> to vector<32x16x128xf32>
    %cst_39 = arith.constant dense<0.000000e+00> : vector<32x128xf32>
    %85 = vector.multi_reduction <add>, %84, %cst_39 [1] : vector<32x16x128xf32> to vector<32x128xf32>
    %c0_40 = arith.constant 0 : index
    %c0_41 = arith.constant 0 : index
    %86 = vector.load %arg13[%c0_40, %c0_41] : memref<128x16xf32, #tpu.memory_space<vmem>>, vector<128x16xf32>
    %cst_42 = arith.constant dense<0.000000e+00> : vector<32x16xf32>
    %87 = tpu.matmul %85, %86, %cst_42 {dimension_numbers = #tpu.dot_dimension_numbers<[1], [0], [0], [1], [0, 0, 1, 1], [], []>} : vector<32x128xf32>, vector<128x16xf32>, vector<32x16xf32> -> vector<32x16xf32>
    %c0_43 = arith.constant 0 : index
    %c0_44 = arith.constant 0 : index
    %88 = vector.load %arg14[%c0_43, %c0_44] : memref<1x16xf32, #tpu.memory_space<vmem>>, vector<1x16xf32>
    %89 = vector.broadcast %88 : vector<1x16xf32> to vector<32x16xf32>
    %90 = arith.addf %87, %89 : vector<32x16xf32>
    %cst_45 = arith.constant 5.000000e-01 : f32
    %91 = vector.broadcast %cst_45 : f32 to vector<32x16xf32>
    %92 = arith.mulf %91, %90 : vector<32x16xf32>
    %cst_46 = arith.constant 0.707106769 : f32
    %93 = vector.broadcast %cst_46 : f32 to vector<32x16xf32>
    %94 = arith.mulf %90, %93 : vector<32x16xf32>
    %95 = math.erf %94 : vector<32x16xf32>
    %cst_47 = arith.constant 1.000000e+00 : f32
    %96 = vector.broadcast %cst_47 : f32 to vector<32x16xf32>
    %97 = arith.addf %96, %95 : vector<32x16xf32>
    %98 = arith.mulf %92, %97 : vector<32x16xf32>
    %c0_48 = arith.constant 0 : index
    %c0_49 = arith.constant 0 : index
    %99 = vector.load %arg15[%c0_48, %c0_49] : memref<16x64xf32, #tpu.memory_space<vmem>>, vector<16x64xf32>
    %cst_50 = arith.constant dense<0.000000e+00> : vector<32x64xf32>
    %100 = tpu.matmul %98, %99, %cst_50 {dimension_numbers = #tpu.dot_dimension_numbers<[1], [0], [0], [1], [0, 0, 1, 1], [], []>} : vector<32x16xf32>, vector<16x64xf32>, vector<32x64xf32> -> vector<32x64xf32>
    %c0_51 = arith.constant 0 : index
    %c0_52 = arith.constant 0 : index
    %101 = vector.load %arg16[%c0_51, %c0_52] : memref<1x64xf32, #tpu.memory_space<vmem>>, vector<1x64xf32>
    %102 = vector.broadcast %101 : vector<1x64xf32> to vector<32x64xf32>
    %103 = arith.addf %100, %102 : vector<32x64xf32>
    %cst_53 = arith.constant 5.000000e-01 : f32
    %104 = vector.broadcast %cst_53 : f32 to vector<32x64xf32>
    %105 = arith.mulf %104, %103 : vector<32x64xf32>
    %cst_54 = arith.constant 0.707106769 : f32
    %106 = vector.broadcast %cst_54 : f32 to vector<32x64xf32>
    %107 = arith.mulf %103, %106 : vector<32x64xf32>
    %108 = math.erf %107 : vector<32x64xf32>
    %cst_55 = arith.constant 1.000000e+00 : f32
    %109 = vector.broadcast %cst_55 : f32 to vector<32x64xf32>
    %110 = arith.addf %109, %108 : vector<32x64xf32>
    %111 = arith.mulf %105, %110 : vector<32x64xf32>
    %c0_56 = arith.constant 0 : index
    %c0_57 = arith.constant 0 : index
    %112 = vector.load %arg17[%c0_56, %c0_57] : memref<64x16xf32, #tpu.memory_space<vmem>>, vector<64x16xf32>
    %cst_58 = arith.constant dense<0.000000e+00> : vector<32x16xf32>
    %113 = tpu.matmul %111, %112, %cst_58 {dimension_numbers = #tpu.dot_dimension_numbers<[1], [0], [0], [1], [0, 0, 1, 1], [], []>} : vector<32x64xf32>, vector<64x16xf32>, vector<32x16xf32> -> vector<32x16xf32>
    %c0_59 = arith.constant 0 : index
    %c0_60 = arith.constant 0 : index
    %114 = vector.load %arg18[%c0_59, %c0_60] : memref<1x16xf32, #tpu.memory_space<vmem>>, vector<1x16xf32>
    %115 = vector.broadcast %114 : vector<1x16xf32> to vector<32x16xf32>
    %116 = arith.addf %113, %115 : vector<32x16xf32>
    %117 = arith.addf %116, %98 : vector<32x16xf32>
    %118 = vector.shape_cast %117 : vector<32x16xf32> to vector<2x16x16xf32>
    %c0_61 = arith.constant 0 : index
    %c0_62 = arith.constant 0 : index
    %c0_63 = arith.constant 0 : index
    %119 = vector.load %arg19[%c0_61, %c0_62, %c0_63] : memref<2x16x16xf32, #tpu.memory_space<vmem>>, vector<2x16x16xf32>
    tpu.vector_store %arg19[%c0_61, %c0_62, %c0_63], %118 {strides = array<i32>} : memref<2x16x16xf32, #tpu.memory_space<vmem>>, vector<2x16x16xf32>,
    return
  }
  func.func @transform_0(%arg0: i32, %arg1: memref<1xi32, #tpu.memory_space<smem>>) -> (i32, i32) {
    %c0_i32 = arith.constant 0 : i32
    %c0_i32_0 = arith.constant 0 : i32
    return %arg0, %c0_i32 : i32, i32
  }
  func.func @transform_1(%arg0: i32, %arg1: memref<1xi32, #tpu.memory_space<smem>>) -> (i32, i32) {
    %c0_i32 = arith.constant 0 : i32
    %c0_i32_0 = arith.constant 0 : i32
    return %arg0, %c0_i32 : i32, i32
  }
  func.func @transform_2(%arg0: i32, %arg1: memref<1xi32, #tpu.memory_space<smem>>) -> (i32, i32, i32) {
    %c0_i32 = arith.constant 0 : i32
    %c0_i32_0 = arith.constant 0 : i32
    %c0_i32_1 = arith.constant 0 : i32
    return %c0_i32, %arg0, %c0_i32_0 : i32, i32, i32
  }
  func.func @transform_3(%arg0: i32, %arg1: memref<1xi32, #tpu.memory_space<smem>>) -> (i32, i32) {
    %c0_i32 = arith.constant 0 : i32
    %c0_i32_0 = arith.constant 0 : i32
    return %arg0, %c0_i32 : i32, i32
  }
  func.func @transform_4(%arg0: i32, %arg1: memref<1xi32, #tpu.memory_space<smem>>) -> (i32, i32) {
    %c0_i32 = arith.constant 0 : i32
    %c0_i32_0 = arith.constant 0 : i32
    return %arg0, %c0_i32 : i32, i32
  }
  func.func @transform_5(%arg0: i32, %arg1: memref<1xi32, #tpu.memory_space<smem>>) -> (i32, i32) {
    %c0_i32 = arith.constant 0 : i32
    %c0_i32_0 = arith.constant 0 : i32
    %c0_i32_1 = arith.constant 0 : i32
    return %c0_i32, %c0_i32_0 : i32, i32
  }
  func.func @transform_6(%arg0: i32, %arg1: memref<1xi32, #tpu.memory_space<smem>>) -> (i32, i32) {
    %c0_i32 = arith.constant 0 : i32
    %c0_i32_0 = arith.constant 0 : i32
    %c0_i32_1 = arith.constant 0 : i32
    return %c0_i32, %c0_i32_0 : i32, i32
  }
  func.func @transform_7(%arg0: i32, %arg1: memref<1xi32, #tpu.memory_space<smem>>) -> (i32, i32) {
    %c0_i32 = arith.constant 0 : i32
    %c0_i32_0 = arith.constant 0 : i32
    %c0_i32_1 = arith.constant 0 : i32
    return %c0_i32, %c0_i32_0 : i32, i32
  }
  func.func @transform_8(%arg0: i32, %arg1: memref<1xi32, #tpu.memory_space<smem>>) -> (i32, i32) {
    %c0_i32 = arith.constant 0 : i32
    %c0_i32_0 = arith.constant 0 : i32
    %c0_i32_1 = arith.constant 0 : i32
    return %c0_i32, %c0_i32_0 : i32, i32
  }
  func.func @transform_9(%arg0: i32, %arg1: memref<1xi32, #tpu.memory_space<smem>>) -> (i32, i32) {
    %c0_i32 = arith.constant 0 : i32
    %c0_i32_0 = arith.constant 0 : i32
    %c0_i32_1 = arith.constant 0 : i32
    return %c0_i32, %c0_i32_0 : i32, i32
  }
  func.func @transform_10(%arg0: i32, %arg1: memref<1xi32, #tpu.memory_space<smem>>) -> (i32, i32) {
    %c0_i32 = arith.constant 0 : i32
    %c0_i32_0 = arith.constant 0 : i32
    %c0_i32_1 = arith.constant 0 : i32
    return %c0_i32, %c0_i32_0 : i32, i32
  }
  func.func @transform_11(%arg0: i32, %arg1: memref<1xi32, #tpu.memory_space<smem>>) -> (i32, i32) {
    %c0_i32 = arith.constant 0 : i32
    %c0_i32_0 = arith.constant 0 : i32
    %c0_i32_1 = arith.constant 0 : i32
    return %c0_i32, %c0_i32_0 : i32, i32
  }
  func.func @transform_12(%arg0: i32, %arg1: memref<1xi32, #tpu.memory_space<smem>>) -> (i32, i32) {
    %c0_i32 = arith.constant 0 : i32
    %c0_i32_0 = arith.constant 0 : i32
    %c0_i32_1 = arith.constant 0 : i32
    return %c0_i32, %c0_i32_0 : i32, i32
  }
  func.func @transform_13(%arg0: i32, %arg1: memref<1xi32, #tpu.memory_space<smem>>) -> (i32, i32) {
    %c0_i32 = arith.constant 0 : i32
    %c0_i32_0 = arith.constant 0 : i32
    %c0_i32_1 = arith.constant 0 : i32
    return %c0_i32, %c0_i32_0 : i32, i32
  }
  func.func @transform_14(%arg0: i32, %arg1: memref<1xi32, #tpu.memory_space<smem>>) -> (i32, i32) {
    %c0_i32 = arith.constant 0 : i32
    %c0_i32_0 = arith.constant 0 : i32
    %c0_i32_1 = arith.constant 0 : i32
    return %c0_i32, %c0_i32_0 : i32, i32
  }
  func.func @transform_15(%arg0: i32, %arg1: memref<1xi32, #tpu.memory_space<smem>>) -> (i32, i32) {
    %c0_i32 = arith.constant 0 : i32
    %c0_i32_0 = arith.constant 0 : i32
    %c0_i32_1 = arith.constant 0 : i32
    return %c0_i32, %c0_i32_0 : i32, i32
  }
  func.func @transform_16(%arg0: i32, %arg1: memref<1xi32, #tpu.memory_space<smem>>) -> (i32, i32) {
    %c0_i32 = arith.constant 0 : i32
    %c0_i32_0 = arith.constant 0 : i32
    %c0_i32_1 = arith.constant 0 : i32
    return %c0_i32, %c0_i32_0 : i32, i32
  }
  func.func @transform_17(%arg0: i32, %arg1: memref<1xi32, #tpu.memory_space<smem>>) -> (i32, i32, i32) {
    %c0_i32 = arith.constant 0 : i32
    %c0_i32_0 = arith.constant 0 : i32
    %c0_i32_1 = arith.constant 0 : i32
    return %c0_i32, %arg0, %c0_i32_0 : i32, i32, i32
  }
}

</mosaic_0001>

<llo_original>
// kernel: calm_encoder_forward.1
$region0: #{calm_encoder_forward.1}
  #allocation0 [shape = 'u32[]', space=smem, size = 0x4, offset = 0x4, fixed_abs, tag = 'smem constant byte address 0x4 - core index']
  #allocation1 [shape = 'u32[144,128]{1,0:T(1,128)}', space=vmem, size = 0x12000, scoped, tag = 'internal scratch']
  #allocation2 [shape = 's32[1]{0}', space=sflag, size = 0x4, scoped, tag = 'scoped memory for calm_encoder_forward.1']
  #allocation3 [shape = 's32[1]{0:T(128)S(6)}', space=smem, size = 0x200, scoped, tag = 'prefetched SMEM operand 0']
  %s0 = inlined_call_operand.<no memory space> [shape: s32[1], index: 0, kind: input, shape index: {}]
  %s1 = inlined_call_operand.vmem [shape: f32[16,16], index: 1, kind: input, shape index: {}]
  %s2 = inlined_call_operand.vmem [shape: f32[256,2], index: 2, kind: input, shape index: {}]
  %s3 = inlined_call_operand.vmem [shape: f32[2,256,128], index: 3, kind: input, shape index: {}]
  %s4 = inlined_call_operand.vmem [shape: f32[256,32], index: 4, kind: input, shape index: {}]
  %s5 = inlined_call_operand.vmem [shape: f32[256,32], index: 5, kind: input, shape index: {}]
  %s6 = inlined_call_operand.vmem [shape: f32[2,16], index: 6, kind: input, shape index: {}]
  %s7 = inlined_call_operand.vmem [shape: f32[16,32], index: 7, kind: input, shape index: {}]
  %s8 = inlined_call_operand.vmem [shape: f32[16,32], index: 8, kind: input, shape index: {}]
  %s9 = inlined_call_operand.vmem [shape: f32[1,32], index: 9, kind: input, shape index: {}]
  %s10 = inlined_call_operand.vmem [shape: f32[32,128], index: 10, kind: input, shape index: {}]
  %s11 = inlined_call_operand.vmem [shape: f32[1,128], index: 11, kind: input, shape index: {}]
  %s12 = inlined_call_operand.vmem [shape: f32[128,16], index: 12, kind: input, shape index: {}]
  %s13 = inlined_call_operand.vmem [shape: f32[1,16], index: 13, kind: input, shape index: {}]
  %s14 = inlined_call_operand.vmem [shape: f32[16,64], index: 14, kind: input, shape index: {}]
  %s15 = inlined_call_operand.vmem [shape: f32[1,64], index: 15, kind: input, shape index: {}]
  %s16 = inlined_call_operand.vmem [shape: f32[64,16], index: 16, kind: input, shape index: {}]
  %s17 = inlined_call_operand.vmem [shape: f32[1,16], index: 17, kind: input, shape index: {}]
  %s18 = inlined_call_operand.hbm [shape: f32[2,16,16], index: 18, kind: output, shape index: {}]
  %s19 = sld [smem:[#allocation0]]
  $region78: #{calm_encoder_forward.1} parent=0
    _
  %s21 = ssub.s32 1, %s19
  %s22 = scalar_select 0, %s21, %s19
  %23 = sst [smem:[#allocation3]] %s0
  $region1: #{calm_encoder_forward.1} parent=0
    #allocation4 [shape = 'u8[16384]{0}', space=vmem, size = 0x4000, scoped, tag = 'output window, operand 0, single buffered']
    #allocation5 [shape = 's32[1]{0}', space=sflag, size = 0x4, scoped, tag = 'scoped memory for calm_encoder_forward.1']
    %24 = vsyncpa [#allocation5], 0
    // Predicated region
    $region2: #{calm_encoder_forward.1} parent=1 // pred_check
      _
    $region3: #{calm_encoder_forward.1} parent=1 // pred_check_branch
      %26 = sbr.rel (0) target = $region5
    $region4: #{calm_encoder_forward.1} parent=1 // pred_region
      _
    $region5: #{calm_encoder_forward.1} parent=1 // pred_fallthru
      _
    // Predicated region
    $region6: #{calm_encoder_forward.1} parent=1 // pred_check
      _
    $region7: #{calm_encoder_forward.1} parent=1 // pred_check_branch
      %28 = sbr.rel (0) target = $region9
    $region8: #{calm_encoder_forward.1} parent=1 // pred_region
      _
    $region9: #{calm_encoder_forward.1} parent=1 // pred_fallthru
      _
    // Predicated region
    $region10: #{calm_encoder_forward.1} parent=1 // pred_check
      _
    $region11: #{calm_encoder_forward.1} parent=1 // pred_check_branch
      %30 = sbr.rel (0) target = $region13
    $region12: #{calm_encoder_forward.1} parent=1 // pred_region
      _
    $region13: #{calm_encoder_forward.1} parent=1 // pred_fallthru
      _
    // Predicated region
    $region14: #{calm_encoder_forward.1} parent=1 // pred_check
      _
    $region15: #{calm_encoder_forward.1} parent=1 // pred_check_branch
      %32 = sbr.rel (0) target = $region17
    $region16: #{calm_encoder_forward.1} parent=1 // pred_region
      _
    $region17: #{calm_encoder_forward.1} parent=1 // pred_fallthru
      _
    // Predicated region
    $region18: #{calm_encoder_forward.1} parent=1 // pred_check
      _
    $region19: #{calm_encoder_forward.1} parent=1 // pred_check_branch
      %34 = sbr.rel (0) target = $region21
    $region20: #{calm_encoder_forward.1} parent=1 // pred_region
      _
    $region21: #{calm_encoder_forward.1} parent=1 // pred_fallthru
      _
    // Predicated region
    $region22: #{calm_encoder_forward.1} parent=1 // pred_check
      _
    $region23: #{calm_encoder_forward.1} parent=1 // pred_check_branch
      %36 = sbr.rel (0) target = $region25
    $region24: #{calm_encoder_forward.1} parent=1 // pred_region
      _
    $region25: #{calm_encoder_forward.1} parent=1 // pred_fallthru
      _
    // Predicated region
    $region26: #{calm_encoder_forward.1} parent=1 // pred_check
      _
    $region27: #{calm_encoder_forward.1} parent=1 // pred_check_branch
      %38 = sbr.rel (0) target = $region29
    $region28: #{calm_encoder_forward.1} parent=1 // pred_region
      _
    $region29: #{calm_encoder_forward.1} parent=1 // pred_fallthru
      _
    // Predicated region
    $region30: #{calm_encoder_forward.1} parent=1 // pred_check
      _
    $region31: #{calm_encoder_forward.1} parent=1 // pred_check_branch
      %40 = sbr.rel (0) target = $region33
    $region32: #{calm_encoder_forward.1} parent=1 // pred_region
      _
    $region33: #{calm_encoder_forward.1} parent=1 // pred_fallthru
      _
    // Predicated region
    $region34: #{calm_encoder_forward.1} parent=1 // pred_check
      _
    $region35: #{calm_encoder_forward.1} parent=1 // pred_check_branch
      %42 = sbr.rel (0) target = $region37
    $region36: #{calm_encoder_forward.1} parent=1 // pred_region
      _
    $region37: #{calm_encoder_forward.1} parent=1 // pred_fallthru
      _
    // Predicated region
    $region38: #{calm_encoder_forward.1} parent=1 // pred_check
      _
    $region39: #{calm_encoder_forward.1} parent=1 // pred_check_branch
      %44 = sbr.rel (0) target = $region41
    $region40: #{calm_encoder_forward.1} parent=1 // pred_region
      _
    $region41: #{calm_encoder_forward.1} parent=1 // pred_fallthru
      _
    // Predicated region
    $region42: #{calm_encoder_forward.1} parent=1 // pred_check
      _
    $region43: #{calm_encoder_forward.1} parent=1 // pred_check_branch
      %46 = sbr.rel (0) target = $region45
    $region44: #{calm_encoder_forward.1} parent=1 // pred_region
      _
    $region45: #{calm_encoder_forward.1} parent=1 // pred_fallthru
      _
    // Predicated region
    $region46: #{calm_encoder_forward.1} parent=1 // pred_check
      _
    $region47: #{calm_encoder_forward.1} parent=1 // pred_check_branch
      %48 = sbr.rel (0) target = $region49
    $region48: #{calm_encoder_forward.1} parent=1 // pred_region
      _
    $region49: #{calm_encoder_forward.1} parent=1 // pred_fallthru
      _
    // Predicated region
    $region50: #{calm_encoder_forward.1} parent=1 // pred_check
      _
    $region51: #{calm_encoder_forward.1} parent=1 // pred_check_branch
      %50 = sbr.rel (0) target = $region53
    $region52: #{calm_encoder_forward.1} parent=1 // pred_region
      _
    $region53: #{calm_encoder_forward.1} parent=1 // pred_fallthru
      _
    // Predicated region
    $region54: #{calm_encoder_forward.1} parent=1 // pred_check
      _
    $region55: #{calm_encoder_forward.1} parent=1 // pred_check_branch
      %52 = sbr.rel (0) target = $region57
    $region56: #{calm_encoder_forward.1} parent=1 // pred_region
      _
    $region57: #{calm_encoder_forward.1} parent=1 // pred_fallthru
      _
    // Predicated region
    $region58: #{calm_encoder_forward.1} parent=1 // pred_check
      _
    $region59: #{calm_encoder_forward.1} parent=1 // pred_check_branch
      %54 = sbr.rel (0) target = $region61
    $region60: #{calm_encoder_forward.1} parent=1 // pred_region
      _
    $region61: #{calm_encoder_forward.1} parent=1 // pred_fallthru
      _
    // Predicated region
    $region62: #{calm_encoder_forward.1} parent=1 // pred_check
      _
    $region63: #{calm_encoder_forward.1} parent=1 // pred_check_branch
      %56 = sbr.rel (0) target = $region65
    $region64: #{calm_encoder_forward.1} parent=1 // pred_region
      _
    $region65: #{calm_encoder_forward.1} parent=1 // pred_fallthru
      _
    // Predicated region
    $region66: #{calm_encoder_forward.1} parent=1 // pred_check
      _
    $region67: #{calm_encoder_forward.1} parent=1 // pred_check_branch
      %58 = sbr.rel (0) target = $region69
    $region68: #{calm_encoder_forward.1} parent=1 // pred_region
      _
    $region69: #{calm_encoder_forward.1} parent=1 // pred_fallthru
      _
    %s59 = sld [smem:[#allocation3]]
    %v60 = vlaneseq
    %v61 = vand.u32 %v60, 127
    %v62 = vstv %s59
    %vm63 = vcmp.lt.s32.totalorder %v61, %v62
    %v64 = vld [vmem:[%s1] sm:$0xff]
    %v65 = vld [vmem:[%s1 + $0x8] sm:$0xff]
    %v66 = vsel %vm63, %v64, inf
    %v67 = vsel %vm63, %v65, inf
    %vm68 = vcmask 130048
    %v69 = vsel %vm68, %v66, inf
    %70 = vmin.xlane.f32.xlu0 %v69
    %v71 = vpop.xlane.xlu0 %70
    %v72 = vsel %vm68, %v67, inf
    %73 = vmin.xlane.f32.xlu0 %v72
    %v74 = vpop.xlane.xlu0 %73
    %v75 = vsel %vm63, %v64, -inf
    %v76 = vsel %vm63, %v65, -inf
    %v77 = vsel %vm68, %v75, -inf
    %78 = vmax.xlane.f32.xlu0 %v77
    %v79 = vpop.xlane.xlu0 %78
    %v80 = vsel %vm68, %v76, -inf
    %81 = vmax.xlane.f32.xlu0 %v80
    %v82 = vpop.xlane.xlu0 %81
    %v83 = vsub.f32 %v79, %v71
    %v84 = vsub.f32 %v82, %v74
    %v85 = vadd.f32 %v83, 1e-08
    %v86 = vadd.f32 %v84, 1e-08
    %v87 = vrcp.pop %v85
    %v88 = vmul.f32 -1.0, %v87
    %v89 = vrcp.pop %v86
    %v90 = vmul.f32 -1.0, %v89
    %v91 = vsub.f32 %v64, %v71
    %v92 = vsub.f32 %v65, %v74
    %v93 = vmul.f32 %v91, %v88
    %v94 = vmul.f32 %v92, %v90
    %v95 = vsel %vm63, %v93, -inf
    %v96 = vsel %vm63, %v94, -inf
    %v97 = vsel %vm68, %v95, -inf
    %98 = vmax.xlane.f32.xlu0 %v97
    %v99 = vpop.xlane.xlu0 %98
    %v100 = vsel %vm68, %v96, -inf
    %101 = vmax.xlane.f32.xlu0 %v100
    %v102 = vpop.xlane.xlu0 %101
    %v103 = vsub.f32 %v95, %v99
    %v104 = vsub.f32 %v96, %v102
    %v105 = vmul.f32 %v103, 1.442695
    %v106 = vpow.pop %v105
    %v107 = vmul.f32 %v104, 1.442695
    %v108 = vpow.pop %v107
    %v109 = vsel %vm63, %v106, 0.0
    %v110 = vsel %vm63, %v108, 0.0
    %v111 = vsel %vm68, %v109, 0.0
    %112 = vadd.xlane.f32.xlu0 %v111
    %v113 = vpop.xlane.xlu0 %112
    %v114 = vsel %vm68, %v110, 0.0
    %115 = vadd.xlane.f32.xlu0 %v114
    %v116 = vpop.xlane.xlu0 %115
    %v117 = vrcp.pop %v113
    %v118 = vrcp.pop %v116
    %v119 = vmul.f32 %v109, %v117
    %v120 = vmul.f32 %v110, %v118
    %v121 = vld [vmem:[%s2] sm:$0xff]
    %v122 = vld [vmem:[%s2 + $0x8] sm:$0xff]
    %v123 = vld [vmem:[%s2 + $0x10] sm:$0xff]
    %v124 = vld [vmem:[%s2 + $0x18] sm:$0xff]
    %v125 = vld [vmem:[%s2 + $0x20] sm:$0xff]
    %v126 = vld [vmem:[%s2 + $0x28] sm:$0xff]
    %v127 = vld [vmem:[%s2 + $0x30] sm:$0xff]
    %v128 = vld [vmem:[%s2 + $0x38] sm:$0xff]
    %v129 = vld [vmem:[%s2 + $0x40] sm:$0xff]
    %v130 = vld [vmem:[%s2 + $0x48] sm:$0xff]
    %v131 = vld [vmem:[%s2 + $0x50] sm:$0xff]
    %v132 = vld [vmem:[%s2 + $0x58] sm:$0xff]
    %v133 = vld [vmem:[%s2 + $0x60] sm:$0xff]
    %v134 = vld [vmem:[%s2 + $0x68] sm:$0xff]
    %v135 = vld [vmem:[%s2 + $0x70] sm:$0xff]
    %v136 = vld [vmem:[%s2 + $0x78] sm:$0xff]
    %v137 = vld [vmem:[%s2 + $0x80] sm:$0xff]
    %v138 = vld [vmem:[%s2 + $0x88] sm:$0xff]
    %v139 = vld [vmem:[%s2 + $0x90] sm:$0xff]
    %v140 = vld [vmem:[%s2 + $0x98] sm:$0xff]
    %v141 = vld [vmem:[%s2 + $0xa0] sm:$0xff]
    %v142 = vld [vmem:[%s2 + $0xa8] sm:$0xff]
    %v143 = vld [vmem:[%s2 + $0xb0] sm:$0xff]
    %v144 = vld [vmem:[%s2 + $0xb8] sm:$0xff]
    %v145 = vld [vmem:[%s2 + $0xc0] sm:$0xff]
    %v146 = vld [vmem:[%s2 + $0xc8] sm:$0xff]
    %v147 = vld [vmem:[%s2 + $0xd0] sm:$0xff]
    %v148 = vld [vmem:[%s2 + $0xd8] sm:$0xff]
    %v149 = vld [vmem:[%s2 + $0xe0] sm:$0xff]
    %v150 = vld [vmem:[%s2 + $0xe8] sm:$0xff]
    %v151 = vld [vmem:[%s2 + $0xf0] sm:$0xff]
    %v152 = vld [vmem:[%s2 + $0xf8] sm:$0xff]
    %v153 = vld [vmem:[%s6] sm:$0x1]
    %155 = vset.pattern.permute.xlu0 0
    %156 = vperm.xlu0 %155, %v121
    %v157 = vpop.permute.xlu0 %156
    %160 = vset.pattern.permute.xlu0 0
    %161 = vperm.xlu0 %160, %v122
    %v162 = vpop.permute.xlu0 %161
    %165 = vset.pattern.permute.xlu0 0
    %166 = vperm.xlu0 %165, %v123
    %v167 = vpop.permute.xlu0 %166
    %170 = vset.pattern.permute.xlu0 0
    %171 = vperm.xlu0 %170, %v124
    %v172 = vpop.permute.xlu0 %171
    %175 = vset.pattern.permute.xlu0 0
    %176 = vperm.xlu0 %175, %v125
    %v177 = vpop.permute.xlu0 %176
    %180 = vset.pattern.permute.xlu0 0
    %181 = vperm.xlu0 %180, %v126
    %v182 = vpop.permute.xlu0 %181
    %185 = vset.pattern.permute.xlu0 0
    %186 = vperm.xlu0 %185, %v127
    %v187 = vpop.permute.xlu0 %186
    %190 = vset.pattern.permute.xlu0 0
    %191 = vperm.xlu0 %190, %v128
    %v192 = vpop.permute.xlu0 %191
    %195 = vset.pattern.permute.xlu0 0
    %196 = vperm.xlu0 %195, %v129
    %v197 = vpop.permute.xlu0 %196
    %200 = vset.pattern.permute.xlu0 0
    %201 = vperm.xlu0 %200, %v130
    %v202 = vpop.permute.xlu0 %201
    %205 = vset.pattern.permute.xlu0 0
    %206 = vperm.xlu0 %205, %v131
    %v207 = vpop.permute.xlu0 %206
    %210 = vset.pattern.permute.xlu0 0
    %211 = vperm.xlu0 %210, %v132
    %v212 = vpop.permute.xlu0 %211
    %215 = vset.pattern.permute.xlu0 0
    %216 = vperm.xlu0 %215, %v133
    %v217 = vpop.permute.xlu0 %216
    %220 = vset.pattern.permute.xlu0 0
    %221 = vperm.xlu0 %220, %v134
    %v222 = vpop.permute.xlu0 %221
    %225 = vset.pattern.permute.xlu0 0
    %226 = vperm.xlu0 %225, %v135
    %v227 = vpop.permute.xlu0 %226
    %230 = vset.pattern.permute.xlu0 0
    %231 = vperm.xlu0 %230, %v136
    %v232 = vpop.permute.xlu0 %231
    %235 = vset.pattern.permute.xlu0 0
    %236 = vperm.xlu0 %235, %v137
    %v237 = vpop.permute.xlu0 %236
    %240 = vset.pattern.permute.xlu0 0
    %241 = vperm.xlu0 %240, %v138
    %v242 = vpop.permute.xlu0 %241
    %245 = vset.pattern.permute.xlu0 0
    %246 = vperm.xlu0 %245, %v139
    %v247 = vpop.permute.xlu0 %246
    %250 = vset.pattern.permute.xlu0 0
    %251 = vperm.xlu0 %250, %v140
    %v252 = vpop.permute.xlu0 %251
    %255 = vset.pattern.permute.xlu0 0
    %256 = vperm.xlu0 %255, %v141
    %v257 = vpop.permute.xlu0 %256
    %260 = vset.pattern.permute.xlu0 0
    %261 = vperm.xlu0 %260, %v142
    %v262 = vpop.permute.xlu0 %261
    %265 = vset.pattern.permute.xlu0 0
    %266 = vperm.xlu0 %265, %v143
    %v267 = vpop.permute.xlu0 %266
    %270 = vset.pattern.permute.xlu0 0
    %271 = vperm.xlu0 %270, %v144
    %v272 = vpop.permute.xlu0 %271
    %275 = vset.pattern.permute.xlu0 0
    %276 = vperm.xlu0 %275, %v145
    %v277 = vpop.permute.xlu0 %276
    %280 = vset.pattern.permute.xlu0 0
    %281 = vperm.xlu0 %280, %v146
    %v282 = vpop.permute.xlu0 %281
    %285 = vset.pattern.permute.xlu0 0
    %286 = vperm.xlu0 %285, %v147
    %v287 = vpop.permute.xlu0 %286
    %290 = vset.pattern.permute.xlu0 0
    %291 = vperm.xlu0 %290, %v148
    %v292 = vpop.permute.xlu0 %291
    %295 = vset.pattern.permute.xlu0 0
    %296 = vperm.xlu0 %295, %v149
    %v297 = vpop.permute.xlu0 %296
    %300 = vset.pattern.permute.xlu0 0
    %301 = vperm.xlu0 %300, %v150
    %v302 = vpop.permute.xlu0 %301
    %305 = vset.pattern.permute.xlu0 0
    %306 = vperm.xlu0 %305, %v151
    %v307 = vpop.permute.xlu0 %306
    %310 = vset.pattern.permute.xlu0 0
    %311 = vperm.xlu0 %310, %v152
    %v312 = vpop.permute.xlu0 %311
    %v314 = vlaneseq
    %v315 = vshrl.u32 %v314, 7
    %v316 = vsub.s32 0, %v315
    %v317 = vrot.slane %v153, %v316
    %v318 = vmul.f32 %v157, %v317
    %v319 = vmul.f32 %v162, %v317
    %v320 = vmul.f32 %v167, %v317
    %v321 = vmul.f32 %v172, %v317
    %v322 = vmul.f32 %v177, %v317
    %v323 = vmul.f32 %v182, %v317
    %v324 = vmul.f32 %v187, %v317
    %v325 = vmul.f32 %v192, %v317
    %v326 = vmul.f32 %v197, %v317
    %v327 = vmul.f32 %v202, %v317
    %v328 = vmul.f32 %v207, %v317
    %v329 = vmul.f32 %v212, %v317
    %v330 = vmul.f32 %v217, %v317
    %v331 = vmul.f32 %v222, %v317
    %v332 = vmul.f32 %v227, %v317
    %v333 = vmul.f32 %v232, %v317
    %v334 = vmul.f32 %v237, %v317
    %v335 = vmul.f32 %v242, %v317
    %v336 = vmul.f32 %v247, %v317
    %v337 = vmul.f32 %v252, %v317
    %v338 = vmul.f32 %v257, %v317
    %v339 = vmul.f32 %v262, %v317
    %v340 = vmul.f32 %v267, %v317
    %v341 = vmul.f32 %v272, %v317
    %v342 = vmul.f32 %v277, %v317
    %v343 = vmul.f32 %v282, %v317
    %v344 = vmul.f32 %v287, %v317
    %v345 = vmul.f32 %v292, %v317
    %v346 = vmul.f32 %v297, %v317
    %v347 = vmul.f32 %v302, %v317
    %v348 = vmul.f32 %v307, %v317
    %v349 = vmul.f32 %v312, %v317
    %v350 = vld [vmem:[%s6 + $0x1] sm:$0x1]
    %351 = vset.pattern.permute.xlu0 1
    %352 = vperm.xlu0 %351, %v121
    %v353 = vpop.permute.xlu0 %352
    %355 = vset.pattern.permute.xlu0 1
    %356 = vperm.xlu0 %355, %v122
    %v357 = vpop.permute.xlu0 %356
    %359 = vset.pattern.permute.xlu0 1
    %360 = vperm.xlu0 %359, %v123
    %v361 = vpop.permute.xlu0 %360
    %363 = vset.pattern.permute.xlu0 1
    %364 = vperm.xlu0 %363, %v124
    %v365 = vpop.permute.xlu0 %364
    %367 = vset.pattern.permute.xlu0 1
    %368 = vperm.xlu0 %367, %v125
    %v369 = vpop.permute.xlu0 %368
    %371 = vset.pattern.permute.xlu0 1
    %372 = vperm.xlu0 %371, %v126
    %v373 = vpop.permute.xlu0 %372
    %375 = vset.pattern.permute.xlu0 1
    %376 = vperm.xlu0 %375, %v127
    %v377 = vpop.permute.xlu0 %376
    %379 = vset.pattern.permute.xlu0 1
    %380 = vperm.xlu0 %379, %v128
    %v381 = vpop.permute.xlu0 %380
    %383 = vset.pattern.permute.xlu0 1
    %384 = vperm.xlu0 %383, %v129
    %v385 = vpop.permute.xlu0 %384
    %387 = vset.pattern.permute.xlu0 1
    %388 = vperm.xlu0 %387, %v130
    %v389 = vpop.permute.xlu0 %388
    %391 = vset.pattern.permute.xlu0 1
    %392 = vperm.xlu0 %391, %v131
    %v393 = vpop.permute.xlu0 %392
    %395 = vset.pattern.permute.xlu0 1
    %396 = vperm.xlu0 %395, %v132
    %v397 = vpop.permute.xlu0 %396
    %399 = vset.pattern.permute.xlu0 1
    %400 = vperm.xlu0 %399, %v133
    %v401 = vpop.permute.xlu0 %400
    %403 = vset.pattern.permute.xlu0 1
    %404 = vperm.xlu0 %403, %v134
    %v405 = vpop.permute.xlu0 %404
    %407 = vset.pattern.permute.xlu0 1
    %408 = vperm.xlu0 %407, %v135
    %v409 = vpop.permute.xlu0 %408
    %411 = vset.pattern.permute.xlu0 1
    %412 = vperm.xlu0 %411, %v136
    %v413 = vpop.permute.xlu0 %412
    %415 = vset.pattern.permute.xlu0 1
    %416 = vperm.xlu0 %415, %v137
    %v417 = vpop.permute.xlu0 %416
    %419 = vset.pattern.permute.xlu0 1
    %420 = vperm.xlu0 %419, %v138
    %v421 = vpop.permute.xlu0 %420
    %423 = vset.pattern.permute.xlu0 1
    %424 = vperm.xlu0 %423, %v139
    %v425 = vpop.permute.xlu0 %424
    %427 = vset.pattern.permute.xlu0 1
    %428 = vperm.xlu0 %427, %v140
    %v429 = vpop.permute.xlu0 %428
    %431 = vset.pattern.permute.xlu0 1
    %432 = vperm.xlu0 %431, %v141
    %v433 = vpop.permute.xlu0 %432
    %435 = vset.pattern.permute.xlu0 1
    %436 = vperm.xlu0 %435, %v142
    %v437 = vpop.permute.xlu0 %436
    %439 = vset.pattern.permute.xlu0 1
    %440 = vperm.xlu0 %439, %v143
    %v441 = vpop.permute.xlu0 %440
    %443 = vset.pattern.permute.xlu0 1
    %444 = vperm.xlu0 %443, %v144
    %v445 = vpop.permute.xlu0 %444
    %447 = vset.pattern.permute.xlu0 1
    %448 = vperm.xlu0 %447, %v145
    %v449 = vpop.permute.xlu0 %448
    %451 = vset.pattern.permute.xlu0 1
    %452 = vperm.xlu0 %451, %v146
    %v453 = vpop.permute.xlu0 %452
    %455 = vset.pattern.permute.xlu0 1
    %456 = vperm.xlu0 %455, %v147
    %v457 = vpop.permute.xlu0 %456
    %459 = vset.pattern.permute.xlu0 1
    %460 = vperm.xlu0 %459, %v148
    %v461 = vpop.permute.xlu0 %460
    %463 = vset.pattern.permute.xlu0 1
    %464 = vperm.xlu0 %463, %v149
    %v465 = vpop.permute.xlu0 %464
    %467 = vset.pattern.permute.xlu0 1
    %468 = vperm.xlu0 %467, %v150
    %v469 = vpop.permute.xlu0 %468
    %471 = vset.pattern.permute.xlu0 1
    %472 = vperm.xlu0 %471, %v151
    %v473 = vpop.permute.xlu0 %472
    %475 = vset.pattern.permute.xlu0 1
    %476 = vperm.xlu0 %475, %v152
    %v477 = vpop.permute.xlu0 %476
    %v479 = vlaneseq
    %v480 = vshrl.u32 %v479, 7
    %v481 = vsub.s32 0, %v480
    %v482 = vrot.slane %v350, %v481
    %v483 = vmul.f32 %v353, %v482
    %v484 = vmul.f32 %v357, %v482
    %v485 = vmul.f32 %v361, %v482
    %v486 = vmul.f32 %v365, %v482
    %v487 = vmul.f32 %v369, %v482
    %v488 = vmul.f32 %v373, %v482
    %v489 = vmul.f32 %v377, %v482
    %v490 = vmul.f32 %v381, %v482
    %v491 = vmul.f32 %v385, %v482
    %v492 = vmul.f32 %v389, %v482
    %v493 = vmul.f32 %v393, %v482
    %v494 = vmul.f32 %v397, %v482
    %v495 = vmul.f32 %v401, %v482
    %v496 = vmul.f32 %v405, %v482
    %v497 = vmul.f32 %v409, %v482
    %v498 = vmul.f32 %v413, %v482
    %v499 = vmul.f32 %v417, %v482
    %v500 = vmul.f32 %v421, %v482
    %v501 = vmul.f32 %v425, %v482
    %v502 = vmul.f32 %v429, %v482
    %v503 = vmul.f32 %v433, %v482
    %v504 = vmul.f32 %v437, %v482
    %v505 = vmul.f32 %v441, %v482
    %v506 = vmul.f32 %v445, %v482
    %v507 = vmul.f32 %v449, %v482
    %v508 = vmul.f32 %v453, %v482
    %v509 = vmul.f32 %v457, %v482
    %v510 = vmul.f32 %v461, %v482
    %v511 = vmul.f32 %v465, %v482
    %v512 = vmul.f32 %v469, %v482
    %v513 = vmul.f32 %v473, %v482
    %v514 = vmul.f32 %v477, %v482
    %v515 = vadd.f32 %v318, %v483
    %v516 = vadd.f32 %v319, %v484
    %v517 = vadd.f32 %v320, %v485
    %v518 = vadd.f32 %v321, %v486
    %v519 = vadd.f32 %v322, %v487
    %v520 = vadd.f32 %v323, %v488
    %v521 = vadd.f32 %v324, %v489
    %v522 = vadd.f32 %v325, %v490
    %v523 = vadd.f32 %v326, %v491
    %v524 = vadd.f32 %v327, %v492
    %v525 = vadd.f32 %v328, %v493
    %v526 = vadd.f32 %v329, %v494
    %v527 = vadd.f32 %v330, %v495
    %v528 = vadd.f32 %v331, %v496
    %v529 = vadd.f32 %v332, %v497
    %v530 = vadd.f32 %v333, %v498
    %v531 = vadd.f32 %v334, %v499
    %v532 = vadd.f32 %v335, %v500
    %v533 = vadd.f32 %v336, %v501
    %v534 = vadd.f32 %v337, %v502
    %v535 = vadd.f32 %v338, %v503
    %v536 = vadd.f32 %v339, %v504
    %v537 = vadd.f32 %v340, %v505
    %v538 = vadd.f32 %v341, %v506
    %v539 = vadd.f32 %v342, %v507
    %v540 = vadd.f32 %v343, %v508
    %v541 = vadd.f32 %v344, %v509
    %v542 = vadd.f32 %v345, %v510
    %v543 = vadd.f32 %v346, %v511
    %v544 = vadd.f32 %v347, %v512
    %v545 = vadd.f32 %v348, %v513
    %v546 = vadd.f32 %v349, %v514
    %v547 = vand.u32 2147483647, %v515
    %vm548 = vcmp.le.f32.partialorder %v547, 0.7853982
    %vm549 = vcmp.lt.s32.totalorder %v515, 0
    %v550 = vand.u32 %v515, 2139095040
    %v551 = vshrl.u32 %v550, 23
    %v552 = vsub.s32 %v551, 127
    %v553 = vand.u32 2147483647, %v515
    %v554 = vand.u32 %v553, 8388607
    %v555 = vor.u32 %v554, 8388608
    %v556 = vsub.s32 0, %v555
    %v557 = vadd.s32 %v552, 1
    %vm558 = vcmp.gt.s32.totalorder %v557, 0
    %v559 = vsel %vm558, %v557, 0
    %v560 = vshrl.u32 %v559, 5
    %v561 = vand.u32 %v559, 31
    %v562 = vsub.s32 32, %v561
    %v563 = vshrl.u32 683565275, %v562
    %v564 = vshll.u32 683565275, %v561
    %v565 = vshrl.u32 2475754826, %v562
    %v566 = vor.u32 %v564, %v565
    %v567 = vshll.u32 2475754826, %v561
    %v568 = vshrl.u32 2131351028, %v562
    %v569 = vor.u32 %v567, %v568
    %v570 = vshll.u32 2131351028, %v561
    %v571 = vshrl.u32 2102212464, %v562
    %v572 = vor.u32 %v570, %v571
    %v573 = vshll.u32 2102212464, %v561
    %v574 = vshrl.u32 920167782, %v562
    %v575 = vor.u32 %v573, %v574
    %v576 = vshll.u32 920167782, %v561
    %v577 = vshrl.u32 1326507024, %v562
    %v578 = vor.u32 %v576, %v577
    %vm579 = vcmp.lt.s32.totalorder %v560, 1
    %vm580 = vcmp.lt.s32.totalorder %v560, 2
    %vm581 = vcmp.lt.s32.totalorder %v560, 3
    %vm582 = vcmp.lt.s32.totalorder %v560, 4
    %v583 = vsel %vm579, %v563, %v566
    %v584 = vsel %vm582, %v572, 2102212464
    %v585 = vsel %vm581, %v569, %v584
    %v586 = vsel %vm580, %v583, %v585
    %v587 = vsel %vm579, %v566, %v569
    %v588 = vsel %vm582, %v575, 920167782
    %v589 = vsel %vm581, %v572, %v588
    %v590 = vsel %vm580, %v587, %v589
    %v591 = vsel %vm579, %v569, %v572
    %v592 = vsel %vm582, %v578, 1326507024
    %v593 = vsel %vm581, %v575, %v592
    %v594 = vsel %vm580, %v591, %v593
    %v595 = vshll.u32 %v555, 8
    %v596 = vmul.u32.u64.compose %v595, %v594
    %v597 = vextract.low.u32 %v596
    %v598 = vextract.high.u32 %v596
    %v599 = vmul.u32.u64.compose %v595, %v590
    %v600 = vextract.low.u32 %v599
    %v601 = vextract.high.u32 %v599
    %v602 = vmul.u32 %v595, %v586
    %v603 = vadd.s32 %v598, %v600
    %vm604 = vc.u32 %v598, %v600
    %v605 = vadd.s32 %v601, 1
    %v606 = vsel %vm604, %v605, %v601
    %v607 = vadd.s32 %v602, %v606
    %v608 = vadd.s32 %v607, 536870912
    %v609 = vshrl.u32 %v608, 30
    %v610 = vshll.u32 %v609, 30
    %v611 = vsub.s32 %v607, %v610
    %vm612 = vcmp.lt.s32.totalorder %v611, 0
    %v613 = vsub.s32 0, %v611
    %v614 = vsel %vm612, %v613, %v611
    %v615 = vclz %v614
    %v616 = vsub.s32 %v615, 2
    %vm617 = vcmp.gt.s32.totalorder 0, %v616
    %v618 = vsel %vm617, 0, %v616
    %v619 = vsub.s32 32, %v618
    %v620 = vshll.u32 %v611, %v618
    %v621 = vshrl.u32 %v603, %v619
    %v622 = vor.u32 %v620, %v621
    %v623 = vsub.s32 4294967266, %v618
    %v624 = vadd.s32 %v623, 127
    %v625 = vshll.u32 %v624, 23
    %v626 = vor.u32 4788187, %v625
    %v627 = vand.u32 2147483647, %v626
    %v629 = vcvt.s32.f32 %v622
    %v630 = vmul.f32 %v629, %v627
    %v631 = vxor.u32 %v630, 2147483648
    %v632 = vsel %vm549, %v631, %v630
    %v633 = vsub.s32 4, %v609
    %v634 = vsel %vm549, %v633, %v609
    %v635 = vsel %vm548, %v515, %v632
    %v636 = vsel %vm548, 0, %v634
    %v637 = vcosq.f32.pop %v635
    %v638 = vsinq.f32.pop %v635
    %vm639 = vweird.f32 %v515
    %v640 = vadd.s32 %v636, 3
    %v641 = vand.u32 %v640, 3
    %vm642 = vcmp.lt.s32.totalorder %v641, 2
    %vm643 = vcmp.eq.s32.totalorder %v641, 0
    %v644 = vxor.u32 %v638, 2147483648
    %v645 = vsel %vm643, %v637, %v644
    %vm646 = vcmp.eq.s32.totalorder %v641, 2
    %v647 = vxor.u32 %v637, 2147483648
    %v648 = vsel %vm646, %v647, %v638
    %v649 = vsel %vm642, %v645, %v648
    %v650 = vsel %vm639, nan, %v649
    %v651 = vand.u32 2147483647, %v516
    %vm652 = vcmp.le.f32.partialorder %v651, 0.7853982
    %vm653 = vcmp.lt.s32.totalorder %v516, 0
    %v654 = vand.u32 %v516, 2139095040
    %v655 = vshrl.u32 %v654, 23
    %v656 = vsub.s32 %v655, 127
    %v657 = vand.u32 2147483647, %v516
    %v658 = vand.u32 %v657, 8388607
    %v659 = vor.u32 %v658, 8388608
    %v660 = vsub.s32 0, %v659
    %v661 = vadd.s32 %v656, 1
    %vm662 = vcmp.gt.s32.totalorder %v661, 0
    %v663 = vsel %vm662, %v661, 0
    %v664 = vshrl.u32 %v663, 5
    %v665 = vand.u32 %v663, 31
    %v666 = vsub.s32 32, %v665
    %v667 = vshrl.u32 683565275, %v666
    %v668 = vshll.u32 683565275, %v665
    %v669 = vshrl.u32 2475754826, %v666
    %v670 = vor.u32 %v668, %v669
    %v671 = vshll.u32 2475754826, %v665
    %v672 = vshrl.u32 2131351028, %v666
    %v673 = vor.u32 %v671, %v672
    %v674 = vshll.u32 2131351028, %v665
    %v675 = vshrl.u32 2102212464, %v666
    %v676 = vor.u32 %v674, %v675
    %v677 = vshll.u32 2102212464, %v665
    %v678 = vshrl.u32 920167782, %v666
    %v679 = vor.u32 %v677, %v678
    %v680 = vshll.u32 920167782, %v665
    %v681 = vshrl.u32 1326507024, %v666
    %v682 = vor.u32 %v680, %v681
    %vm683 = vcmp.lt.s32.totalorder %v664, 1
    %vm684 = vcmp.lt.s32.totalorder %v664, 2
    %vm685 = vcmp.lt.s32.totalorder %v664, 3
    %vm686 = vcmp.lt.s32.totalorder %v664, 4
    %v687 = vsel %vm683, %v667, %v670
    %v688 = vsel %vm686, %v676, 2102212464
    %v689 = vsel %vm685, %v673, %v688
    %v690 = vsel %vm684, %v687, %v689
    %v691 = vsel %vm683, %v670, %v673
    %v692 = vsel %vm686, %v679, 920167782
    %v693 = vsel %vm685, %v676, %v692
    %v694 = vsel %vm684, %v691, %v693
    %v695 = vsel %vm683, %v673, %v676
    %v696 = vsel %vm686, %v682, 1326507024
    %v697 = vsel %vm685, %v679, %v696
    %v698 = vsel %vm684, %v695, %v697
    %v699 = vshll.u32 %v659, 8
    %v700 = vmul.u32.u64.compose %v699, %v698
    %v701 = vextract.low.u32 %v700
    %v702 = vextract.high.u32 %v700
    %v703 = vmul.u32.u64.compose %v699, %v694
    %v704 = vextract.low.u32 %v703
    %v705 = vextract.high.u32 %v703
    %v706 = vmul.u32 %v699, %v690
    %v707 = vadd.s32 %v702, %v704
    %vm708 = vc.u32 %v702, %v704
    %v709 = vadd.s32 %v705, 1
    %v710 = vsel %vm708, %v709, %v705
    %v711 = vadd.s32 %v706, %v710
    %v712 = vadd.s32 %v711, 536870912
    %v713 = vshrl.u32 %v712, 30
    %v714 = vshll.u32 %v713, 30
    %v715 = vsub.s32 %v711, %v714
    %vm716 = vcmp.lt.s32.totalorder %v715, 0
    %v717 = vsub.s32 0, %v715
    %v718 = vsel %vm716, %v717, %v715
    %v719 = vclz %v718
    %v720 = vsub.s32 %v719, 2
    %vm721 = vcmp.gt.s32.totalorder 0, %v720
    %v722 = vsel %vm721, 0, %v720
    %v723 = vsub.s32 32, %v722
    %v724 = vshll.u32 %v715, %v722
    %v725 = vshrl.u32 %v707, %v723
    %v726 = vor.u32 %v724, %v725
    %v727 = vsub.s32 4294967266, %v722
    %v728 = vadd.s32 %v727, 127
    %v729 = vshll.u32 %v728, 23
    %v730 = vor.u32 4788187, %v729
    %v731 = vand.u32 2147483647, %v730
    %v733 = vcvt.s32.f32 %v726
    %v734 = vmul.f32 %v733, %v731
    %v735 = vxor.u32 %v734, 2147483648
    %v736 = vsel %vm653, %v735, %v734
    %v737 = vsub.s32 4, %v713
    %v738 = vsel %vm653, %v737, %v713
    %v739 = vsel %vm652, %v516, %v736
    %v740 = vsel %vm652, 0, %v738
    %v741 = vcosq.f32.pop %v739
    %v742 = vsinq.f32.pop %v739
    %vm743 = vweird.f32 %v516
    %v744 = vadd.s32 %v740, 3
    %v745 = vand.u32 %v744, 3
    %vm746 = vcmp.lt.s32.totalorder %v745, 2
    %vm747 = vcmp.eq.s32.totalorder %v745, 0
    %v748 = vxor.u32 %v742, 2147483648
    %v749 = vsel %vm747, %v741, %v748
    %vm750 = vcmp.eq.s32.totalorder %v745, 2
    %v751 = vxor.u32 %v741, 2147483648
    %v752 = vsel %vm750, %v751, %v742
    %v753 = vsel %vm746, %v749, %v752
    %v754 = vsel %vm743, nan, %v753
    %v755 = vand.u32 2147483647, %v517
    %vm756 = vcmp.le.f32.partialorder %v755, 0.7853982
    %vm757 = vcmp.lt.s32.totalorder %v517, 0
    %v758 = vand.u32 %v517, 2139095040
    %v759 = vshrl.u32 %v758, 23
    %v760 = vsub.s32 %v759, 127
    %v761 = vand.u32 2147483647, %v517
    %v762 = vand.u32 %v761, 8388607
    %v763 = vor.u32 %v762, 8388608
    %v764 = vsub.s32 0, %v763
    %v765 = vadd.s32 %v760, 1
    %vm766 = vcmp.gt.s32.totalorder %v765, 0
    %v767 = vsel %vm766, %v765, 0
    %v768 = vshrl.u32 %v767, 5
    %v769 = vand.u32 %v767, 31
    %v770 = vsub.s32 32, %v769
    %v771 = vshrl.u32 683565275, %v770
    %v772 = vshll.u32 683565275, %v769
    %v773 = vshrl.u32 2475754826, %v770
    %v774 = vor.u32 %v772, %v773
    %v775 = vshll.u32 2475754826, %v769
    %v776 = vshrl.u32 2131351028, %v770
    %v777 = vor.u32 %v775, %v776
    %v778 = vshll.u32 2131351028, %v769
    %v779 = vshrl.u32 2102212464, %v770
    %v780 = vor.u32 %v778, %v779
    %v781 = vshll.u32 2102212464, %v769
    %v782 = vshrl.u32 920167782, %v770
    %v783 = vor.u32 %v781, %v782
    %v784 = vshll.u32 920167782, %v769
    %v785 = vshrl.u32 1326507024, %v770
    %v786 = vor.u32 %v784, %v785
    %vm787 = vcmp.lt.s32.totalorder %v768, 1
    %vm788 = vcmp.lt.s32.totalorder %v768, 2
    %vm789 = vcmp.lt.s32.totalorder %v768, 3
    %vm790 = vcmp.lt.s32.totalorder %v768, 4
    %v791 = vsel %vm787, %v771, %v774
    %v792 = vsel %vm790, %v780, 2102212464
    %v793 = vsel %vm789, %v777, %v792
    %v794 = vsel %vm788, %v791, %v793
    %v795 = vsel %vm787, %v774, %v777
    %v796 = vsel %vm790, %v783, 920167782
    %v797 = vsel %vm789, %v780, %v796
    %v798 = vsel %vm788, %v795, %v797
    %v799 = vsel %vm787, %v777, %v780
    %v800 = vsel %vm790, %v786, 1326507024
    %v801 = vsel %vm789, %v783, %v800
    %v802 = vsel %vm788, %v799, %v801
    %v803 = vshll.u32 %v763, 8
    %v804 = vmul.u32.u64.compose %v803, %v802
    %v805 = vextract.low.u32 %v804
    %v806 = vextract.high.u32 %v804
    %v807 = vmul.u32.u64.compose %v803, %v798
    %v808 = vextract.low.u32 %v807
    %v809 = vextract.high.u32 %v807
    %v810 = vmul.u32 %v803, %v794
    %v811 = vadd.s32 %v806, %v808
    %vm812 = vc.u32 %v806, %v808
    %v813 = vadd.s32 %v809, 1
    %v814 = vsel %vm812, %v813, %v809
    %v815 = vadd.s32 %v810, %v814
    %v816 = vadd.s32 %v815, 536870912
    %v817 = vshrl.u32 %v816, 30
    %v818 = vshll.u32 %v817, 30
    %v819 = vsub.s32 %v815, %v818
    %vm820 = vcmp.lt.s32.totalorder %v819, 0
    %v821 = vsub.s32 0, %v819
    %v822 = vsel %vm820, %v821, %v819
    %v823 = vclz %v822
    %v824 = vsub.s32 %v823, 2
    %vm825 = vcmp.gt.s32.totalorder 0, %v824
    %v826 = vsel %vm825, 0, %v824
    %v827 = vsub.s32 32, %v826
    %v828 = vshll.u32 %v819, %v826
    %v829 = vshrl.u32 %v811, %v827
    %v830 = vor.u32 %v828, %v829
    %v831 = vsub.s32 4294967266, %v826
    %v832 = vadd.s32 %v831, 127
    %v833 = vshll.u32 %v832, 23
    %v834 = vor.u32 4788187, %v833
    %v835 = vand.u32 2147483647, %v834
    %v837 = vcvt.s32.f32 %v830
    %v838 = vmul.f32 %v837, %v835
    %v839 = vxor.u32 %v838, 2147483648
    %v840 = vsel %vm757, %v839, %v838
    %v841 = vsub.s32 4, %v817
    %v842 = vsel %vm757, %v841, %v817
    %v843 = vsel %vm756, %v517, %v840
    %v844 = vsel %vm756, 0, %v842
    %v845 = vcosq.f32.pop %v843
    %v846 = vsinq.f32.pop %v843
    %vm847 = vweird.f32 %v517
    %v848 = vadd.s32 %v844, 3
    %v849 = vand.u32 %v848, 3
    %vm850 = vcmp.lt.s32.totalorder %v849, 2
    %vm851 = vcmp.eq.s32.totalorder %v849, 0
    %v852 = vxor.u32 %v846, 2147483648
    %v853 = vsel %vm851, %v845, %v852
    %vm854 = vcmp.eq.s32.totalorder %v849, 2
    %v855 = vxor.u32 %v845, 2147483648
    %v856 = vsel %vm854, %v855, %v846
    %v857 = vsel %vm850, %v853, %v856
    %v858 = vsel %vm847, nan, %v857
    %v859 = vand.u32 2147483647, %v518
    %vm860 = vcmp.le.f32.partialorder %v859, 0.7853982
    %vm861 = vcmp.lt.s32.totalorder %v518, 0
    %v862 = vand.u32 %v518, 2139095040
    %v863 = vshrl.u32 %v862, 23
    %v864 = vsub.s32 %v863, 127
    %v865 = vand.u32 2147483647, %v518
    %v866 = vand.u32 %v865, 8388607
    %v867 = vor.u32 %v866, 8388608
    %v868 = vsub.s32 0, %v867
    %v869 = vadd.s32 %v864, 1
    %vm870 = vcmp.gt.s32.totalorder %v869, 0
    %v871 = vsel %vm870, %v869, 0
    %v872 = vshrl.u32 %v871, 5
    %v873 = vand.u32 %v871, 31
    %v874 = vsub.s32 32, %v873
    %v875 = vshrl.u32 683565275, %v874
    %v876 = vshll.u32 683565275, %v873
    %v877 = vshrl.u32 2475754826, %v874
    %v878 = vor.u32 %v876, %v877
    %v879 = vshll.u32 2475754826, %v873
    %v880 = vshrl.u32 2131351028, %v874
    %v881 = vor.u32 %v879, %v880
    %v882 = vshll.u32 2131351028, %v873
    %v883 = vshrl.u32 2102212464, %v874
    %v884 = vor.u32 %v882, %v883
    %v885 = vshll.u32 2102212464, %v873
    %v886 = vshrl.u32 920167782, %v874
    %v887 = vor.u32 %v885, %v886
    %v888 = vshll.u32 920167782, %v873
    %v889 = vshrl.u32 1326507024, %v874
    %v890 = vor.u32 %v888, %v889
    %vm891 = vcmp.lt.s32.totalorder %v872, 1
    %vm892 = vcmp.lt.s32.totalorder %v872, 2
    %vm893 = vcmp.lt.s32.totalorder %v872, 3
    %vm894 = vcmp.lt.s32.totalorder %v872, 4
    %v895 = vsel %vm891, %v875, %v878
    %v896 = vsel %vm894, %v884, 2102212464
    %v897 = vsel %vm893, %v881, %v896
    %v898 = vsel %vm892, %v895, %v897
    %v899 = vsel %vm891, %v878, %v881
    %v900 = vsel %vm894, %v887, 920167782
    %v901 = vsel %vm893, %v884, %v900
    %v902 = vsel %vm892, %v899, %v901
    %v903 = vsel %vm891, %v881, %v884
    %v904 = vsel %vm894, %v890, 1326507024
    %v905 = vsel %vm893, %v887, %v904
    %v906 = vsel %vm892, %v903, %v905
    %v907 = vshll.u32 %v867, 8
    %v908 = vmul.u32.u64.compose %v907, %v906
    %v909 = vextract.low.u32 %v908
    %v910 = vextract.high.u32 %v908
    %v911 = vmul.u32.u64.compose %v907, %v902
    %v912 = vextract.low.u32 %v911
    %v913 = vextract.high.u32 %v911
    %v914 = vmul.u32 %v907, %v898
    %v915 = vadd.s32 %v910, %v912
    %vm916 = vc.u32 %v910, %v912
    %v917 = vadd.s32 %v913, 1
    %v918 = vsel %vm916, %v917, %v913
    %v919 = vadd.s32 %v914, %v918
    %v920 = vadd.s32 %v919, 536870912
    %v921 = vshrl.u32 %v920, 30
    %v922 = vshll.u32 %v921, 30
    %v923 = vsub.s32 %v919, %v922
    %vm924 = vcmp.lt.s32.totalorder %v923, 0
    %v925 = vsub.s32 0, %v923
    %v926 = vsel %vm924, %v925, %v923
    %v927 = vclz %v926
    %v928 = vsub.s32 %v927, 2
    %vm929 = vcmp.gt.s32.totalorder 0, %v928
    %v930 = vsel %vm929, 0, %v928
    %v931 = vsub.s32 32, %v930
    %v932 = vshll.u32 %v923, %v930
    %v933 = vshrl.u32 %v915, %v931
    %v934 = vor.u32 %v932, %v933
    %v935 = vsub.s32 4294967266, %v930
    %v936 = vadd.s32 %v935, 127
    %v937 = vshll.u32 %v936, 23
    %v938 = vor.u32 4788187, %v937
    %v939 = vand.u32 2147483647, %v938
    %v941 = vcvt.s32.f32 %v934
    %v942 = vmul.f32 %v941, %v939
    %v943 = vxor.u32 %v942, 2147483648
    %v944 = vsel %vm861, %v943, %v942
    %v945 = vsub.s32 4, %v921
    %v946 = vsel %vm861, %v945, %v921
    %v947 = vsel %vm860, %v518, %v944
    %v948 = vsel %vm860, 0, %v946
    %v949 = vcosq.f32.pop %v947
    %v950 = vsinq.f32.pop %v947
    %vm951 = vweird.f32 %v518
    %v952 = vadd.s32 %v948, 3
    %v953 = vand.u32 %v952, 3
    %vm954 = vcmp.lt.s32.totalorder %v953, 2
    %vm955 = vcmp.eq.s32.totalorder %v953, 0
    %v956 = vxor.u32 %v950, 2147483648
    %v957 = vsel %vm955, %v949, %v956
    %vm958 = vcmp.eq.s32.totalorder %v953, 2
    %v959 = vxor.u32 %v949, 2147483648
    %v960 = vsel %vm958, %v959, %v950
    %v961 = vsel %vm954, %v957, %v960
    %v962 = vsel %vm951, nan, %v961
    %v963 = vand.u32 2147483647, %v519
    %vm964 = vcmp.le.f32.partialorder %v963, 0.7853982
    %vm965 = vcmp.lt.s32.totalorder %v519, 0
    %v966 = vand.u32 %v519, 2139095040
    %v967 = vshrl.u32 %v966, 23
    %v968 = vsub.s32 %v967, 127
    %v969 = vand.u32 2147483647, %v519
    %v970 = vand.u32 %v969, 8388607
    %v971 = vor.u32 %v970, 8388608
    %v972 = vsub.s32 0, %v971
    %v973 = vadd.s32 %v968, 1
    %vm974 = vcmp.gt.s32.totalorder %v973, 0
    %v975 = vsel %vm974, %v973, 0
    %v976 = vshrl.u32 %v975, 5
    %v977 = vand.u32 %v975, 31
    %v978 = vsub.s32 32, %v977
    %v979 = vshrl.u32 683565275, %v978
    %v980 = vshll.u32 683565275, %v977
    %v981 = vshrl.u32 2475754826, %v978
    %v982 = vor.u32 %v980, %v981
    %v983 = vshll.u32 2475754826, %v977
    %v984 = vshrl.u32 2131351028, %v978
    %v985 = vor.u32 %v983, %v984
    %v986 = vshll.u32 2131351028, %v977
    %v987 = vshrl.u32 2102212464, %v978
    %v988 = vor.u32 %v986, %v987
    %v989 = vshll.u32 2102212464, %v977
    %v990 = vshrl.u32 920167782, %v978
    %v991 = vor.u32 %v989, %v990
    %v992 = vshll.u32 920167782, %v977
    %v993 = vshrl.u32 1326507024, %v978
    %v994 = vor.u32 %v992, %v993
    %vm995 = vcmp.lt.s32.totalorder %v976, 1
    %vm996 = vcmp.lt.s32.totalorder %v976, 2
    %vm997 = vcmp.lt.s32.totalorder %v976, 3
    %vm998 = vcmp.lt.s32.totalorder %v976, 4
    %v999 = vsel %vm995, %v979, %v982
    %v1000 = vsel %vm998, %v988, 2102212464
    %v1001 = vsel %vm997, %v985, %v1000
    %v1002 = vsel %vm996, %v999, %v1001
    %v1003 = vsel %vm995, %v982, %v985
    %v1004 = vsel %vm998, %v991, 920167782
    %v1005 = vsel %vm997, %v988, %v1004
    %v1006 = vsel %vm996, %v1003, %v1005
    %v1007 = vsel %vm995, %v985, %v988
    %v1008 = vsel %vm998, %v994, 1326507024
    %v1009 = vsel %vm997, %v991, %v1008
    %v1010 = vsel %vm996, %v1007, %v1009
    %v1011 = vshll.u32 %v971, 8
    %v1012 = vmul.u32.u64.compose %v1011, %v1010
    %v1013 = vextract.low.u32 %v1012
    %v1014 = vextract.high.u32 %v1012
    %v1015 = vmul.u32.u64.compose %v1011, %v1006
    %v1016 = vextract.low.u32 %v1015
    %v1017 = vextract.high.u32 %v1015
    %v1018 = vmul.u32 %v1011, %v1002
    %v1019 = vadd.s32 %v1014, %v1016
    %vm1020 = vc.u32 %v1014, %v1016
    %v1021 = vadd.s32 %v1017, 1
    %v1022 = vsel %vm1020, %v1021, %v1017
    %v1023 = vadd.s32 %v1018, %v1022
    %v1024 = vadd.s32 %v1023, 536870912
    %v1025 = vshrl.u32 %v1024, 30
    %v1026 = vshll.u32 %v1025, 30
    %v1027 = vsub.s32 %v1023, %v1026
    %vm1028 = vcmp.lt.s32.totalorder %v1027, 0
    %v1029 = vsub.s32 0, %v1027
    %v1030 = vsel %vm1028, %v1029, %v1027
    %v1031 = vclz %v1030
    %v1032 = vsub.s32 %v1031, 2
    %vm1033 = vcmp.gt.s32.totalorder 0, %v1032
    %v1034 = vsel %vm1033, 0, %v1032
    %v1035 = vsub.s32 32, %v1034
    %v1036 = vshll.u32 %v1027, %v1034
    %v1037 = vshrl.u32 %v1019, %v1035
    %v1038 = vor.u32 %v1036, %v1037
    %v1039 = vsub.s32 4294967266, %v1034
    %v1040 = vadd.s32 %v1039, 127
    %v1041 = vshll.u32 %v1040, 23
    %v1042 = vor.u32 4788187, %v1041
    %v1043 = vand.u32 2147483647, %v1042
    %v1045 = vcvt.s32.f32 %v1038
    %v1046 = vmul.f32 %v1045, %v1043
    %v1047 = vxor.u32 %v1046, 2147483648
    %v1048 = vsel %vm965, %v1047, %v1046
    %v1049 = vsub.s32 4, %v1025
    %v1050 = vsel %vm965, %v1049, %v1025
    %v1051 = vsel %vm964, %v519, %v1048
    %v1052 = vsel %vm964, 0, %v1050
    %v1053 = vcosq.f32.pop %v1051
    %v1054 = vsinq.f32.pop %v1051
    %vm1055 = vweird.f32 %v519
    %v1056 = vadd.s32 %v1052, 3
    %v1057 = vand.u32 %v1056, 3
    %vm1058 = vcmp.lt.s32.totalorder %v1057, 2
    %vm1059 = vcmp.eq.s32.totalorder %v1057, 0
    %v1060 = vxor.u32 %v1054, 2147483648
    %v1061 = vsel %vm1059, %v1053, %v1060
    %vm1062 = vcmp.eq.s32.totalorder %v1057, 2
    %v1063 = vxor.u32 %v1053, 2147483648
    %v1064 = vsel %vm1062, %v1063, %v1054
    %v1065 = vsel %vm1058, %v1061, %v1064
    %v1066 = vsel %vm1055, nan, %v1065
    %v1067 = vand.u32 2147483647, %v520
    %vm1068 = vcmp.le.f32.partialorder %v1067, 0.7853982
    %vm1069 = vcmp.lt.s32.totalorder %v520, 0
    %v1070 = vand.u32 %v520, 2139095040
    %v1071 = vshrl.u32 %v1070, 23
    %v1072 = vsub.s32 %v1071, 127
    %v1073 = vand.u32 2147483647, %v520
    %v1074 = vand.u32 %v1073, 8388607
    %v1075 = vor.u32 %v1074, 8388608
    %v1076 = vsub.s32 0, %v1075
    %v1077 = vadd.s32 %v1072, 1
    %vm1078 = vcmp.gt.s32.totalorder %v1077, 0
    %v1079 = vsel %vm1078, %v1077, 0
    %v1080 = vshrl.u32 %v1079, 5
    %v1081 = vand.u32 %v1079, 31
    %v1082 = vsub.s32 32, %v1081
    %v1083 = vshrl.u32 683565275, %v1082
    %v1084 = vshll.u32 683565275, %v1081
    %v1085 = vshrl.u32 2475754826, %v1082
    %v1086 = vor.u32 %v1084, %v1085
    %v1087 = vshll.u32 2475754826, %v1081
    %v1088 = vshrl.u32 2131351028, %v1082
    %v1089 = vor.u32 %v1087, %v1088
    %v1090 = vshll.u32 2131351028, %v1081
    %v1091 = vshrl.u32 2102212464, %v1082
    %v1092 = vor.u32 %v1090, %v1091
    %v1093 = vshll.u32 2102212464, %v1081
    %v1094 = vshrl.u32 920167782, %v1082
    %v1095 = vor.u32 %v1093, %v1094
    %v1096 = vshll.u32 920167782, %v1081
    %v1097 = vshrl.u32 1326507024, %v1082
    %v1098 = vor.u32 %v1096, %v1097
    %vm1099 = vcmp.lt.s32.totalorder %v1080, 1
    %vm1100 = vcmp.lt.s32.totalorder %v1080, 2
    %vm1101 = vcmp.lt.s32.totalorder %v1080, 3
    %vm1102 = vcmp.lt.s32.totalorder %v1080, 4
    %v1103 = vsel %vm1099, %v1083, %v1086
    %v1104 = vsel %vm1102, %v1092, 2102212464
    %v1105 = vsel %vm1101, %v1089, %v1104
    %v1106 = vsel %vm1100, %v1103, %v1105
    %v1107 = vsel %vm1099, %v1086, %v1089
    %v1108 = vsel %vm1102, %v1095, 920167782
    %v1109 = vsel %vm1101, %v1092, %v1108
    %v1110 = vsel %vm1100, %v1107, %v1109
    %v1111 = vsel %vm1099, %v1089, %v1092
    %v1112 = vsel %vm1102, %v1098, 1326507024
    %v1113 = vsel %vm1101, %v1095, %v1112
    %v1114 = vsel %vm1100, %v1111, %v1113
    %v1115 = vshll.u32 %v1075, 8
    %v1116 = vmul.u32.u64.compose %v1115, %v1114
    %v1117 = vextract.low.u32 %v1116
    %v1118 = vextract.high.u32 %v1116
    %v1119 = vmul.u32.u64.compose %v1115, %v1110
    %v1120 = vextract.low.u32 %v1119
    %v1121 = vextract.high.u32 %v1119
    %v1122 = vmul.u32 %v1115, %v1106
    %v1123 = vadd.s32 %v1118, %v1120
    %vm1124 = vc.u32 %v1118, %v1120
    %v1125 = vadd.s32 %v1121, 1
    %v1126 = vsel %vm1124, %v1125, %v1121
    %v1127 = vadd.s32 %v1122, %v1126
    %v1128 = vadd.s32 %v1127, 536870912
    %v1129 = vshrl.u32 %v1128, 30
    %v1130 = vshll.u32 %v1129, 30
    %v1131 = vsub.s32 %v1127, %v1130
    %vm1132 = vcmp.lt.s32.totalorder %v1131, 0
    %v1133 = vsub.s32 0, %v1131
    %v1134 = vsel %vm1132, %v1133, %v1131
    %v1135 = vclz %v1134
    %v1136 = vsub.s32 %v1135, 2
    %vm1137 = vcmp.gt.s32.totalorder 0, %v1136
    %v1138 = vsel %vm1137, 0, %v1136
    %v1139 = vsub.s32 32, %v1138
    %v1140 = vshll.u32 %v1131, %v1138
    %v1141 = vshrl.u32 %v1123, %v1139
    %v1142 = vor.u32 %v1140, %v1141
    %v1143 = vsub.s32 4294967266, %v1138
    %v1144 = vadd.s32 %v1143, 127
    %v1145 = vshll.u32 %v1144, 23
    %v1146 = vor.u32 4788187, %v1145
    %v1147 = vand.u32 2147483647, %v1146
    %v1149 = vcvt.s32.f32 %v1142
    %v1150 = vmul.f32 %v1149, %v1147
    %v1151 = vxor.u32 %v1150, 2147483648
    %v1152 = vsel %vm1069, %v1151, %v1150
    %v1153 = vsub.s32 4, %v1129
    %v1154 = vsel %vm1069, %v1153, %v1129
    %v1155 = vsel %vm1068, %v520, %v1152
    %v1156 = vsel %vm1068, 0, %v1154
    %v1157 = vcosq.f32.pop %v1155
    %v1158 = vsinq.f32.pop %v1155
    %vm1159 = vweird.f32 %v520
    %v1160 = vadd.s32 %v1156, 3
    %v1161 = vand.u32 %v1160, 3
    %vm1162 = vcmp.lt.s32.totalorder %v1161, 2
    %vm1163 = vcmp.eq.s32.totalorder %v1161, 0
    %v1164 = vxor.u32 %v1158, 2147483648
    %v1165 = vsel %vm1163, %v1157, %v1164
    %vm1166 = vcmp.eq.s32.totalorder %v1161, 2
    %v1167 = vxor.u32 %v1157, 2147483648
    %v1168 = vsel %vm1166, %v1167, %v1158
    %v1169 = vsel %vm1162, %v1165, %v1168
    %v1170 = vsel %vm1159, nan, %v1169
    %v1171 = vand.u32 2147483647, %v521
    %vm1172 = vcmp.le.f32.partialorder %v1171, 0.7853982
    %vm1173 = vcmp.lt.s32.totalorder %v521, 0
    %v1174 = vand.u32 %v521, 2139095040
    %v1175 = vshrl.u32 %v1174, 23
    %v1176 = vsub.s32 %v1175, 127
    %v1177 = vand.u32 2147483647, %v521
    %v1178 = vand.u32 %v1177, 8388607
    %v1179 = vor.u32 %v1178, 8388608
    %v1180 = vsub.s32 0, %v1179
    %v1181 = vadd.s32 %v1176, 1
    %vm1182 = vcmp.gt.s32.totalorder %v1181, 0
    %v1183 = vsel %vm1182, %v1181, 0
    %v1184 = vshrl.u32 %v1183, 5
    %v1185 = vand.u32 %v1183, 31
    %v1186 = vsub.s32 32, %v1185
    %v1187 = vshrl.u32 683565275, %v1186
    %v1188 = vshll.u32 683565275, %v1185
    %v1189 = vshrl.u32 2475754826, %v1186
    %v1190 = vor.u32 %v1188, %v1189
    %v1191 = vshll.u32 2475754826, %v1185
    %v1192 = vshrl.u32 2131351028, %v1186
    %v1193 = vor.u32 %v1191, %v1192
    %v1194 = vshll.u32 2131351028, %v1185
    %v1195 = vshrl.u32 2102212464, %v1186
    %v1196 = vor.u32 %v1194, %v1195
    %v1197 = vshll.u32 2102212464, %v1185
    %v1198 = vshrl.u32 920167782, %v1186
    %v1199 = vor.u32 %v1197, %v1198
    %v1200 = vshll.u32 920167782, %v1185
    %v1201 = vshrl.u32 1326507024, %v1186
    %v1202 = vor.u32 %v1200, %v1201
    %vm1203 = vcmp.lt.s32.totalorder %v1184, 1
    %vm1204 = vcmp.lt.s32.totalorder %v1184, 2
    %vm1205 = vcmp.lt.s32.totalorder %v1184, 3
    %vm1206 = vcmp.lt.s32.totalorder %v1184, 4
    %v1207 = vsel %vm1203, %v1187, %v1190
    %v1208 = vsel %vm1206, %v1196, 2102212464
    %v1209 = vsel %vm1205, %v1193, %v1208
    %v1210 = vsel %vm1204, %v1207, %v1209
    %v1211 = vsel %vm1203, %v1190, %v1193
    %v1212 = vsel %vm1206, %v1199, 920167782
    %v1213 = vsel %vm1205, %v1196, %v1212
    %v1214 = vsel %vm1204, %v1211, %v1213
    %v1215 = vsel %vm1203, %v1193, %v1196
    %v1216 = vsel %vm1206, %v1202, 1326507024
    %v1217 = vsel %vm1205, %v1199, %v1216
    %v1218 = vsel %vm1204, %v1215, %v1217
    %v1219 = vshll.u32 %v1179, 8
    %v1220 = vmul.u32.u64.compose %v1219, %v1218
    %v1221 = vextract.low.u32 %v1220
    %v1222 = vextract.high.u32 %v1220
    %v1223 = vmul.u32.u64.compose %v1219, %v1214
    %v1224 = vextract.low.u32 %v1223
    %v1225 = vextract.high.u32 %v1223
    %v1226 = vmul.u32 %v1219, %v1210
    %v1227 = vadd.s32 %v1222, %v1224
    %vm1228 = vc.u32 %v1222, %v1224
    %v1229 = vadd.s32 %v1225, 1
    %v1230 = vsel %vm1228, %v1229, %v1225
    %v1231 = vadd.s32 %v1226, %v1230
    %v1232 = vadd.s32 %v1231, 536870912
    %v1233 = vshrl.u32 %v1232, 30
    %v1234 = vshll.u32 %v1233, 30
    %v1235 = vsub.s32 %v1231, %v1234
    %vm1236 = vcmp.lt.s32.totalorder %v1235, 0
    %v1237 = vsub.s32 0, %v1235
    %v1238 = vsel %vm1236, %v1237, %v1235
    %v1239 = vclz %v1238
    %v1240 = vsub.s32 %v1239, 2
    %vm1241 = vcmp.gt.s32.totalorder 0, %v1240
    %v1242 = vsel %vm1241, 0, %v1240
    %v1243 = vsub.s32 32, %v1242
    %v1244 = vshll.u32 %v1235, %v1242
    %v1245 = vshrl.u32 %v1227, %v1243
    %v1246 = vor.u32 %v1244, %v1245
    %v1247 = vsub.s32 4294967266, %v1242
    %v1248 = vadd.s32 %v1247, 127
    %v1249 = vshll.u32 %v1248, 23
    %v1250 = vor.u32 4788187, %v1249
    %v1251 = vand.u32 2147483647, %v1250
    %v1253 = vcvt.s32.f32 %v1246
    %v1254 = vmul.f32 %v1253, %v1251
    %v1255 = vxor.u32 %v1254, 2147483648
    %v1256 = vsel %vm1173, %v1255, %v1254
    %v1257 = vsub.s32 4, %v1233
    %v1258 = vsel %vm1173, %v1257, %v1233
    %v1259 = vsel %vm1172, %v521, %v1256
    %v1260 = vsel %vm1172, 0, %v1258
    %v1261 = vcosq.f32.pop %v1259
    %v1262 = vsinq.f32.pop %v1259
    %vm1263 = vweird.f32 %v521
    %v1264 = vadd.s32 %v1260, 3
    %v1265 = vand.u32 %v1264, 3
    %vm1266 = vcmp.lt.s32.totalorder %v1265, 2
    %vm1267 = vcmp.eq.s32.totalorder %v1265, 0
    %v1268 = vxor.u32 %v1262, 2147483648
    %v1269 = vsel %vm1267, %v1261, %v1268
    %vm1270 = vcmp.eq.s32.totalorder %v1265, 2
    %v1271 = vxor.u32 %v1261, 2147483648
    %v1272 = vsel %vm1270, %v1271, %v1262
    %v1273 = vsel %vm1266, %v1269, %v1272
    %v1274 = vsel %vm1263, nan, %v1273
    %v1275 = vand.u32 2147483647, %v522
    %vm1276 = vcmp.le.f32.partialorder %v1275, 0.7853982
    %vm1277 = vcmp.lt.s32.totalorder %v522, 0
    %v1278 = vand.u32 %v522, 2139095040
    %v1279 = vshrl.u32 %v1278, 23
    %v1280 = vsub.s32 %v1279, 127
    %v1281 = vand.u32 2147483647, %v522
    %v1282 = vand.u32 %v1281, 8388607
    %v1283 = vor.u32 %v1282, 8388608
    %v1284 = vsub.s32 0, %v1283
    %v1285 = vadd.s32 %v1280, 1
    %vm1286 = vcmp.gt.s32.totalorder %v1285, 0
    %v1287 = vsel %vm1286, %v1285, 0
    %v1288 = vshrl.u32 %v1287, 5
    %v1289 = vand.u32 %v1287, 31
    %v1290 = vsub.s32 32, %v1289
    %v1291 = vshrl.u32 683565275, %v1290
    %v1292 = vshll.u32 683565275, %v1289
    %v1293 = vshrl.u32 2475754826, %v1290
    %v1294 = vor.u32 %v1292, %v1293
    %v1295 = vshll.u32 2475754826, %v1289
    %v1296 = vshrl.u32 2131351028, %v1290
    %v1297 = vor.u32 %v1295, %v1296
    %v1298 = vshll.u32 2131351028, %v1289
    %v1299 = vshrl.u32 2102212464, %v1290
    %v1300 = vor.u32 %v1298, %v1299
    %v1301 = vshll.u32 2102212464, %v1289
    %v1302 = vshrl.u32 920167782, %v1290
    %v1303 = vor.u32 %v1301, %v1302
    %v1304 = vshll.u32 920167782, %v1289
    %v1305 = vshrl.u32 1326507024, %v1290
    %v1306 = vor.u32 %v1304, %v1305
    %vm1307 = vcmp.lt.s32.totalorder %v1288, 1
    %vm1308 = vcmp.lt.s32.totalorder %v1288, 2
    %vm1309 = vcmp.lt.s32.totalorder %v1288, 3
    %vm1310 = vcmp.lt.s32.totalorder %v1288, 4
    %v1311 = vsel %vm1307, %v1291, %v1294
    %v1312 = vsel %vm1310, %v1300, 2102212464
    %v1313 = vsel %vm1309, %v1297, %v1312
    %v1314 = vsel %vm1308, %v1311, %v1313
    %v1315 = vsel %vm1307, %v1294, %v1297
    %v1316 = vsel %vm1310, %v1303, 920167782
    %v1317 = vsel %vm1309, %v1300, %v1316
    %v1318 = vsel %vm1308, %v1315, %v1317
    %v1319 = vsel %vm1307, %v1297, %v1300
    %v1320 = vsel %vm1310, %v1306, 1326507024
    %v1321 = vsel %vm1309, %v1303, %v1320
    %v1322 = vsel %vm1308, %v1319, %v1321
    %v1323 = vshll.u32 %v1283, 8
    %v1324 = vmul.u32.u64.compose %v1323, %v1322
    %v1325 = vextract.low.u32 %v1324
    %v1326 = vextract.high.u32 %v1324
    %v1327 = vmul.u32.u64.compose %v1323, %v1318
    %v1328 = vextract.low.u32 %v1327
    %v1329 = vextract.high.u32 %v1327
    %v1330 = vmul.u32 %v1323, %v1314
    %v1331 = vadd.s32 %v1326, %v1328
    %vm1332 = vc.u32 %v1326, %v1328
    %v1333 = vadd.s32 %v1329, 1
    %v1334 = vsel %vm1332, %v1333, %v1329
    %v1335 = vadd.s32 %v1330, %v1334
    %v1336 = vadd.s32 %v1335, 536870912
    %v1337 = vshrl.u32 %v1336, 30
    %v1338 = vshll.u32 %v1337, 30
    %v1339 = vsub.s32 %v1335, %v1338
    %vm1340 = vcmp.lt.s32.totalorder %v1339, 0
    %v1341 = vsub.s32 0, %v1339
    %v1342 = vsel %vm1340, %v1341, %v1339
    %v1343 = vclz %v1342
    %v1344 = vsub.s32 %v1343, 2
    %vm1345 = vcmp.gt.s32.totalorder 0, %v1344
    %v1346 = vsel %vm1345, 0, %v1344
    %v1347 = vsub.s32 32, %v1346
    %v1348 = vshll.u32 %v1339, %v1346
    %v1349 = vshrl.u32 %v1331, %v1347
    %v1350 = vor.u32 %v1348, %v1349
    %v1351 = vsub.s32 4294967266, %v1346
    %v1352 = vadd.s32 %v1351, 127
    %v1353 = vshll.u32 %v1352, 23
    %v1354 = vor.u32 4788187, %v1353
    %v1355 = vand.u32 2147483647, %v1354
    %v1357 = vcvt.s32.f32 %v1350
    %v1358 = vmul.f32 %v1357, %v1355
    %v1359 = vxor.u32 %v1358, 2147483648
    %v1360 = vsel %vm1277, %v1359, %v1358
    %v1361 = vsub.s32 4, %v1337
    %v1362 = vsel %vm1277, %v1361, %v1337
    %v1363 = vsel %vm1276, %v522, %v1360
    %v1364 = vsel %vm1276, 0, %v1362
    %v1365 = vcosq.f32.pop %v1363
    %v1366 = vsinq.f32.pop %v1363
    %vm1367 = vweird.f32 %v522
    %v1368 = vadd.s32 %v1364, 3
    %v1369 = vand.u32 %v1368, 3
    %vm1370 = vcmp.lt.s32.totalorder %v1369, 2
    %vm1371 = vcmp.eq.s32.totalorder %v1369, 0
    %v1372 = vxor.u32 %v1366, 2147483648
    %v1373 = vsel %vm1371, %v1365, %v1372
    %vm1374 = vcmp.eq.s32.totalorder %v1369, 2
    %v1375 = vxor.u32 %v1365, 2147483648
    %v1376 = vsel %vm1374, %v1375, %v1366
    %v1377 = vsel %vm1370, %v1373, %v1376
    %v1378 = vsel %vm1367, nan, %v1377
    %v1379 = vand.u32 2147483647, %v523
    %vm1380 = vcmp.le.f32.partialorder %v1379, 0.7853982
    %vm1381 = vcmp.lt.s32.totalorder %v523, 0
    %v1382 = vand.u32 %v523, 2139095040
    %v1383 = vshrl.u32 %v1382, 23
    %v1384 = vsub.s32 %v1383, 127
    %v1385 = vand.u32 2147483647, %v523
    %v1386 = vand.u32 %v1385, 8388607
    %v1387 = vor.u32 %v1386, 8388608
    %v1388 = vsub.s32 0, %v1387
    %v1389 = vadd.s32 %v1384, 1
    %vm1390 = vcmp.gt.s32.totalorder %v1389, 0
    %v1391 = vsel %vm1390, %v1389, 0
    %v1392 = vshrl.u32 %v1391, 5
    %v1393 = vand.u32 %v1391, 31
    %v1394 = vsub.s32 32, %v1393
    %v1395 = vshrl.u32 683565275, %v1394
    %v1396 = vshll.u32 683565275, %v1393
    %v1397 = vshrl.u32 2475754826, %v1394
    %v1398 = vor.u32 %v1396, %v1397
    %v1399 = vshll.u32 2475754826, %v1393
    %v1400 = vshrl.u32 2131351028, %v1394
    %v1401 = vor.u32 %v1399, %v1400
    %v1402 = vshll.u32 2131351028, %v1393
    %v1403 = vshrl.u32 2102212464, %v1394
    %v1404 = vor.u32 %v1402, %v1403
    %v1405 = vshll.u32 2102212464, %v1393
    %v1406 = vshrl.u32 920167782, %v1394
    %v1407 = vor.u32 %v1405, %v1406
    %v1408 = vshll.u32 920167782, %v1393
    %v1409 = vshrl.u32 1326507024, %v1394
    %v1410 = vor.u32 %v1408, %v1409
    %vm1411 = vcmp.lt.s32.totalorder %v1392, 1
    %vm1412 = vcmp.lt.s32.totalorder %v1392, 2
    %vm1413 = vcmp.lt.s32.totalorder %v1392, 3
    %vm1414 = vcmp.lt.s32.totalorder %v1392, 4
    %v1415 = vsel %vm1411, %v1395, %v1398
    %v1416 = vsel %vm1414, %v1404, 2102212464
    %v1417 = vsel %vm1413, %v1401, %v1416
    %v1418 = vsel %vm1412, %v1415, %v1417
    %v1419 = vsel %vm1411, %v1398, %v1401
    %v1420 = vsel %vm1414, %v1407, 920167782
    %v1421 = vsel %vm1413, %v1404, %v1420
    %v1422 = vsel %vm1412, %v1419, %v1421
    %v1423 = vsel %vm1411, %v1401, %v1404
    %v1424 = vsel %vm1414, %v1410, 1326507024
    %v1425 = vsel %vm1413, %v1407, %v1424
    %v1426 = vsel %vm1412, %v1423, %v1425
    %v1427 = vshll.u32 %v1387, 8
    %v1428 = vmul.u32.u64.compose %v1427, %v1426
    %v1429 = vextract.low.u32 %v1428
    %v1430 = vextract.high.u32 %v1428
    %v1431 = vmul.u32.u64.compose %v1427, %v1422
    %v1432 = vextract.low.u32 %v1431
    %v1433 = vextract.high.u32 %v1431
    %v1434 = vmul.u32 %v1427, %v1418
    %v1435 = vadd.s32 %v1430, %v1432
    %vm1436 = vc.u32 %v1430, %v1432
    %v1437 = vadd.s32 %v1433, 1
    %v1438 = vsel %vm1436, %v1437, %v1433
    %v1439 = vadd.s32 %v1434, %v1438
    %v1440 = vadd.s32 %v1439, 536870912
    %v1441 = vshrl.u32 %v1440, 30
    %v1442 = vshll.u32 %v1441, 30
    %v1443 = vsub.s32 %v1439, %v1442
    %vm1444 = vcmp.lt.s32.totalorder %v1443, 0
    %v1445 = vsub.s32 0, %v1443
    %v1446 = vsel %vm1444, %v1445, %v1443
    %v1447 = vclz %v1446
    %v1448 = vsub.s32 %v1447, 2
    %vm1449 = vcmp.gt.s32.totalorder 0, %v1448
    %v1450 = vsel %vm1449, 0, %v1448
    %v1451 = vsub.s32 32, %v1450
    %v1452 = vshll.u32 %v1443, %v1450
    %v1453 = vshrl.u32 %v1435, %v1451
    %v1454 = vor.u32 %v1452, %v1453
    %v1455 = vsub.s32 4294967266, %v1450
    %v1456 = vadd.s32 %v1455, 127
    %v1457 = vshll.u32 %v1456, 23
    %v1458 = vor.u32 4788187, %v1457
    %v1459 = vand.u32 2147483647, %v1458
    %v1461 = vcvt.s32.f32 %v1454
    %v1462 = vmul.f32 %v1461, %v1459
    %v1463 = vxor.u32 %v1462, 2147483648
    %v1464 = vsel %vm1381, %v1463, %v1462
    %v1465 = vsub.s32 4, %v1441
    %v1466 = vsel %vm1381, %v1465, %v1441
    %v1467 = vsel %vm1380, %v523, %v1464
    %v1468 = vsel %vm1380, 0, %v1466
    %v1469 = vcosq.f32.pop %v1467
    %v1470 = vsinq.f32.pop %v1467
    %vm1471 = vweird.f32 %v523
    %v1472 = vadd.s32 %v1468, 3
    %v1473 = vand.u32 %v1472, 3
    %vm1474 = vcmp.lt.s32.totalorder %v1473, 2
    %vm1475 = vcmp.eq.s32.totalorder %v1473, 0
    %v1476 = vxor.u32 %v1470, 2147483648
    %v1477 = vsel %vm1475, %v1469, %v1476
    %vm1478 = vcmp.eq.s32.totalorder %v1473, 2
    %v1479 = vxor.u32 %v1469, 2147483648
    %v1480 = vsel %vm1478, %v1479, %v1470
    %v1481 = vsel %vm1474, %v1477, %v1480
    %v1482 = vsel %vm1471, nan, %v1481
    %v1483 = vand.u32 2147483647, %v524
    %vm1484 = vcmp.le.f32.partialorder %v1483, 0.7853982
    %vm1485 = vcmp.lt.s32.totalorder %v524, 0
    %v1486 = vand.u32 %v524, 2139095040
    %v1487 = vshrl.u32 %v1486, 23
    %v1488 = vsub.s32 %v1487, 127
    %v1489 = vand.u32 2147483647, %v524
    %v1490 = vand.u32 %v1489, 8388607
    %v1491 = vor.u32 %v1490, 8388608
    %v1492 = vsub.s32 0, %v1491
    %v1493 = vadd.s32 %v1488, 1
    %vm1494 = vcmp.gt.s32.totalorder %v1493, 0
    %v1495 = vsel %vm1494, %v1493, 0
    %v1496 = vshrl.u32 %v1495, 5
    %v1497 = vand.u32 %v1495, 31
    %v1498 = vsub.s32 32, %v1497
    %v1499 = vshrl.u32 683565275, %v1498
    %v1500 = vshll.u32 683565275, %v1497
    %v1501 = vshrl.u32 2475754826, %v1498
    %v1502 = vor.u32 %v1500, %v1501
    %v1503 = vshll.u32 2475754826, %v1497
    %v1504 = vshrl.u32 2131351028, %v1498
    %v1505 = vor.u32 %v1503, %v1504
    %v1506 = vshll.u32 2131351028, %v1497
    %v1507 = vshrl.u32 2102212464, %v1498
    %v1508 = vor.u32 %v1506, %v1507
    %v1509 = vshll.u32 2102212464, %v1497
    %v1510 = vshrl.u32 920167782, %v1498
    %v1511 = vor.u32 %v1509, %v1510
    %v1512 = vshll.u32 920167782, %v1497
    %v1513 = vshrl.u32 1326507024, %v1498
    %v1514 = vor.u32 %v1512, %v1513
    %vm1515 = vcmp.lt.s32.totalorder %v1496, 1
    %vm1516 = vcmp.lt.s32.totalorder %v1496, 2
    %vm1517 = vcmp.lt.s32.totalorder %v1496, 3
    %vm1518 = vcmp.lt.s32.totalorder %v1496, 4
    %v1519 = vsel %vm1515, %v1499, %v1502
    %v1520 = vsel %vm1518, %v1508, 2102212464
    %v1521 = vsel %vm1517, %v1505, %v1520
    %v1522 = vsel %vm1516, %v1519, %v1521
    %v1523 = vsel %vm1515, %v1502, %v1505
    %v1524 = vsel %vm1518, %v1511, 920167782
    %v1525 = vsel %vm1517, %v1508, %v1524
    %v1526 = vsel %vm1516, %v1523, %v1525
    %v1527 = vsel %vm1515, %v1505, %v1508
    %v1528 = vsel %vm1518, %v1514, 1326507024
    %v1529 = vsel %vm1517, %v1511, %v1528
    %v1530 = vsel %vm1516, %v1527, %v1529
    %v1531 = vshll.u32 %v1491, 8
    %v1532 = vmul.u32.u64.compose %v1531, %v1530
    %v1533 = vextract.low.u32 %v1532
    %v1534 = vextract.high.u32 %v1532
    %v1535 = vmul.u32.u64.compose %v1531, %v1526
    %v1536 = vextract.low.u32 %v1535
    %v1537 = vextract.high.u32 %v1535
    %v1538 = vmul.u32 %v1531, %v1522
    %v1539 = vadd.s32 %v1534, %v1536
    %vm1540 = vc.u32 %v1534, %v1536
    %v1541 = vadd.s32 %v1537, 1
    %v1542 = vsel %vm1540, %v1541, %v1537
    %v1543 = vadd.s32 %v1538, %v1542
    %v1544 = vadd.s32 %v1543, 536870912
    %v1545 = vshrl.u32 %v1544, 30
    %v1546 = vshll.u32 %v1545, 30
    %v1547 = vsub.s32 %v1543, %v1546
    %vm1548 = vcmp.lt.s32.totalorder %v1547, 0
    %v1549 = vsub.s32 0, %v1547
    %v1550 = vsel %vm1548, %v1549, %v1547
    %v1551 = vclz %v1550
    %v1552 = vsub.s32 %v1551, 2
    %vm1553 = vcmp.gt.s32.totalorder 0, %v1552
    %v1554 = vsel %vm1553, 0, %v1552
    %v1555 = vsub.s32 32, %v1554
    %v1556 = vshll.u32 %v1547, %v1554
    %v1557 = vshrl.u32 %v1539, %v1555
    %v1558 = vor.u32 %v1556, %v1557
    %v1559 = vsub.s32 4294967266, %v1554
    %v1560 = vadd.s32 %v1559, 127
    %v1561 = vshll.u32 %v1560, 23
    %v1562 = vor.u32 4788187, %v1561
    %v1563 = vand.u32 2147483647, %v1562
    %v1565 = vcvt.s32.f32 %v1558
    %v1566 = vmul.f32 %v1565, %v1563
    %v1567 = vxor.u32 %v1566, 2147483648
    %v1568 = vsel %vm1485, %v1567, %v1566
    %v1569 = vsub.s32 4, %v1545
    %v1570 = vsel %vm1485, %v1569, %v1545
    %v1571 = vsel %vm1484, %v524, %v1568
    %v1572 = vsel %vm1484, 0, %v1570
    %v1573 = vcosq.f32.pop %v1571
    %v1574 = vsinq.f32.pop %v1571
    %vm1575 = vweird.f32 %v524
    %v1576 = vadd.s32 %v1572, 3
    %v1577 = vand.u32 %v1576, 3
    %vm1578 = vcmp.lt.s32.totalorder %v1577, 2
    %vm1579 = vcmp.eq.s32.totalorder %v1577, 0
    %v1580 = vxor.u32 %v1574, 2147483648
    %v1581 = vsel %vm1579, %v1573, %v1580
    %vm1582 = vcmp.eq.s32.totalorder %v1577, 2
    %v1583 = vxor.u32 %v1573, 2147483648
    %v1584 = vsel %vm1582, %v1583, %v1574
    %v1585 = vsel %vm1578, %v1581, %v1584
    %v1586 = vsel %vm1575, nan, %v1585
    %v1587 = vand.u32 2147483647, %v525
    %vm1588 = vcmp.le.f32.partialorder %v1587, 0.7853982
    %vm1589 = vcmp.lt.s32.totalorder %v525, 0
    %v1590 = vand.u32 %v525, 2139095040
    %v1591 = vshrl.u32 %v1590, 23
    %v1592 = vsub.s32 %v1591, 127
    %v1593 = vand.u32 2147483647, %v525
    %v1594 = vand.u32 %v1593, 8388607
    %v1595 = vor.u32 %v1594, 8388608
    %v1596 = vsub.s32 0, %v1595
    %v1597 = vadd.s32 %v1592, 1
    %vm1598 = vcmp.gt.s32.totalorder %v1597, 0
    %v1599 = vsel %vm1598, %v1597, 0
    %v1600 = vshrl.u32 %v1599, 5
    %v1601 = vand.u32 %v1599, 31
    %v1602 = vsub.s32 32, %v1601
    %v1603 = vshrl.u32 683565275, %v1602
    %v1604 = vshll.u32 683565275, %v1601
    %v1605 = vshrl.u32 2475754826, %v1602
    %v1606 = vor.u32 %v1604, %v1605
    %v1607 = vshll.u32 2475754826, %v1601
    %v1608 = vshrl.u32 2131351028, %v1602
    %v1609 = vor.u32 %v1607, %v1608
    %v1610 = vshll.u32 2131351028, %v1601
    %v1611 = vshrl.u32 2102212464, %v1602
    %v1612 = vor.u32 %v1610, %v1611
    %v1613 = vshll.u32 2102212464, %v1601
    %v1614 = vshrl.u32 920167782, %v1602
    %v1615 = vor.u32 %v1613, %v1614
    %v1616 = vshll.u32 920167782, %v1601
    %v1617 = vshrl.u32 1326507024, %v1602
    %v1618 = vor.u32 %v1616, %v1617
    %vm1619 = vcmp.lt.s32.totalorder %v1600, 1
    %vm1620 = vcmp.lt.s32.totalorder %v1600, 2
    %vm1621 = vcmp.lt.s32.totalorder %v1600, 3
    %vm1622 = vcmp.lt.s32.totalorder %v1600, 4
    %v1623 = vsel %vm1619, %v1603, %v1606
    %v1624 = vsel %vm1622, %v1612, 2102212464
    %v1625 = vsel %vm1621, %v1609, %v1624
    %v1626 = vsel %vm1620, %v1623, %v1625
    %v1627 = vsel %vm1619, %v1606, %v1609
    %v1628 = vsel %vm1622, %v1615, 920167782
    %v1629 = vsel %vm1621, %v1612, %v1628
    %v1630 = vsel %vm1620, %v1627, %v1629
    %v1631 = vsel %vm1619, %v1609, %v1612
    %v1632 = vsel %vm1622, %v1618, 1326507024
    %v1633 = vsel %vm1621, %v1615, %v1632
    %v1634 = vsel %vm1620, %v1631, %v1633
    %v1635 = vshll.u32 %v1595, 8
    %v1636 = vmul.u32.u64.compose %v1635, %v1634
    %v1637 = vextract.low.u32 %v1636
    %v1638 = vextract.high.u32 %v1636
    %v1639 = vmul.u32.u64.compose %v1635, %v1630
    %v1640 = vextract.low.u32 %v1639
    %v1641 = vextract.high.u32 %v1639
    %v1642 = vmul.u32 %v1635, %v1626
    %v1643 = vadd.s32 %v1638, %v1640
    %vm1644 = vc.u32 %v1638, %v1640
    %v1645 = vadd.s32 %v1641, 1
    %v1646 = vsel %vm1644, %v1645, %v1641
    %v1647 = vadd.s32 %v1642, %v1646
    %v1648 = vadd.s32 %v1647, 536870912
    %v1649 = vshrl.u32 %v1648, 30
    %v1650 = vshll.u32 %v1649, 30
    %v1651 = vsub.s32 %v1647, %v1650
    %vm1652 = vcmp.lt.s32.totalorder %v1651, 0
    %v1653 = vsub.s32 0, %v1651
    %v1654 = vsel %vm1652, %v1653, %v1651
    %v1655 = vclz %v1654
    %v1656 = vsub.s32 %v1655, 2
    %vm1657 = vcmp.gt.s32.totalorder 0, %v1656
    %v1658 = vsel %vm1657, 0, %v1656
    %v1659 = vsub.s32 32, %v1658
    %v1660 = vshll.u32 %v1651, %v1658
    %v1661 = vshrl.u32 %v1643, %v1659
    %v1662 = vor.u32 %v1660, %v1661
    %v1663 = vsub.s32 4294967266, %v1658
    %v1664 = vadd.s32 %v1663, 127
    %v1665 = vshll.u32 %v1664, 23
    %v1666 = vor.u32 4788187, %v1665
    %v1667 = vand.u32 2147483647, %v1666
    %v1669 = vcvt.s32.f32 %v1662
    %v1670 = vmul.f32 %v1669, %v1667
    %v1671 = vxor.u32 %v1670, 2147483648
    %v1672 = vsel %vm1589, %v1671, %v1670
    %v1673 = vsub.s32 4, %v1649
    %v1674 = vsel %vm1589, %v1673, %v1649
    %v1675 = vsel %vm1588, %v525, %v1672
    %v1676 = vsel %vm1588, 0, %v1674
    %v1677 = vcosq.f32.pop %v1675
    %v1678 = vsinq.f32.pop %v1675
    %vm1679 = vweird.f32 %v525
    %v1680 = vadd.s32 %v1676, 3
    %v1681 = vand.u32 %v1680, 3
    %vm1682 = vcmp.lt.s32.totalorder %v1681, 2
    %vm1683 = vcmp.eq.s32.totalorder %v1681, 0
    %v1684 = vxor.u32 %v1678, 2147483648
    %v1685 = vsel %vm1683, %v1677, %v1684
    %vm1686 = vcmp.eq.s32.totalorder %v1681, 2
    %v1687 = vxor.u32 %v1677, 2147483648
    %v1688 = vsel %vm1686, %v1687, %v1678
    %v1689 = vsel %vm1682, %v1685, %v1688
    %v1690 = vsel %vm1679, nan, %v1689
    %v1691 = vand.u32 2147483647, %v526
    %vm1692 = vcmp.le.f32.partialorder %v1691, 0.7853982
    %vm1693 = vcmp.lt.s32.totalorder %v526, 0
    %v1694 = vand.u32 %v526, 2139095040
    %v1695 = vshrl.u32 %v1694, 23
    %v1696 = vsub.s32 %v1695, 127
    %v1697 = vand.u32 2147483647, %v526
    %v1698 = vand.u32 %v1697, 8388607
    %v1699 = vor.u32 %v1698, 8388608
    %v1700 = vsub.s32 0, %v1699
    %v1701 = vadd.s32 %v1696, 1
    %vm1702 = vcmp.gt.s32.totalorder %v1701, 0
    %v1703 = vsel %vm1702, %v1701, 0
    %v1704 = vshrl.u32 %v1703, 5
    %v1705 = vand.u32 %v1703, 31
    %v1706 = vsub.s32 32, %v1705
    %v1707 = vshrl.u32 683565275, %v1706
    %v1708 = vshll.u32 683565275, %v1705
    %v1709 = vshrl.u32 2475754826, %v1706
    %v1710 = vor.u32 %v1708, %v1709
    %v1711 = vshll.u32 2475754826, %v1705
    %v1712 = vshrl.u32 2131351028, %v1706
    %v1713 = vor.u32 %v1711, %v1712
    %v1714 = vshll.u32 2131351028, %v1705
    %v1715 = vshrl.u32 2102212464, %v1706
    %v1716 = vor.u32 %v1714, %v1715
    %v1717 = vshll.u32 2102212464, %v1705
    %v1718 = vshrl.u32 920167782, %v1706
    %v1719 = vor.u32 %v1717, %v1718
    %v1720 = vshll.u32 920167782, %v1705
    %v1721 = vshrl.u32 1326507024, %v1706
    %v1722 = vor.u32 %v1720, %v1721
    %vm1723 = vcmp.lt.s32.totalorder %v1704, 1
    %vm1724 = vcmp.lt.s32.totalorder %v1704, 2
    %vm1725 = vcmp.lt.s32.totalorder %v1704, 3
    %vm1726 = vcmp.lt.s32.totalorder %v1704, 4
    %v1727 = vsel %vm1723, %v1707, %v1710
    %v1728 = vsel %vm1726, %v1716, 2102212464
    %v1729 = vsel %vm1725, %v1713, %v1728
    %v1730 = vsel %vm1724, %v1727, %v1729
    %v1731 = vsel %vm1723, %v1710, %v1713
    %v1732 = vsel %vm1726, %v1719, 920167782
    %v1733 = vsel %vm1725, %v1716, %v1732
    %v1734 = vsel %vm1724, %v1731, %v1733
    %v1735 = vsel %vm1723, %v1713, %v1716
    %v1736 = vsel %vm1726, %v1722, 1326507024
    %v1737 = vsel %vm1725, %v1719, %v1736
    %v1738 = vsel %vm1724, %v1735, %v1737
    %v1739 = vshll.u32 %v1699, 8
    %v1740 = vmul.u32.u64.compose %v1739, %v1738
    %v1741 = vextract.low.u32 %v1740
    %v1742 = vextract.high.u32 %v1740
    %v1743 = vmul.u32.u64.compose %v1739, %v1734
    %v1744 = vextract.low.u32 %v1743
    %v1745 = vextract.high.u32 %v1743
    %v1746 = vmul.u32 %v1739, %v1730
    %v1747 = vadd.s32 %v1742, %v1744
    %vm1748 = vc.u32 %v1742, %v1744
    %v1749 = vadd.s32 %v1745, 1
    %v1750 = vsel %vm1748, %v1749, %v1745
    %v1751 = vadd.s32 %v1746, %v1750
    %v1752 = vadd.s32 %v1751, 536870912
    %v1753 = vshrl.u32 %v1752, 30
    %v1754 = vshll.u32 %v1753, 30
    %v1755 = vsub.s32 %v1751, %v1754
    %vm1756 = vcmp.lt.s32.totalorder %v1755, 0
    %v1757 = vsub.s32 0, %v1755
    %v1758 = vsel %vm1756, %v1757, %v1755
    %v1759 = vclz %v1758
    %v1760 = vsub.s32 %v1759, 2
    %vm1761 = vcmp.gt.s32.totalorder 0, %v1760
    %v1762 = vsel %vm1761, 0, %v1760
    %v1763 = vsub.s32 32, %v1762
    %v1764 = vshll.u32 %v1755, %v1762
    %v1765 = vshrl.u32 %v1747, %v1763
    %v1766 = vor.u32 %v1764, %v1765
    %v1767 = vsub.s32 4294967266, %v1762
    %v1768 = vadd.s32 %v1767, 127
    %v1769 = vshll.u32 %v1768, 23
    %v1770 = vor.u32 4788187, %v1769
    %v1771 = vand.u32 2147483647, %v1770
    %v1773 = vcvt.s32.f32 %v1766
    %v1774 = vmul.f32 %v1773, %v1771
    %v1775 = vxor.u32 %v1774, 2147483648
    %v1776 = vsel %vm1693, %v1775, %v1774
    %v1777 = vsub.s32 4, %v1753
    %v1778 = vsel %vm1693, %v1777, %v1753
    %v1779 = vsel %vm1692, %v526, %v1776
    %v1780 = vsel %vm1692, 0, %v1778
    %v1781 = vcosq.f32.pop %v1779
    %v1782 = vsinq.f32.pop %v1779
    %vm1783 = vweird.f32 %v526
    %v1784 = vadd.s32 %v1780, 3
    %v1785 = vand.u32 %v1784, 3
    %vm1786 = vcmp.lt.s32.totalorder %v1785, 2
    %vm1787 = vcmp.eq.s32.totalorder %v1785, 0
    %v1788 = vxor.u32 %v1782, 2147483648
    %v1789 = vsel %vm1787, %v1781, %v1788
    %vm1790 = vcmp.eq.s32.totalorder %v1785, 2
    %v1791 = vxor.u32 %v1781, 2147483648
    %v1792 = vsel %vm1790, %v1791, %v1782
    %v1793 = vsel %vm1786, %v1789, %v1792
    %v1794 = vsel %vm1783, nan, %v1793
    %v1795 = vand.u32 2147483647, %v527
    %vm1796 = vcmp.le.f32.partialorder %v1795, 0.7853982
    %vm1797 = vcmp.lt.s32.totalorder %v527, 0
    %v1798 = vand.u32 %v527, 2139095040
    %v1799 = vshrl.u32 %v1798, 23
    %v1800 = vsub.s32 %v1799, 127
    %v1801 = vand.u32 2147483647, %v527
    %v1802 = vand.u32 %v1801, 8388607
    %v1803 = vor.u32 %v1802, 8388608
    %v1804 = vsub.s32 0, %v1803
    %v1805 = vadd.s32 %v1800, 1
    %vm1806 = vcmp.gt.s32.totalorder %v1805, 0
    %v1807 = vsel %vm1806, %v1805, 0
    %v1808 = vshrl.u32 %v1807, 5
    %v1809 = vand.u32 %v1807, 31
    %v1810 = vsub.s32 32, %v1809
    %v1811 = vshrl.u32 683565275, %v1810
    %v1812 = vshll.u32 683565275, %v1809
    %v1813 = vshrl.u32 2475754826, %v1810
    %v1814 = vor.u32 %v1812, %v1813
    %v1815 = vshll.u32 2475754826, %v1809
    %v1816 = vshrl.u32 2131351028, %v1810
    %v1817 = vor.u32 %v1815, %v1816
    %v1818 = vshll.u32 2131351028, %v1809
    %v1819 = vshrl.u32 2102212464, %v1810
    %v1820 = vor.u32 %v1818, %v1819
    %v1821 = vshll.u32 2102212464, %v1809
    %v1822 = vshrl.u32 920167782, %v1810
    %v1823 = vor.u32 %v1821, %v1822
    %v1824 = vshll.u32 920167782, %v1809
    %v1825 = vshrl.u32 1326507024, %v1810
    %v1826 = vor.u32 %v1824, %v1825
    %vm1827 = vcmp.lt.s32.totalorder %v1808, 1
    %vm1828 = vcmp.lt.s32.totalorder %v1808, 2
    %vm1829 = vcmp.lt.s32.totalorder %v1808, 3
    %vm1830 = vcmp.lt.s32.totalorder %v1808, 4
    %v1831 = vsel %vm1827, %v1811, %v1814
    %v1832 = vsel %vm1830, %v1820, 2102212464
    %v1833 = vsel %vm1829, %v1817, %v1832
    %v1834 = vsel %vm1828, %v1831, %v1833
    %v1835 = vsel %vm1827, %v1814, %v1817
    %v1836 = vsel %vm1830, %v1823, 920167782
    %v1837 = vsel %vm1829, %v1820, %v1836
    %v1838 = vsel %vm1828, %v1835, %v1837
    %v1839 = vsel %vm1827, %v1817, %v1820
    %v1840 = vsel %vm1830, %v1826, 1326507024
    %v1841 = vsel %vm1829, %v1823, %v1840
    %v1842 = vsel %vm1828, %v1839, %v1841
    %v1843 = vshll.u32 %v1803, 8
    %v1844 = vmul.u32.u64.compose %v1843, %v1842
    %v1845 = vextract.low.u32 %v1844
    %v1846 = vextract.high.u32 %v1844
    %v1847 = vmul.u32.u64.compose %v1843, %v1838
    %v1848 = vextract.low.u32 %v1847
    %v1849 = vextract.high.u32 %v1847
    %v1850 = vmul.u32 %v1843, %v1834
    %v1851 = vadd.s32 %v1846, %v1848
    %vm1852 = vc.u32 %v1846, %v1848
    %v1853 = vadd.s32 %v1849, 1
    %v1854 = vsel %vm1852, %v1853, %v1849
    %v1855 = vadd.s32 %v1850, %v1854
    %v1856 = vadd.s32 %v1855, 536870912
    %v1857 = vshrl.u32 %v1856, 30
    %v1858 = vshll.u32 %v1857, 30
    %v1859 = vsub.s32 %v1855, %v1858
    %vm1860 = vcmp.lt.s32.totalorder %v1859, 0
    %v1861 = vsub.s32 0, %v1859
    %v1862 = vsel %vm1860, %v1861, %v1859
    %v1863 = vclz %v1862
    %v1864 = vsub.s32 %v1863, 2
    %vm1865 = vcmp.gt.s32.totalorder 0, %v1864
    %v1866 = vsel %vm1865, 0, %v1864
    %v1867 = vsub.s32 32, %v1866
    %v1868 = vshll.u32 %v1859, %v1866
    %v1869 = vshrl.u32 %v1851, %v1867
    %v1870 = vor.u32 %v1868, %v1869
    %v1871 = vsub.s32 4294967266, %v1866
    %v1872 = vadd.s32 %v1871, 127
    %v1873 = vshll.u32 %v1872, 23
    %v1874 = vor.u32 4788187, %v1873
    %v1875 = vand.u32 2147483647, %v1874
    %v1877 = vcvt.s32.f32 %v1870
    %v1878 = vmul.f32 %v1877, %v1875
    %v1879 = vxor.u32 %v1878, 2147483648
    %v1880 = vsel %vm1797, %v1879, %v1878
    %v1881 = vsub.s32 4, %v1857
    %v1882 = vsel %vm1797, %v1881, %v1857
    %v1883 = vsel %vm1796, %v527, %v1880
    %v1884 = vsel %vm1796, 0, %v1882
    %v1885 = vcosq.f32.pop %v1883
    %v1886 = vsinq.f32.pop %v1883
    %vm1887 = vweird.f32 %v527
    %v1888 = vadd.s32 %v1884, 3
    %v1889 = vand.u32 %v1888, 3
    %vm1890 = vcmp.lt.s32.totalorder %v1889, 2
    %vm1891 = vcmp.eq.s32.totalorder %v1889, 0
    %v1892 = vxor.u32 %v1886, 2147483648
    %v1893 = vsel %vm1891, %v1885, %v1892
    %vm1894 = vcmp.eq.s32.totalorder %v1889, 2
    %v1895 = vxor.u32 %v1885, 2147483648
    %v1896 = vsel %vm1894, %v1895, %v1886
    %v1897 = vsel %vm1890, %v1893, %v1896
    %v1898 = vsel %vm1887, nan, %v1897
    %v1899 = vand.u32 2147483647, %v528
    %vm1900 = vcmp.le.f32.partialorder %v1899, 0.7853982
    %vm1901 = vcmp.lt.s32.totalorder %v528, 0
    %v1902 = vand.u32 %v528, 2139095040
    %v1903 = vshrl.u32 %v1902, 23
    %v1904 = vsub.s32 %v1903, 127
    %v1905 = vand.u32 2147483647, %v528
    %v1906 = vand.u32 %v1905, 8388607
    %v1907 = vor.u32 %v1906, 8388608
    %v1908 = vsub.s32 0, %v1907
    %v1909 = vadd.s32 %v1904, 1
    %vm1910 = vcmp.gt.s32.totalorder %v1909, 0
    %v1911 = vsel %vm1910, %v1909, 0
    %v1912 = vshrl.u32 %v1911, 5
    %v1913 = vand.u32 %v1911, 31
    %v1914 = vsub.s32 32, %v1913
    %v1915 = vshrl.u32 683565275, %v1914
    %v1916 = vshll.u32 683565275, %v1913
    %v1917 = vshrl.u32 2475754826, %v1914
    %v1918 = vor.u32 %v1916, %v1917
    %v1919 = vshll.u32 2475754826, %v1913
    %v1920 = vshrl.u32 2131351028, %v1914
    %v1921 = vor.u32 %v1919, %v1920
    %v1922 = vshll.u32 2131351028, %v1913
    %v1923 = vshrl.u32 2102212464, %v1914
    %v1924 = vor.u32 %v1922, %v1923
    %v1925 = vshll.u32 2102212464, %v1913
    %v1926 = vshrl.u32 920167782, %v1914
    %v1927 = vor.u32 %v1925, %v1926
    %v1928 = vshll.u32 920167782, %v1913
    %v1929 = vshrl.u32 1326507024, %v1914
    %v1930 = vor.u32 %v1928, %v1929
    %vm1931 = vcmp.lt.s32.totalorder %v1912, 1
    %vm1932 = vcmp.lt.s32.totalorder %v1912, 2
    %vm1933 = vcmp.lt.s32.totalorder %v1912, 3
    %vm1934 = vcmp.lt.s32.totalorder %v1912, 4
    %v1935 = vsel %vm1931, %v1915, %v1918
    %v1936 = vsel %vm1934, %v1924, 2102212464
    %v1937 = vsel %vm1933, %v1921, %v1936
    %v1938 = vsel %vm1932, %v1935, %v1937
    %v1939 = vsel %vm1931, %v1918, %v1921
    %v1940 = vsel %vm1934, %v1927, 920167782
    %v1941 = vsel %vm1933, %v1924, %v1940
    %v1942 = vsel %vm1932, %v1939, %v1941
    %v1943 = vsel %vm1931, %v1921, %v1924
    %v1944 = vsel %vm1934, %v1930, 1326507024
    %v1945 = vsel %vm1933, %v1927, %v1944
    %v1946 = vsel %vm1932, %v1943, %v1945
    %v1947 = vshll.u32 %v1907, 8
    %v1948 = vmul.u32.u64.compose %v1947, %v1946
    %v1949 = vextract.low.u32 %v1948
    %v1950 = vextract.high.u32 %v1948
    %v1951 = vmul.u32.u64.compose %v1947, %v1942
    %v1952 = vextract.low.u32 %v1951
    %v1953 = vextract.high.u32 %v1951
    %v1954 = vmul.u32 %v1947, %v1938
    %v1955 = vadd.s32 %v1950, %v1952
    %vm1956 = vc.u32 %v1950, %v1952
    %v1957 = vadd.s32 %v1953, 1
    %v1958 = vsel %vm1956, %v1957, %v1953
    %v1959 = vadd.s32 %v1954, %v1958
    %v1960 = vadd.s32 %v1959, 536870912
    %v1961 = vshrl.u32 %v1960, 30
    %v1962 = vshll.u32 %v1961, 30
    %v1963 = vsub.s32 %v1959, %v1962
    %vm1964 = vcmp.lt.s32.totalorder %v1963, 0
    %v1965 = vsub.s32 0, %v1963
    %v1966 = vsel %vm1964, %v1965, %v1963
    %v1967 = vclz %v1966
    %v1968 = vsub.s32 %v1967, 2
    %vm1969 = vcmp.gt.s32.totalorder 0, %v1968
    %v1970 = vsel %vm1969, 0, %v1968
    %v1971 = vsub.s32 32, %v1970
    %v1972 = vshll.u32 %v1963, %v1970
    %v1973 = vshrl.u32 %v1955, %v1971
    %v1974 = vor.u32 %v1972, %v1973
    %v1975 = vsub.s32 4294967266, %v1970
    %v1976 = vadd.s32 %v1975, 127
    %v1977 = vshll.u32 %v1976, 23
    %v1978 = vor.u32 4788187, %v1977
    %v1979 = vand.u32 2147483647, %v1978
    %v1981 = vcvt.s32.f32 %v1974
    %v1982 = vmul.f32 %v1981, %v1979
    %v1983 = vxor.u32 %v1982, 2147483648
    %v1984 = vsel %vm1901, %v1983, %v1982
    %v1985 = vsub.s32 4, %v1961
    %v1986 = vsel %vm1901, %v1985, %v1961
    %v1987 = vsel %vm1900, %v528, %v1984
    %v1988 = vsel %vm1900, 0, %v1986
    %v1989 = vcosq.f32.pop %v1987
    %v1990 = vsinq.f32.pop %v1987
    %vm1991 = vweird.f32 %v528
    %v1992 = vadd.s32 %v1988, 3
    %v1993 = vand.u32 %v1992, 3
    %vm1994 = vcmp.lt.s32.totalorder %v1993, 2
    %vm1995 = vcmp.eq.s32.totalorder %v1993, 0
    %v1996 = vxor.u32 %v1990, 2147483648
    %v1997 = vsel %vm1995, %v1989, %v1996
    %vm1998 = vcmp.eq.s32.totalorder %v1993, 2
    %v1999 = vxor.u32 %v1989, 2147483648
    %v2000 = vsel %vm1998, %v1999, %v1990
    %v2001 = vsel %vm1994, %v1997, %v2000
    %v2002 = vsel %vm1991, nan, %v2001
    %v2003 = vand.u32 2147483647, %v529
    %vm2004 = vcmp.le.f32.partialorder %v2003, 0.7853982
    %vm2005 = vcmp.lt.s32.totalorder %v529, 0
    %v2006 = vand.u32 %v529, 2139095040
    %v2007 = vshrl.u32 %v2006, 23
    %v2008 = vsub.s32 %v2007, 127
    %v2009 = vand.u32 2147483647, %v529
    %v2010 = vand.u32 %v2009, 8388607
    %v2011 = vor.u32 %v2010, 8388608
    %v2012 = vsub.s32 0, %v2011
    %v2013 = vadd.s32 %v2008, 1
    %vm2014 = vcmp.gt.s32.totalorder %v2013, 0
    %v2015 = vsel %vm2014, %v2013, 0
    %v2016 = vshrl.u32 %v2015, 5
    %v2017 = vand.u32 %v2015, 31
    %v2018 = vsub.s32 32, %v2017
    %v2019 = vshrl.u32 683565275, %v2018
    %v2020 = vshll.u32 683565275, %v2017
    %v2021 = vshrl.u32 2475754826, %v2018
    %v2022 = vor.u32 %v2020, %v2021
    %v2023 = vshll.u32 2475754826, %v2017
    %v2024 = vshrl.u32 2131351028, %v2018
    %v2025 = vor.u32 %v2023, %v2024
    %v2026 = vshll.u32 2131351028, %v2017
    %v2027 = vshrl.u32 2102212464, %v2018
    %v2028 = vor.u32 %v2026, %v2027
    %v2029 = vshll.u32 2102212464, %v2017
    %v2030 = vshrl.u32 920167782, %v2018
    %v2031 = vor.u32 %v2029, %v2030
    %v2032 = vshll.u32 920167782, %v2017
    %v2033 = vshrl.u32 1326507024, %v2018
    %v2034 = vor.u32 %v2032, %v2033
    %vm2035 = vcmp.lt.s32.totalorder %v2016, 1
    %vm2036 = vcmp.lt.s32.totalorder %v2016, 2
    %vm2037 = vcmp.lt.s32.totalorder %v2016, 3
    %vm2038 = vcmp.lt.s32.totalorder %v2016, 4
    %v2039 = vsel %vm2035, %v2019, %v2022
    %v2040 = vsel %vm2038, %v2028, 2102212464
    %v2041 = vsel %vm2037, %v2025, %v2040
    %v2042 = vsel %vm2036, %v2039, %v2041
    %v2043 = vsel %vm2035, %v2022, %v2025
    %v2044 = vsel %vm2038, %v2031, 920167782
    %v2045 = vsel %vm2037, %v2028, %v2044
    %v2046 = vsel %vm2036, %v2043, %v2045
    %v2047 = vsel %vm2035, %v2025, %v2028
    %v2048 = vsel %vm2038, %v2034, 1326507024
    %v2049 = vsel %vm2037, %v2031, %v2048
    %v2050 = vsel %vm2036, %v2047, %v2049
    %v2051 = vshll.u32 %v2011, 8
    %v2052 = vmul.u32.u64.compose %v2051, %v2050
    %v2053 = vextract.low.u32 %v2052
    %v2054 = vextract.high.u32 %v2052
    %v2055 = vmul.u32.u64.compose %v2051, %v2046
    %v2056 = vextract.low.u32 %v2055
    %v2057 = vextract.high.u32 %v2055
    %v2058 = vmul.u32 %v2051, %v2042
    %v2059 = vadd.s32 %v2054, %v2056
    %vm2060 = vc.u32 %v2054, %v2056
    %v2061 = vadd.s32 %v2057, 1
    %v2062 = vsel %vm2060, %v2061, %v2057
    %v2063 = vadd.s32 %v2058, %v2062
    %v2064 = vadd.s32 %v2063, 536870912
    %v2065 = vshrl.u32 %v2064, 30
    %v2066 = vshll.u32 %v2065, 30
    %v2067 = vsub.s32 %v2063, %v2066
    %vm2068 = vcmp.lt.s32.totalorder %v2067, 0
    %v2069 = vsub.s32 0, %v2067
    %v2070 = vsel %vm2068, %v2069, %v2067
    %v2071 = vclz %v2070
    %v2072 = vsub.s32 %v2071, 2
    %vm2073 = vcmp.gt.s32.totalorder 0, %v2072
    %v2074 = vsel %vm2073, 0, %v2072
    %v2075 = vsub.s32 32, %v2074
    %v2076 = vshll.u32 %v2067, %v2074
    %v2077 = vshrl.u32 %v2059, %v2075
    %v2078 = vor.u32 %v2076, %v2077
    %v2079 = vsub.s32 4294967266, %v2074
    %v2080 = vadd.s32 %v2079, 127
    %v2081 = vshll.u32 %v2080, 23
    %v2082 = vor.u32 4788187, %v2081
    %v2083 = vand.u32 2147483647, %v2082
    %v2085 = vcvt.s32.f32 %v2078
    %v2086 = vmul.f32 %v2085, %v2083
    %v2087 = vxor.u32 %v2086, 2147483648
    %v2088 = vsel %vm2005, %v2087, %v2086
    %v2089 = vsub.s32 4, %v2065
    %v2090 = vsel %vm2005, %v2089, %v2065
    %v2091 = vsel %vm2004, %v529, %v2088
    %v2092 = vsel %vm2004, 0, %v2090
    %v2093 = vcosq.f32.pop %v2091
    %v2094 = vsinq.f32.pop %v2091
    %vm2095 = vweird.f32 %v529
    %v2096 = vadd.s32 %v2092, 3
    %v2097 = vand.u32 %v2096, 3
    %vm2098 = vcmp.lt.s32.totalorder %v2097, 2
    %vm2099 = vcmp.eq.s32.totalorder %v2097, 0
    %v2100 = vxor.u32 %v2094, 2147483648
    %v2101 = vsel %vm2099, %v2093, %v2100
    %vm2102 = vcmp.eq.s32.totalorder %v2097, 2
    %v2103 = vxor.u32 %v2093, 2147483648
    %v2104 = vsel %vm2102, %v2103, %v2094
    %v2105 = vsel %vm2098, %v2101, %v2104
    %v2106 = vsel %vm2095, nan, %v2105
    %v2107 = vand.u32 2147483647, %v530
    %vm2108 = vcmp.le.f32.partialorder %v2107, 0.7853982
    %vm2109 = vcmp.lt.s32.totalorder %v530, 0
    %v2110 = vand.u32 %v530, 2139095040
    %v2111 = vshrl.u32 %v2110, 23
    %v2112 = vsub.s32 %v2111, 127
    %v2113 = vand.u32 2147483647, %v530
    %v2114 = vand.u32 %v2113, 8388607
    %v2115 = vor.u32 %v2114, 8388608
    %v2116 = vsub.s32 0, %v2115
    %v2117 = vadd.s32 %v2112, 1
    %vm2118 = vcmp.gt.s32.totalorder %v2117, 0
    %v2119 = vsel %vm2118, %v2117, 0
    %v2120 = vshrl.u32 %v2119, 5
    %v2121 = vand.u32 %v2119, 31
    %v2122 = vsub.s32 32, %v2121
    %v2123 = vshrl.u32 683565275, %v2122
    %v2124 = vshll.u32 683565275, %v2121
    %v2125 = vshrl.u32 2475754826, %v2122
    %v2126 = vor.u32 %v2124, %v2125
    %v2127 = vshll.u32 2475754826, %v2121
    %v2128 = vshrl.u32 2131351028, %v2122
    %v2129 = vor.u32 %v2127, %v2128
    %v2130 = vshll.u32 2131351028, %v2121
    %v2131 = vshrl.u32 2102212464, %v2122
    %v2132 = vor.u32 %v2130, %v2131
    %v2133 = vshll.u32 2102212464, %v2121
    %v2134 = vshrl.u32 920167782, %v2122
    %v2135 = vor.u32 %v2133, %v2134
    %v2136 = vshll.u32 920167782, %v2121
    %v2137 = vshrl.u32 1326507024, %v2122
    %v2138 = vor.u32 %v2136, %v2137
    %vm2139 = vcmp.lt.s32.totalorder %v2120, 1
    %vm2140 = vcmp.lt.s32.totalorder %v2120, 2
    %vm2141 = vcmp.lt.s32.totalorder %v2120, 3
    %vm2142 = vcmp.lt.s32.totalorder %v2120, 4
    %v2143 = vsel %vm2139, %v2123, %v2126
    %v2144 = vsel %vm2142, %v2132, 2102212464
    %v2145 = vsel %vm2141, %v2129, %v2144
    %v2146 = vsel %vm2140, %v2143, %v2145
    %v2147 = vsel %vm2139, %v2126, %v2129
    %v2148 = vsel %vm2142, %v2135, 920167782
    %v2149 = vsel %vm2141, %v2132, %v2148
    %v2150 = vsel %vm2140, %v2147, %v2149
    %v2151 = vsel %vm2139, %v2129, %v2132
    %v2152 = vsel %vm2142, %v2138, 1326507024
    %v2153 = vsel %vm2141, %v2135, %v2152
    %v2154 = vsel %vm2140, %v2151, %v2153
    %v2155 = vshll.u32 %v2115, 8
    %v2156 = vmul.u32.u64.compose %v2155, %v2154
    %v2157 = vextract.low.u32 %v2156
    %v2158 = vextract.high.u32 %v2156
    %v2159 = vmul.u32.u64.compose %v2155, %v2150
    %v2160 = vextract.low.u32 %v2159
    %v2161 = vextract.high.u32 %v2159
    %v2162 = vmul.u32 %v2155, %v2146
    %v2163 = vadd.s32 %v2158, %v2160
    %vm2164 = vc.u32 %v2158, %v2160
    %v2165 = vadd.s32 %v2161, 1
    %v2166 = vsel %vm2164, %v2165, %v2161
    %v2167 = vadd.s32 %v2162, %v2166
    %v2168 = vadd.s32 %v2167, 536870912
    %v2169 = vshrl.u32 %v2168, 30
    %v2170 = vshll.u32 %v2169, 30
    %v2171 = vsub.s32 %v2167, %v2170
    %vm2172 = vcmp.lt.s32.totalorder %v2171, 0
    %v2173 = vsub.s32 0, %v2171
    %v2174 = vsel %vm2172, %v2173, %v2171
    %v2175 = vclz %v2174
    %v2176 = vsub.s32 %v2175, 2
    %vm2177 = vcmp.gt.s32.totalorder 0, %v2176
    %v2178 = vsel %vm2177, 0, %v2176
    %v2179 = vsub.s32 32, %v2178
    %v2180 = vshll.u32 %v2171, %v2178
    %v2181 = vshrl.u32 %v2163, %v2179
    %v2182 = vor.u32 %v2180, %v2181
    %v2183 = vsub.s32 4294967266, %v2178
    %v2184 = vadd.s32 %v2183, 127
    %v2185 = vshll.u32 %v2184, 23
    %v2186 = vor.u32 4788187, %v2185
    %v2187 = vand.u32 2147483647, %v2186
    %v2189 = vcvt.s32.f32 %v2182
    %v2190 = vmul.f32 %v2189, %v2187
    %v2191 = vxor.u32 %v2190, 2147483648
    %v2192 = vsel %vm2109, %v2191, %v2190
    %v2193 = vsub.s32 4, %v2169
    %v2194 = vsel %vm2109, %v2193, %v2169
    %v2195 = vsel %vm2108, %v530, %v2192
    %v2196 = vsel %vm2108, 0, %v2194
    %v2197 = vcosq.f32.pop %v2195
    %v2198 = vsinq.f32.pop %v2195
    %vm2199 = vweird.f32 %v530
    %v2200 = vadd.s32 %v2196, 3
    %v2201 = vand.u32 %v2200, 3
    %vm2202 = vcmp.lt.s32.totalorder %v2201, 2
    %vm2203 = vcmp.eq.s32.totalorder %v2201, 0
    %v2204 = vxor.u32 %v2198, 2147483648
    %v2205 = vsel %vm2203, %v2197, %v2204
    %vm2206 = vcmp.eq.s32.totalorder %v2201, 2
    %v2207 = vxor.u32 %v2197, 2147483648
    %v2208 = vsel %vm2206, %v2207, %v2198
    %v2209 = vsel %vm2202, %v2205, %v2208
    %v2210 = vsel %vm2199, nan, %v2209
    %v2211 = vand.u32 2147483647, %v531
    %vm2212 = vcmp.le.f32.partialorder %v2211, 0.7853982
    %vm2213 = vcmp.lt.s32.totalorder %v531, 0
    %v2214 = vand.u32 %v531, 2139095040
    %v2215 = vshrl.u32 %v2214, 23
    %v2216 = vsub.s32 %v2215, 127
    %v2217 = vand.u32 2147483647, %v531
    %v2218 = vand.u32 %v2217, 8388607
    %v2219 = vor.u32 %v2218, 8388608
    %v2220 = vsub.s32 0, %v2219
    %v2221 = vadd.s32 %v2216, 1
    %vm2222 = vcmp.gt.s32.totalorder %v2221, 0
    %v2223 = vsel %vm2222, %v2221, 0
    %v2224 = vshrl.u32 %v2223, 5
    %v2225 = vand.u32 %v2223, 31
    %v2226 = vsub.s32 32, %v2225
    %v2227 = vshrl.u32 683565275, %v2226
    %v2228 = vshll.u32 683565275, %v2225
    %v2229 = vshrl.u32 2475754826, %v2226
    %v2230 = vor.u32 %v2228, %v2229
    %v2231 = vshll.u32 2475754826, %v2225
    %v2232 = vshrl.u32 2131351028, %v2226
    %v2233 = vor.u32 %v2231, %v2232
    %v2234 = vshll.u32 2131351028, %v2225
    %v2235 = vshrl.u32 2102212464, %v2226
    %v2236 = vor.u32 %v2234, %v2235
    %v2237 = vshll.u32 2102212464, %v2225
    %v2238 = vshrl.u32 920167782, %v2226
    %v2239 = vor.u32 %v2237, %v2238
    %v2240 = vshll.u32 920167782, %v2225
    %v2241 = vshrl.u32 1326507024, %v2226
    %v2242 = vor.u32 %v2240, %v2241
    %vm2243 = vcmp.lt.s32.totalorder %v2224, 1
    %vm2244 = vcmp.lt.s32.totalorder %v2224, 2
    %vm2245 = vcmp.lt.s32.totalorder %v2224, 3
    %vm2246 = vcmp.lt.s32.totalorder %v2224, 4
    %v2247 = vsel %vm2243, %v2227, %v2230
    %v2248 = vsel %vm2246, %v2236, 2102212464
    %v2249 = vsel %vm2245, %v2233, %v2248
    %v2250 = vsel %vm2244, %v2247, %v2249
    %v2251 = vsel %vm2243, %v2230, %v2233
    %v2252 = vsel %vm2246, %v2239, 920167782
    %v2253 = vsel %vm2245, %v2236, %v2252
    %v2254 = vsel %vm2244, %v2251, %v2253
    %v2255 = vsel %vm2243, %v2233, %v2236
    %v2256 = vsel %vm2246, %v2242, 1326507024
    %v2257 = vsel %vm2245, %v2239, %v2256
    %v2258 = vsel %vm2244, %v2255, %v2257
    %v2259 = vshll.u32 %v2219, 8
    %v2260 = vmul.u32.u64.compose %v2259, %v2258
    %v2261 = vextract.low.u32 %v2260
    %v2262 = vextract.high.u32 %v2260
    %v2263 = vmul.u32.u64.compose %v2259, %v2254
    %v2264 = vextract.low.u32 %v2263
    %v2265 = vextract.high.u32 %v2263
    %v2266 = vmul.u32 %v2259, %v2250
    %v2267 = vadd.s32 %v2262, %v2264
    %vm2268 = vc.u32 %v2262, %v2264
    %v2269 = vadd.s32 %v2265, 1
    %v2270 = vsel %vm2268, %v2269, %v2265
    %v2271 = vadd.s32 %v2266, %v2270
    %v2272 = vadd.s32 %v2271, 536870912
    %v2273 = vshrl.u32 %v2272, 30
    %v2274 = vshll.u32 %v2273, 30
    %v2275 = vsub.s32 %v2271, %v2274
    %vm2276 = vcmp.lt.s32.totalorder %v2275, 0
    %v2277 = vsub.s32 0, %v2275
    %v2278 = vsel %vm2276, %v2277, %v2275
    %v2279 = vclz %v2278
    %v2280 = vsub.s32 %v2279, 2
    %vm2281 = vcmp.gt.s32.totalorder 0, %v2280
    %v2282 = vsel %vm2281, 0, %v2280
    %v2283 = vsub.s32 32, %v2282
    %v2284 = vshll.u32 %v2275, %v2282
    %v2285 = vshrl.u32 %v2267, %v2283
    %v2286 = vor.u32 %v2284, %v2285
    %v2287 = vsub.s32 4294967266, %v2282
    %v2288 = vadd.s32 %v2287, 127
    %v2289 = vshll.u32 %v2288, 23
    %v2290 = vor.u32 4788187, %v2289
    %v2291 = vand.u32 2147483647, %v2290
    %v2293 = vcvt.s32.f32 %v2286
    %v2294 = vmul.f32 %v2293, %v2291
    %v2295 = vxor.u32 %v2294, 2147483648
    %v2296 = vsel %vm2213, %v2295, %v2294
    %v2297 = vsub.s32 4, %v2273
    %v2298 = vsel %vm2213, %v2297, %v2273
    %v2299 = vsel %vm2212, %v531, %v2296
    %v2300 = vsel %vm2212, 0, %v2298
    %v2301 = vcosq.f32.pop %v2299
    %v2302 = vsinq.f32.pop %v2299
    %vm2303 = vweird.f32 %v531
    %v2304 = vadd.s32 %v2300, 3
    %v2305 = vand.u32 %v2304, 3
    %vm2306 = vcmp.lt.s32.totalorder %v2305, 2
    %vm2307 = vcmp.eq.s32.totalorder %v2305, 0
    %v2308 = vxor.u32 %v2302, 2147483648
    %v2309 = vsel %vm2307, %v2301, %v2308
    %vm2310 = vcmp.eq.s32.totalorder %v2305, 2
    %v2311 = vxor.u32 %v2301, 2147483648
    %v2312 = vsel %vm2310, %v2311, %v2302
    %v2313 = vsel %vm2306, %v2309, %v2312
    %v2314 = vsel %vm2303, nan, %v2313
    %v2315 = vand.u32 2147483647, %v532
    %vm2316 = vcmp.le.f32.partialorder %v2315, 0.7853982
    %vm2317 = vcmp.lt.s32.totalorder %v532, 0
    %v2318 = vand.u32 %v532, 2139095040
    %v2319 = vshrl.u32 %v2318, 23
    %v2320 = vsub.s32 %v2319, 127
    %v2321 = vand.u32 2147483647, %v532
    %v2322 = vand.u32 %v2321, 8388607
    %v2323 = vor.u32 %v2322, 8388608
    %v2324 = vsub.s32 0, %v2323
    %v2325 = vadd.s32 %v2320, 1
    %vm2326 = vcmp.gt.s32.totalorder %v2325, 0
    %v2327 = vsel %vm2326, %v2325, 0
    %v2328 = vshrl.u32 %v2327, 5
    %v2329 = vand.u32 %v2327, 31
    %v2330 = vsub.s32 32, %v2329
    %v2331 = vshrl.u32 683565275, %v2330
    %v2332 = vshll.u32 683565275, %v2329
    %v2333 = vshrl.u32 2475754826, %v2330
    %v2334 = vor.u32 %v2332, %v2333
    %v2335 = vshll.u32 2475754826, %v2329
    %v2336 = vshrl.u32 2131351028, %v2330
    %v2337 = vor.u32 %v2335, %v2336
    %v2338 = vshll.u32 2131351028, %v2329
    %v2339 = vshrl.u32 2102212464, %v2330
    %v2340 = vor.u32 %v2338, %v2339
    %v2341 = vshll.u32 2102212464, %v2329
    %v2342 = vshrl.u32 920167782, %v2330
    %v2343 = vor.u32 %v2341, %v2342
    %v2344 = vshll.u32 920167782, %v2329
    %v2345 = vshrl.u32 1326507024, %v2330
    %v2346 = vor.u32 %v2344, %v2345
    %vm2347 = vcmp.lt.s32.totalorder %v2328, 1
    %vm2348 = vcmp.lt.s32.totalorder %v2328, 2
    %vm2349 = vcmp.lt.s32.totalorder %v2328, 3
    %vm2350 = vcmp.lt.s32.totalorder %v2328, 4
    %v2351 = vsel %vm2347, %v2331, %v2334
    %v2352 = vsel %vm2350, %v2340, 2102212464
    %v2353 = vsel %vm2349, %v2337, %v2352
    %v2354 = vsel %vm2348, %v2351, %v2353
    %v2355 = vsel %vm2347, %v2334, %v2337
    %v2356 = vsel %vm2350, %v2343, 920167782
    %v2357 = vsel %vm2349, %v2340, %v2356
    %v2358 = vsel %vm2348, %v2355, %v2357
    %v2359 = vsel %vm2347, %v2337, %v2340
    %v2360 = vsel %vm2350, %v2346, 1326507024
    %v2361 = vsel %vm2349, %v2343, %v2360
    %v2362 = vsel %vm2348, %v2359, %v2361
    %v2363 = vshll.u32 %v2323, 8
    %v2364 = vmul.u32.u64.compose %v2363, %v2362
    %v2365 = vextract.low.u32 %v2364
    %v2366 = vextract.high.u32 %v2364
    %v2367 = vmul.u32.u64.compose %v2363, %v2358
    %v2368 = vextract.low.u32 %v2367
    %v2369 = vextract.high.u32 %v2367
    %v2370 = vmul.u32 %v2363, %v2354
    %v2371 = vadd.s32 %v2366, %v2368
    %vm2372 = vc.u32 %v2366, %v2368
    %v2373 = vadd.s32 %v2369, 1
    %v2374 = vsel %vm2372, %v2373, %v2369
    %v2375 = vadd.s32 %v2370, %v2374
    %v2376 = vadd.s32 %v2375, 536870912
    %v2377 = vshrl.u32 %v2376, 30
    %v2378 = vshll.u32 %v2377, 30
    %v2379 = vsub.s32 %v2375, %v2378
    %vm2380 = vcmp.lt.s32.totalorder %v2379, 0
    %v2381 = vsub.s32 0, %v2379
    %v2382 = vsel %vm2380, %v2381, %v2379
    %v2383 = vclz %v2382
    %v2384 = vsub.s32 %v2383, 2
    %vm2385 = vcmp.gt.s32.totalorder 0, %v2384
    %v2386 = vsel %vm2385, 0, %v2384
    %v2387 = vsub.s32 32, %v2386
    %v2388 = vshll.u32 %v2379, %v2386
    %v2389 = vshrl.u32 %v2371, %v2387
    %v2390 = vor.u32 %v2388, %v2389
    %v2391 = vsub.s32 4294967266, %v2386
    %v2392 = vadd.s32 %v2391, 127
    %v2393 = vshll.u32 %v2392, 23
    %v2394 = vor.u32 4788187, %v2393
    %v2395 = vand.u32 2147483647, %v2394
    %v2397 = vcvt.s32.f32 %v2390
    %v2398 = vmul.f32 %v2397, %v2395
    %v2399 = vxor.u32 %v2398, 2147483648
    %v2400 = vsel %vm2317, %v2399, %v2398
    %v2401 = vsub.s32 4, %v2377
    %v2402 = vsel %vm2317, %v2401, %v2377
    %v2403 = vsel %vm2316, %v532, %v2400
    %v2404 = vsel %vm2316, 0, %v2402
    %v2405 = vcosq.f32.pop %v2403
    %v2406 = vsinq.f32.pop %v2403
    %vm2407 = vweird.f32 %v532
    %v2408 = vadd.s32 %v2404, 3
    %v2409 = vand.u32 %v2408, 3
    %vm2410 = vcmp.lt.s32.totalorder %v2409, 2
    %vm2411 = vcmp.eq.s32.totalorder %v2409, 0
    %v2412 = vxor.u32 %v2406, 2147483648
    %v2413 = vsel %vm2411, %v2405, %v2412
    %vm2414 = vcmp.eq.s32.totalorder %v2409, 2
    %v2415 = vxor.u32 %v2405, 2147483648
    %v2416 = vsel %vm2414, %v2415, %v2406
    %v2417 = vsel %vm2410, %v2413, %v2416
    %v2418 = vsel %vm2407, nan, %v2417
    %v2419 = vand.u32 2147483647, %v533
    %vm2420 = vcmp.le.f32.partialorder %v2419, 0.7853982
    %vm2421 = vcmp.lt.s32.totalorder %v533, 0
    %v2422 = vand.u32 %v533, 2139095040
    %v2423 = vshrl.u32 %v2422, 23
    %v2424 = vsub.s32 %v2423, 127
    %v2425 = vand.u32 2147483647, %v533
    %v2426 = vand.u32 %v2425, 8388607
    %v2427 = vor.u32 %v2426, 8388608
    %v2428 = vsub.s32 0, %v2427
    %v2429 = vadd.s32 %v2424, 1
    %vm2430 = vcmp.gt.s32.totalorder %v2429, 0
    %v2431 = vsel %vm2430, %v2429, 0
    %v2432 = vshrl.u32 %v2431, 5
    %v2433 = vand.u32 %v2431, 31
    %v2434 = vsub.s32 32, %v2433
    %v2435 = vshrl.u32 683565275, %v2434
    %v2436 = vshll.u32 683565275, %v2433
    %v2437 = vshrl.u32 2475754826, %v2434
    %v2438 = vor.u32 %v2436, %v2437
    %v2439 = vshll.u32 2475754826, %v2433
    %v2440 = vshrl.u32 2131351028, %v2434
    %v2441 = vor.u32 %v2439, %v2440
    %v2442 = vshll.u32 2131351028, %v2433
    %v2443 = vshrl.u32 2102212464, %v2434
    %v2444 = vor.u32 %v2442, %v2443
    %v2445 = vshll.u32 2102212464, %v2433
    %v2446 = vshrl.u32 920167782, %v2434
    %v2447 = vor.u32 %v2445, %v2446
    %v2448 = vshll.u32 920167782, %v2433
    %v2449 = vshrl.u32 1326507024, %v2434
    %v2450 = vor.u32 %v2448, %v2449
    %vm2451 = vcmp.lt.s32.totalorder %v2432, 1
    %vm2452 = vcmp.lt.s32.totalorder %v2432, 2
    %vm2453 = vcmp.lt.s32.totalorder %v2432, 3
    %vm2454 = vcmp.lt.s32.totalorder %v2432, 4
    %v2455 = vsel %vm2451, %v2435, %v2438
    %v2456 = vsel %vm2454, %v2444, 2102212464
    %v2457 = vsel %vm2453, %v2441, %v2456
    %v2458 = vsel %vm2452, %v2455, %v2457
    %v2459 = vsel %vm2451, %v2438, %v2441
    %v2460 = vsel %vm2454, %v2447, 920167782
    %v2461 = vsel %vm2453, %v2444, %v2460
    %v2462 = vsel %vm2452, %v2459, %v2461
    %v2463 = vsel %vm2451, %v2441, %v2444
    %v2464 = vsel %vm2454, %v2450, 1326507024
    %v2465 = vsel %vm2453, %v2447, %v2464
    %v2466 = vsel %vm2452, %v2463, %v2465
    %v2467 = vshll.u32 %v2427, 8
    %v2468 = vmul.u32.u64.compose %v2467, %v2466
    %v2469 = vextract.low.u32 %v2468
    %v2470 = vextract.high.u32 %v2468
    %v2471 = vmul.u32.u64.compose %v2467, %v2462
    %v2472 = vextract.low.u32 %v2471
    %v2473 = vextract.high.u32 %v2471
    %v2474 = vmul.u32 %v2467, %v2458
    %v2475 = vadd.s32 %v2470, %v2472
    %vm2476 = vc.u32 %v2470, %v2472
    %v2477 = vadd.s32 %v2473, 1
    %v2478 = vsel %vm2476, %v2477, %v2473
    %v2479 = vadd.s32 %v2474, %v2478
    %v2480 = vadd.s32 %v2479, 536870912
    %v2481 = vshrl.u32 %v2480, 30
    %v2482 = vshll.u32 %v2481, 30
    %v2483 = vsub.s32 %v2479, %v2482
    %vm2484 = vcmp.lt.s32.totalorder %v2483, 0
    %v2485 = vsub.s32 0, %v2483
    %v2486 = vsel %vm2484, %v2485, %v2483
    %v2487 = vclz %v2486
    %v2488 = vsub.s32 %v2487, 2
    %vm2489 = vcmp.gt.s32.totalorder 0, %v2488
    %v2490 = vsel %vm2489, 0, %v2488
    %v2491 = vsub.s32 32, %v2490
    %v2492 = vshll.u32 %v2483, %v2490
    %v2493 = vshrl.u32 %v2475, %v2491
    %v2494 = vor.u32 %v2492, %v2493
    %v2495 = vsub.s32 4294967266, %v2490
    %v2496 = vadd.s32 %v2495, 127
    %v2497 = vshll.u32 %v2496, 23
    %v2498 = vor.u32 4788187, %v2497
    %v2499 = vand.u32 2147483647, %v2498
    %v2501 = vcvt.s32.f32 %v2494
    %v2502 = vmul.f32 %v2501, %v2499
    %v2503 = vxor.u32 %v2502, 2147483648
    %v2504 = vsel %vm2421, %v2503, %v2502
    %v2505 = vsub.s32 4, %v2481
    %v2506 = vsel %vm2421, %v2505, %v2481
    %v2507 = vsel %vm2420, %v533, %v2504
    %v2508 = vsel %vm2420, 0, %v2506
    %v2509 = vcosq.f32.pop %v2507
    %v2510 = vsinq.f32.pop %v2507
    %vm2511 = vweird.f32 %v533
    %v2512 = vadd.s32 %v2508, 3
    %v2513 = vand.u32 %v2512, 3
    %vm2514 = vcmp.lt.s32.totalorder %v2513, 2
    %vm2515 = vcmp.eq.s32.totalorder %v2513, 0
    %v2516 = vxor.u32 %v2510, 2147483648
    %v2517 = vsel %vm2515, %v2509, %v2516
    %vm2518 = vcmp.eq.s32.totalorder %v2513, 2
    %v2519 = vxor.u32 %v2509, 2147483648
    %v2520 = vsel %vm2518, %v2519, %v2510
    %v2521 = vsel %vm2514, %v2517, %v2520
    %v2522 = vsel %vm2511, nan, %v2521
    %v2523 = vand.u32 2147483647, %v534
    %vm2524 = vcmp.le.f32.partialorder %v2523, 0.7853982
    %vm2525 = vcmp.lt.s32.totalorder %v534, 0
    %v2526 = vand.u32 %v534, 2139095040
    %v2527 = vshrl.u32 %v2526, 23
    %v2528 = vsub.s32 %v2527, 127
    %v2529 = vand.u32 2147483647, %v534
    %v2530 = vand.u32 %v2529, 8388607
    %v2531 = vor.u32 %v2530, 8388608
    %v2532 = vsub.s32 0, %v2531
    %v2533 = vadd.s32 %v2528, 1
    %vm2534 = vcmp.gt.s32.totalorder %v2533, 0
    %v2535 = vsel %vm2534, %v2533, 0
    %v2536 = vshrl.u32 %v2535, 5
    %v2537 = vand.u32 %v2535, 31
    %v2538 = vsub.s32 32, %v2537
    %v2539 = vshrl.u32 683565275, %v2538
    %v2540 = vshll.u32 683565275, %v2537
    %v2541 = vshrl.u32 2475754826, %v2538
    %v2542 = vor.u32 %v2540, %v2541
    %v2543 = vshll.u32 2475754826, %v2537
    %v2544 = vshrl.u32 2131351028, %v2538
    %v2545 = vor.u32 %v2543, %v2544
    %v2546 = vshll.u32 2131351028, %v2537
    %v2547 = vshrl.u32 2102212464, %v2538
    %v2548 = vor.u32 %v2546, %v2547
    %v2549 = vshll.u32 2102212464, %v2537
    %v2550 = vshrl.u32 920167782, %v2538
    %v2551 = vor.u32 %v2549, %v2550
    %v2552 = vshll.u32 920167782, %v2537
    %v2553 = vshrl.u32 1326507024, %v2538
    %v2554 = vor.u32 %v2552, %v2553
    %vm2555 = vcmp.lt.s32.totalorder %v2536, 1
    %vm2556 = vcmp.lt.s32.totalorder %v2536, 2
    %vm2557 = vcmp.lt.s32.totalorder %v2536, 3
    %vm2558 = vcmp.lt.s32.totalorder %v2536, 4
    %v2559 = vsel %vm2555, %v2539, %v2542
    %v2560 = vsel %vm2558, %v2548, 2102212464
    %v2561 = vsel %vm2557, %v2545, %v2560
    %v2562 = vsel %vm2556, %v2559, %v2561
    %v2563 = vsel %vm2555, %v2542, %v2545
    %v2564 = vsel %vm2558, %v2551, 920167782
    %v2565 = vsel %vm2557, %v2548, %v2564
    %v2566 = vsel %vm2556, %v2563, %v2565
    %v2567 = vsel %vm2555, %v2545, %v2548
    %v2568 = vsel %vm2558, %v2554, 1326507024
    %v2569 = vsel %vm2557, %v2551, %v2568
    %v2570 = vsel %vm2556, %v2567, %v2569
    %v2571 = vshll.u32 %v2531, 8
    %v2572 = vmul.u32.u64.compose %v2571, %v2570
    %v2573 = vextract.low.u32 %v2572
    %v2574 = vextract.high.u32 %v2572
    %v2575 = vmul.u32.u64.compose %v2571, %v2566
    %v2576 = vextract.low.u32 %v2575
    %v2577 = vextract.high.u32 %v2575
    %v2578 = vmul.u32 %v2571, %v2562
    %v2579 = vadd.s32 %v2574, %v2576
    %vm2580 = vc.u32 %v2574, %v2576
    %v2581 = vadd.s32 %v2577, 1
    %v2582 = vsel %vm2580, %v2581, %v2577
    %v2583 = vadd.s32 %v2578, %v2582
    %v2584 = vadd.s32 %v2583, 536870912
    %v2585 = vshrl.u32 %v2584, 30
    %v2586 = vshll.u32 %v2585, 30
    %v2587 = vsub.s32 %v2583, %v2586
    %vm2588 = vcmp.lt.s32.totalorder %v2587, 0
    %v2589 = vsub.s32 0, %v2587
    %v2590 = vsel %vm2588, %v2589, %v2587
    %v2591 = vclz %v2590
    %v2592 = vsub.s32 %v2591, 2
    %vm2593 = vcmp.gt.s32.totalorder 0, %v2592
    %v2594 = vsel %vm2593, 0, %v2592
    %v2595 = vsub.s32 32, %v2594
    %v2596 = vshll.u32 %v2587, %v2594
    %v2597 = vshrl.u32 %v2579, %v2595
    %v2598 = vor.u32 %v2596, %v2597
    %v2599 = vsub.s32 4294967266, %v2594
    %v2600 = vadd.s32 %v2599, 127
    %v2601 = vshll.u32 %v2600, 23
    %v2602 = vor.u32 4788187, %v2601
    %v2603 = vand.u32 2147483647, %v2602
    %v2605 = vcvt.s32.f32 %v2598
    %v2606 = vmul.f32 %v2605, %v2603
    %v2607 = vxor.u32 %v2606, 2147483648
    %v2608 = vsel %vm2525, %v2607, %v2606
    %v2609 = vsub.s32 4, %v2585
    %v2610 = vsel %vm2525, %v2609, %v2585
    %v2611 = vsel %vm2524, %v534, %v2608
    %v2612 = vsel %vm2524, 0, %v2610
    %v2613 = vcosq.f32.pop %v2611
    %v2614 = vsinq.f32.pop %v2611
    %vm2615 = vweird.f32 %v534
    %v2616 = vadd.s32 %v2612, 3
    %v2617 = vand.u32 %v2616, 3
    %vm2618 = vcmp.lt.s32.totalorder %v2617, 2
    %vm2619 = vcmp.eq.s32.totalorder %v2617, 0
    %v2620 = vxor.u32 %v2614, 2147483648
    %v2621 = vsel %vm2619, %v2613, %v2620
    %vm2622 = vcmp.eq.s32.totalorder %v2617, 2
    %v2623 = vxor.u32 %v2613, 2147483648
    %v2624 = vsel %vm2622, %v2623, %v2614
    %v2625 = vsel %vm2618, %v2621, %v2624
    %v2626 = vsel %vm2615, nan, %v2625
    %v2627 = vand.u32 2147483647, %v535
    %vm2628 = vcmp.le.f32.partialorder %v2627, 0.7853982
    %vm2629 = vcmp.lt.s32.totalorder %v535, 0
    %v2630 = vand.u32 %v535, 2139095040
    %v2631 = vshrl.u32 %v2630, 23
    %v2632 = vsub.s32 %v2631, 127
    %v2633 = vand.u32 2147483647, %v535
    %v2634 = vand.u32 %v2633, 8388607
    %v2635 = vor.u32 %v2634, 8388608
    %v2636 = vsub.s32 0, %v2635
    %v2637 = vadd.s32 %v2632, 1
    %vm2638 = vcmp.gt.s32.totalorder %v2637, 0
    %v2639 = vsel %vm2638, %v2637, 0
    %v2640 = vshrl.u32 %v2639, 5
    %v2641 = vand.u32 %v2639, 31
    %v2642 = vsub.s32 32, %v2641
    %v2643 = vshrl.u32 683565275, %v2642
    %v2644 = vshll.u32 683565275, %v2641
    %v2645 = vshrl.u32 2475754826, %v2642
    %v2646 = vor.u32 %v2644, %v2645
    %v2647 = vshll.u32 2475754826, %v2641
    %v2648 = vshrl.u32 2131351028, %v2642
    %v2649 = vor.u32 %v2647, %v2648
    %v2650 = vshll.u32 2131351028, %v2641
    %v2651 = vshrl.u32 2102212464, %v2642
    %v2652 = vor.u32 %v2650, %v2651
    %v2653 = vshll.u32 2102212464, %v2641
    %v2654 = vshrl.u32 920167782, %v2642
    %v2655 = vor.u32 %v2653, %v2654
    %v2656 = vshll.u32 920167782, %v2641
    %v2657 = vshrl.u32 1326507024, %v2642
    %v2658 = vor.u32 %v2656, %v2657
    %vm2659 = vcmp.lt.s32.totalorder %v2640, 1
    %vm2660 = vcmp.lt.s32.totalorder %v2640, 2
    %vm2661 = vcmp.lt.s32.totalorder %v2640, 3
    %vm2662 = vcmp.lt.s32.totalorder %v2640, 4
    %v2663 = vsel %vm2659, %v2643, %v2646
    %v2664 = vsel %vm2662, %v2652, 2102212464
    %v2665 = vsel %vm2661, %v2649, %v2664
    %v2666 = vsel %vm2660, %v2663, %v2665
    %v2667 = vsel %vm2659, %v2646, %v2649
    %v2668 = vsel %vm2662, %v2655, 920167782
    %v2669 = vsel %vm2661, %v2652, %v2668
    %v2670 = vsel %vm2660, %v2667, %v2669
    %v2671 = vsel %vm2659, %v2649, %v2652
    %v2672 = vsel %vm2662, %v2658, 1326507024
    %v2673 = vsel %vm2661, %v2655, %v2672
    %v2674 = vsel %vm2660, %v2671, %v2673
    %v2675 = vshll.u32 %v2635, 8
    %v2676 = vmul.u32.u64.compose %v2675, %v2674
    %v2677 = vextract.low.u32 %v2676
    %v2678 = vextract.high.u32 %v2676
    %v2679 = vmul.u32.u64.compose %v2675, %v2670
    %v2680 = vextract.low.u32 %v2679
    %v2681 = vextract.high.u32 %v2679
    %v2682 = vmul.u32 %v2675, %v2666
    %v2683 = vadd.s32 %v2678, %v2680
    %vm2684 = vc.u32 %v2678, %v2680
    %v2685 = vadd.s32 %v2681, 1
    %v2686 = vsel %vm2684, %v2685, %v2681
    %v2687 = vadd.s32 %v2682, %v2686
    %v2688 = vadd.s32 %v2687, 536870912
    %v2689 = vshrl.u32 %v2688, 30
    %v2690 = vshll.u32 %v2689, 30
    %v2691 = vsub.s32 %v2687, %v2690
    %vm2692 = vcmp.lt.s32.totalorder %v2691, 0
    %v2693 = vsub.s32 0, %v2691
    %v2694 = vsel %vm2692, %v2693, %v2691
    %v2695 = vclz %v2694
    %v2696 = vsub.s32 %v2695, 2
    %vm2697 = vcmp.gt.s32.totalorder 0, %v2696
    %v2698 = vsel %vm2697, 0, %v2696
    %v2699 = vsub.s32 32, %v2698
    %v2700 = vshll.u32 %v2691, %v2698
    %v2701 = vshrl.u32 %v2683, %v2699
    %v2702 = vor.u32 %v2700, %v2701
    %v2703 = vsub.s32 4294967266, %v2698
    %v2704 = vadd.s32 %v2703, 127
    %v2705 = vshll.u32 %v2704, 23
    %v2706 = vor.u32 4788187, %v2705
    %v2707 = vand.u32 2147483647, %v2706
    %v2709 = vcvt.s32.f32 %v2702
    %v2710 = vmul.f32 %v2709, %v2707
    %v2711 = vxor.u32 %v2710, 2147483648
    %v2712 = vsel %vm2629, %v2711, %v2710
    %v2713 = vsub.s32 4, %v2689
    %v2714 = vsel %vm2629, %v2713, %v2689
    %v2715 = vsel %vm2628, %v535, %v2712
    %v2716 = vsel %vm2628, 0, %v2714
    %v2717 = vcosq.f32.pop %v2715
    %v2718 = vsinq.f32.pop %v2715
    %vm2719 = vweird.f32 %v535
    %v2720 = vadd.s32 %v2716, 3
    %v2721 = vand.u32 %v2720, 3
    %vm2722 = vcmp.lt.s32.totalorder %v2721, 2
    %vm2723 = vcmp.eq.s32.totalorder %v2721, 0
    %v2724 = vxor.u32 %v2718, 2147483648
    %v2725 = vsel %vm2723, %v2717, %v2724
    %vm2726 = vcmp.eq.s32.totalorder %v2721, 2
    %v2727 = vxor.u32 %v2717, 2147483648
    %v2728 = vsel %vm2726, %v2727, %v2718
    %v2729 = vsel %vm2722, %v2725, %v2728
    %v2730 = vsel %vm2719, nan, %v2729
    %v2731 = vand.u32 2147483647, %v536
    %vm2732 = vcmp.le.f32.partialorder %v2731, 0.7853982
    %vm2733 = vcmp.lt.s32.totalorder %v536, 0
    %v2734 = vand.u32 %v536, 2139095040
    %v2735 = vshrl.u32 %v2734, 23
    %v2736 = vsub.s32 %v2735, 127
    %v2737 = vand.u32 2147483647, %v536
    %v2738 = vand.u32 %v2737, 8388607
    %v2739 = vor.u32 %v2738, 8388608
    %v2740 = vsub.s32 0, %v2739
    %v2741 = vadd.s32 %v2736, 1
    %vm2742 = vcmp.gt.s32.totalorder %v2741, 0
    %v2743 = vsel %vm2742, %v2741, 0
    %v2744 = vshrl.u32 %v2743, 5
    %v2745 = vand.u32 %v2743, 31
    %v2746 = vsub.s32 32, %v2745
    %v2747 = vshrl.u32 683565275, %v2746
    %v2748 = vshll.u32 683565275, %v2745
    %v2749 = vshrl.u32 2475754826, %v2746
    %v2750 = vor.u32 %v2748, %v2749
    %v2751 = vshll.u32 2475754826, %v2745
    %v2752 = vshrl.u32 2131351028, %v2746
    %v2753 = vor.u32 %v2751, %v2752
    %v2754 = vshll.u32 2131351028, %v2745
    %v2755 = vshrl.u32 2102212464, %v2746
    %v2756 = vor.u32 %v2754, %v2755
    %v2757 = vshll.u32 2102212464, %v2745
    %v2758 = vshrl.u32 920167782, %v2746
    %v2759 = vor.u32 %v2757, %v2758
    %v2760 = vshll.u32 920167782, %v2745
    %v2761 = vshrl.u32 1326507024, %v2746
    %v2762 = vor.u32 %v2760, %v2761
    %vm2763 = vcmp.lt.s32.totalorder %v2744, 1
    %vm2764 = vcmp.lt.s32.totalorder %v2744, 2
    %vm2765 = vcmp.lt.s32.totalorder %v2744, 3
    %vm2766 = vcmp.lt.s32.totalorder %v2744, 4
    %v2767 = vsel %vm2763, %v2747, %v2750
    %v2768 = vsel %vm2766, %v2756, 2102212464
    %v2769 = vsel %vm2765, %v2753, %v2768
    %v2770 = vsel %vm2764, %v2767, %v2769
    %v2771 = vsel %vm2763, %v2750, %v2753
    %v2772 = vsel %vm2766, %v2759, 920167782
    %v2773 = vsel %vm2765, %v2756, %v2772
    %v2774 = vsel %vm2764, %v2771, %v2773
    %v2775 = vsel %vm2763, %v2753, %v2756
    %v2776 = vsel %vm2766, %v2762, 1326507024
    %v2777 = vsel %vm2765, %v2759, %v2776
    %v2778 = vsel %vm2764, %v2775, %v2777
    %v2779 = vshll.u32 %v2739, 8
    %v2780 = vmul.u32.u64.compose %v2779, %v2778
    %v2781 = vextract.low.u32 %v2780
    %v2782 = vextract.high.u32 %v2780
    %v2783 = vmul.u32.u64.compose %v2779, %v2774
    %v2784 = vextract.low.u32 %v2783
    %v2785 = vextract.high.u32 %v2783
    %v2786 = vmul.u32 %v2779, %v2770
    %v2787 = vadd.s32 %v2782, %v2784
    %vm2788 = vc.u32 %v2782, %v2784
    %v2789 = vadd.s32 %v2785, 1
    %v2790 = vsel %vm2788, %v2789, %v2785
    %v2791 = vadd.s32 %v2786, %v2790
    %v2792 = vadd.s32 %v2791, 536870912
    %v2793 = vshrl.u32 %v2792, 30
    %v2794 = vshll.u32 %v2793, 30
    %v2795 = vsub.s32 %v2791, %v2794
    %vm2796 = vcmp.lt.s32.totalorder %v2795, 0
    %v2797 = vsub.s32 0, %v2795
    %v2798 = vsel %vm2796, %v2797, %v2795
    %v2799 = vclz %v2798
    %v2800 = vsub.s32 %v2799, 2
    %vm2801 = vcmp.gt.s32.totalorder 0, %v2800
    %v2802 = vsel %vm2801, 0, %v2800
    %v2803 = vsub.s32 32, %v2802
    %v2804 = vshll.u32 %v2795, %v2802
    %v2805 = vshrl.u32 %v2787, %v2803
    %v2806 = vor.u32 %v2804, %v2805
    %v2807 = vsub.s32 4294967266, %v2802
    %v2808 = vadd.s32 %v2807, 127
    %v2809 = vshll.u32 %v2808, 23
    %v2810 = vor.u32 4788187, %v2809
    %v2811 = vand.u32 2147483647, %v2810
    %v2813 = vcvt.s32.f32 %v2806
    %v2814 = vmul.f32 %v2813, %v2811
    %v2815 = vxor.u32 %v2814, 2147483648
    %v2816 = vsel %vm2733, %v2815, %v2814
    %v2817 = vsub.s32 4, %v2793
    %v2818 = vsel %vm2733, %v2817, %v2793
    %v2819 = vsel %vm2732, %v536, %v2816
    %v2820 = vsel %vm2732, 0, %v2818
    %v2821 = vcosq.f32.pop %v2819
    %v2822 = vsinq.f32.pop %v2819
    %vm2823 = vweird.f32 %v536
    %v2824 = vadd.s32 %v2820, 3
    %v2825 = vand.u32 %v2824, 3
    %vm2826 = vcmp.lt.s32.totalorder %v2825, 2
    %vm2827 = vcmp.eq.s32.totalorder %v2825, 0
    %v2828 = vxor.u32 %v2822, 2147483648
    %v2829 = vsel %vm2827, %v2821, %v2828
    %vm2830 = vcmp.eq.s32.totalorder %v2825, 2
    %v2831 = vxor.u32 %v2821, 2147483648
    %v2832 = vsel %vm2830, %v2831, %v2822
    %v2833 = vsel %vm2826, %v2829, %v2832
    %v2834 = vsel %vm2823, nan, %v2833
    %v2835 = vand.u32 2147483647, %v537
    %vm2836 = vcmp.le.f32.partialorder %v2835, 0.7853982
    %vm2837 = vcmp.lt.s32.totalorder %v537, 0
    %v2838 = vand.u32 %v537, 2139095040
    %v2839 = vshrl.u32 %v2838, 23
    %v2840 = vsub.s32 %v2839, 127
    %v2841 = vand.u32 2147483647, %v537
    %v2842 = vand.u32 %v2841, 8388607
    %v2843 = vor.u32 %v2842, 8388608
    %v2844 = vsub.s32 0, %v2843
    %v2845 = vadd.s32 %v2840, 1
    %vm2846 = vcmp.gt.s32.totalorder %v2845, 0
    %v2847 = vsel %vm2846, %v2845, 0
    %v2848 = vshrl.u32 %v2847, 5
    %v2849 = vand.u32 %v2847, 31
    %v2850 = vsub.s32 32, %v2849
    %v2851 = vshrl.u32 683565275, %v2850
    %v2852 = vshll.u32 683565275, %v2849
    %v2853 = vshrl.u32 2475754826, %v2850
    %v2854 = vor.u32 %v2852, %v2853
    %v2855 = vshll.u32 2475754826, %v2849
    %v2856 = vshrl.u32 2131351028, %v2850
    %v2857 = vor.u32 %v2855, %v2856
    %v2858 = vshll.u32 2131351028, %v2849
    %v2859 = vshrl.u32 2102212464, %v2850
    %v2860 = vor.u32 %v2858, %v2859
    %v2861 = vshll.u32 2102212464, %v2849
    %v2862 = vshrl.u32 920167782, %v2850
    %v2863 = vor.u32 %v2861, %v2862
    %v2864 = vshll.u32 920167782, %v2849
    %v2865 = vshrl.u32 1326507024, %v2850
    %v2866 = vor.u32 %v2864, %v2865
    %vm2867 = vcmp.lt.s32.totalorder %v2848, 1
    %vm2868 = vcmp.lt.s32.totalorder %v2848, 2
    %vm2869 = vcmp.lt.s32.totalorder %v2848, 3
    %vm2870 = vcmp.lt.s32.totalorder %v2848, 4
    %v2871 = vsel %vm2867, %v2851, %v2854
    %v2872 = vsel %vm2870, %v2860, 2102212464
    %v2873 = vsel %vm2869, %v2857, %v2872
    %v2874 = vsel %vm2868, %v2871, %v2873
    %v2875 = vsel %vm2867, %v2854, %v2857
    %v2876 = vsel %vm2870, %v2863, 920167782
    %v2877 = vsel %vm2869, %v2860, %v2876
    %v2878 = vsel %vm2868, %v2875, %v2877
    %v2879 = vsel %vm2867, %v2857, %v2860
    %v2880 = vsel %vm2870, %v2866, 1326507024
    %v2881 = vsel %vm2869, %v2863, %v2880
    %v2882 = vsel %vm2868, %v2879, %v2881
    %v2883 = vshll.u32 %v2843, 8
    %v2884 = vmul.u32.u64.compose %v2883, %v2882
    %v2885 = vextract.low.u32 %v2884
    %v2886 = vextract.high.u32 %v2884
    %v2887 = vmul.u32.u64.compose %v2883, %v2878
    %v2888 = vextract.low.u32 %v2887
    %v2889 = vextract.high.u32 %v2887
    %v2890 = vmul.u32 %v2883, %v2874
    %v2891 = vadd.s32 %v2886, %v2888
    %vm2892 = vc.u32 %v2886, %v2888
    %v2893 = vadd.s32 %v2889, 1
    %v2894 = vsel %vm2892, %v2893, %v2889
    %v2895 = vadd.s32 %v2890, %v2894
    %v2896 = vadd.s32 %v2895, 536870912
    %v2897 = vshrl.u32 %v2896, 30
    %v2898 = vshll.u32 %v2897, 30
    %v2899 = vsub.s32 %v2895, %v2898
    %vm2900 = vcmp.lt.s32.totalorder %v2899, 0
    %v2901 = vsub.s32 0, %v2899
    %v2902 = vsel %vm2900, %v2901, %v2899
    %v2903 = vclz %v2902
    %v2904 = vsub.s32 %v2903, 2
    %vm2905 = vcmp.gt.s32.totalorder 0, %v2904
    %v2906 = vsel %vm2905, 0, %v2904
    %v2907 = vsub.s32 32, %v2906
    %v2908 = vshll.u32 %v2899, %v2906
    %v2909 = vshrl.u32 %v2891, %v2907
    %v2910 = vor.u32 %v2908, %v2909
    %v2911 = vsub.s32 4294967266, %v2906
    %v2912 = vadd.s32 %v2911, 127
    %v2913 = vshll.u32 %v2912, 23
    %v2914 = vor.u32 4788187, %v2913
    %v2915 = vand.u32 2147483647, %v2914
    %v2917 = vcvt.s32.f32 %v2910
    %v2918 = vmul.f32 %v2917, %v2915
    %v2919 = vxor.u32 %v2918, 2147483648
    %v2920 = vsel %vm2837, %v2919, %v2918
    %v2921 = vsub.s32 4, %v2897
    %v2922 = vsel %vm2837, %v2921, %v2897
    %v2923 = vsel %vm2836, %v537, %v2920
    %v2924 = vsel %vm2836, 0, %v2922
    %v2925 = vcosq.f32.pop %v2923
    %v2926 = vsinq.f32.pop %v2923
    %vm2927 = vweird.f32 %v537
    %v2928 = vadd.s32 %v2924, 3
    %v2929 = vand.u32 %v2928, 3
    %vm2930 = vcmp.lt.s32.totalorder %v2929, 2
    %vm2931 = vcmp.eq.s32.totalorder %v2929, 0
    %v2932 = vxor.u32 %v2926, 2147483648
    %v2933 = vsel %vm2931, %v2925, %v2932
    %vm2934 = vcmp.eq.s32.totalorder %v2929, 2
    %v2935 = vxor.u32 %v2925, 2147483648
    %v2936 = vsel %vm2934, %v2935, %v2926
    %v2937 = vsel %vm2930, %v2933, %v2936
    %v2938 = vsel %vm2927, nan, %v2937
    %v2939 = vand.u32 2147483647, %v538
    %vm2940 = vcmp.le.f32.partialorder %v2939, 0.7853982
    %vm2941 = vcmp.lt.s32.totalorder %v538, 0
    %v2942 = vand.u32 %v538, 2139095040
    %v2943 = vshrl.u32 %v2942, 23
    %v2944 = vsub.s32 %v2943, 127
    %v2945 = vand.u32 2147483647, %v538
    %v2946 = vand.u32 %v2945, 8388607
    %v2947 = vor.u32 %v2946, 8388608
    %v2948 = vsub.s32 0, %v2947
    %v2949 = vadd.s32 %v2944, 1
    %vm2950 = vcmp.gt.s32.totalorder %v2949, 0
    %v2951 = vsel %vm2950, %v2949, 0
    %v2952 = vshrl.u32 %v2951, 5
    %v2953 = vand.u32 %v2951, 31
    %v2954 = vsub.s32 32, %v2953
    %v2955 = vshrl.u32 683565275, %v2954
    %v2956 = vshll.u32 683565275, %v2953
    %v2957 = vshrl.u32 2475754826, %v2954
    %v2958 = vor.u32 %v2956, %v2957
    %v2959 = vshll.u32 2475754826, %v2953
    %v2960 = vshrl.u32 2131351028, %v2954
    %v2961 = vor.u32 %v2959, %v2960
    %v2962 = vshll.u32 2131351028, %v2953
    %v2963 = vshrl.u32 2102212464, %v2954
    %v2964 = vor.u32 %v2962, %v2963
    %v2965 = vshll.u32 2102212464, %v2953
    %v2966 = vshrl.u32 920167782, %v2954
    %v2967 = vor.u32 %v2965, %v2966
    %v2968 = vshll.u32 920167782, %v2953
    %v2969 = vshrl.u32 1326507024, %v2954
    %v2970 = vor.u32 %v2968, %v2969
    %vm2971 = vcmp.lt.s32.totalorder %v2952, 1
    %vm2972 = vcmp.lt.s32.totalorder %v2952, 2
    %vm2973 = vcmp.lt.s32.totalorder %v2952, 3
    %vm2974 = vcmp.lt.s32.totalorder %v2952, 4
    %v2975 = vsel %vm2971, %v2955, %v2958
    %v2976 = vsel %vm2974, %v2964, 2102212464
    %v2977 = vsel %vm2973, %v2961, %v2976
    %v2978 = vsel %vm2972, %v2975, %v2977
    %v2979 = vsel %vm2971, %v2958, %v2961
    %v2980 = vsel %vm2974, %v2967, 920167782
    %v2981 = vsel %vm2973, %v2964, %v2980
    %v2982 = vsel %vm2972, %v2979, %v2981
    %v2983 = vsel %vm2971, %v2961, %v2964
    %v2984 = vsel %vm2974, %v2970, 1326507024
    %v2985 = vsel %vm2973, %v2967, %v2984
    %v2986 = vsel %vm2972, %v2983, %v2985
    %v2987 = vshll.u32 %v2947, 8
    %v2988 = vmul.u32.u64.compose %v2987, %v2986
    %v2989 = vextract.low.u32 %v2988
    %v2990 = vextract.high.u32 %v2988
    %v2991 = vmul.u32.u64.compose %v2987, %v2982
    %v2992 = vextract.low.u32 %v2991
    %v2993 = vextract.high.u32 %v2991
    %v2994 = vmul.u32 %v2987, %v2978
    %v2995 = vadd.s32 %v2990, %v2992
    %vm2996 = vc.u32 %v2990, %v2992
    %v2997 = vadd.s32 %v2993, 1
    %v2998 = vsel %vm2996, %v2997, %v2993
    %v2999 = vadd.s32 %v2994, %v2998
    %v3000 = vadd.s32 %v2999, 536870912
    %v3001 = vshrl.u32 %v3000, 30
    %v3002 = vshll.u32 %v3001, 30
    %v3003 = vsub.s32 %v2999, %v3002
    %vm3004 = vcmp.lt.s32.totalorder %v3003, 0
    %v3005 = vsub.s32 0, %v3003
    %v3006 = vsel %vm3004, %v3005, %v3003
    %v3007 = vclz %v3006
    %v3008 = vsub.s32 %v3007, 2
    %vm3009 = vcmp.gt.s32.totalorder 0, %v3008
    %v3010 = vsel %vm3009, 0, %v3008
    %v3011 = vsub.s32 32, %v3010
    %v3012 = vshll.u32 %v3003, %v3010
    %v3013 = vshrl.u32 %v2995, %v3011
    %v3014 = vor.u32 %v3012, %v3013
    %v3015 = vsub.s32 4294967266, %v3010
    %v3016 = vadd.s32 %v3015, 127
    %v3017 = vshll.u32 %v3016, 23
    %v3018 = vor.u32 4788187, %v3017
    %v3019 = vand.u32 2147483647, %v3018
    %v3021 = vcvt.s32.f32 %v3014
    %v3022 = vmul.f32 %v3021, %v3019
    %v3023 = vxor.u32 %v3022, 2147483648
    %v3024 = vsel %vm2941, %v3023, %v3022
    %v3025 = vsub.s32 4, %v3001
    %v3026 = vsel %vm2941, %v3025, %v3001
    %v3027 = vsel %vm2940, %v538, %v3024
    %v3028 = vsel %vm2940, 0, %v3026
    %v3029 = vcosq.f32.pop %v3027
    %v3030 = vsinq.f32.pop %v3027
    %vm3031 = vweird.f32 %v538
    %v3032 = vadd.s32 %v3028, 3
    %v3033 = vand.u32 %v3032, 3
    %vm3034 = vcmp.lt.s32.totalorder %v3033, 2
    %vm3035 = vcmp.eq.s32.totalorder %v3033, 0
    %v3036 = vxor.u32 %v3030, 2147483648
    %v3037 = vsel %vm3035, %v3029, %v3036
    %vm3038 = vcmp.eq.s32.totalorder %v3033, 2
    %v3039 = vxor.u32 %v3029, 2147483648
    %v3040 = vsel %vm3038, %v3039, %v3030
    %v3041 = vsel %vm3034, %v3037, %v3040
    %v3042 = vsel %vm3031, nan, %v3041
    %v3043 = vand.u32 2147483647, %v539
    %vm3044 = vcmp.le.f32.partialorder %v3043, 0.7853982
    %vm3045 = vcmp.lt.s32.totalorder %v539, 0
    %v3046 = vand.u32 %v539, 2139095040
    %v3047 = vshrl.u32 %v3046, 23
    %v3048 = vsub.s32 %v3047, 127
    %v3049 = vand.u32 2147483647, %v539
    %v3050 = vand.u32 %v3049, 8388607
    %v3051 = vor.u32 %v3050, 8388608
    %v3052 = vsub.s32 0, %v3051
    %v3053 = vadd.s32 %v3048, 1
    %vm3054 = vcmp.gt.s32.totalorder %v3053, 0
    %v3055 = vsel %vm3054, %v3053, 0
    %v3056 = vshrl.u32 %v3055, 5
    %v3057 = vand.u32 %v3055, 31
    %v3058 = vsub.s32 32, %v3057
    %v3059 = vshrl.u32 683565275, %v3058
    %v3060 = vshll.u32 683565275, %v3057
    %v3061 = vshrl.u32 2475754826, %v3058
    %v3062 = vor.u32 %v3060, %v3061
    %v3063 = vshll.u32 2475754826, %v3057
    %v3064 = vshrl.u32 2131351028, %v3058
    %v3065 = vor.u32 %v3063, %v3064
    %v3066 = vshll.u32 2131351028, %v3057
    %v3067 = vshrl.u32 2102212464, %v3058
    %v3068 = vor.u32 %v3066, %v3067
    %v3069 = vshll.u32 2102212464, %v3057
    %v3070 = vshrl.u32 920167782, %v3058
    %v3071 = vor.u32 %v3069, %v3070
    %v3072 = vshll.u32 920167782, %v3057
    %v3073 = vshrl.u32 1326507024, %v3058
    %v3074 = vor.u32 %v3072, %v3073
    %vm3075 = vcmp.lt.s32.totalorder %v3056, 1
    %vm3076 = vcmp.lt.s32.totalorder %v3056, 2
    %vm3077 = vcmp.lt.s32.totalorder %v3056, 3
    %vm3078 = vcmp.lt.s32.totalorder %v3056, 4
    %v3079 = vsel %vm3075, %v3059, %v3062
    %v3080 = vsel %vm3078, %v3068, 2102212464
    %v3081 = vsel %vm3077, %v3065, %v3080
    %v3082 = vsel %vm3076, %v3079, %v3081
    %v3083 = vsel %vm3075, %v3062, %v3065
    %v3084 = vsel %vm3078, %v3071, 920167782
    %v3085 = vsel %vm3077, %v3068, %v3084
    %v3086 = vsel %vm3076, %v3083, %v3085
    %v3087 = vsel %vm3075, %v3065, %v3068
    %v3088 = vsel %vm3078, %v3074, 1326507024
    %v3089 = vsel %vm3077, %v3071, %v3088
    %v3090 = vsel %vm3076, %v3087, %v3089
    %v3091 = vshll.u32 %v3051, 8
    %v3092 = vmul.u32.u64.compose %v3091, %v3090
    %v3093 = vextract.low.u32 %v3092
    %v3094 = vextract.high.u32 %v3092
    %v3095 = vmul.u32.u64.compose %v3091, %v3086
    %v3096 = vextract.low.u32 %v3095
    %v3097 = vextract.high.u32 %v3095
    %v3098 = vmul.u32 %v3091, %v3082
    %v3099 = vadd.s32 %v3094, %v3096
    %vm3100 = vc.u32 %v3094, %v3096
    %v3101 = vadd.s32 %v3097, 1
    %v3102 = vsel %vm3100, %v3101, %v3097
    %v3103 = vadd.s32 %v3098, %v3102
    %v3104 = vadd.s32 %v3103, 536870912
    %v3105 = vshrl.u32 %v3104, 30
    %v3106 = vshll.u32 %v3105, 30
    %v3107 = vsub.s32 %v3103, %v3106
    %vm3108 = vcmp.lt.s32.totalorder %v3107, 0
    %v3109 = vsub.s32 0, %v3107
    %v3110 = vsel %vm3108, %v3109, %v3107
    %v3111 = vclz %v3110
    %v3112 = vsub.s32 %v3111, 2
    %vm3113 = vcmp.gt.s32.totalorder 0, %v3112
    %v3114 = vsel %vm3113, 0, %v3112
    %v3115 = vsub.s32 32, %v3114
    %v3116 = vshll.u32 %v3107, %v3114
    %v3117 = vshrl.u32 %v3099, %v3115
    %v3118 = vor.u32 %v3116, %v3117
    %v3119 = vsub.s32 4294967266, %v3114
    %v3120 = vadd.s32 %v3119, 127
    %v3121 = vshll.u32 %v3120, 23
    %v3122 = vor.u32 4788187, %v3121
    %v3123 = vand.u32 2147483647, %v3122
    %v3125 = vcvt.s32.f32 %v3118
    %v3126 = vmul.f32 %v3125, %v3123
    %v3127 = vxor.u32 %v3126, 2147483648
    %v3128 = vsel %vm3045, %v3127, %v3126
    %v3129 = vsub.s32 4, %v3105
    %v3130 = vsel %vm3045, %v3129, %v3105
    %v3131 = vsel %vm3044, %v539, %v3128
    %v3132 = vsel %vm3044, 0, %v3130
    %v3133 = vcosq.f32.pop %v3131
    %v3134 = vsinq.f32.pop %v3131
    %vm3135 = vweird.f32 %v539
    %v3136 = vadd.s32 %v3132, 3
    %v3137 = vand.u32 %v3136, 3
    %vm3138 = vcmp.lt.s32.totalorder %v3137, 2
    %vm3139 = vcmp.eq.s32.totalorder %v3137, 0
    %v3140 = vxor.u32 %v3134, 2147483648
    %v3141 = vsel %vm3139, %v3133, %v3140
    %vm3142 = vcmp.eq.s32.totalorder %v3137, 2
    %v3143 = vxor.u32 %v3133, 2147483648
    %v3144 = vsel %vm3142, %v3143, %v3134
    %v3145 = vsel %vm3138, %v3141, %v3144
    %v3146 = vsel %vm3135, nan, %v3145
    %v3147 = vand.u32 2147483647, %v540
    %vm3148 = vcmp.le.f32.partialorder %v3147, 0.7853982
    %vm3149 = vcmp.lt.s32.totalorder %v540, 0
    %v3150 = vand.u32 %v540, 2139095040
    %v3151 = vshrl.u32 %v3150, 23
    %v3152 = vsub.s32 %v3151, 127
    %v3153 = vand.u32 2147483647, %v540
    %v3154 = vand.u32 %v3153, 8388607
    %v3155 = vor.u32 %v3154, 8388608
    %v3156 = vsub.s32 0, %v3155
    %v3157 = vadd.s32 %v3152, 1
    %vm3158 = vcmp.gt.s32.totalorder %v3157, 0
    %v3159 = vsel %vm3158, %v3157, 0
    %v3160 = vshrl.u32 %v3159, 5
    %v3161 = vand.u32 %v3159, 31
    %v3162 = vsub.s32 32, %v3161
    %v3163 = vshrl.u32 683565275, %v3162
    %v3164 = vshll.u32 683565275, %v3161
    %v3165 = vshrl.u32 2475754826, %v3162
    %v3166 = vor.u32 %v3164, %v3165
    %v3167 = vshll.u32 2475754826, %v3161
    %v3168 = vshrl.u32 2131351028, %v3162
    %v3169 = vor.u32 %v3167, %v3168
    %v3170 = vshll.u32 2131351028, %v3161
    %v3171 = vshrl.u32 2102212464, %v3162
    %v3172 = vor.u32 %v3170, %v3171
    %v3173 = vshll.u32 2102212464, %v3161
    %v3174 = vshrl.u32 920167782, %v3162
    %v3175 = vor.u32 %v3173, %v3174
    %v3176 = vshll.u32 920167782, %v3161
    %v3177 = vshrl.u32 1326507024, %v3162
    %v3178 = vor.u32 %v3176, %v3177
    %vm3179 = vcmp.lt.s32.totalorder %v3160, 1
    %vm3180 = vcmp.lt.s32.totalorder %v3160, 2
    %vm3181 = vcmp.lt.s32.totalorder %v3160, 3
    %vm3182 = vcmp.lt.s32.totalorder %v3160, 4
    %v3183 = vsel %vm3179, %v3163, %v3166
    %v3184 = vsel %vm3182, %v3172, 2102212464
    %v3185 = vsel %vm3181, %v3169, %v3184
    %v3186 = vsel %vm3180, %v3183, %v3185
    %v3187 = vsel %vm3179, %v3166, %v3169
    %v3188 = vsel %vm3182, %v3175, 920167782
    %v3189 = vsel %vm3181, %v3172, %v3188
    %v3190 = vsel %vm3180, %v3187, %v3189
    %v3191 = vsel %vm3179, %v3169, %v3172
    %v3192 = vsel %vm3182, %v3178, 1326507024
    %v3193 = vsel %vm3181, %v3175, %v3192
    %v3194 = vsel %vm3180, %v3191, %v3193
    %v3195 = vshll.u32 %v3155, 8
    %v3196 = vmul.u32.u64.compose %v3195, %v3194
    %v3197 = vextract.low.u32 %v3196
    %v3198 = vextract.high.u32 %v3196
    %v3199 = vmul.u32.u64.compose %v3195, %v3190
    %v3200 = vextract.low.u32 %v3199
    %v3201 = vextract.high.u32 %v3199
    %v3202 = vmul.u32 %v3195, %v3186
    %v3203 = vadd.s32 %v3198, %v3200
    %vm3204 = vc.u32 %v3198, %v3200
    %v3205 = vadd.s32 %v3201, 1
    %v3206 = vsel %vm3204, %v3205, %v3201
    %v3207 = vadd.s32 %v3202, %v3206
    %v3208 = vadd.s32 %v3207, 536870912
    %v3209 = vshrl.u32 %v3208, 30
    %v3210 = vshll.u32 %v3209, 30
    %v3211 = vsub.s32 %v3207, %v3210
    %vm3212 = vcmp.lt.s32.totalorder %v3211, 0
    %v3213 = vsub.s32 0, %v3211
    %v3214 = vsel %vm3212, %v3213, %v3211
    %v3215 = vclz %v3214
    %v3216 = vsub.s32 %v3215, 2
    %vm3217 = vcmp.gt.s32.totalorder 0, %v3216
    %v3218 = vsel %vm3217, 0, %v3216
    %v3219 = vsub.s32 32, %v3218
    %v3220 = vshll.u32 %v3211, %v3218
    %v3221 = vshrl.u32 %v3203, %v3219
    %v3222 = vor.u32 %v3220, %v3221
    %v3223 = vsub.s32 4294967266, %v3218
    %v3224 = vadd.s32 %v3223, 127
    %v3225 = vshll.u32 %v3224, 23
    %v3226 = vor.u32 4788187, %v3225
    %v3227 = vand.u32 2147483647, %v3226
    %v3229 = vcvt.s32.f32 %v3222
    %v3230 = vmul.f32 %v3229, %v3227
    %v3231 = vxor.u32 %v3230, 2147483648
    %v3232 = vsel %vm3149, %v3231, %v3230
    %v3233 = vsub.s32 4, %v3209
    %v3234 = vsel %vm3149, %v3233, %v3209
    %v3235 = vsel %vm3148, %v540, %v3232
    %v3236 = vsel %vm3148, 0, %v3234
    %v3237 = vcosq.f32.pop %v3235
    %v3238 = vsinq.f32.pop %v3235
    %vm3239 = vweird.f32 %v540
    %v3240 = vadd.s32 %v3236, 3
    %v3241 = vand.u32 %v3240, 3
    %vm3242 = vcmp.lt.s32.totalorder %v3241, 2
    %vm3243 = vcmp.eq.s32.totalorder %v3241, 0
    %v3244 = vxor.u32 %v3238, 2147483648
    %v3245 = vsel %vm3243, %v3237, %v3244
    %vm3246 = vcmp.eq.s32.totalorder %v3241, 2
    %v3247 = vxor.u32 %v3237, 2147483648
    %v3248 = vsel %vm3246, %v3247, %v3238
    %v3249 = vsel %vm3242, %v3245, %v3248
    %v3250 = vsel %vm3239, nan, %v3249
    %v3251 = vand.u32 2147483647, %v541
    %vm3252 = vcmp.le.f32.partialorder %v3251, 0.7853982
    %vm3253 = vcmp.lt.s32.totalorder %v541, 0
    %v3254 = vand.u32 %v541, 2139095040
    %v3255 = vshrl.u32 %v3254, 23
    %v3256 = vsub.s32 %v3255, 127
    %v3257 = vand.u32 2147483647, %v541
    %v3258 = vand.u32 %v3257, 8388607
    %v3259 = vor.u32 %v3258, 8388608
    %v3260 = vsub.s32 0, %v3259
    %v3261 = vadd.s32 %v3256, 1
    %vm3262 = vcmp.gt.s32.totalorder %v3261, 0
    %v3263 = vsel %vm3262, %v3261, 0
    %v3264 = vshrl.u32 %v3263, 5
    %v3265 = vand.u32 %v3263, 31
    %v3266 = vsub.s32 32, %v3265
    %v3267 = vshrl.u32 683565275, %v3266
    %v3268 = vshll.u32 683565275, %v3265
    %v3269 = vshrl.u32 2475754826, %v3266
    %v3270 = vor.u32 %v3268, %v3269
    %v3271 = vshll.u32 2475754826, %v3265
    %v3272 = vshrl.u32 2131351028, %v3266
    %v3273 = vor.u32 %v3271, %v3272
    %v3274 = vshll.u32 2131351028, %v3265
    %v3275 = vshrl.u32 2102212464, %v3266
    %v3276 = vor.u32 %v3274, %v3275
    %v3277 = vshll.u32 2102212464, %v3265
    %v3278 = vshrl.u32 920167782, %v3266
    %v3279 = vor.u32 %v3277, %v3278
    %v3280 = vshll.u32 920167782, %v3265
    %v3281 = vshrl.u32 1326507024, %v3266
    %v3282 = vor.u32 %v3280, %v3281
    %vm3283 = vcmp.lt.s32.totalorder %v3264, 1
    %vm3284 = vcmp.lt.s32.totalorder %v3264, 2
    %vm3285 = vcmp.lt.s32.totalorder %v3264, 3
    %vm3286 = vcmp.lt.s32.totalorder %v3264, 4
    %v3287 = vsel %vm3283, %v3267, %v3270
    %v3288 = vsel %vm3286, %v3276, 2102212464
    %v3289 = vsel %vm3285, %v3273, %v3288
    %v3290 = vsel %vm3284, %v3287, %v3289
    %v3291 = vsel %vm3283, %v3270, %v3273
    %v3292 = vsel %vm3286, %v3279, 920167782
    %v3293 = vsel %vm3285, %v3276, %v3292
    %v3294 = vsel %vm3284, %v3291, %v3293
    %v3295 = vsel %vm3283, %v3273, %v3276
    %v3296 = vsel %vm3286, %v3282, 1326507024
    %v3297 = vsel %vm3285, %v3279, %v3296
    %v3298 = vsel %vm3284, %v3295, %v3297
    %v3299 = vshll.u32 %v3259, 8
    %v3300 = vmul.u32.u64.compose %v3299, %v3298
    %v3301 = vextract.low.u32 %v3300
    %v3302 = vextract.high.u32 %v3300
    %v3303 = vmul.u32.u64.compose %v3299, %v3294
    %v3304 = vextract.low.u32 %v3303
    %v3305 = vextract.high.u32 %v3303
    %v3306 = vmul.u32 %v3299, %v3290
    %v3307 = vadd.s32 %v3302, %v3304
    %vm3308 = vc.u32 %v3302, %v3304
    %v3309 = vadd.s32 %v3305, 1
    %v3310 = vsel %vm3308, %v3309, %v3305
    %v3311 = vadd.s32 %v3306, %v3310
    %v3312 = vadd.s32 %v3311, 536870912
    %v3313 = vshrl.u32 %v3312, 30
    %v3314 = vshll.u32 %v3313, 30
    %v3315 = vsub.s32 %v3311, %v3314
    %vm3316 = vcmp.lt.s32.totalorder %v3315, 0
    %v3317 = vsub.s32 0, %v3315
    %v3318 = vsel %vm3316, %v3317, %v3315
    %v3319 = vclz %v3318
    %v3320 = vsub.s32 %v3319, 2
    %vm3321 = vcmp.gt.s32.totalorder 0, %v3320
    %v3322 = vsel %vm3321, 0, %v3320
    %v3323 = vsub.s32 32, %v3322
    %v3324 = vshll.u32 %v3315, %v3322
    %v3325 = vshrl.u32 %v3307, %v3323
    %v3326 = vor.u32 %v3324, %v3325
    %v3327 = vsub.s32 4294967266, %v3322
    %v3328 = vadd.s32 %v3327, 127
    %v3329 = vshll.u32 %v3328, 23
    %v3330 = vor.u32 4788187, %v3329
    %v3331 = vand.u32 2147483647, %v3330
    %v3333 = vcvt.s32.f32 %v3326
    %v3334 = vmul.f32 %v3333, %v3331
    %v3335 = vxor.u32 %v3334, 2147483648
    %v3336 = vsel %vm3253, %v3335, %v3334
    %v3337 = vsub.s32 4, %v3313
    %v3338 = vsel %vm3253, %v3337, %v3313
    %v3339 = vsel %vm3252, %v541, %v3336
    %v3340 = vsel %vm3252, 0, %v3338
    %v3341 = vcosq.f32.pop %v3339
    %v3342 = vsinq.f32.pop %v3339
    %vm3343 = vweird.f32 %v541
    %v3344 = vadd.s32 %v3340, 3
    %v3345 = vand.u32 %v3344, 3
    %vm3346 = vcmp.lt.s32.totalorder %v3345, 2
    %vm3347 = vcmp.eq.s32.totalorder %v3345, 0
    %v3348 = vxor.u32 %v3342, 2147483648
    %v3349 = vsel %vm3347, %v3341, %v3348
    %vm3350 = vcmp.eq.s32.totalorder %v3345, 2
    %v3351 = vxor.u32 %v3341, 2147483648
    %v3352 = vsel %vm3350, %v3351, %v3342
    %v3353 = vsel %vm3346, %v3349, %v3352
    %v3354 = vsel %vm3343, nan, %v3353
    %v3355 = vand.u32 2147483647, %v542
    %vm3356 = vcmp.le.f32.partialorder %v3355, 0.7853982
    %vm3357 = vcmp.lt.s32.totalorder %v542, 0
    %v3358 = vand.u32 %v542, 2139095040
    %v3359 = vshrl.u32 %v3358, 23
    %v3360 = vsub.s32 %v3359, 127
    %v3361 = vand.u32 2147483647, %v542
    %v3362 = vand.u32 %v3361, 8388607
    %v3363 = vor.u32 %v3362, 8388608
    %v3364 = vsub.s32 0, %v3363
    %v3365 = vadd.s32 %v3360, 1
    %vm3366 = vcmp.gt.s32.totalorder %v3365, 0
    %v3367 = vsel %vm3366, %v3365, 0
    %v3368 = vshrl.u32 %v3367, 5
    %v3369 = vand.u32 %v3367, 31
    %v3370 = vsub.s32 32, %v3369
    %v3371 = vshrl.u32 683565275, %v3370
    %v3372 = vshll.u32 683565275, %v3369
    %v3373 = vshrl.u32 2475754826, %v3370
    %v3374 = vor.u32 %v3372, %v3373
    %v3375 = vshll.u32 2475754826, %v3369
    %v3376 = vshrl.u32 2131351028, %v3370
    %v3377 = vor.u32 %v3375, %v3376
    %v3378 = vshll.u32 2131351028, %v3369
    %v3379 = vshrl.u32 2102212464, %v3370
    %v3380 = vor.u32 %v3378, %v3379
    %v3381 = vshll.u32 2102212464, %v3369
    %v3382 = vshrl.u32 920167782, %v3370
    %v3383 = vor.u32 %v3381, %v3382
    %v3384 = vshll.u32 920167782, %v3369
    %v3385 = vshrl.u32 1326507024, %v3370
    %v3386 = vor.u32 %v3384, %v3385
    %vm3387 = vcmp.lt.s32.totalorder %v3368, 1
    %vm3388 = vcmp.lt.s32.totalorder %v3368, 2
    %vm3389 = vcmp.lt.s32.totalorder %v3368, 3
    %vm3390 = vcmp.lt.s32.totalorder %v3368, 4
    %v3391 = vsel %vm3387, %v3371, %v3374
    %v3392 = vsel %vm3390, %v3380, 2102212464
    %v3393 = vsel %vm3389, %v3377, %v3392
    %v3394 = vsel %vm3388, %v3391, %v3393
    %v3395 = vsel %vm3387, %v3374, %v3377
    %v3396 = vsel %vm3390, %v3383, 920167782
    %v3397 = vsel %vm3389, %v3380, %v3396
    %v3398 = vsel %vm3388, %v3395, %v3397
    %v3399 = vsel %vm3387, %v3377, %v3380
    %v3400 = vsel %vm3390, %v3386, 1326507024
    %v3401 = vsel %vm3389, %v3383, %v3400
    %v3402 = vsel %vm3388, %v3399, %v3401
    %v3403 = vshll.u32 %v3363, 8
    %v3404 = vmul.u32.u64.compose %v3403, %v3402
    %v3405 = vextract.low.u32 %v3404
    %v3406 = vextract.high.u32 %v3404
    %v3407 = vmul.u32.u64.compose %v3403, %v3398
    %v3408 = vextract.low.u32 %v3407
    %v3409 = vextract.high.u32 %v3407
    %v3410 = vmul.u32 %v3403, %v3394
    %v3411 = vadd.s32 %v3406, %v3408
    %vm3412 = vc.u32 %v3406, %v3408
    %v3413 = vadd.s32 %v3409, 1
    %v3414 = vsel %vm3412, %v3413, %v3409
    %v3415 = vadd.s32 %v3410, %v3414
    %v3416 = vadd.s32 %v3415, 536870912
    %v3417 = vshrl.u32 %v3416, 30
    %v3418 = vshll.u32 %v3417, 30
    %v3419 = vsub.s32 %v3415, %v3418
    %vm3420 = vcmp.lt.s32.totalorder %v3419, 0
    %v3421 = vsub.s32 0, %v3419
    %v3422 = vsel %vm3420, %v3421, %v3419
    %v3423 = vclz %v3422
    %v3424 = vsub.s32 %v3423, 2
    %vm3425 = vcmp.gt.s32.totalorder 0, %v3424
    %v3426 = vsel %vm3425, 0, %v3424
    %v3427 = vsub.s32 32, %v3426
    %v3428 = vshll.u32 %v3419, %v3426
    %v3429 = vshrl.u32 %v3411, %v3427
    %v3430 = vor.u32 %v3428, %v3429
    %v3431 = vsub.s32 4294967266, %v3426
    %v3432 = vadd.s32 %v3431, 127
    %v3433 = vshll.u32 %v3432, 23
    %v3434 = vor.u32 4788187, %v3433
    %v3435 = vand.u32 2147483647, %v3434
    %v3437 = vcvt.s32.f32 %v3430
    %v3438 = vmul.f32 %v3437, %v3435
    %v3439 = vxor.u32 %v3438, 2147483648
    %v3440 = vsel %vm3357, %v3439, %v3438
    %v3441 = vsub.s32 4, %v3417
    %v3442 = vsel %vm3357, %v3441, %v3417
    %v3443 = vsel %vm3356, %v542, %v3440
    %v3444 = vsel %vm3356, 0, %v3442
    %v3445 = vcosq.f32.pop %v3443
    %v3446 = vsinq.f32.pop %v3443
    %vm3447 = vweird.f32 %v542
    %v3448 = vadd.s32 %v3444, 3
    %v3449 = vand.u32 %v3448, 3
    %vm3450 = vcmp.lt.s32.totalorder %v3449, 2
    %vm3451 = vcmp.eq.s32.totalorder %v3449, 0
    %v3452 = vxor.u32 %v3446, 2147483648
    %v3453 = vsel %vm3451, %v3445, %v3452
    %vm3454 = vcmp.eq.s32.totalorder %v3449, 2
    %v3455 = vxor.u32 %v3445, 2147483648
    %v3456 = vsel %vm3454, %v3455, %v3446
    %v3457 = vsel %vm3450, %v3453, %v3456
    %v3458 = vsel %vm3447, nan, %v3457
    %v3459 = vand.u32 2147483647, %v543
    %vm3460 = vcmp.le.f32.partialorder %v3459, 0.7853982
    %vm3461 = vcmp.lt.s32.totalorder %v543, 0
    %v3462 = vand.u32 %v543, 2139095040
    %v3463 = vshrl.u32 %v3462, 23
    %v3464 = vsub.s32 %v3463, 127
    %v3465 = vand.u32 2147483647, %v543
    %v3466 = vand.u32 %v3465, 8388607
    %v3467 = vor.u32 %v3466, 8388608
    %v3468 = vsub.s32 0, %v3467
    %v3469 = vadd.s32 %v3464, 1
    %vm3470 = vcmp.gt.s32.totalorder %v3469, 0
    %v3471 = vsel %vm3470, %v3469, 0
    %v3472 = vshrl.u32 %v3471, 5
    %v3473 = vand.u32 %v3471, 31
    %v3474 = vsub.s32 32, %v3473
    %v3475 = vshrl.u32 683565275, %v3474
    %v3476 = vshll.u32 683565275, %v3473
    %v3477 = vshrl.u32 2475754826, %v3474
    %v3478 = vor.u32 %v3476, %v3477
    %v3479 = vshll.u32 2475754826, %v3473
    %v3480 = vshrl.u32 2131351028, %v3474
    %v3481 = vor.u32 %v3479, %v3480
    %v3482 = vshll.u32 2131351028, %v3473
    %v3483 = vshrl.u32 2102212464, %v3474
    %v3484 = vor.u32 %v3482, %v3483
    %v3485 = vshll.u32 2102212464, %v3473
    %v3486 = vshrl.u32 920167782, %v3474
    %v3487 = vor.u32 %v3485, %v3486
    %v3488 = vshll.u32 920167782, %v3473
    %v3489 = vshrl.u32 1326507024, %v3474
    %v3490 = vor.u32 %v3488, %v3489
    %vm3491 = vcmp.lt.s32.totalorder %v3472, 1
    %vm3492 = vcmp.lt.s32.totalorder %v3472, 2
    %vm3493 = vcmp.lt.s32.totalorder %v3472, 3
    %vm3494 = vcmp.lt.s32.totalorder %v3472, 4
    %v3495 = vsel %vm3491, %v3475, %v3478
    %v3496 = vsel %vm3494, %v3484, 2102212464
    %v3497 = vsel %vm3493, %v3481, %v3496
    %v3498 = vsel %vm3492, %v3495, %v3497
    %v3499 = vsel %vm3491, %v3478, %v3481
    %v3500 = vsel %vm3494, %v3487, 920167782
    %v3501 = vsel %vm3493, %v3484, %v3500
    %v3502 = vsel %vm3492, %v3499, %v3501
    %v3503 = vsel %vm3491, %v3481, %v3484
    %v3504 = vsel %vm3494, %v3490, 1326507024
    %v3505 = vsel %vm3493, %v3487, %v3504
    %v3506 = vsel %vm3492, %v3503, %v3505
    %v3507 = vshll.u32 %v3467, 8
    %v3508 = vmul.u32.u64.compose %v3507, %v3506
    %v3509 = vextract.low.u32 %v3508
    %v3510 = vextract.high.u32 %v3508
    %v3511 = vmul.u32.u64.compose %v3507, %v3502
    %v3512 = vextract.low.u32 %v3511
    %v3513 = vextract.high.u32 %v3511
    %v3514 = vmul.u32 %v3507, %v3498
    %v3515 = vadd.s32 %v3510, %v3512
    %vm3516 = vc.u32 %v3510, %v3512
    %v3517 = vadd.s32 %v3513, 1
    %v3518 = vsel %vm3516, %v3517, %v3513
    %v3519 = vadd.s32 %v3514, %v3518
    %v3520 = vadd.s32 %v3519, 536870912
    %v3521 = vshrl.u32 %v3520, 30
    %v3522 = vshll.u32 %v3521, 30
    %v3523 = vsub.s32 %v3519, %v3522
    %vm3524 = vcmp.lt.s32.totalorder %v3523, 0
    %v3525 = vsub.s32 0, %v3523
    %v3526 = vsel %vm3524, %v3525, %v3523
    %v3527 = vclz %v3526
    %v3528 = vsub.s32 %v3527, 2
    %vm3529 = vcmp.gt.s32.totalorder 0, %v3528
    %v3530 = vsel %vm3529, 0, %v3528
    %v3531 = vsub.s32 32, %v3530
    %v3532 = vshll.u32 %v3523, %v3530
    %v3533 = vshrl.u32 %v3515, %v3531
    %v3534 = vor.u32 %v3532, %v3533
    %v3535 = vsub.s32 4294967266, %v3530
    %v3536 = vadd.s32 %v3535, 127
    %v3537 = vshll.u32 %v3536, 23
    %v3538 = vor.u32 4788187, %v3537
    %v3539 = vand.u32 2147483647, %v3538
    %v3541 = vcvt.s32.f32 %v3534
    %v3542 = vmul.f32 %v3541, %v3539
    %v3543 = vxor.u32 %v3542, 2147483648
    %v3544 = vsel %vm3461, %v3543, %v3542
    %v3545 = vsub.s32 4, %v3521
    %v3546 = vsel %vm3461, %v3545, %v3521
    %v3547 = vsel %vm3460, %v543, %v3544
    %v3548 = vsel %vm3460, 0, %v3546
    %v3549 = vcosq.f32.pop %v3547
    %v3550 = vsinq.f32.pop %v3547
    %vm3551 = vweird.f32 %v543
    %v3552 = vadd.s32 %v3548, 3
    %v3553 = vand.u32 %v3552, 3
    %vm3554 = vcmp.lt.s32.totalorder %v3553, 2
    %vm3555 = vcmp.eq.s32.totalorder %v3553, 0
    %v3556 = vxor.u32 %v3550, 2147483648
    %v3557 = vsel %vm3555, %v3549, %v3556
    %vm3558 = vcmp.eq.s32.totalorder %v3553, 2
    %v3559 = vxor.u32 %v3549, 2147483648
    %v3560 = vsel %vm3558, %v3559, %v3550
    %v3561 = vsel %vm3554, %v3557, %v3560
    %v3562 = vsel %vm3551, nan, %v3561
    %v3563 = vand.u32 2147483647, %v544
    %vm3564 = vcmp.le.f32.partialorder %v3563, 0.7853982
    %vm3565 = vcmp.lt.s32.totalorder %v544, 0
    %v3566 = vand.u32 %v544, 2139095040
    %v3567 = vshrl.u32 %v3566, 23
    %v3568 = vsub.s32 %v3567, 127
    %v3569 = vand.u32 2147483647, %v544
    %v3570 = vand.u32 %v3569, 8388607
    %v3571 = vor.u32 %v3570, 8388608
    %v3572 = vsub.s32 0, %v3571
    %v3573 = vadd.s32 %v3568, 1
    %vm3574 = vcmp.gt.s32.totalorder %v3573, 0
    %v3575 = vsel %vm3574, %v3573, 0
    %v3576 = vshrl.u32 %v3575, 5
    %v3577 = vand.u32 %v3575, 31
    %v3578 = vsub.s32 32, %v3577
    %v3579 = vshrl.u32 683565275, %v3578
    %v3580 = vshll.u32 683565275, %v3577
    %v3581 = vshrl.u32 2475754826, %v3578
    %v3582 = vor.u32 %v3580, %v3581
    %v3583 = vshll.u32 2475754826, %v3577
    %v3584 = vshrl.u32 2131351028, %v3578
    %v3585 = vor.u32 %v3583, %v3584
    %v3586 = vshll.u32 2131351028, %v3577
    %v3587 = vshrl.u32 2102212464, %v3578
    %v3588 = vor.u32 %v3586, %v3587
    %v3589 = vshll.u32 2102212464, %v3577
    %v3590 = vshrl.u32 920167782, %v3578
    %v3591 = vor.u32 %v3589, %v3590
    %v3592 = vshll.u32 920167782, %v3577
    %v3593 = vshrl.u32 1326507024, %v3578
    %v3594 = vor.u32 %v3592, %v3593
    %vm3595 = vcmp.lt.s32.totalorder %v3576, 1
    %vm3596 = vcmp.lt.s32.totalorder %v3576, 2
    %vm3597 = vcmp.lt.s32.totalorder %v3576, 3
    %vm3598 = vcmp.lt.s32.totalorder %v3576, 4
    %v3599 = vsel %vm3595, %v3579, %v3582
    %v3600 = vsel %vm3598, %v3588, 2102212464
    %v3601 = vsel %vm3597, %v3585, %v3600
    %v3602 = vsel %vm3596, %v3599, %v3601
    %v3603 = vsel %vm3595, %v3582, %v3585
    %v3604 = vsel %vm3598, %v3591, 920167782
    %v3605 = vsel %vm3597, %v3588, %v3604
    %v3606 = vsel %vm3596, %v3603, %v3605
    %v3607 = vsel %vm3595, %v3585, %v3588
    %v3608 = vsel %vm3598, %v3594, 1326507024
    %v3609 = vsel %vm3597, %v3591, %v3608
    %v3610 = vsel %vm3596, %v3607, %v3609
    %v3611 = vshll.u32 %v3571, 8
    %v3612 = vmul.u32.u64.compose %v3611, %v3610
    %v3613 = vextract.low.u32 %v3612
    %v3614 = vextract.high.u32 %v3612
    %v3615 = vmul.u32.u64.compose %v3611, %v3606
    %v3616 = vextract.low.u32 %v3615
    %v3617 = vextract.high.u32 %v3615
    %v3618 = vmul.u32 %v3611, %v3602
    %v3619 = vadd.s32 %v3614, %v3616
    %vm3620 = vc.u32 %v3614, %v3616
    %v3621 = vadd.s32 %v3617, 1
    %v3622 = vsel %vm3620, %v3621, %v3617
    %v3623 = vadd.s32 %v3618, %v3622
    %v3624 = vadd.s32 %v3623, 536870912
    %v3625 = vshrl.u32 %v3624, 30
    %v3626 = vshll.u32 %v3625, 30
    %v3627 = vsub.s32 %v3623, %v3626
    %vm3628 = vcmp.lt.s32.totalorder %v3627, 0
    %v3629 = vsub.s32 0, %v3627
    %v3630 = vsel %vm3628, %v3629, %v3627
    %v3631 = vclz %v3630
    %v3632 = vsub.s32 %v3631, 2
    %vm3633 = vcmp.gt.s32.totalorder 0, %v3632
    %v3634 = vsel %vm3633, 0, %v3632
    %v3635 = vsub.s32 32, %v3634
    %v3636 = vshll.u32 %v3627, %v3634
    %v3637 = vshrl.u32 %v3619, %v3635
    %v3638 = vor.u32 %v3636, %v3637
    %v3639 = vsub.s32 4294967266, %v3634
    %v3640 = vadd.s32 %v3639, 127
    %v3641 = vshll.u32 %v3640, 23
    %v3642 = vor.u32 4788187, %v3641
    %v3643 = vand.u32 2147483647, %v3642
    %v3645 = vcvt.s32.f32 %v3638
    %v3646 = vmul.f32 %v3645, %v3643
    %v3647 = vxor.u32 %v3646, 2147483648
    %v3648 = vsel %vm3565, %v3647, %v3646
    %v3649 = vsub.s32 4, %v3625
    %v3650 = vsel %vm3565, %v3649, %v3625
    %v3651 = vsel %vm3564, %v544, %v3648
    %v3652 = vsel %vm3564, 0, %v3650
    %v3653 = vcosq.f32.pop %v3651
    %v3654 = vsinq.f32.pop %v3651
    %vm3655 = vweird.f32 %v544
    %v3656 = vadd.s32 %v3652, 3
    %v3657 = vand.u32 %v3656, 3
    %vm3658 = vcmp.lt.s32.totalorder %v3657, 2
    %vm3659 = vcmp.eq.s32.totalorder %v3657, 0
    %v3660 = vxor.u32 %v3654, 2147483648
    %v3661 = vsel %vm3659, %v3653, %v3660
    %vm3662 = vcmp.eq.s32.totalorder %v3657, 2
    %v3663 = vxor.u32 %v3653, 2147483648
    %v3664 = vsel %vm3662, %v3663, %v3654
    %v3665 = vsel %vm3658, %v3661, %v3664
    %v3666 = vsel %vm3655, nan, %v3665
    %v3667 = vand.u32 2147483647, %v545
    %vm3668 = vcmp.le.f32.partialorder %v3667, 0.7853982
    %vm3669 = vcmp.lt.s32.totalorder %v545, 0
    %v3670 = vand.u32 %v545, 2139095040
    %v3671 = vshrl.u32 %v3670, 23
    %v3672 = vsub.s32 %v3671, 127
    %v3673 = vand.u32 2147483647, %v545
    %v3674 = vand.u32 %v3673, 8388607
    %v3675 = vor.u32 %v3674, 8388608
    %v3676 = vsub.s32 0, %v3675
    %v3677 = vadd.s32 %v3672, 1
    %vm3678 = vcmp.gt.s32.totalorder %v3677, 0
    %v3679 = vsel %vm3678, %v3677, 0
    %v3680 = vshrl.u32 %v3679, 5
    %v3681 = vand.u32 %v3679, 31
    %v3682 = vsub.s32 32, %v3681
    %v3683 = vshrl.u32 683565275, %v3682
    %v3684 = vshll.u32 683565275, %v3681
    %v3685 = vshrl.u32 2475754826, %v3682
    %v3686 = vor.u32 %v3684, %v3685
    %v3687 = vshll.u32 2475754826, %v3681
    %v3688 = vshrl.u32 2131351028, %v3682
    %v3689 = vor.u32 %v3687, %v3688
    %v3690 = vshll.u32 2131351028, %v3681
    %v3691 = vshrl.u32 2102212464, %v3682
    %v3692 = vor.u32 %v3690, %v3691
    %v3693 = vshll.u32 2102212464, %v3681
    %v3694 = vshrl.u32 920167782, %v3682
    %v3695 = vor.u32 %v3693, %v3694
    %v3696 = vshll.u32 920167782, %v3681
    %v3697 = vshrl.u32 1326507024, %v3682
    %v3698 = vor.u32 %v3696, %v3697
    %vm3699 = vcmp.lt.s32.totalorder %v3680, 1
    %vm3700 = vcmp.lt.s32.totalorder %v3680, 2
    %vm3701 = vcmp.lt.s32.totalorder %v3680, 3
    %vm3702 = vcmp.lt.s32.totalorder %v3680, 4
    %v3703 = vsel %vm3699, %v3683, %v3686
    %v3704 = vsel %vm3702, %v3692, 2102212464
    %v3705 = vsel %vm3701, %v3689, %v3704
    %v3706 = vsel %vm3700, %v3703, %v3705
    %v3707 = vsel %vm3699, %v3686, %v3689
    %v3708 = vsel %vm3702, %v3695, 920167782
    %v3709 = vsel %vm3701, %v3692, %v3708
    %v3710 = vsel %vm3700, %v3707, %v3709
    %v3711 = vsel %vm3699, %v3689, %v3692
    %v3712 = vsel %vm3702, %v3698, 1326507024
    %v3713 = vsel %vm3701, %v3695, %v3712
    %v3714 = vsel %vm3700, %v3711, %v3713
    %v3715 = vshll.u32 %v3675, 8
    %v3716 = vmul.u32.u64.compose %v3715, %v3714
    %v3717 = vextract.low.u32 %v3716
    %v3718 = vextract.high.u32 %v3716
    %v3719 = vmul.u32.u64.compose %v3715, %v3710
    %v3720 = vextract.low.u32 %v3719
    %v3721 = vextract.high.u32 %v3719
    %v3722 = vmul.u32 %v3715, %v3706
    %v3723 = vadd.s32 %v3718, %v3720
    %vm3724 = vc.u32 %v3718, %v3720
    %v3725 = vadd.s32 %v3721, 1
    %v3726 = vsel %vm3724, %v3725, %v3721
    %v3727 = vadd.s32 %v3722, %v3726
    %v3728 = vadd.s32 %v3727, 536870912
    %v3729 = vshrl.u32 %v3728, 30
    %v3730 = vshll.u32 %v3729, 30
    %v3731 = vsub.s32 %v3727, %v3730
    %vm3732 = vcmp.lt.s32.totalorder %v3731, 0
    %v3733 = vsub.s32 0, %v3731
    %v3734 = vsel %vm3732, %v3733, %v3731
    %v3735 = vclz %v3734
    %v3736 = vsub.s32 %v3735, 2
    %vm3737 = vcmp.gt.s32.totalorder 0, %v3736
    %v3738 = vsel %vm3737, 0, %v3736
    %v3739 = vsub.s32 32, %v3738
    %v3740 = vshll.u32 %v3731, %v3738
    %v3741 = vshrl.u32 %v3723, %v3739
    %v3742 = vor.u32 %v3740, %v3741
    %v3743 = vsub.s32 4294967266, %v3738
    %v3744 = vadd.s32 %v3743, 127
    %v3745 = vshll.u32 %v3744, 23
    %v3746 = vor.u32 4788187, %v3745
    %v3747 = vand.u32 2147483647, %v3746
    %v3749 = vcvt.s32.f32 %v3742
    %v3750 = vmul.f32 %v3749, %v3747
    %v3751 = vxor.u32 %v3750, 2147483648
    %v3752 = vsel %vm3669, %v3751, %v3750
    %v3753 = vsub.s32 4, %v3729
    %v3754 = vsel %vm3669, %v3753, %v3729
    %v3755 = vsel %vm3668, %v545, %v3752
    %v3756 = vsel %vm3668, 0, %v3754
    %v3757 = vcosq.f32.pop %v3755
    %v3758 = vsinq.f32.pop %v3755
    %vm3759 = vweird.f32 %v545
    %v3760 = vadd.s32 %v3756, 3
    %v3761 = vand.u32 %v3760, 3
    %vm3762 = vcmp.lt.s32.totalorder %v3761, 2
    %vm3763 = vcmp.eq.s32.totalorder %v3761, 0
    %v3764 = vxor.u32 %v3758, 2147483648
    %v3765 = vsel %vm3763, %v3757, %v3764
    %vm3766 = vcmp.eq.s32.totalorder %v3761, 2
    %v3767 = vxor.u32 %v3757, 2147483648
    %v3768 = vsel %vm3766, %v3767, %v3758
    %v3769 = vsel %vm3762, %v3765, %v3768
    %v3770 = vsel %vm3759, nan, %v3769
    %v3771 = vand.u32 2147483647, %v546
    %vm3772 = vcmp.le.f32.partialorder %v3771, 0.7853982
    %vm3773 = vcmp.lt.s32.totalorder %v546, 0
    %v3774 = vand.u32 %v546, 2139095040
    %v3775 = vshrl.u32 %v3774, 23
    %v3776 = vsub.s32 %v3775, 127
    %v3777 = vand.u32 2147483647, %v546
    %v3778 = vand.u32 %v3777, 8388607
    %v3779 = vor.u32 %v3778, 8388608
    %v3780 = vsub.s32 0, %v3779
    %v3781 = vadd.s32 %v3776, 1
    %vm3782 = vcmp.gt.s32.totalorder %v3781, 0
    %v3783 = vsel %vm3782, %v3781, 0
    %v3784 = vshrl.u32 %v3783, 5
    %v3785 = vand.u32 %v3783, 31
    %v3786 = vsub.s32 32, %v3785
    %v3787 = vshrl.u32 683565275, %v3786
    %v3788 = vshll.u32 683565275, %v3785
    %v3789 = vshrl.u32 2475754826, %v3786
    %v3790 = vor.u32 %v3788, %v3789
    %v3791 = vshll.u32 2475754826, %v3785
    %v3792 = vshrl.u32 2131351028, %v3786
    %v3793 = vor.u32 %v3791, %v3792
    %v3794 = vshll.u32 2131351028, %v3785
    %v3795 = vshrl.u32 2102212464, %v3786
    %v3796 = vor.u32 %v3794, %v3795
    %v3797 = vshll.u32 2102212464, %v3785
    %v3798 = vshrl.u32 920167782, %v3786
    %v3799 = vor.u32 %v3797, %v3798
    %v3800 = vshll.u32 920167782, %v3785
    %v3801 = vshrl.u32 1326507024, %v3786
    %v3802 = vor.u32 %v3800, %v3801
    %vm3803 = vcmp.lt.s32.totalorder %v3784, 1
    %vm3804 = vcmp.lt.s32.totalorder %v3784, 2
    %vm3805 = vcmp.lt.s32.totalorder %v3784, 3
    %vm3806 = vcmp.lt.s32.totalorder %v3784, 4
    %v3807 = vsel %vm3803, %v3787, %v3790
    %v3808 = vsel %vm3806, %v3796, 2102212464
    %v3809 = vsel %vm3805, %v3793, %v3808
    %v3810 = vsel %vm3804, %v3807, %v3809
    %v3811 = vsel %vm3803, %v3790, %v3793
    %v3812 = vsel %vm3806, %v3799, 920167782
    %v3813 = vsel %vm3805, %v3796, %v3812
    %v3814 = vsel %vm3804, %v3811, %v3813
    %v3815 = vsel %vm3803, %v3793, %v3796
    %v3816 = vsel %vm3806, %v3802, 1326507024
    %v3817 = vsel %vm3805, %v3799, %v3816
    %v3818 = vsel %vm3804, %v3815, %v3817
    %v3819 = vshll.u32 %v3779, 8
    %v3820 = vmul.u32.u64.compose %v3819, %v3818
    %v3821 = vextract.low.u32 %v3820
    %v3822 = vextract.high.u32 %v3820
    %v3823 = vmul.u32.u64.compose %v3819, %v3814
    %v3824 = vextract.low.u32 %v3823
    %v3825 = vextract.high.u32 %v3823
    %v3826 = vmul.u32 %v3819, %v3810
    %v3827 = vadd.s32 %v3822, %v3824
    %vm3828 = vc.u32 %v3822, %v3824
    %v3829 = vadd.s32 %v3825, 1
    %v3830 = vsel %vm3828, %v3829, %v3825
    %v3831 = vadd.s32 %v3826, %v3830
    %v3832 = vadd.s32 %v3831, 536870912
    %v3833 = vshrl.u32 %v3832, 30
    %v3834 = vshll.u32 %v3833, 30
    %v3835 = vsub.s32 %v3831, %v3834
    %vm3836 = vcmp.lt.s32.totalorder %v3835, 0
    %v3837 = vsub.s32 0, %v3835
    %v3838 = vsel %vm3836, %v3837, %v3835
    %v3839 = vclz %v3838
    %v3840 = vsub.s32 %v3839, 2
    %vm3841 = vcmp.gt.s32.totalorder 0, %v3840
    %v3842 = vsel %vm3841, 0, %v3840
    %v3843 = vsub.s32 32, %v3842
    %v3844 = vshll.u32 %v3835, %v3842
    %v3845 = vshrl.u32 %v3827, %v3843
    %v3846 = vor.u32 %v3844, %v3845
    %v3847 = vsub.s32 4294967266, %v3842
    %v3848 = vadd.s32 %v3847, 127
    %v3849 = vshll.u32 %v3848, 23
    %v3850 = vor.u32 4788187, %v3849
    %v3851 = vand.u32 2147483647, %v3850
    %v3853 = vcvt.s32.f32 %v3846
    %v3854 = vmul.f32 %v3853, %v3851
    %v3855 = vxor.u32 %v3854, 2147483648
    %v3856 = vsel %vm3773, %v3855, %v3854
    %v3857 = vsub.s32 4, %v3833
    %v3858 = vsel %vm3773, %v3857, %v3833
    %v3859 = vsel %vm3772, %v546, %v3856
    %v3860 = vsel %vm3772, 0, %v3858
    %v3861 = vcosq.f32.pop %v3859
    %v3862 = vsinq.f32.pop %v3859
    %vm3863 = vweird.f32 %v546
    %v3864 = vadd.s32 %v3860, 3
    %v3865 = vand.u32 %v3864, 3
    %vm3866 = vcmp.lt.s32.totalorder %v3865, 2
    %vm3867 = vcmp.eq.s32.totalorder %v3865, 0
    %v3868 = vxor.u32 %v3862, 2147483648
    %v3869 = vsel %vm3867, %v3861, %v3868
    %vm3870 = vcmp.eq.s32.totalorder %v3865, 2
    %v3871 = vxor.u32 %v3861, 2147483648
    %v3872 = vsel %vm3870, %v3871, %v3862
    %v3873 = vsel %vm3866, %v3869, %v3872
    %v3874 = vsel %vm3863, nan, %v3873
    %v3875 = vld [vmem:[%s7] sm:$0xff]
    %v3876 = vld [vmem:[%s7 + $0x8] sm:$0xff]
    %v3877 = vand.u32 2147483647, %v515
    %vm3878 = vcmp.le.f32.partialorder %v3877, 0.7853982
    %vm3879 = vcmp.lt.s32.totalorder %v515, 0
    %v3880 = vand.u32 %v515, 2139095040
    %v3881 = vshrl.u32 %v3880, 23
    %v3882 = vsub.s32 %v3881, 127
    %v3883 = vand.u32 2147483647, %v515
    %v3884 = vand.u32 %v3883, 8388607
    %v3885 = vor.u32 %v3884, 8388608
    %v3886 = vsub.s32 0, %v3885
    %v3887 = vadd.s32 %v3882, 1
    %vm3888 = vcmp.gt.s32.totalorder %v3887, 0
    %v3889 = vsel %vm3888, %v3887, 0
    %v3890 = vshrl.u32 %v3889, 5
    %v3891 = vand.u32 %v3889, 31
    %v3892 = vsub.s32 32, %v3891
    %v3893 = vshrl.u32 683565275, %v3892
    %v3894 = vshll.u32 683565275, %v3891
    %v3895 = vshrl.u32 2475754826, %v3892
    %v3896 = vor.u32 %v3894, %v3895
    %v3897 = vshll.u32 2475754826, %v3891
    %v3898 = vshrl.u32 2131351028, %v3892
    %v3899 = vor.u32 %v3897, %v3898
    %v3900 = vshll.u32 2131351028, %v3891
    %v3901 = vshrl.u32 2102212464, %v3892
    %v3902 = vor.u32 %v3900, %v3901
    %v3903 = vshll.u32 2102212464, %v3891
    %v3904 = vshrl.u32 920167782, %v3892
    %v3905 = vor.u32 %v3903, %v3904
    %v3906 = vshll.u32 920167782, %v3891
    %v3907 = vshrl.u32 1326507024, %v3892
    %v3908 = vor.u32 %v3906, %v3907
    %vm3909 = vcmp.lt.s32.totalorder %v3890, 1
    %vm3910 = vcmp.lt.s32.totalorder %v3890, 2
    %vm3911 = vcmp.lt.s32.totalorder %v3890, 3
    %vm3912 = vcmp.lt.s32.totalorder %v3890, 4
    %v3913 = vsel %vm3909, %v3893, %v3896
    %v3914 = vsel %vm3912, %v3902, 2102212464
    %v3915 = vsel %vm3911, %v3899, %v3914
    %v3916 = vsel %vm3910, %v3913, %v3915
    %v3917 = vsel %vm3909, %v3896, %v3899
    %v3918 = vsel %vm3912, %v3905, 920167782
    %v3919 = vsel %vm3911, %v3902, %v3918
    %v3920 = vsel %vm3910, %v3917, %v3919
    %v3921 = vsel %vm3909, %v3899, %v3902
    %v3922 = vsel %vm3912, %v3908, 1326507024
    %v3923 = vsel %vm3911, %v3905, %v3922
    %v3924 = vsel %vm3910, %v3921, %v3923
    %v3925 = vshll.u32 %v3885, 8
    %v3926 = vmul.u32.u64.compose %v3925, %v3924
    %v3927 = vextract.low.u32 %v3926
    %v3928 = vextract.high.u32 %v3926
    %v3929 = vmul.u32.u64.compose %v3925, %v3920
    %v3930 = vextract.low.u32 %v3929
    %v3931 = vextract.high.u32 %v3929
    %v3932 = vmul.u32 %v3925, %v3916
    %v3933 = vadd.s32 %v3928, %v3930
    %vm3934 = vc.u32 %v3928, %v3930
    %v3935 = vadd.s32 %v3931, 1
    %v3936 = vsel %vm3934, %v3935, %v3931
    %v3937 = vadd.s32 %v3932, %v3936
    %v3938 = vadd.s32 %v3937, 536870912
    %v3939 = vshrl.u32 %v3938, 30
    %v3940 = vshll.u32 %v3939, 30
    %v3941 = vsub.s32 %v3937, %v3940
    %vm3942 = vcmp.lt.s32.totalorder %v3941, 0
    %v3943 = vsub.s32 0, %v3941
    %v3944 = vsel %vm3942, %v3943, %v3941
    %v3945 = vclz %v3944
    %v3946 = vsub.s32 %v3945, 2
    %vm3947 = vcmp.gt.s32.totalorder 0, %v3946
    %v3948 = vsel %vm3947, 0, %v3946
    %v3949 = vsub.s32 32, %v3948
    %v3950 = vshll.u32 %v3941, %v3948
    %v3951 = vshrl.u32 %v3933, %v3949
    %v3952 = vor.u32 %v3950, %v3951
    %v3953 = vsub.s32 4294967266, %v3948
    %v3954 = vadd.s32 %v3953, 127
    %v3955 = vshll.u32 %v3954, 23
    %v3956 = vor.u32 4788187, %v3955
    %v3957 = vand.u32 2147483647, %v3956
    %v3959 = vcvt.s32.f32 %v3952
    %v3960 = vmul.f32 %v3959, %v3957
    %v3961 = vxor.u32 %v3960, 2147483648
    %v3962 = vsel %vm3879, %v3961, %v3960
    %v3963 = vsub.s32 4, %v3939
    %v3964 = vsel %vm3879, %v3963, %v3939
    %v3965 = vsel %vm3878, %v515, %v3962
    %v3966 = vsel %vm3878, 0, %v3964
    %v3967 = vcosq.f32.pop %v3965
    %v3968 = vsinq.f32.pop %v3965
    %vm3969 = vweird.f32 %v515
    %v3970 = vand.u32 %v3966, 3
    %vm3971 = vcmp.lt.s32.totalorder %v3970, 2
    %vm3972 = vcmp.eq.s32.totalorder %v3970, 0
    %v3973 = vxor.u32 %v3968, 2147483648
    %v3974 = vsel %vm3972, %v3967, %v3973
    %vm3975 = vcmp.eq.s32.totalorder %v3970, 2
    %v3976 = vxor.u32 %v3967, 2147483648
    %v3977 = vsel %vm3975, %v3976, %v3968
    %v3978 = vsel %vm3971, %v3974, %v3977
    %v3979 = vsel %vm3969, nan, %v3978
    %v3980 = vand.u32 2147483647, %v516
    %vm3981 = vcmp.le.f32.partialorder %v3980, 0.7853982
    %vm3982 = vcmp.lt.s32.totalorder %v516, 0
    %v3983 = vand.u32 %v516, 2139095040
    %v3984 = vshrl.u32 %v3983, 23
    %v3985 = vsub.s32 %v3984, 127
    %v3986 = vand.u32 2147483647, %v516
    %v3987 = vand.u32 %v3986, 8388607
    %v3988 = vor.u32 %v3987, 8388608
    %v3989 = vsub.s32 0, %v3988
    %v3990 = vadd.s32 %v3985, 1
    %vm3991 = vcmp.gt.s32.totalorder %v3990, 0
    %v3992 = vsel %vm3991, %v3990, 0
    %v3993 = vshrl.u32 %v3992, 5
    %v3994 = vand.u32 %v3992, 31
    %v3995 = vsub.s32 32, %v3994
    %v3996 = vshrl.u32 683565275, %v3995
    %v3997 = vshll.u32 683565275, %v3994
    %v3998 = vshrl.u32 2475754826, %v3995
    %v3999 = vor.u32 %v3997, %v3998
    %v4000 = vshll.u32 2475754826, %v3994
    %v4001 = vshrl.u32 2131351028, %v3995
    %v4002 = vor.u32 %v4000, %v4001
    %v4003 = vshll.u32 2131351028, %v3994
    %v4004 = vshrl.u32 2102212464, %v3995
    %v4005 = vor.u32 %v4003, %v4004
    %v4006 = vshll.u32 2102212464, %v3994
    %v4007 = vshrl.u32 920167782, %v3995
    %v4008 = vor.u32 %v4006, %v4007
    %v4009 = vshll.u32 920167782, %v3994
    %v4010 = vshrl.u32 1326507024, %v3995
    %v4011 = vor.u32 %v4009, %v4010
    %vm4012 = vcmp.lt.s32.totalorder %v3993, 1
    %vm4013 = vcmp.lt.s32.totalorder %v3993, 2
    %vm4014 = vcmp.lt.s32.totalorder %v3993, 3
    %vm4015 = vcmp.lt.s32.totalorder %v3993, 4
    %v4016 = vsel %vm4012, %v3996, %v3999
    %v4017 = vsel %vm4015, %v4005, 2102212464
    %v4018 = vsel %vm4014, %v4002, %v4017
    %v4019 = vsel %vm4013, %v4016, %v4018
    %v4020 = vsel %vm4012, %v3999, %v4002
    %v4021 = vsel %vm4015, %v4008, 920167782
    %v4022 = vsel %vm4014, %v4005, %v4021
    %v4023 = vsel %vm4013, %v4020, %v4022
    %v4024 = vsel %vm4012, %v4002, %v4005
    %v4025 = vsel %vm4015, %v4011, 1326507024
    %v4026 = vsel %vm4014, %v4008, %v4025
    %v4027 = vsel %vm4013, %v4024, %v4026
    %v4028 = vshll.u32 %v3988, 8
    %v4029 = vmul.u32.u64.compose %v4028, %v4027
    %v4030 = vextract.low.u32 %v4029
    %v4031 = vextract.high.u32 %v4029
    %v4032 = vmul.u32.u64.compose %v4028, %v4023
    %v4033 = vextract.low.u32 %v4032
    %v4034 = vextract.high.u32 %v4032
    %v4035 = vmul.u32 %v4028, %v4019
    %v4036 = vadd.s32 %v4031, %v4033
    %vm4037 = vc.u32 %v4031, %v4033
    %v4038 = vadd.s32 %v4034, 1
    %v4039 = vsel %vm4037, %v4038, %v4034
    %v4040 = vadd.s32 %v4035, %v4039
    %v4041 = vadd.s32 %v4040, 536870912
    %v4042 = vshrl.u32 %v4041, 30
    %v4043 = vshll.u32 %v4042, 30
    %v4044 = vsub.s32 %v4040, %v4043
    %vm4045 = vcmp.lt.s32.totalorder %v4044, 0
    %v4046 = vsub.s32 0, %v4044
    %v4047 = vsel %vm4045, %v4046, %v4044
    %v4048 = vclz %v4047
    %v4049 = vsub.s32 %v4048, 2
    %vm4050 = vcmp.gt.s32.totalorder 0, %v4049
    %v4051 = vsel %vm4050, 0, %v4049
    %v4052 = vsub.s32 32, %v4051
    %v4053 = vshll.u32 %v4044, %v4051
    %v4054 = vshrl.u32 %v4036, %v4052
    %v4055 = vor.u32 %v4053, %v4054
    %v4056 = vsub.s32 4294967266, %v4051
    %v4057 = vadd.s32 %v4056, 127
    %v4058 = vshll.u32 %v4057, 23
    %v4059 = vor.u32 4788187, %v4058
    %v4060 = vand.u32 2147483647, %v4059
    %v4062 = vcvt.s32.f32 %v4055
    %v4063 = vmul.f32 %v4062, %v4060
    %v4064 = vxor.u32 %v4063, 2147483648
    %v4065 = vsel %vm3982, %v4064, %v4063
    %v4066 = vsub.s32 4, %v4042
    %v4067 = vsel %vm3982, %v4066, %v4042
    %v4068 = vsel %vm3981, %v516, %v4065
    %v4069 = vsel %vm3981, 0, %v4067
    %v4070 = vcosq.f32.pop %v4068
    %v4071 = vsinq.f32.pop %v4068
    %vm4072 = vweird.f32 %v516
    %v4073 = vand.u32 %v4069, 3
    %vm4074 = vcmp.lt.s32.totalorder %v4073, 2
    %vm4075 = vcmp.eq.s32.totalorder %v4073, 0
    %v4076 = vxor.u32 %v4071, 2147483648
    %v4077 = vsel %vm4075, %v4070, %v4076
    %vm4078 = vcmp.eq.s32.totalorder %v4073, 2
    %v4079 = vxor.u32 %v4070, 2147483648
    %v4080 = vsel %vm4078, %v4079, %v4071
    %v4081 = vsel %vm4074, %v4077, %v4080
    %v4082 = vsel %vm4072, nan, %v4081
    %v4083 = vand.u32 2147483647, %v517
    %vm4084 = vcmp.le.f32.partialorder %v4083, 0.7853982
    %vm4085 = vcmp.lt.s32.totalorder %v517, 0
    %v4086 = vand.u32 %v517, 2139095040
    %v4087 = vshrl.u32 %v4086, 23
    %v4088 = vsub.s32 %v4087, 127
    %v4089 = vand.u32 2147483647, %v517
    %v4090 = vand.u32 %v4089, 8388607
    %v4091 = vor.u32 %v4090, 8388608
    %v4092 = vsub.s32 0, %v4091
    %v4093 = vadd.s32 %v4088, 1
    %vm4094 = vcmp.gt.s32.totalorder %v4093, 0
    %v4095 = vsel %vm4094, %v4093, 0
    %v4096 = vshrl.u32 %v4095, 5
    %v4097 = vand.u32 %v4095, 31
    %v4098 = vsub.s32 32, %v4097
    %v4099 = vshrl.u32 683565275, %v4098
    %v4100 = vshll.u32 683565275, %v4097
    %v4101 = vshrl.u32 2475754826, %v4098
    %v4102 = vor.u32 %v4100, %v4101
    %v4103 = vshll.u32 2475754826, %v4097
    %v4104 = vshrl.u32 2131351028, %v4098
    %v4105 = vor.u32 %v4103, %v4104
    %v4106 = vshll.u32 2131351028, %v4097
    %v4107 = vshrl.u32 2102212464, %v4098
    %v4108 = vor.u32 %v4106, %v4107
    %v4109 = vshll.u32 2102212464, %v4097
    %v4110 = vshrl.u32 920167782, %v4098
    %v4111 = vor.u32 %v4109, %v4110
    %v4112 = vshll.u32 920167782, %v4097
    %v4113 = vshrl.u32 1326507024, %v4098
    %v4114 = vor.u32 %v4112, %v4113
    %vm4115 = vcmp.lt.s32.totalorder %v4096, 1
    %vm4116 = vcmp.lt.s32.totalorder %v4096, 2
    %vm4117 = vcmp.lt.s32.totalorder %v4096, 3
    %vm4118 = vcmp.lt.s32.totalorder %v4096, 4
    %v4119 = vsel %vm4115, %v4099, %v4102
    %v4120 = vsel %vm4118, %v4108, 2102212464
    %v4121 = vsel %vm4117, %v4105, %v4120
    %v4122 = vsel %vm4116, %v4119, %v4121
    %v4123 = vsel %vm4115, %v4102, %v4105
    %v4124 = vsel %vm4118, %v4111, 920167782
    %v4125 = vsel %vm4117, %v4108, %v4124
    %v4126 = vsel %vm4116, %v4123, %v4125
    %v4127 = vsel %vm4115, %v4105, %v4108
    %v4128 = vsel %vm4118, %v4114, 1326507024
    %v4129 = vsel %vm4117, %v4111, %v4128
    %v4130 = vsel %vm4116, %v4127, %v4129
    %v4131 = vshll.u32 %v4091, 8
    %v4132 = vmul.u32.u64.compose %v4131, %v4130
    %v4133 = vextract.low.u32 %v4132
    %v4134 = vextract.high.u32 %v4132
    %v4135 = vmul.u32.u64.compose %v4131, %v4126
    %v4136 = vextract.low.u32 %v4135
    %v4137 = vextract.high.u32 %v4135
    %v4138 = vmul.u32 %v4131, %v4122
    %v4139 = vadd.s32 %v4134, %v4136
    %vm4140 = vc.u32 %v4134, %v4136
    %v4141 = vadd.s32 %v4137, 1
    %v4142 = vsel %vm4140, %v4141, %v4137
    %v4143 = vadd.s32 %v4138, %v4142
    %v4144 = vadd.s32 %v4143, 536870912
    %v4145 = vshrl.u32 %v4144, 30
    %v4146 = vshll.u32 %v4145, 30
    %v4147 = vsub.s32 %v4143, %v4146
    %vm4148 = vcmp.lt.s32.totalorder %v4147, 0
    %v4149 = vsub.s32 0, %v4147
    %v4150 = vsel %vm4148, %v4149, %v4147
    %v4151 = vclz %v4150
    %v4152 = vsub.s32 %v4151, 2
    %vm4153 = vcmp.gt.s32.totalorder 0, %v4152
    %v4154 = vsel %vm4153, 0, %v4152
    %v4155 = vsub.s32 32, %v4154
    %v4156 = vshll.u32 %v4147, %v4154
    %v4157 = vshrl.u32 %v4139, %v4155
    %v4158 = vor.u32 %v4156, %v4157
    %v4159 = vsub.s32 4294967266, %v4154
    %v4160 = vadd.s32 %v4159, 127
    %v4161 = vshll.u32 %v4160, 23
    %v4162 = vor.u32 4788187, %v4161
    %v4163 = vand.u32 2147483647, %v4162
    %v4165 = vcvt.s32.f32 %v4158
    %v4166 = vmul.f32 %v4165, %v4163
    %v4167 = vxor.u32 %v4166, 2147483648
    %v4168 = vsel %vm4085, %v4167, %v4166
    %v4169 = vsub.s32 4, %v4145
    %v4170 = vsel %vm4085, %v4169, %v4145
    %v4171 = vsel %vm4084, %v517, %v4168
    %v4172 = vsel %vm4084, 0, %v4170
    %v4173 = vcosq.f32.pop %v4171
    %v4174 = vsinq.f32.pop %v4171
    %vm4175 = vweird.f32 %v517
    %v4176 = vand.u32 %v4172, 3
    %vm4177 = vcmp.lt.s32.totalorder %v4176, 2
    %vm4178 = vcmp.eq.s32.totalorder %v4176, 0
    %v4179 = vxor.u32 %v4174, 2147483648
    %v4180 = vsel %vm4178, %v4173, %v4179
    %vm4181 = vcmp.eq.s32.totalorder %v4176, 2
    %v4182 = vxor.u32 %v4173, 2147483648
    %v4183 = vsel %vm4181, %v4182, %v4174
    %v4184 = vsel %vm4177, %v4180, %v4183
    %v4185 = vsel %vm4175, nan, %v4184
    %v4186 = vand.u32 2147483647, %v518
    %vm4187 = vcmp.le.f32.partialorder %v4186, 0.7853982
    %vm4188 = vcmp.lt.s32.totalorder %v518, 0
    %v4189 = vand.u32 %v518, 2139095040
    %v4190 = vshrl.u32 %v4189, 23
    %v4191 = vsub.s32 %v4190, 127
    %v4192 = vand.u32 2147483647, %v518
    %v4193 = vand.u32 %v4192, 8388607
    %v4194 = vor.u32 %v4193, 8388608
    %v4195 = vsub.s32 0, %v4194
    %v4196 = vadd.s32 %v4191, 1
    %vm4197 = vcmp.gt.s32.totalorder %v4196, 0
    %v4198 = vsel %vm4197, %v4196, 0
    %v4199 = vshrl.u32 %v4198, 5
    %v4200 = vand.u32 %v4198, 31
    %v4201 = vsub.s32 32, %v4200
    %v4202 = vshrl.u32 683565275, %v4201
    %v4203 = vshll.u32 683565275, %v4200
    %v4204 = vshrl.u32 2475754826, %v4201
    %v4205 = vor.u32 %v4203, %v4204
    %v4206 = vshll.u32 2475754826, %v4200
    %v4207 = vshrl.u32 2131351028, %v4201
    %v4208 = vor.u32 %v4206, %v4207
    %v4209 = vshll.u32 2131351028, %v4200
    %v4210 = vshrl.u32 2102212464, %v4201
    %v4211 = vor.u32 %v4209, %v4210
    %v4212 = vshll.u32 2102212464, %v4200
    %v4213 = vshrl.u32 920167782, %v4201
    %v4214 = vor.u32 %v4212, %v4213
    %v4215 = vshll.u32 920167782, %v4200
    %v4216 = vshrl.u32 1326507024, %v4201
    %v4217 = vor.u32 %v4215, %v4216
    %vm4218 = vcmp.lt.s32.totalorder %v4199, 1
    %vm4219 = vcmp.lt.s32.totalorder %v4199, 2
    %vm4220 = vcmp.lt.s32.totalorder %v4199, 3
    %vm4221 = vcmp.lt.s32.totalorder %v4199, 4
    %v4222 = vsel %vm4218, %v4202, %v4205
    %v4223 = vsel %vm4221, %v4211, 2102212464
    %v4224 = vsel %vm4220, %v4208, %v4223
    %v4225 = vsel %vm4219, %v4222, %v4224
    %v4226 = vsel %vm4218, %v4205, %v4208
    %v4227 = vsel %vm4221, %v4214, 920167782
    %v4228 = vsel %vm4220, %v4211, %v4227
    %v4229 = vsel %vm4219, %v4226, %v4228
    %v4230 = vsel %vm4218, %v4208, %v4211
    %v4231 = vsel %vm4221, %v4217, 1326507024
    %v4232 = vsel %vm4220, %v4214, %v4231
    %v4233 = vsel %vm4219, %v4230, %v4232
    %v4234 = vshll.u32 %v4194, 8
    %v4235 = vmul.u32.u64.compose %v4234, %v4233
    %v4236 = vextract.low.u32 %v4235
    %v4237 = vextract.high.u32 %v4235
    %v4238 = vmul.u32.u64.compose %v4234, %v4229
    %v4239 = vextract.low.u32 %v4238
    %v4240 = vextract.high.u32 %v4238
    %v4241 = vmul.u32 %v4234, %v4225
    %v4242 = vadd.s32 %v4237, %v4239
    %vm4243 = vc.u32 %v4237, %v4239
    %v4244 = vadd.s32 %v4240, 1
    %v4245 = vsel %vm4243, %v4244, %v4240
    %v4246 = vadd.s32 %v4241, %v4245
    %v4247 = vadd.s32 %v4246, 536870912
    %v4248 = vshrl.u32 %v4247, 30
    %v4249 = vshll.u32 %v4248, 30
    %v4250 = vsub.s32 %v4246, %v4249
    %vm4251 = vcmp.lt.s32.totalorder %v4250, 0
    %v4252 = vsub.s32 0, %v4250
    %v4253 = vsel %vm4251, %v4252, %v4250
    %v4254 = vclz %v4253
    %v4255 = vsub.s32 %v4254, 2
    %vm4256 = vcmp.gt.s32.totalorder 0, %v4255
    %v4257 = vsel %vm4256, 0, %v4255
    %v4258 = vsub.s32 32, %v4257
    %v4259 = vshll.u32 %v4250, %v4257
    %v4260 = vshrl.u32 %v4242, %v4258
    %v4261 = vor.u32 %v4259, %v4260
    %v4262 = vsub.s32 4294967266, %v4257
    %v4263 = vadd.s32 %v4262, 127
    %v4264 = vshll.u32 %v4263, 23
    %v4265 = vor.u32 4788187, %v4264
    %v4266 = vand.u32 2147483647, %v4265
    %v4268 = vcvt.s32.f32 %v4261
    %v4269 = vmul.f32 %v4268, %v4266
    %v4270 = vxor.u32 %v4269, 2147483648
    %v4271 = vsel %vm4188, %v4270, %v4269
    %v4272 = vsub.s32 4, %v4248
    %v4273 = vsel %vm4188, %v4272, %v4248
    %v4274 = vsel %vm4187, %v518, %v4271
    %v4275 = vsel %vm4187, 0, %v4273
    %v4276 = vcosq.f32.pop %v4274
    %v4277 = vsinq.f32.pop %v4274
    %vm4278 = vweird.f32 %v518
    %v4279 = vand.u32 %v4275, 3
    %vm4280 = vcmp.lt.s32.totalorder %v4279, 2
    %vm4281 = vcmp.eq.s32.totalorder %v4279, 0
    %v4282 = vxor.u32 %v4277, 2147483648
    %v4283 = vsel %vm4281, %v4276, %v4282
    %vm4284 = vcmp.eq.s32.totalorder %v4279, 2
    %v4285 = vxor.u32 %v4276, 2147483648
    %v4286 = vsel %vm4284, %v4285, %v4277
    %v4287 = vsel %vm4280, %v4283, %v4286
    %v4288 = vsel %vm4278, nan, %v4287
    %v4289 = vand.u32 2147483647, %v519
    %vm4290 = vcmp.le.f32.partialorder %v4289, 0.7853982
    %vm4291 = vcmp.lt.s32.totalorder %v519, 0
    %v4292 = vand.u32 %v519, 2139095040
    %v4293 = vshrl.u32 %v4292, 23
    %v4294 = vsub.s32 %v4293, 127
    %v4295 = vand.u32 2147483647, %v519
    %v4296 = vand.u32 %v4295, 8388607
    %v4297 = vor.u32 %v4296, 8388608
    %v4298 = vsub.s32 0, %v4297
    %v4299 = vadd.s32 %v4294, 1
    %vm4300 = vcmp.gt.s32.totalorder %v4299, 0
    %v4301 = vsel %vm4300, %v4299, 0
    %v4302 = vshrl.u32 %v4301, 5
    %v4303 = vand.u32 %v4301, 31
    %v4304 = vsub.s32 32, %v4303
    %v4305 = vshrl.u32 683565275, %v4304
    %v4306 = vshll.u32 683565275, %v4303
    %v4307 = vshrl.u32 2475754826, %v4304
    %v4308 = vor.u32 %v4306, %v4307
    %v4309 = vshll.u32 2475754826, %v4303
    %v4310 = vshrl.u32 2131351028, %v4304
    %v4311 = vor.u32 %v4309, %v4310
    %v4312 = vshll.u32 2131351028, %v4303
    %v4313 = vshrl.u32 2102212464, %v4304
    %v4314 = vor.u32 %v4312, %v4313
    %v4315 = vshll.u32 2102212464, %v4303
    %v4316 = vshrl.u32 920167782, %v4304
    %v4317 = vor.u32 %v4315, %v4316
    %v4318 = vshll.u32 920167782, %v4303
    %v4319 = vshrl.u32 1326507024, %v4304
    %v4320 = vor.u32 %v4318, %v4319
    %vm4321 = vcmp.lt.s32.totalorder %v4302, 1
    %vm4322 = vcmp.lt.s32.totalorder %v4302, 2
    %vm4323 = vcmp.lt.s32.totalorder %v4302, 3
    %vm4324 = vcmp.lt.s32.totalorder %v4302, 4
    %v4325 = vsel %vm4321, %v4305, %v4308
    %v4326 = vsel %vm4324, %v4314, 2102212464
    %v4327 = vsel %vm4323, %v4311, %v4326
    %v4328 = vsel %vm4322, %v4325, %v4327
    %v4329 = vsel %vm4321, %v4308, %v4311
    %v4330 = vsel %vm4324, %v4317, 920167782
    %v4331 = vsel %vm4323, %v4314, %v4330
    %v4332 = vsel %vm4322, %v4329, %v4331
    %v4333 = vsel %vm4321, %v4311, %v4314
    %v4334 = vsel %vm4324, %v4320, 1326507024
    %v4335 = vsel %vm4323, %v4317, %v4334
    %v4336 = vsel %vm4322, %v4333, %v4335
    %v4337 = vshll.u32 %v4297, 8
    %v4338 = vmul.u32.u64.compose %v4337, %v4336
    %v4339 = vextract.low.u32 %v4338
    %v4340 = vextract.high.u32 %v4338
    %v4341 = vmul.u32.u64.compose %v4337, %v4332
    %v4342 = vextract.low.u32 %v4341
    %v4343 = vextract.high.u32 %v4341
    %v4344 = vmul.u32 %v4337, %v4328
    %v4345 = vadd.s32 %v4340, %v4342
    %vm4346 = vc.u32 %v4340, %v4342
    %v4347 = vadd.s32 %v4343, 1
    %v4348 = vsel %vm4346, %v4347, %v4343
    %v4349 = vadd.s32 %v4344, %v4348
    %v4350 = vadd.s32 %v4349, 536870912
    %v4351 = vshrl.u32 %v4350, 30
    %v4352 = vshll.u32 %v4351, 30
    %v4353 = vsub.s32 %v4349, %v4352
    %vm4354 = vcmp.lt.s32.totalorder %v4353, 0
    %v4355 = vsub.s32 0, %v4353
    %v4356 = vsel %vm4354, %v4355, %v4353
    %v4357 = vclz %v4356
    %v4358 = vsub.s32 %v4357, 2
    %vm4359 = vcmp.gt.s32.totalorder 0, %v4358
    %v4360 = vsel %vm4359, 0, %v4358
    %v4361 = vsub.s32 32, %v4360
    %v4362 = vshll.u32 %v4353, %v4360
    %v4363 = vshrl.u32 %v4345, %v4361
    %v4364 = vor.u32 %v4362, %v4363
    %v4365 = vsub.s32 4294967266, %v4360
    %v4366 = vadd.s32 %v4365, 127
    %v4367 = vshll.u32 %v4366, 23
    %v4368 = vor.u32 4788187, %v4367
    %v4369 = vand.u32 2147483647, %v4368
    %v4371 = vcvt.s32.f32 %v4364
    %v4372 = vmul.f32 %v4371, %v4369
    %v4373 = vxor.u32 %v4372, 2147483648
    %v4374 = vsel %vm4291, %v4373, %v4372
    %v4375 = vsub.s32 4, %v4351
    %v4376 = vsel %vm4291, %v4375, %v4351
    %v4377 = vsel %vm4290, %v519, %v4374
    %v4378 = vsel %vm4290, 0, %v4376
    %v4379 = vcosq.f32.pop %v4377
    %v4380 = vsinq.f32.pop %v4377
    %vm4381 = vweird.f32 %v519
    %v4382 = vand.u32 %v4378, 3
    %vm4383 = vcmp.lt.s32.totalorder %v4382, 2
    %vm4384 = vcmp.eq.s32.totalorder %v4382, 0
    %v4385 = vxor.u32 %v4380, 2147483648
    %v4386 = vsel %vm4384, %v4379, %v4385
    %vm4387 = vcmp.eq.s32.totalorder %v4382, 2
    %v4388 = vxor.u32 %v4379, 2147483648
    %v4389 = vsel %vm4387, %v4388, %v4380
    %v4390 = vsel %vm4383, %v4386, %v4389
    %v4391 = vsel %vm4381, nan, %v4390
    %v4392 = vand.u32 2147483647, %v520
    %vm4393 = vcmp.le.f32.partialorder %v4392, 0.7853982
    %vm4394 = vcmp.lt.s32.totalorder %v520, 0
    %v4395 = vand.u32 %v520, 2139095040
    %v4396 = vshrl.u32 %v4395, 23
    %v4397 = vsub.s32 %v4396, 127
    %v4398 = vand.u32 2147483647, %v520
    %v4399 = vand.u32 %v4398, 8388607
    %v4400 = vor.u32 %v4399, 8388608
    %v4401 = vsub.s32 0, %v4400
    %v4402 = vadd.s32 %v4397, 1
    %vm4403 = vcmp.gt.s32.totalorder %v4402, 0
    %v4404 = vsel %vm4403, %v4402, 0
    %v4405 = vshrl.u32 %v4404, 5
    %v4406 = vand.u32 %v4404, 31
    %v4407 = vsub.s32 32, %v4406
    %v4408 = vshrl.u32 683565275, %v4407
    %v4409 = vshll.u32 683565275, %v4406
    %v4410 = vshrl.u32 2475754826, %v4407
    %v4411 = vor.u32 %v4409, %v4410
    %v4412 = vshll.u32 2475754826, %v4406
    %v4413 = vshrl.u32 2131351028, %v4407
    %v4414 = vor.u32 %v4412, %v4413
    %v4415 = vshll.u32 2131351028, %v4406
    %v4416 = vshrl.u32 2102212464, %v4407
    %v4417 = vor.u32 %v4415, %v4416
    %v4418 = vshll.u32 2102212464, %v4406
    %v4419 = vshrl.u32 920167782, %v4407
    %v4420 = vor.u32 %v4418, %v4419
    %v4421 = vshll.u32 920167782, %v4406
    %v4422 = vshrl.u32 1326507024, %v4407
    %v4423 = vor.u32 %v4421, %v4422
    %vm4424 = vcmp.lt.s32.totalorder %v4405, 1
    %vm4425 = vcmp.lt.s32.totalorder %v4405, 2
    %vm4426 = vcmp.lt.s32.totalorder %v4405, 3
    %vm4427 = vcmp.lt.s32.totalorder %v4405, 4
    %v4428 = vsel %vm4424, %v4408, %v4411
    %v4429 = vsel %vm4427, %v4417, 2102212464
    %v4430 = vsel %vm4426, %v4414, %v4429
    %v4431 = vsel %vm4425, %v4428, %v4430
    %v4432 = vsel %vm4424, %v4411, %v4414
    %v4433 = vsel %vm4427, %v4420, 920167782
    %v4434 = vsel %vm4426, %v4417, %v4433
    %v4435 = vsel %vm4425, %v4432, %v4434
    %v4436 = vsel %vm4424, %v4414, %v4417
    %v4437 = vsel %vm4427, %v4423, 1326507024
    %v4438 = vsel %vm4426, %v4420, %v4437
    %v4439 = vsel %vm4425, %v4436, %v4438
    %v4440 = vshll.u32 %v4400, 8
    %v4441 = vmul.u32.u64.compose %v4440, %v4439
    %v4442 = vextract.low.u32 %v4441
    %v4443 = vextract.high.u32 %v4441
    %v4444 = vmul.u32.u64.compose %v4440, %v4435
    %v4445 = vextract.low.u32 %v4444
    %v4446 = vextract.high.u32 %v4444
    %v4447 = vmul.u32 %v4440, %v4431
    %v4448 = vadd.s32 %v4443, %v4445
    %vm4449 = vc.u32 %v4443, %v4445
    %v4450 = vadd.s32 %v4446, 1
    %v4451 = vsel %vm4449, %v4450, %v4446
    %v4452 = vadd.s32 %v4447, %v4451
    %v4453 = vadd.s32 %v4452, 536870912
    %v4454 = vshrl.u32 %v4453, 30
    %v4455 = vshll.u32 %v4454, 30
    %v4456 = vsub.s32 %v4452, %v4455
    %vm4457 = vcmp.lt.s32.totalorder %v4456, 0
    %v4458 = vsub.s32 0, %v4456
    %v4459 = vsel %vm4457, %v4458, %v4456
    %v4460 = vclz %v4459
    %v4461 = vsub.s32 %v4460, 2
    %vm4462 = vcmp.gt.s32.totalorder 0, %v4461
    %v4463 = vsel %vm4462, 0, %v4461
    %v4464 = vsub.s32 32, %v4463
    %v4465 = vshll.u32 %v4456, %v4463
    %v4466 = vshrl.u32 %v4448, %v4464
    %v4467 = vor.u32 %v4465, %v4466
    %v4468 = vsub.s32 4294967266, %v4463
    %v4469 = vadd.s32 %v4468, 127
    %v4470 = vshll.u32 %v4469, 23
    %v4471 = vor.u32 4788187, %v4470
    %v4472 = vand.u32 2147483647, %v4471
    %v4474 = vcvt.s32.f32 %v4467
    %v4475 = vmul.f32 %v4474, %v4472
    %v4476 = vxor.u32 %v4475, 2147483648
    %v4477 = vsel %vm4394, %v4476, %v4475
    %v4478 = vsub.s32 4, %v4454
    %v4479 = vsel %vm4394, %v4478, %v4454
    %v4480 = vsel %vm4393, %v520, %v4477
    %v4481 = vsel %vm4393, 0, %v4479
    %v4482 = vcosq.f32.pop %v4480
    %v4483 = vsinq.f32.pop %v4480
    %vm4484 = vweird.f32 %v520
    %v4485 = vand.u32 %v4481, 3
    %vm4486 = vcmp.lt.s32.totalorder %v4485, 2
    %vm4487 = vcmp.eq.s32.totalorder %v4485, 0
    %v4488 = vxor.u32 %v4483, 2147483648
    %v4489 = vsel %vm4487, %v4482, %v4488
    %vm4490 = vcmp.eq.s32.totalorder %v4485, 2
    %v4491 = vxor.u32 %v4482, 2147483648
    %v4492 = vsel %vm4490, %v4491, %v4483
    %v4493 = vsel %vm4486, %v4489, %v4492
    %v4494 = vsel %vm4484, nan, %v4493
    %v4495 = vand.u32 2147483647, %v521
    %vm4496 = vcmp.le.f32.partialorder %v4495, 0.7853982
    %vm4497 = vcmp.lt.s32.totalorder %v521, 0
    %v4498 = vand.u32 %v521, 2139095040
    %v4499 = vshrl.u32 %v4498, 23
    %v4500 = vsub.s32 %v4499, 127
    %v4501 = vand.u32 2147483647, %v521
    %v4502 = vand.u32 %v4501, 8388607
    %v4503 = vor.u32 %v4502, 8388608
    %v4504 = vsub.s32 0, %v4503
    %v4505 = vadd.s32 %v4500, 1
    %vm4506 = vcmp.gt.s32.totalorder %v4505, 0
    %v4507 = vsel %vm4506, %v4505, 0
    %v4508 = vshrl.u32 %v4507, 5
    %v4509 = vand.u32 %v4507, 31
    %v4510 = vsub.s32 32, %v4509
    %v4511 = vshrl.u32 683565275, %v4510
    %v4512 = vshll.u32 683565275, %v4509
    %v4513 = vshrl.u32 2475754826, %v4510
    %v4514 = vor.u32 %v4512, %v4513
    %v4515 = vshll.u32 2475754826, %v4509
    %v4516 = vshrl.u32 2131351028, %v4510
    %v4517 = vor.u32 %v4515, %v4516
    %v4518 = vshll.u32 2131351028, %v4509
    %v4519 = vshrl.u32 2102212464, %v4510
    %v4520 = vor.u32 %v4518, %v4519
    %v4521 = vshll.u32 2102212464, %v4509
    %v4522 = vshrl.u32 920167782, %v4510
    %v4523 = vor.u32 %v4521, %v4522
    %v4524 = vshll.u32 920167782, %v4509
    %v4525 = vshrl.u32 1326507024, %v4510
    %v4526 = vor.u32 %v4524, %v4525
    %vm4527 = vcmp.lt.s32.totalorder %v4508, 1
    %vm4528 = vcmp.lt.s32.totalorder %v4508, 2
    %vm4529 = vcmp.lt.s32.totalorder %v4508, 3
    %vm4530 = vcmp.lt.s32.totalorder %v4508, 4
    %v4531 = vsel %vm4527, %v4511, %v4514
    %v4532 = vsel %vm4530, %v4520, 2102212464
    %v4533 = vsel %vm4529, %v4517, %v4532
    %v4534 = vsel %vm4528, %v4531, %v4533
    %v4535 = vsel %vm4527, %v4514, %v4517
    %v4536 = vsel %vm4530, %v4523, 920167782
    %v4537 = vsel %vm4529, %v4520, %v4536
    %v4538 = vsel %vm4528, %v4535, %v4537
    %v4539 = vsel %vm4527, %v4517, %v4520
    %v4540 = vsel %vm4530, %v4526, 1326507024
    %v4541 = vsel %vm4529, %v4523, %v4540
    %v4542 = vsel %vm4528, %v4539, %v4541
    %v4543 = vshll.u32 %v4503, 8
    %v4544 = vmul.u32.u64.compose %v4543, %v4542
    %v4545 = vextract.low.u32 %v4544
    %v4546 = vextract.high.u32 %v4544
    %v4547 = vmul.u32.u64.compose %v4543, %v4538
    %v4548 = vextract.low.u32 %v4547
    %v4549 = vextract.high.u32 %v4547
    %v4550 = vmul.u32 %v4543, %v4534
    %v4551 = vadd.s32 %v4546, %v4548
    %vm4552 = vc.u32 %v4546, %v4548
    %v4553 = vadd.s32 %v4549, 1
    %v4554 = vsel %vm4552, %v4553, %v4549
    %v4555 = vadd.s32 %v4550, %v4554
    %v4556 = vadd.s32 %v4555, 536870912
    %v4557 = vshrl.u32 %v4556, 30
    %v4558 = vshll.u32 %v4557, 30
    %v4559 = vsub.s32 %v4555, %v4558
    %vm4560 = vcmp.lt.s32.totalorder %v4559, 0
    %v4561 = vsub.s32 0, %v4559
    %v4562 = vsel %vm4560, %v4561, %v4559
    %v4563 = vclz %v4562
    %v4564 = vsub.s32 %v4563, 2
    %vm4565 = vcmp.gt.s32.totalorder 0, %v4564
    %v4566 = vsel %vm4565, 0, %v4564
    %v4567 = vsub.s32 32, %v4566
    %v4568 = vshll.u32 %v4559, %v4566
    %v4569 = vshrl.u32 %v4551, %v4567
    %v4570 = vor.u32 %v4568, %v4569
    %v4571 = vsub.s32 4294967266, %v4566
    %v4572 = vadd.s32 %v4571, 127
    %v4573 = vshll.u32 %v4572, 23
    %v4574 = vor.u32 4788187, %v4573
    %v4575 = vand.u32 2147483647, %v4574
    %v4577 = vcvt.s32.f32 %v4570
    %v4578 = vmul.f32 %v4577, %v4575
    %v4579 = vxor.u32 %v4578, 2147483648
    %v4580 = vsel %vm4497, %v4579, %v4578
    %v4581 = vsub.s32 4, %v4557
    %v4582 = vsel %vm4497, %v4581, %v4557
    %v4583 = vsel %vm4496, %v521, %v4580
    %v4584 = vsel %vm4496, 0, %v4582
    %v4585 = vcosq.f32.pop %v4583
    %v4586 = vsinq.f32.pop %v4583
    %vm4587 = vweird.f32 %v521
    %v4588 = vand.u32 %v4584, 3
    %vm4589 = vcmp.lt.s32.totalorder %v4588, 2
    %vm4590 = vcmp.eq.s32.totalorder %v4588, 0
    %v4591 = vxor.u32 %v4586, 2147483648
    %v4592 = vsel %vm4590, %v4585, %v4591
    %vm4593 = vcmp.eq.s32.totalorder %v4588, 2
    %v4594 = vxor.u32 %v4585, 2147483648
    %v4595 = vsel %vm4593, %v4594, %v4586
    %v4596 = vsel %vm4589, %v4592, %v4595
    %v4597 = vsel %vm4587, nan, %v4596
    %v4598 = vand.u32 2147483647, %v522
    %vm4599 = vcmp.le.f32.partialorder %v4598, 0.7853982
    %vm4600 = vcmp.lt.s32.totalorder %v522, 0
    %v4601 = vand.u32 %v522, 2139095040
    %v4602 = vshrl.u32 %v4601, 23
    %v4603 = vsub.s32 %v4602, 127
    %v4604 = vand.u32 2147483647, %v522
    %v4605 = vand.u32 %v4604, 8388607
    %v4606 = vor.u32 %v4605, 8388608
    %v4607 = vsub.s32 0, %v4606
    %v4608 = vadd.s32 %v4603, 1
    %vm4609 = vcmp.gt.s32.totalorder %v4608, 0
    %v4610 = vsel %vm4609, %v4608, 0
    %v4611 = vshrl.u32 %v4610, 5
    %v4612 = vand.u32 %v4610, 31
    %v4613 = vsub.s32 32, %v4612
    %v4614 = vshrl.u32 683565275, %v4613
    %v4615 = vshll.u32 683565275, %v4612
    %v4616 = vshrl.u32 2475754826, %v4613
    %v4617 = vor.u32 %v4615, %v4616
    %v4618 = vshll.u32 2475754826, %v4612
    %v4619 = vshrl.u32 2131351028, %v4613
    %v4620 = vor.u32 %v4618, %v4619
    %v4621 = vshll.u32 2131351028, %v4612
    %v4622 = vshrl.u32 2102212464, %v4613
    %v4623 = vor.u32 %v4621, %v4622
    %v4624 = vshll.u32 2102212464, %v4612
    %v4625 = vshrl.u32 920167782, %v4613
    %v4626 = vor.u32 %v4624, %v4625
    %v4627 = vshll.u32 920167782, %v4612
    %v4628 = vshrl.u32 1326507024, %v4613
    %v4629 = vor.u32 %v4627, %v4628
    %vm4630 = vcmp.lt.s32.totalorder %v4611, 1
    %vm4631 = vcmp.lt.s32.totalorder %v4611, 2
    %vm4632 = vcmp.lt.s32.totalorder %v4611, 3
    %vm4633 = vcmp.lt.s32.totalorder %v4611, 4
    %v4634 = vsel %vm4630, %v4614, %v4617
    %v4635 = vsel %vm4633, %v4623, 2102212464
    %v4636 = vsel %vm4632, %v4620, %v4635
    %v4637 = vsel %vm4631, %v4634, %v4636
    %v4638 = vsel %vm4630, %v4617, %v4620
    %v4639 = vsel %vm4633, %v4626, 920167782
    %v4640 = vsel %vm4632, %v4623, %v4639
    %v4641 = vsel %vm4631, %v4638, %v4640
    %v4642 = vsel %vm4630, %v4620, %v4623
    %v4643 = vsel %vm4633, %v4629, 1326507024
    %v4644 = vsel %vm4632, %v4626, %v4643
    %v4645 = vsel %vm4631, %v4642, %v4644
    %v4646 = vshll.u32 %v4606, 8
    %v4647 = vmul.u32.u64.compose %v4646, %v4645
    %v4648 = vextract.low.u32 %v4647
    %v4649 = vextract.high.u32 %v4647
    %v4650 = vmul.u32.u64.compose %v4646, %v4641
    %v4651 = vextract.low.u32 %v4650
    %v4652 = vextract.high.u32 %v4650
    %v4653 = vmul.u32 %v4646, %v4637
    %v4654 = vadd.s32 %v4649, %v4651
    %vm4655 = vc.u32 %v4649, %v4651
    %v4656 = vadd.s32 %v4652, 1
    %v4657 = vsel %vm4655, %v4656, %v4652
    %v4658 = vadd.s32 %v4653, %v4657
    %v4659 = vadd.s32 %v4658, 536870912
    %v4660 = vshrl.u32 %v4659, 30
    %v4661 = vshll.u32 %v4660, 30
    %v4662 = vsub.s32 %v4658, %v4661
    %vm4663 = vcmp.lt.s32.totalorder %v4662, 0
    %v4664 = vsub.s32 0, %v4662
    %v4665 = vsel %vm4663, %v4664, %v4662
    %v4666 = vclz %v4665
    %v4667 = vsub.s32 %v4666, 2
    %vm4668 = vcmp.gt.s32.totalorder 0, %v4667
    %v4669 = vsel %vm4668, 0, %v4667
    %v4670 = vsub.s32 32, %v4669
    %v4671 = vshll.u32 %v4662, %v4669
    %v4672 = vshrl.u32 %v4654, %v4670
    %v4673 = vor.u32 %v4671, %v4672
    %v4674 = vsub.s32 4294967266, %v4669
    %v4675 = vadd.s32 %v4674, 127
    %v4676 = vshll.u32 %v4675, 23
    %v4677 = vor.u32 4788187, %v4676
    %v4678 = vand.u32 2147483647, %v4677
    %v4680 = vcvt.s32.f32 %v4673
    %v4681 = vmul.f32 %v4680, %v4678
    %v4682 = vxor.u32 %v4681, 2147483648
    %v4683 = vsel %vm4600, %v4682, %v4681
    %v4684 = vsub.s32 4, %v4660
    %v4685 = vsel %vm4600, %v4684, %v4660
    %v4686 = vsel %vm4599, %v522, %v4683
    %v4687 = vsel %vm4599, 0, %v4685
    %v4688 = vcosq.f32.pop %v4686
    %v4689 = vsinq.f32.pop %v4686
    %vm4690 = vweird.f32 %v522
    %v4691 = vand.u32 %v4687, 3
    %vm4692 = vcmp.lt.s32.totalorder %v4691, 2
    %vm4693 = vcmp.eq.s32.totalorder %v4691, 0
    %v4694 = vxor.u32 %v4689, 2147483648
    %v4695 = vsel %vm4693, %v4688, %v4694
    %vm4696 = vcmp.eq.s32.totalorder %v4691, 2
    %v4697 = vxor.u32 %v4688, 2147483648
    %v4698 = vsel %vm4696, %v4697, %v4689
    %v4699 = vsel %vm4692, %v4695, %v4698
    %v4700 = vsel %vm4690, nan, %v4699
    %v4701 = vand.u32 2147483647, %v523
    %vm4702 = vcmp.le.f32.partialorder %v4701, 0.7853982
    %vm4703 = vcmp.lt.s32.totalorder %v523, 0
    %v4704 = vand.u32 %v523, 2139095040
    %v4705 = vshrl.u32 %v4704, 23
    %v4706 = vsub.s32 %v4705, 127
    %v4707 = vand.u32 2147483647, %v523
    %v4708 = vand.u32 %v4707, 8388607
    %v4709 = vor.u32 %v4708, 8388608
    %v4710 = vsub.s32 0, %v4709
    %v4711 = vadd.s32 %v4706, 1
    %vm4712 = vcmp.gt.s32.totalorder %v4711, 0
    %v4713 = vsel %vm4712, %v4711, 0
    %v4714 = vshrl.u32 %v4713, 5
    %v4715 = vand.u32 %v4713, 31
    %v4716 = vsub.s32 32, %v4715
    %v4717 = vshrl.u32 683565275, %v4716
    %v4718 = vshll.u32 683565275, %v4715
    %v4719 = vshrl.u32 2475754826, %v4716
    %v4720 = vor.u32 %v4718, %v4719
    %v4721 = vshll.u32 2475754826, %v4715
    %v4722 = vshrl.u32 2131351028, %v4716
    %v4723 = vor.u32 %v4721, %v4722
    %v4724 = vshll.u32 2131351028, %v4715
    %v4725 = vshrl.u32 2102212464, %v4716
    %v4726 = vor.u32 %v4724, %v4725
    %v4727 = vshll.u32 2102212464, %v4715
    %v4728 = vshrl.u32 920167782, %v4716
    %v4729 = vor.u32 %v4727, %v4728
    %v4730 = vshll.u32 920167782, %v4715
    %v4731 = vshrl.u32 1326507024, %v4716
    %v4732 = vor.u32 %v4730, %v4731
    %vm4733 = vcmp.lt.s32.totalorder %v4714, 1
    %vm4734 = vcmp.lt.s32.totalorder %v4714, 2
    %vm4735 = vcmp.lt.s32.totalorder %v4714, 3
    %vm4736 = vcmp.lt.s32.totalorder %v4714, 4
    %v4737 = vsel %vm4733, %v4717, %v4720
    %v4738 = vsel %vm4736, %v4726, 2102212464
    %v4739 = vsel %vm4735, %v4723, %v4738
    %v4740 = vsel %vm4734, %v4737, %v4739
    %v4741 = vsel %vm4733, %v4720, %v4723
    %v4742 = vsel %vm4736, %v4729, 920167782
    %v4743 = vsel %vm4735, %v4726, %v4742
    %v4744 = vsel %vm4734, %v4741, %v4743
    %v4745 = vsel %vm4733, %v4723, %v4726
    %v4746 = vsel %vm4736, %v4732, 1326507024
    %v4747 = vsel %vm4735, %v4729, %v4746
    %v4748 = vsel %vm4734, %v4745, %v4747
    %v4749 = vshll.u32 %v4709, 8
    %v4750 = vmul.u32.u64.compose %v4749, %v4748
    %v4751 = vextract.low.u32 %v4750
    %v4752 = vextract.high.u32 %v4750
    %v4753 = vmul.u32.u64.compose %v4749, %v4744
    %v4754 = vextract.low.u32 %v4753
    %v4755 = vextract.high.u32 %v4753
    %v4756 = vmul.u32 %v4749, %v4740
    %v4757 = vadd.s32 %v4752, %v4754
    %vm4758 = vc.u32 %v4752, %v4754
    %v4759 = vadd.s32 %v4755, 1
    %v4760 = vsel %vm4758, %v4759, %v4755
    %v4761 = vadd.s32 %v4756, %v4760
    %v4762 = vadd.s32 %v4761, 536870912
    %v4763 = vshrl.u32 %v4762, 30
    %v4764 = vshll.u32 %v4763, 30
    %v4765 = vsub.s32 %v4761, %v4764
    %vm4766 = vcmp.lt.s32.totalorder %v4765, 0
    %v4767 = vsub.s32 0, %v4765
    %v4768 = vsel %vm4766, %v4767, %v4765
    %v4769 = vclz %v4768
    %v4770 = vsub.s32 %v4769, 2
    %vm4771 = vcmp.gt.s32.totalorder 0, %v4770
    %v4772 = vsel %vm4771, 0, %v4770
    %v4773 = vsub.s32 32, %v4772
    %v4774 = vshll.u32 %v4765, %v4772
    %v4775 = vshrl.u32 %v4757, %v4773
    %v4776 = vor.u32 %v4774, %v4775
    %v4777 = vsub.s32 4294967266, %v4772
    %v4778 = vadd.s32 %v4777, 127
    %v4779 = vshll.u32 %v4778, 23
    %v4780 = vor.u32 4788187, %v4779
    %v4781 = vand.u32 2147483647, %v4780
    %v4783 = vcvt.s32.f32 %v4776
    %v4784 = vmul.f32 %v4783, %v4781
    %v4785 = vxor.u32 %v4784, 2147483648
    %v4786 = vsel %vm4703, %v4785, %v4784
    %v4787 = vsub.s32 4, %v4763
    %v4788 = vsel %vm4703, %v4787, %v4763
    %v4789 = vsel %vm4702, %v523, %v4786
    %v4790 = vsel %vm4702, 0, %v4788
    %v4791 = vcosq.f32.pop %v4789
    %v4792 = vsinq.f32.pop %v4789
    %vm4793 = vweird.f32 %v523
    %v4794 = vand.u32 %v4790, 3
    %vm4795 = vcmp.lt.s32.totalorder %v4794, 2
    %vm4796 = vcmp.eq.s32.totalorder %v4794, 0
    %v4797 = vxor.u32 %v4792, 2147483648
    %v4798 = vsel %vm4796, %v4791, %v4797
    %vm4799 = vcmp.eq.s32.totalorder %v4794, 2
    %v4800 = vxor.u32 %v4791, 2147483648
    %v4801 = vsel %vm4799, %v4800, %v4792
    %v4802 = vsel %vm4795, %v4798, %v4801
    %v4803 = vsel %vm4793, nan, %v4802
    %v4804 = vand.u32 2147483647, %v524
    %vm4805 = vcmp.le.f32.partialorder %v4804, 0.7853982
    %vm4806 = vcmp.lt.s32.totalorder %v524, 0
    %v4807 = vand.u32 %v524, 2139095040
    %v4808 = vshrl.u32 %v4807, 23
    %v4809 = vsub.s32 %v4808, 127
    %v4810 = vand.u32 2147483647, %v524
    %v4811 = vand.u32 %v4810, 8388607
    %v4812 = vor.u32 %v4811, 8388608
    %v4813 = vsub.s32 0, %v4812
    %v4814 = vadd.s32 %v4809, 1
    %vm4815 = vcmp.gt.s32.totalorder %v4814, 0
    %v4816 = vsel %vm4815, %v4814, 0
    %v4817 = vshrl.u32 %v4816, 5
    %v4818 = vand.u32 %v4816, 31
    %v4819 = vsub.s32 32, %v4818
    %v4820 = vshrl.u32 683565275, %v4819
    %v4821 = vshll.u32 683565275, %v4818
    %v4822 = vshrl.u32 2475754826, %v4819
    %v4823 = vor.u32 %v4821, %v4822
    %v4824 = vshll.u32 2475754826, %v4818
    %v4825 = vshrl.u32 2131351028, %v4819
    %v4826 = vor.u32 %v4824, %v4825
    %v4827 = vshll.u32 2131351028, %v4818
    %v4828 = vshrl.u32 2102212464, %v4819
    %v4829 = vor.u32 %v4827, %v4828
    %v4830 = vshll.u32 2102212464, %v4818
    %v4831 = vshrl.u32 920167782, %v4819
    %v4832 = vor.u32 %v4830, %v4831
    %v4833 = vshll.u32 920167782, %v4818
    %v4834 = vshrl.u32 1326507024, %v4819
    %v4835 = vor.u32 %v4833, %v4834
    %vm4836 = vcmp.lt.s32.totalorder %v4817, 1
    %vm4837 = vcmp.lt.s32.totalorder %v4817, 2
    %vm4838 = vcmp.lt.s32.totalorder %v4817, 3
    %vm4839 = vcmp.lt.s32.totalorder %v4817, 4
    %v4840 = vsel %vm4836, %v4820, %v4823
    %v4841 = vsel %vm4839, %v4829, 2102212464
    %v4842 = vsel %vm4838, %v4826, %v4841
    %v4843 = vsel %vm4837, %v4840, %v4842
    %v4844 = vsel %vm4836, %v4823, %v4826
    %v4845 = vsel %vm4839, %v4832, 920167782
    %v4846 = vsel %vm4838, %v4829, %v4845
    %v4847 = vsel %vm4837, %v4844, %v4846
    %v4848 = vsel %vm4836, %v4826, %v4829
    %v4849 = vsel %vm4839, %v4835, 1326507024
    %v4850 = vsel %vm4838, %v4832, %v4849
    %v4851 = vsel %vm4837, %v4848, %v4850
    %v4852 = vshll.u32 %v4812, 8
    %v4853 = vmul.u32.u64.compose %v4852, %v4851
    %v4854 = vextract.low.u32 %v4853
    %v4855 = vextract.high.u32 %v4853
    %v4856 = vmul.u32.u64.compose %v4852, %v4847
    %v4857 = vextract.low.u32 %v4856
    %v4858 = vextract.high.u32 %v4856
    %v4859 = vmul.u32 %v4852, %v4843
    %v4860 = vadd.s32 %v4855, %v4857
    %vm4861 = vc.u32 %v4855, %v4857
    %v4862 = vadd.s32 %v4858, 1
    %v4863 = vsel %vm4861, %v4862, %v4858
    %v4864 = vadd.s32 %v4859, %v4863
    %v4865 = vadd.s32 %v4864, 536870912
    %v4866 = vshrl.u32 %v4865, 30
    %v4867 = vshll.u32 %v4866, 30
    %v4868 = vsub.s32 %v4864, %v4867
    %vm4869 = vcmp.lt.s32.totalorder %v4868, 0
    %v4870 = vsub.s32 0, %v4868
    %v4871 = vsel %vm4869, %v4870, %v4868
    %v4872 = vclz %v4871
    %v4873 = vsub.s32 %v4872, 2
    %vm4874 = vcmp.gt.s32.totalorder 0, %v4873
    %v4875 = vsel %vm4874, 0, %v4873
    %v4876 = vsub.s32 32, %v4875
    %v4877 = vshll.u32 %v4868, %v4875
    %v4878 = vshrl.u32 %v4860, %v4876
    %v4879 = vor.u32 %v4877, %v4878
    %v4880 = vsub.s32 4294967266, %v4875
    %v4881 = vadd.s32 %v4880, 127
    %v4882 = vshll.u32 %v4881, 23
    %v4883 = vor.u32 4788187, %v4882
    %v4884 = vand.u32 2147483647, %v4883
    %v4886 = vcvt.s32.f32 %v4879
    %v4887 = vmul.f32 %v4886, %v4884
    %v4888 = vxor.u32 %v4887, 2147483648
    %v4889 = vsel %vm4806, %v4888, %v4887
    %v4890 = vsub.s32 4, %v4866
    %v4891 = vsel %vm4806, %v4890, %v4866
    %v4892 = vsel %vm4805, %v524, %v4889
    %v4893 = vsel %vm4805, 0, %v4891
    %v4894 = vcosq.f32.pop %v4892
    %v4895 = vsinq.f32.pop %v4892
    %vm4896 = vweird.f32 %v524
    %v4897 = vand.u32 %v4893, 3
    %vm4898 = vcmp.lt.s32.totalorder %v4897, 2
    %vm4899 = vcmp.eq.s32.totalorder %v4897, 0
    %v4900 = vxor.u32 %v4895, 2147483648
    %v4901 = vsel %vm4899, %v4894, %v4900
    %vm4902 = vcmp.eq.s32.totalorder %v4897, 2
    %v4903 = vxor.u32 %v4894, 2147483648
    %v4904 = vsel %vm4902, %v4903, %v4895
    %v4905 = vsel %vm4898, %v4901, %v4904
    %v4906 = vsel %vm4896, nan, %v4905
    %v4907 = vand.u32 2147483647, %v525
    %vm4908 = vcmp.le.f32.partialorder %v4907, 0.7853982
    %vm4909 = vcmp.lt.s32.totalorder %v525, 0
    %v4910 = vand.u32 %v525, 2139095040
    %v4911 = vshrl.u32 %v4910, 23
    %v4912 = vsub.s32 %v4911, 127
    %v4913 = vand.u32 2147483647, %v525
    %v4914 = vand.u32 %v4913, 8388607
    %v4915 = vor.u32 %v4914, 8388608
    %v4916 = vsub.s32 0, %v4915
    %v4917 = vadd.s32 %v4912, 1
    %vm4918 = vcmp.gt.s32.totalorder %v4917, 0
    %v4919 = vsel %vm4918, %v4917, 0
    %v4920 = vshrl.u32 %v4919, 5
    %v4921 = vand.u32 %v4919, 31
    %v4922 = vsub.s32 32, %v4921
    %v4923 = vshrl.u32 683565275, %v4922
    %v4924 = vshll.u32 683565275, %v4921
    %v4925 = vshrl.u32 2475754826, %v4922
    %v4926 = vor.u32 %v4924, %v4925
    %v4927 = vshll.u32 2475754826, %v4921
    %v4928 = vshrl.u32 2131351028, %v4922
    %v4929 = vor.u32 %v4927, %v4928
    %v4930 = vshll.u32 2131351028, %v4921
    %v4931 = vshrl.u32 2102212464, %v4922
    %v4932 = vor.u32 %v4930, %v4931
    %v4933 = vshll.u32 2102212464, %v4921
    %v4934 = vshrl.u32 920167782, %v4922
    %v4935 = vor.u32 %v4933, %v4934
    %v4936 = vshll.u32 920167782, %v4921
    %v4937 = vshrl.u32 1326507024, %v4922
    %v4938 = vor.u32 %v4936, %v4937
    %vm4939 = vcmp.lt.s32.totalorder %v4920, 1
    %vm4940 = vcmp.lt.s32.totalorder %v4920, 2
    %vm4941 = vcmp.lt.s32.totalorder %v4920, 3
    %vm4942 = vcmp.lt.s32.totalorder %v4920, 4
    %v4943 = vsel %vm4939, %v4923, %v4926
    %v4944 = vsel %vm4942, %v4932, 2102212464
    %v4945 = vsel %vm4941, %v4929, %v4944
    %v4946 = vsel %vm4940, %v4943, %v4945
    %v4947 = vsel %vm4939, %v4926, %v4929
    %v4948 = vsel %vm4942, %v4935, 920167782
    %v4949 = vsel %vm4941, %v4932, %v4948
    %v4950 = vsel %vm4940, %v4947, %v4949
    %v4951 = vsel %vm4939, %v4929, %v4932
    %v4952 = vsel %vm4942, %v4938, 1326507024
    %v4953 = vsel %vm4941, %v4935, %v4952
    %v4954 = vsel %vm4940, %v4951, %v4953
    %v4955 = vshll.u32 %v4915, 8
    %v4956 = vmul.u32.u64.compose %v4955, %v4954
    %v4957 = vextract.low.u32 %v4956
    %v4958 = vextract.high.u32 %v4956
    %v4959 = vmul.u32.u64.compose %v4955, %v4950
    %v4960 = vextract.low.u32 %v4959
    %v4961 = vextract.high.u32 %v4959
    %v4962 = vmul.u32 %v4955, %v4946
    %v4963 = vadd.s32 %v4958, %v4960
    %vm4964 = vc.u32 %v4958, %v4960
    %v4965 = vadd.s32 %v4961, 1
    %v4966 = vsel %vm4964, %v4965, %v4961
    %v4967 = vadd.s32 %v4962, %v4966
    %v4968 = vadd.s32 %v4967, 536870912
    %v4969 = vshrl.u32 %v4968, 30
    %v4970 = vshll.u32 %v4969, 30
    %v4971 = vsub.s32 %v4967, %v4970
    %vm4972 = vcmp.lt.s32.totalorder %v4971, 0
    %v4973 = vsub.s32 0, %v4971
    %v4974 = vsel %vm4972, %v4973, %v4971
    %v4975 = vclz %v4974
    %v4976 = vsub.s32 %v4975, 2
    %vm4977 = vcmp.gt.s32.totalorder 0, %v4976
    %v4978 = vsel %vm4977, 0, %v4976
    %v4979 = vsub.s32 32, %v4978
    %v4980 = vshll.u32 %v4971, %v4978
    %v4981 = vshrl.u32 %v4963, %v4979
    %v4982 = vor.u32 %v4980, %v4981
    %v4983 = vsub.s32 4294967266, %v4978
    %v4984 = vadd.s32 %v4983, 127
    %v4985 = vshll.u32 %v4984, 23
    %v4986 = vor.u32 4788187, %v4985
    %v4987 = vand.u32 2147483647, %v4986
    %v4989 = vcvt.s32.f32 %v4982
    %v4990 = vmul.f32 %v4989, %v4987
    %v4991 = vxor.u32 %v4990, 2147483648
    %v4992 = vsel %vm4909, %v4991, %v4990
    %v4993 = vsub.s32 4, %v4969
    %v4994 = vsel %vm4909, %v4993, %v4969
    %v4995 = vsel %vm4908, %v525, %v4992
    %v4996 = vsel %vm4908, 0, %v4994
    %v4997 = vcosq.f32.pop %v4995
    %v4998 = vsinq.f32.pop %v4995
    %vm4999 = vweird.f32 %v525
    %v5000 = vand.u32 %v4996, 3
    %vm5001 = vcmp.lt.s32.totalorder %v5000, 2
    %vm5002 = vcmp.eq.s32.totalorder %v5000, 0
    %v5003 = vxor.u32 %v4998, 2147483648
    %v5004 = vsel %vm5002, %v4997, %v5003
    %vm5005 = vcmp.eq.s32.totalorder %v5000, 2
    %v5006 = vxor.u32 %v4997, 2147483648
    %v5007 = vsel %vm5005, %v5006, %v4998
    %v5008 = vsel %vm5001, %v5004, %v5007
    %v5009 = vsel %vm4999, nan, %v5008
    %v5010 = vand.u32 2147483647, %v526
    %vm5011 = vcmp.le.f32.partialorder %v5010, 0.7853982
    %vm5012 = vcmp.lt.s32.totalorder %v526, 0
    %v5013 = vand.u32 %v526, 2139095040
    %v5014 = vshrl.u32 %v5013, 23
    %v5015 = vsub.s32 %v5014, 127
    %v5016 = vand.u32 2147483647, %v526
    %v5017 = vand.u32 %v5016, 8388607
    %v5018 = vor.u32 %v5017, 8388608
    %v5019 = vsub.s32 0, %v5018
    %v5020 = vadd.s32 %v5015, 1
    %vm5021 = vcmp.gt.s32.totalorder %v5020, 0
    %v5022 = vsel %vm5021, %v5020, 0
    %v5023 = vshrl.u32 %v5022, 5
    %v5024 = vand.u32 %v5022, 31
    %v5025 = vsub.s32 32, %v5024
    %v5026 = vshrl.u32 683565275, %v5025
    %v5027 = vshll.u32 683565275, %v5024
    %v5028 = vshrl.u32 2475754826, %v5025
    %v5029 = vor.u32 %v5027, %v5028
    %v5030 = vshll.u32 2475754826, %v5024
    %v5031 = vshrl.u32 2131351028, %v5025
    %v5032 = vor.u32 %v5030, %v5031
    %v5033 = vshll.u32 2131351028, %v5024
    %v5034 = vshrl.u32 2102212464, %v5025
    %v5035 = vor.u32 %v5033, %v5034
    %v5036 = vshll.u32 2102212464, %v5024
    %v5037 = vshrl.u32 920167782, %v5025
    %v5038 = vor.u32 %v5036, %v5037
    %v5039 = vshll.u32 920167782, %v5024
    %v5040 = vshrl.u32 1326507024, %v5025
    %v5041 = vor.u32 %v5039, %v5040
    %vm5042 = vcmp.lt.s32.totalorder %v5023, 1
    %vm5043 = vcmp.lt.s32.totalorder %v5023, 2
    %vm5044 = vcmp.lt.s32.totalorder %v5023, 3
    %vm5045 = vcmp.lt.s32.totalorder %v5023, 4
    %v5046 = vsel %vm5042, %v5026, %v5029
    %v5047 = vsel %vm5045, %v5035, 2102212464
    %v5048 = vsel %vm5044, %v5032, %v5047
    %v5049 = vsel %vm5043, %v5046, %v5048
    %v5050 = vsel %vm5042, %v5029, %v5032
    %v5051 = vsel %vm5045, %v5038, 920167782
    %v5052 = vsel %vm5044, %v5035, %v5051
    %v5053 = vsel %vm5043, %v5050, %v5052
    %v5054 = vsel %vm5042, %v5032, %v5035
    %v5055 = vsel %vm5045, %v5041, 1326507024
    %v5056 = vsel %vm5044, %v5038, %v5055
    %v5057 = vsel %vm5043, %v5054, %v5056
    %v5058 = vshll.u32 %v5018, 8
    %v5059 = vmul.u32.u64.compose %v5058, %v5057
    %v5060 = vextract.low.u32 %v5059
    %v5061 = vextract.high.u32 %v5059
    %v5062 = vmul.u32.u64.compose %v5058, %v5053
    %v5063 = vextract.low.u32 %v5062
    %v5064 = vextract.high.u32 %v5062
    %v5065 = vmul.u32 %v5058, %v5049
    %v5066 = vadd.s32 %v5061, %v5063
    %vm5067 = vc.u32 %v5061, %v5063
    %v5068 = vadd.s32 %v5064, 1
    %v5069 = vsel %vm5067, %v5068, %v5064
    %v5070 = vadd.s32 %v5065, %v5069
    %v5071 = vadd.s32 %v5070, 536870912
    %v5072 = vshrl.u32 %v5071, 30
    %v5073 = vshll.u32 %v5072, 30
    %v5074 = vsub.s32 %v5070, %v5073
    %vm5075 = vcmp.lt.s32.totalorder %v5074, 0
    %v5076 = vsub.s32 0, %v5074
    %v5077 = vsel %vm5075, %v5076, %v5074
    %v5078 = vclz %v5077
    %v5079 = vsub.s32 %v5078, 2
    %vm5080 = vcmp.gt.s32.totalorder 0, %v5079
    %v5081 = vsel %vm5080, 0, %v5079
    %v5082 = vsub.s32 32, %v5081
    %v5083 = vshll.u32 %v5074, %v5081
    %v5084 = vshrl.u32 %v5066, %v5082
    %v5085 = vor.u32 %v5083, %v5084
    %v5086 = vsub.s32 4294967266, %v5081
    %v5087 = vadd.s32 %v5086, 127
    %v5088 = vshll.u32 %v5087, 23
    %v5089 = vor.u32 4788187, %v5088
    %v5090 = vand.u32 2147483647, %v5089
    %v5092 = vcvt.s32.f32 %v5085
    %v5093 = vmul.f32 %v5092, %v5090
    %v5094 = vxor.u32 %v5093, 2147483648
    %v5095 = vsel %vm5012, %v5094, %v5093
    %v5096 = vsub.s32 4, %v5072
    %v5097 = vsel %vm5012, %v5096, %v5072
    %v5098 = vsel %vm5011, %v526, %v5095
    %v5099 = vsel %vm5011, 0, %v5097
    %v5100 = vcosq.f32.pop %v5098
    %v5101 = vsinq.f32.pop %v5098
    %vm5102 = vweird.f32 %v526
    %v5103 = vand.u32 %v5099, 3
    %vm5104 = vcmp.lt.s32.totalorder %v5103, 2
    %vm5105 = vcmp.eq.s32.totalorder %v5103, 0
    %v5106 = vxor.u32 %v5101, 2147483648
    %v5107 = vsel %vm5105, %v5100, %v5106
    %vm5108 = vcmp.eq.s32.totalorder %v5103, 2
    %v5109 = vxor.u32 %v5100, 2147483648
    %v5110 = vsel %vm5108, %v5109, %v5101
    %v5111 = vsel %vm5104, %v5107, %v5110
    %v5112 = vsel %vm5102, nan, %v5111
    %v5113 = vand.u32 2147483647, %v527
    %vm5114 = vcmp.le.f32.partialorder %v5113, 0.7853982
    %vm5115 = vcmp.lt.s32.totalorder %v527, 0
    %v5116 = vand.u32 %v527, 2139095040
    %v5117 = vshrl.u32 %v5116, 23
    %v5118 = vsub.s32 %v5117, 127
    %v5119 = vand.u32 2147483647, %v527
    %v5120 = vand.u32 %v5119, 8388607
    %v5121 = vor.u32 %v5120, 8388608
    %v5122 = vsub.s32 0, %v5121
    %v5123 = vadd.s32 %v5118, 1
    %vm5124 = vcmp.gt.s32.totalorder %v5123, 0
    %v5125 = vsel %vm5124, %v5123, 0
    %v5126 = vshrl.u32 %v5125, 5
    %v5127 = vand.u32 %v5125, 31
    %v5128 = vsub.s32 32, %v5127
    %v5129 = vshrl.u32 683565275, %v5128
    %v5130 = vshll.u32 683565275, %v5127
    %v5131 = vshrl.u32 2475754826, %v5128
    %v5132 = vor.u32 %v5130, %v5131
    %v5133 = vshll.u32 2475754826, %v5127
    %v5134 = vshrl.u32 2131351028, %v5128
    %v5135 = vor.u32 %v5133, %v5134
    %v5136 = vshll.u32 2131351028, %v5127
    %v5137 = vshrl.u32 2102212464, %v5128
    %v5138 = vor.u32 %v5136, %v5137
    %v5139 = vshll.u32 2102212464, %v5127
    %v5140 = vshrl.u32 920167782, %v5128
    %v5141 = vor.u32 %v5139, %v5140
    %v5142 = vshll.u32 920167782, %v5127
    %v5143 = vshrl.u32 1326507024, %v5128
    %v5144 = vor.u32 %v5142, %v5143
    %vm5145 = vcmp.lt.s32.totalorder %v5126, 1
    %vm5146 = vcmp.lt.s32.totalorder %v5126, 2
    %vm5147 = vcmp.lt.s32.totalorder %v5126, 3
    %vm5148 = vcmp.lt.s32.totalorder %v5126, 4
    %v5149 = vsel %vm5145, %v5129, %v5132
    %v5150 = vsel %vm5148, %v5138, 2102212464
    %v5151 = vsel %vm5147, %v5135, %v5150
    %v5152 = vsel %vm5146, %v5149, %v5151
    %v5153 = vsel %vm5145, %v5132, %v5135
    %v5154 = vsel %vm5148, %v5141, 920167782
    %v5155 = vsel %vm5147, %v5138, %v5154
    %v5156 = vsel %vm5146, %v5153, %v5155
    %v5157 = vsel %vm5145, %v5135, %v5138
    %v5158 = vsel %vm5148, %v5144, 1326507024
    %v5159 = vsel %vm5147, %v5141, %v5158
    %v5160 = vsel %vm5146, %v5157, %v5159
    %v5161 = vshll.u32 %v5121, 8
    %v5162 = vmul.u32.u64.compose %v5161, %v5160
    %v5163 = vextract.low.u32 %v5162
    %v5164 = vextract.high.u32 %v5162
    %v5165 = vmul.u32.u64.compose %v5161, %v5156
    %v5166 = vextract.low.u32 %v5165
    %v5167 = vextract.high.u32 %v5165
    %v5168 = vmul.u32 %v5161, %v5152
    %v5169 = vadd.s32 %v5164, %v5166
    %vm5170 = vc.u32 %v5164, %v5166
    %v5171 = vadd.s32 %v5167, 1
    %v5172 = vsel %vm5170, %v5171, %v5167
    %v5173 = vadd.s32 %v5168, %v5172
    %v5174 = vadd.s32 %v5173, 536870912
    %v5175 = vshrl.u32 %v5174, 30
    %v5176 = vshll.u32 %v5175, 30
    %v5177 = vsub.s32 %v5173, %v5176
    %vm5178 = vcmp.lt.s32.totalorder %v5177, 0
    %v5179 = vsub.s32 0, %v5177
    %v5180 = vsel %vm5178, %v5179, %v5177
    %v5181 = vclz %v5180
    %v5182 = vsub.s32 %v5181, 2
    %vm5183 = vcmp.gt.s32.totalorder 0, %v5182
    %v5184 = vsel %vm5183, 0, %v5182
    %v5185 = vsub.s32 32, %v5184
    %v5186 = vshll.u32 %v5177, %v5184
    %v5187 = vshrl.u32 %v5169, %v5185
    %v5188 = vor.u32 %v5186, %v5187
    %v5189 = vsub.s32 4294967266, %v5184
    %v5190 = vadd.s32 %v5189, 127
    %v5191 = vshll.u32 %v5190, 23
    %v5192 = vor.u32 4788187, %v5191
    %v5193 = vand.u32 2147483647, %v5192
    %v5195 = vcvt.s32.f32 %v5188
    %v5196 = vmul.f32 %v5195, %v5193
    %v5197 = vxor.u32 %v5196, 2147483648
    %v5198 = vsel %vm5115, %v5197, %v5196
    %v5199 = vsub.s32 4, %v5175
    %v5200 = vsel %vm5115, %v5199, %v5175
    %v5201 = vsel %vm5114, %v527, %v5198
    %v5202 = vsel %vm5114, 0, %v5200
    %v5203 = vcosq.f32.pop %v5201
    %v5204 = vsinq.f32.pop %v5201
    %vm5205 = vweird.f32 %v527
    %v5206 = vand.u32 %v5202, 3
    %vm5207 = vcmp.lt.s32.totalorder %v5206, 2
    %vm5208 = vcmp.eq.s32.totalorder %v5206, 0
    %v5209 = vxor.u32 %v5204, 2147483648
    %v5210 = vsel %vm5208, %v5203, %v5209
    %vm5211 = vcmp.eq.s32.totalorder %v5206, 2
    %v5212 = vxor.u32 %v5203, 2147483648
    %v5213 = vsel %vm5211, %v5212, %v5204
    %v5214 = vsel %vm5207, %v5210, %v5213
    %v5215 = vsel %vm5205, nan, %v5214
    %v5216 = vand.u32 2147483647, %v528
    %vm5217 = vcmp.le.f32.partialorder %v5216, 0.7853982
    %vm5218 = vcmp.lt.s32.totalorder %v528, 0
    %v5219 = vand.u32 %v528, 2139095040
    %v5220 = vshrl.u32 %v5219, 23
    %v5221 = vsub.s32 %v5220, 127
    %v5222 = vand.u32 2147483647, %v528
    %v5223 = vand.u32 %v5222, 8388607
    %v5224 = vor.u32 %v5223, 8388608
    %v5225 = vsub.s32 0, %v5224
    %v5226 = vadd.s32 %v5221, 1
    %vm5227 = vcmp.gt.s32.totalorder %v5226, 0
    %v5228 = vsel %vm5227, %v5226, 0
    %v5229 = vshrl.u32 %v5228, 5
    %v5230 = vand.u32 %v5228, 31
    %v5231 = vsub.s32 32, %v5230
    %v5232 = vshrl.u32 683565275, %v5231
    %v5233 = vshll.u32 683565275, %v5230
    %v5234 = vshrl.u32 2475754826, %v5231
    %v5235 = vor.u32 %v5233, %v5234
    %v5236 = vshll.u32 2475754826, %v5230
    %v5237 = vshrl.u32 2131351028, %v5231
    %v5238 = vor.u32 %v5236, %v5237
    %v5239 = vshll.u32 2131351028, %v5230
    %v5240 = vshrl.u32 2102212464, %v5231
    %v5241 = vor.u32 %v5239, %v5240
    %v5242 = vshll.u32 2102212464, %v5230
    %v5243 = vshrl.u32 920167782, %v5231
    %v5244 = vor.u32 %v5242, %v5243
    %v5245 = vshll.u32 920167782, %v5230
    %v5246 = vshrl.u32 1326507024, %v5231
    %v5247 = vor.u32 %v5245, %v5246
    %vm5248 = vcmp.lt.s32.totalorder %v5229, 1
    %vm5249 = vcmp.lt.s32.totalorder %v5229, 2
    %vm5250 = vcmp.lt.s32.totalorder %v5229, 3
    %vm5251 = vcmp.lt.s32.totalorder %v5229, 4
    %v5252 = vsel %vm5248, %v5232, %v5235
    %v5253 = vsel %vm5251, %v5241, 2102212464
    %v5254 = vsel %vm5250, %v5238, %v5253
    %v5255 = vsel %vm5249, %v5252, %v5254
    %v5256 = vsel %vm5248, %v5235, %v5238
    %v5257 = vsel %vm5251, %v5244, 920167782
    %v5258 = vsel %vm5250, %v5241, %v5257
    %v5259 = vsel %vm5249, %v5256, %v5258
    %v5260 = vsel %vm5248, %v5238, %v5241
    %v5261 = vsel %vm5251, %v5247, 1326507024
    %v5262 = vsel %vm5250, %v5244, %v5261
    %v5263 = vsel %vm5249, %v5260, %v5262
    %v5264 = vshll.u32 %v5224, 8
    %v5265 = vmul.u32.u64.compose %v5264, %v5263
    %v5266 = vextract.low.u32 %v5265
    %v5267 = vextract.high.u32 %v5265
    %v5268 = vmul.u32.u64.compose %v5264, %v5259
    %v5269 = vextract.low.u32 %v5268
    %v5270 = vextract.high.u32 %v5268
    %v5271 = vmul.u32 %v5264, %v5255
    %v5272 = vadd.s32 %v5267, %v5269
    %vm5273 = vc.u32 %v5267, %v5269
    %v5274 = vadd.s32 %v5270, 1
    %v5275 = vsel %vm5273, %v5274, %v5270
    %v5276 = vadd.s32 %v5271, %v5275
    %v5277 = vadd.s32 %v5276, 536870912
    %v5278 = vshrl.u32 %v5277, 30
    %v5279 = vshll.u32 %v5278, 30
    %v5280 = vsub.s32 %v5276, %v5279
    %vm5281 = vcmp.lt.s32.totalorder %v5280, 0
    %v5282 = vsub.s32 0, %v5280
    %v5283 = vsel %vm5281, %v5282, %v5280
    %v5284 = vclz %v5283
    %v5285 = vsub.s32 %v5284, 2
    %vm5286 = vcmp.gt.s32.totalorder 0, %v5285
    %v5287 = vsel %vm5286, 0, %v5285
    %v5288 = vsub.s32 32, %v5287
    %v5289 = vshll.u32 %v5280, %v5287
    %v5290 = vshrl.u32 %v5272, %v5288
    %v5291 = vor.u32 %v5289, %v5290
    %v5292 = vsub.s32 4294967266, %v5287
    %v5293 = vadd.s32 %v5292, 127
    %v5294 = vshll.u32 %v5293, 23
    %v5295 = vor.u32 4788187, %v5294
    %v5296 = vand.u32 2147483647, %v5295
    %v5298 = vcvt.s32.f32 %v5291
    %v5299 = vmul.f32 %v5298, %v5296
    %v5300 = vxor.u32 %v5299, 2147483648
    %v5301 = vsel %vm5218, %v5300, %v5299
    %v5302 = vsub.s32 4, %v5278
    %v5303 = vsel %vm5218, %v5302, %v5278
    %v5304 = vsel %vm5217, %v528, %v5301
    %v5305 = vsel %vm5217, 0, %v5303
    %v5306 = vcosq.f32.pop %v5304
    %v5307 = vsinq.f32.pop %v5304
    %vm5308 = vweird.f32 %v528
    %v5309 = vand.u32 %v5305, 3
    %vm5310 = vcmp.lt.s32.totalorder %v5309, 2
    %vm5311 = vcmp.eq.s32.totalorder %v5309, 0
    %v5312 = vxor.u32 %v5307, 2147483648
    %v5313 = vsel %vm5311, %v5306, %v5312
    %vm5314 = vcmp.eq.s32.totalorder %v5309, 2
    %v5315 = vxor.u32 %v5306, 2147483648
    %v5316 = vsel %vm5314, %v5315, %v5307
    %v5317 = vsel %vm5310, %v5313, %v5316
    %v5318 = vsel %vm5308, nan, %v5317
    %v5319 = vand.u32 2147483647, %v529
    %vm5320 = vcmp.le.f32.partialorder %v5319, 0.7853982
    %vm5321 = vcmp.lt.s32.totalorder %v529, 0
    %v5322 = vand.u32 %v529, 2139095040
    %v5323 = vshrl.u32 %v5322, 23
    %v5324 = vsub.s32 %v5323, 127
    %v5325 = vand.u32 2147483647, %v529
    %v5326 = vand.u32 %v5325, 8388607
    %v5327 = vor.u32 %v5326, 8388608
    %v5328 = vsub.s32 0, %v5327
    %v5329 = vadd.s32 %v5324, 1
    %vm5330 = vcmp.gt.s32.totalorder %v5329, 0
    %v5331 = vsel %vm5330, %v5329, 0
    %v5332 = vshrl.u32 %v5331, 5
    %v5333 = vand.u32 %v5331, 31
    %v5334 = vsub.s32 32, %v5333
    %v5335 = vshrl.u32 683565275, %v5334
    %v5336 = vshll.u32 683565275, %v5333
    %v5337 = vshrl.u32 2475754826, %v5334
    %v5338 = vor.u32 %v5336, %v5337
    %v5339 = vshll.u32 2475754826, %v5333
    %v5340 = vshrl.u32 2131351028, %v5334
    %v5341 = vor.u32 %v5339, %v5340
    %v5342 = vshll.u32 2131351028, %v5333
    %v5343 = vshrl.u32 2102212464, %v5334
    %v5344 = vor.u32 %v5342, %v5343
    %v5345 = vshll.u32 2102212464, %v5333
    %v5346 = vshrl.u32 920167782, %v5334
    %v5347 = vor.u32 %v5345, %v5346
    %v5348 = vshll.u32 920167782, %v5333
    %v5349 = vshrl.u32 1326507024, %v5334
    %v5350 = vor.u32 %v5348, %v5349
    %vm5351 = vcmp.lt.s32.totalorder %v5332, 1
    %vm5352 = vcmp.lt.s32.totalorder %v5332, 2
    %vm5353 = vcmp.lt.s32.totalorder %v5332, 3
    %vm5354 = vcmp.lt.s32.totalorder %v5332, 4
    %v5355 = vsel %vm5351, %v5335, %v5338
    %v5356 = vsel %vm5354, %v5344, 2102212464
    %v5357 = vsel %vm5353, %v5341, %v5356
    %v5358 = vsel %vm5352, %v5355, %v5357
    %v5359 = vsel %vm5351, %v5338, %v5341
    %v5360 = vsel %vm5354, %v5347, 920167782
    %v5361 = vsel %vm5353, %v5344, %v5360
    %v5362 = vsel %vm5352, %v5359, %v5361
    %v5363 = vsel %vm5351, %v5341, %v5344
    %v5364 = vsel %vm5354, %v5350, 1326507024
    %v5365 = vsel %vm5353, %v5347, %v5364
    %v5366 = vsel %vm5352, %v5363, %v5365
    %v5367 = vshll.u32 %v5327, 8
    %v5368 = vmul.u32.u64.compose %v5367, %v5366
    %v5369 = vextract.low.u32 %v5368
    %v5370 = vextract.high.u32 %v5368
    %v5371 = vmul.u32.u64.compose %v5367, %v5362
    %v5372 = vextract.low.u32 %v5371
    %v5373 = vextract.high.u32 %v5371
    %v5374 = vmul.u32 %v5367, %v5358
    %v5375 = vadd.s32 %v5370, %v5372
    %vm5376 = vc.u32 %v5370, %v5372
    %v5377 = vadd.s32 %v5373, 1
    %v5378 = vsel %vm5376, %v5377, %v5373
    %v5379 = vadd.s32 %v5374, %v5378
    %v5380 = vadd.s32 %v5379, 536870912
    %v5381 = vshrl.u32 %v5380, 30
    %v5382 = vshll.u32 %v5381, 30
    %v5383 = vsub.s32 %v5379, %v5382
    %vm5384 = vcmp.lt.s32.totalorder %v5383, 0
    %v5385 = vsub.s32 0, %v5383
    %v5386 = vsel %vm5384, %v5385, %v5383
    %v5387 = vclz %v5386
    %v5388 = vsub.s32 %v5387, 2
    %vm5389 = vcmp.gt.s32.totalorder 0, %v5388
    %v5390 = vsel %vm5389, 0, %v5388
    %v5391 = vsub.s32 32, %v5390
    %v5392 = vshll.u32 %v5383, %v5390
    %v5393 = vshrl.u32 %v5375, %v5391
    %v5394 = vor.u32 %v5392, %v5393
    %v5395 = vsub.s32 4294967266, %v5390
    %v5396 = vadd.s32 %v5395, 127
    %v5397 = vshll.u32 %v5396, 23
    %v5398 = vor.u32 4788187, %v5397
    %v5399 = vand.u32 2147483647, %v5398
    %v5401 = vcvt.s32.f32 %v5394
    %v5402 = vmul.f32 %v5401, %v5399
    %v5403 = vxor.u32 %v5402, 2147483648
    %v5404 = vsel %vm5321, %v5403, %v5402
    %v5405 = vsub.s32 4, %v5381
    %v5406 = vsel %vm5321, %v5405, %v5381
    %v5407 = vsel %vm5320, %v529, %v5404
    %v5408 = vsel %vm5320, 0, %v5406
    %v5409 = vcosq.f32.pop %v5407
    %v5410 = vsinq.f32.pop %v5407
    %vm5411 = vweird.f32 %v529
    %v5412 = vand.u32 %v5408, 3
    %vm5413 = vcmp.lt.s32.totalorder %v5412, 2
    %vm5414 = vcmp.eq.s32.totalorder %v5412, 0
    %v5415 = vxor.u32 %v5410, 2147483648
    %v5416 = vsel %vm5414, %v5409, %v5415
    %vm5417 = vcmp.eq.s32.totalorder %v5412, 2
    %v5418 = vxor.u32 %v5409, 2147483648
    %v5419 = vsel %vm5417, %v5418, %v5410
    %v5420 = vsel %vm5413, %v5416, %v5419
    %v5421 = vsel %vm5411, nan, %v5420
    %v5422 = vand.u32 2147483647, %v530
    %vm5423 = vcmp.le.f32.partialorder %v5422, 0.7853982
    %vm5424 = vcmp.lt.s32.totalorder %v530, 0
    %v5425 = vand.u32 %v530, 2139095040
    %v5426 = vshrl.u32 %v5425, 23
    %v5427 = vsub.s32 %v5426, 127
    %v5428 = vand.u32 2147483647, %v530
    %v5429 = vand.u32 %v5428, 8388607
    %v5430 = vor.u32 %v5429, 8388608
    %v5431 = vsub.s32 0, %v5430
    %v5432 = vadd.s32 %v5427, 1
    %vm5433 = vcmp.gt.s32.totalorder %v5432, 0
    %v5434 = vsel %vm5433, %v5432, 0
    %v5435 = vshrl.u32 %v5434, 5
    %v5436 = vand.u32 %v5434, 31
    %v5437 = vsub.s32 32, %v5436
    %v5438 = vshrl.u32 683565275, %v5437
    %v5439 = vshll.u32 683565275, %v5436
    %v5440 = vshrl.u32 2475754826, %v5437
    %v5441 = vor.u32 %v5439, %v5440
    %v5442 = vshll.u32 2475754826, %v5436
    %v5443 = vshrl.u32 2131351028, %v5437
    %v5444 = vor.u32 %v5442, %v5443
    %v5445 = vshll.u32 2131351028, %v5436
    %v5446 = vshrl.u32 2102212464, %v5437
    %v5447 = vor.u32 %v5445, %v5446
    %v5448 = vshll.u32 2102212464, %v5436
    %v5449 = vshrl.u32 920167782, %v5437
    %v5450 = vor.u32 %v5448, %v5449
    %v5451 = vshll.u32 920167782, %v5436
    %v5452 = vshrl.u32 1326507024, %v5437
    %v5453 = vor.u32 %v5451, %v5452
    %vm5454 = vcmp.lt.s32.totalorder %v5435, 1
    %vm5455 = vcmp.lt.s32.totalorder %v5435, 2
    %vm5456 = vcmp.lt.s32.totalorder %v5435, 3
    %vm5457 = vcmp.lt.s32.totalorder %v5435, 4
    %v5458 = vsel %vm5454, %v5438, %v5441
    %v5459 = vsel %vm5457, %v5447, 2102212464
    %v5460 = vsel %vm5456, %v5444, %v5459
    %v5461 = vsel %vm5455, %v5458, %v5460
    %v5462 = vsel %vm5454, %v5441, %v5444
    %v5463 = vsel %vm5457, %v5450, 920167782
    %v5464 = vsel %vm5456, %v5447, %v5463
    %v5465 = vsel %vm5455, %v5462, %v5464
    %v5466 = vsel %vm5454, %v5444, %v5447
    %v5467 = vsel %vm5457, %v5453, 1326507024
    %v5468 = vsel %vm5456, %v5450, %v5467
    %v5469 = vsel %vm5455, %v5466, %v5468
    %v5470 = vshll.u32 %v5430, 8
    %v5471 = vmul.u32.u64.compose %v5470, %v5469
    %v5472 = vextract.low.u32 %v5471
    %v5473 = vextract.high.u32 %v5471
    %v5474 = vmul.u32.u64.compose %v5470, %v5465
    %v5475 = vextract.low.u32 %v5474
    %v5476 = vextract.high.u32 %v5474
    %v5477 = vmul.u32 %v5470, %v5461
    %v5478 = vadd.s32 %v5473, %v5475
    %vm5479 = vc.u32 %v5473, %v5475
    %v5480 = vadd.s32 %v5476, 1
    %v5481 = vsel %vm5479, %v5480, %v5476
    %v5482 = vadd.s32 %v5477, %v5481
    %v5483 = vadd.s32 %v5482, 536870912
    %v5484 = vshrl.u32 %v5483, 30
    %v5485 = vshll.u32 %v5484, 30
    %v5486 = vsub.s32 %v5482, %v5485
    %vm5487 = vcmp.lt.s32.totalorder %v5486, 0
    %v5488 = vsub.s32 0, %v5486
    %v5489 = vsel %vm5487, %v5488, %v5486
    %v5490 = vclz %v5489
    %v5491 = vsub.s32 %v5490, 2
    %vm5492 = vcmp.gt.s32.totalorder 0, %v5491
    %v5493 = vsel %vm5492, 0, %v5491
    %v5494 = vsub.s32 32, %v5493
    %v5495 = vshll.u32 %v5486, %v5493
    %v5496 = vshrl.u32 %v5478, %v5494
    %v5497 = vor.u32 %v5495, %v5496
    %v5498 = vsub.s32 4294967266, %v5493
    %v5499 = vadd.s32 %v5498, 127
    %v5500 = vshll.u32 %v5499, 23
    %v5501 = vor.u32 4788187, %v5500
    %v5502 = vand.u32 2147483647, %v5501
    %v5504 = vcvt.s32.f32 %v5497
    %v5505 = vmul.f32 %v5504, %v5502
    %v5506 = vxor.u32 %v5505, 2147483648
    %v5507 = vsel %vm5424, %v5506, %v5505
    %v5508 = vsub.s32 4, %v5484
    %v5509 = vsel %vm5424, %v5508, %v5484
    %v5510 = vsel %vm5423, %v530, %v5507
    %v5511 = vsel %vm5423, 0, %v5509
    %v5512 = vcosq.f32.pop %v5510
    %v5513 = vsinq.f32.pop %v5510
    %vm5514 = vweird.f32 %v530
    %v5515 = vand.u32 %v5511, 3
    %vm5516 = vcmp.lt.s32.totalorder %v5515, 2
    %vm5517 = vcmp.eq.s32.totalorder %v5515, 0
    %v5518 = vxor.u32 %v5513, 2147483648
    %v5519 = vsel %vm5517, %v5512, %v5518
    %vm5520 = vcmp.eq.s32.totalorder %v5515, 2
    %v5521 = vxor.u32 %v5512, 2147483648
    %v5522 = vsel %vm5520, %v5521, %v5513
    %v5523 = vsel %vm5516, %v5519, %v5522
    %v5524 = vsel %vm5514, nan, %v5523
    %v5525 = vand.u32 2147483647, %v531
    %vm5526 = vcmp.le.f32.partialorder %v5525, 0.7853982
    %vm5527 = vcmp.lt.s32.totalorder %v531, 0
    %v5528 = vand.u32 %v531, 2139095040
    %v5529 = vshrl.u32 %v5528, 23
    %v5530 = vsub.s32 %v5529, 127
    %v5531 = vand.u32 2147483647, %v531
    %v5532 = vand.u32 %v5531, 8388607
    %v5533 = vor.u32 %v5532, 8388608
    %v5534 = vsub.s32 0, %v5533
    %v5535 = vadd.s32 %v5530, 1
    %vm5536 = vcmp.gt.s32.totalorder %v5535, 0
    %v5537 = vsel %vm5536, %v5535, 0
    %v5538 = vshrl.u32 %v5537, 5
    %v5539 = vand.u32 %v5537, 31
    %v5540 = vsub.s32 32, %v5539
    %v5541 = vshrl.u32 683565275, %v5540
    %v5542 = vshll.u32 683565275, %v5539
    %v5543 = vshrl.u32 2475754826, %v5540
    %v5544 = vor.u32 %v5542, %v5543
    %v5545 = vshll.u32 2475754826, %v5539
    %v5546 = vshrl.u32 2131351028, %v5540
    %v5547 = vor.u32 %v5545, %v5546
    %v5548 = vshll.u32 2131351028, %v5539
    %v5549 = vshrl.u32 2102212464, %v5540
    %v5550 = vor.u32 %v5548, %v5549
    %v5551 = vshll.u32 2102212464, %v5539
    %v5552 = vshrl.u32 920167782, %v5540
    %v5553 = vor.u32 %v5551, %v5552
    %v5554 = vshll.u32 920167782, %v5539
    %v5555 = vshrl.u32 1326507024, %v5540
    %v5556 = vor.u32 %v5554, %v5555
    %vm5557 = vcmp.lt.s32.totalorder %v5538, 1
    %vm5558 = vcmp.lt.s32.totalorder %v5538, 2
    %vm5559 = vcmp.lt.s32.totalorder %v5538, 3
    %vm5560 = vcmp.lt.s32.totalorder %v5538, 4
    %v5561 = vsel %vm5557, %v5541, %v5544
    %v5562 = vsel %vm5560, %v5550, 2102212464
    %v5563 = vsel %vm5559, %v5547, %v5562
    %v5564 = vsel %vm5558, %v5561, %v5563
    %v5565 = vsel %vm5557, %v5544, %v5547
    %v5566 = vsel %vm5560, %v5553, 920167782
    %v5567 = vsel %vm5559, %v5550, %v5566
    %v5568 = vsel %vm5558, %v5565, %v5567
    %v5569 = vsel %vm5557, %v5547, %v5550
    %v5570 = vsel %vm5560, %v5556, 1326507024
    %v5571 = vsel %vm5559, %v5553, %v5570
    %v5572 = vsel %vm5558, %v5569, %v5571
    %v5573 = vshll.u32 %v5533, 8
    %v5574 = vmul.u32.u64.compose %v5573, %v5572
    %v5575 = vextract.low.u32 %v5574
    %v5576 = vextract.high.u32 %v5574
    %v5577 = vmul.u32.u64.compose %v5573, %v5568
    %v5578 = vextract.low.u32 %v5577
    %v5579 = vextract.high.u32 %v5577
    %v5580 = vmul.u32 %v5573, %v5564
    %v5581 = vadd.s32 %v5576, %v5578
    %vm5582 = vc.u32 %v5576, %v5578
    %v5583 = vadd.s32 %v5579, 1
    %v5584 = vsel %vm5582, %v5583, %v5579
    %v5585 = vadd.s32 %v5580, %v5584
    %v5586 = vadd.s32 %v5585, 536870912
    %v5587 = vshrl.u32 %v5586, 30
    %v5588 = vshll.u32 %v5587, 30
    %v5589 = vsub.s32 %v5585, %v5588
    %vm5590 = vcmp.lt.s32.totalorder %v5589, 0
    %v5591 = vsub.s32 0, %v5589
    %v5592 = vsel %vm5590, %v5591, %v5589
    %v5593 = vclz %v5592
    %v5594 = vsub.s32 %v5593, 2
    %vm5595 = vcmp.gt.s32.totalorder 0, %v5594
    %v5596 = vsel %vm5595, 0, %v5594
    %v5597 = vsub.s32 32, %v5596
    %v5598 = vshll.u32 %v5589, %v5596
    %v5599 = vshrl.u32 %v5581, %v5597
    %v5600 = vor.u32 %v5598, %v5599
    %v5601 = vsub.s32 4294967266, %v5596
    %v5602 = vadd.s32 %v5601, 127
    %v5603 = vshll.u32 %v5602, 23
    %v5604 = vor.u32 4788187, %v5603
    %v5605 = vand.u32 2147483647, %v5604
    %v5607 = vcvt.s32.f32 %v5600
    %v5608 = vmul.f32 %v5607, %v5605
    %v5609 = vxor.u32 %v5608, 2147483648
    %v5610 = vsel %vm5527, %v5609, %v5608
    %v5611 = vsub.s32 4, %v5587
    %v5612 = vsel %vm5527, %v5611, %v5587
    %v5613 = vsel %vm5526, %v531, %v5610
    %v5614 = vsel %vm5526, 0, %v5612
    %v5615 = vcosq.f32.pop %v5613
    %v5616 = vsinq.f32.pop %v5613
    %vm5617 = vweird.f32 %v531
    %v5618 = vand.u32 %v5614, 3
    %vm5619 = vcmp.lt.s32.totalorder %v5618, 2
    %vm5620 = vcmp.eq.s32.totalorder %v5618, 0
    %v5621 = vxor.u32 %v5616, 2147483648
    %v5622 = vsel %vm5620, %v5615, %v5621
    %vm5623 = vcmp.eq.s32.totalorder %v5618, 2
    %v5624 = vxor.u32 %v5615, 2147483648
    %v5625 = vsel %vm5623, %v5624, %v5616
    %v5626 = vsel %vm5619, %v5622, %v5625
    %v5627 = vsel %vm5617, nan, %v5626
    %v5628 = vand.u32 2147483647, %v532
    %vm5629 = vcmp.le.f32.partialorder %v5628, 0.7853982
    %vm5630 = vcmp.lt.s32.totalorder %v532, 0
    %v5631 = vand.u32 %v532, 2139095040
    %v5632 = vshrl.u32 %v5631, 23
    %v5633 = vsub.s32 %v5632, 127
    %v5634 = vand.u32 2147483647, %v532
    %v5635 = vand.u32 %v5634, 8388607
    %v5636 = vor.u32 %v5635, 8388608
    %v5637 = vsub.s32 0, %v5636
    %v5638 = vadd.s32 %v5633, 1
    %vm5639 = vcmp.gt.s32.totalorder %v5638, 0
    %v5640 = vsel %vm5639, %v5638, 0
    %v5641 = vshrl.u32 %v5640, 5
    %v5642 = vand.u32 %v5640, 31
    %v5643 = vsub.s32 32, %v5642
    %v5644 = vshrl.u32 683565275, %v5643
    %v5645 = vshll.u32 683565275, %v5642
    %v5646 = vshrl.u32 2475754826, %v5643
    %v5647 = vor.u32 %v5645, %v5646
    %v5648 = vshll.u32 2475754826, %v5642
    %v5649 = vshrl.u32 2131351028, %v5643
    %v5650 = vor.u32 %v5648, %v5649
    %v5651 = vshll.u32 2131351028, %v5642
    %v5652 = vshrl.u32 2102212464, %v5643
    %v5653 = vor.u32 %v5651, %v5652
    %v5654 = vshll.u32 2102212464, %v5642
    %v5655 = vshrl.u32 920167782, %v5643
    %v5656 = vor.u32 %v5654, %v5655
    %v5657 = vshll.u32 920167782, %v5642
    %v5658 = vshrl.u32 1326507024, %v5643
    %v5659 = vor.u32 %v5657, %v5658
    %vm5660 = vcmp.lt.s32.totalorder %v5641, 1
    %vm5661 = vcmp.lt.s32.totalorder %v5641, 2
    %vm5662 = vcmp.lt.s32.totalorder %v5641, 3
    %vm5663 = vcmp.lt.s32.totalorder %v5641, 4
    %v5664 = vsel %vm5660, %v5644, %v5647
    %v5665 = vsel %vm5663, %v5653, 2102212464
    %v5666 = vsel %vm5662, %v5650, %v5665
    %v5667 = vsel %vm5661, %v5664, %v5666
    %v5668 = vsel %vm5660, %v5647, %v5650
    %v5669 = vsel %vm5663, %v5656, 920167782
    %v5670 = vsel %vm5662, %v5653, %v5669
    %v5671 = vsel %vm5661, %v5668, %v5670
    %v5672 = vsel %vm5660, %v5650, %v5653
    %v5673 = vsel %vm5663, %v5659, 1326507024
    %v5674 = vsel %vm5662, %v5656, %v5673
    %v5675 = vsel %vm5661, %v5672, %v5674
    %v5676 = vshll.u32 %v5636, 8
    %v5677 = vmul.u32.u64.compose %v5676, %v5675
    %v5678 = vextract.low.u32 %v5677
    %v5679 = vextract.high.u32 %v5677
    %v5680 = vmul.u32.u64.compose %v5676, %v5671
    %v5681 = vextract.low.u32 %v5680
    %v5682 = vextract.high.u32 %v5680
    %v5683 = vmul.u32 %v5676, %v5667
    %v5684 = vadd.s32 %v5679, %v5681
    %vm5685 = vc.u32 %v5679, %v5681
    %v5686 = vadd.s32 %v5682, 1
    %v5687 = vsel %vm5685, %v5686, %v5682
    %v5688 = vadd.s32 %v5683, %v5687
    %v5689 = vadd.s32 %v5688, 536870912
    %v5690 = vshrl.u32 %v5689, 30
    %v5691 = vshll.u32 %v5690, 30
    %v5692 = vsub.s32 %v5688, %v5691
    %vm5693 = vcmp.lt.s32.totalorder %v5692, 0
    %v5694 = vsub.s32 0, %v5692
    %v5695 = vsel %vm5693, %v5694, %v5692
    %v5696 = vclz %v5695
    %v5697 = vsub.s32 %v5696, 2
    %vm5698 = vcmp.gt.s32.totalorder 0, %v5697
    %v5699 = vsel %vm5698, 0, %v5697
    %v5700 = vsub.s32 32, %v5699
    %v5701 = vshll.u32 %v5692, %v5699
    %v5702 = vshrl.u32 %v5684, %v5700
    %v5703 = vor.u32 %v5701, %v5702
    %v5704 = vsub.s32 4294967266, %v5699
    %v5705 = vadd.s32 %v5704, 127
    %v5706 = vshll.u32 %v5705, 23
    %v5707 = vor.u32 4788187, %v5706
    %v5708 = vand.u32 2147483647, %v5707
    %v5710 = vcvt.s32.f32 %v5703
    %v5711 = vmul.f32 %v5710, %v5708
    %v5712 = vxor.u32 %v5711, 2147483648
    %v5713 = vsel %vm5630, %v5712, %v5711
    %v5714 = vsub.s32 4, %v5690
    %v5715 = vsel %vm5630, %v5714, %v5690
    %v5716 = vsel %vm5629, %v532, %v5713
    %v5717 = vsel %vm5629, 0, %v5715
    %v5718 = vcosq.f32.pop %v5716
    %v5719 = vsinq.f32.pop %v5716
    %vm5720 = vweird.f32 %v532
    %v5721 = vand.u32 %v5717, 3
    %vm5722 = vcmp.lt.s32.totalorder %v5721, 2
    %vm5723 = vcmp.eq.s32.totalorder %v5721, 0
    %v5724 = vxor.u32 %v5719, 2147483648
    %v5725 = vsel %vm5723, %v5718, %v5724
    %vm5726 = vcmp.eq.s32.totalorder %v5721, 2
    %v5727 = vxor.u32 %v5718, 2147483648
    %v5728 = vsel %vm5726, %v5727, %v5719
    %v5729 = vsel %vm5722, %v5725, %v5728
    %v5730 = vsel %vm5720, nan, %v5729
    %v5731 = vand.u32 2147483647, %v533
    %vm5732 = vcmp.le.f32.partialorder %v5731, 0.7853982
    %vm5733 = vcmp.lt.s32.totalorder %v533, 0
    %v5734 = vand.u32 %v533, 2139095040
    %v5735 = vshrl.u32 %v5734, 23
    %v5736 = vsub.s32 %v5735, 127
    %v5737 = vand.u32 2147483647, %v533
    %v5738 = vand.u32 %v5737, 8388607
    %v5739 = vor.u32 %v5738, 8388608
    %v5740 = vsub.s32 0, %v5739
    %v5741 = vadd.s32 %v5736, 1
    %vm5742 = vcmp.gt.s32.totalorder %v5741, 0
    %v5743 = vsel %vm5742, %v5741, 0
    %v5744 = vshrl.u32 %v5743, 5
    %v5745 = vand.u32 %v5743, 31
    %v5746 = vsub.s32 32, %v5745
    %v5747 = vshrl.u32 683565275, %v5746
    %v5748 = vshll.u32 683565275, %v5745
    %v5749 = vshrl.u32 2475754826, %v5746
    %v5750 = vor.u32 %v5748, %v5749
    %v5751 = vshll.u32 2475754826, %v5745
    %v5752 = vshrl.u32 2131351028, %v5746
    %v5753 = vor.u32 %v5751, %v5752
    %v5754 = vshll.u32 2131351028, %v5745
    %v5755 = vshrl.u32 2102212464, %v5746
    %v5756 = vor.u32 %v5754, %v5755
    %v5757 = vshll.u32 2102212464, %v5745
    %v5758 = vshrl.u32 920167782, %v5746
    %v5759 = vor.u32 %v5757, %v5758
    %v5760 = vshll.u32 920167782, %v5745
    %v5761 = vshrl.u32 1326507024, %v5746
    %v5762 = vor.u32 %v5760, %v5761
    %vm5763 = vcmp.lt.s32.totalorder %v5744, 1
    %vm5764 = vcmp.lt.s32.totalorder %v5744, 2
    %vm5765 = vcmp.lt.s32.totalorder %v5744, 3
    %vm5766 = vcmp.lt.s32.totalorder %v5744, 4
    %v5767 = vsel %vm5763, %v5747, %v5750
    %v5768 = vsel %vm5766, %v5756, 2102212464
    %v5769 = vsel %vm5765, %v5753, %v5768
    %v5770 = vsel %vm5764, %v5767, %v5769
    %v5771 = vsel %vm5763, %v5750, %v5753
    %v5772 = vsel %vm5766, %v5759, 920167782
    %v5773 = vsel %vm5765, %v5756, %v5772
    %v5774 = vsel %vm5764, %v5771, %v5773
    %v5775 = vsel %vm5763, %v5753, %v5756
    %v5776 = vsel %vm5766, %v5762, 1326507024
    %v5777 = vsel %vm5765, %v5759, %v5776
    %v5778 = vsel %vm5764, %v5775, %v5777
    %v5779 = vshll.u32 %v5739, 8
    %v5780 = vmul.u32.u64.compose %v5779, %v5778
    %v5781 = vextract.low.u32 %v5780
    %v5782 = vextract.high.u32 %v5780
    %v5783 = vmul.u32.u64.compose %v5779, %v5774
    %v5784 = vextract.low.u32 %v5783
    %v5785 = vextract.high.u32 %v5783
    %v5786 = vmul.u32 %v5779, %v5770
    %v5787 = vadd.s32 %v5782, %v5784
    %vm5788 = vc.u32 %v5782, %v5784
    %v5789 = vadd.s32 %v5785, 1
    %v5790 = vsel %vm5788, %v5789, %v5785
    %v5791 = vadd.s32 %v5786, %v5790
    %v5792 = vadd.s32 %v5791, 536870912
    %v5793 = vshrl.u32 %v5792, 30
    %v5794 = vshll.u32 %v5793, 30
    %v5795 = vsub.s32 %v5791, %v5794
    %vm5796 = vcmp.lt.s32.totalorder %v5795, 0
    %v5797 = vsub.s32 0, %v5795
    %v5798 = vsel %vm5796, %v5797, %v5795
    %v5799 = vclz %v5798
    %v5800 = vsub.s32 %v5799, 2
    %vm5801 = vcmp.gt.s32.totalorder 0, %v5800
    %v5802 = vsel %vm5801, 0, %v5800
    %v5803 = vsub.s32 32, %v5802
    %v5804 = vshll.u32 %v5795, %v5802
    %v5805 = vshrl.u32 %v5787, %v5803
    %v5806 = vor.u32 %v5804, %v5805
    %v5807 = vsub.s32 4294967266, %v5802
    %v5808 = vadd.s32 %v5807, 127
    %v5809 = vshll.u32 %v5808, 23
    %v5810 = vor.u32 4788187, %v5809
    %v5811 = vand.u32 2147483647, %v5810
    %v5813 = vcvt.s32.f32 %v5806
    %v5814 = vmul.f32 %v5813, %v5811
    %v5815 = vxor.u32 %v5814, 2147483648
    %v5816 = vsel %vm5733, %v5815, %v5814
    %v5817 = vsub.s32 4, %v5793
    %v5818 = vsel %vm5733, %v5817, %v5793
    %v5819 = vsel %vm5732, %v533, %v5816
    %v5820 = vsel %vm5732, 0, %v5818
    %v5821 = vcosq.f32.pop %v5819
    %v5822 = vsinq.f32.pop %v5819
    %vm5823 = vweird.f32 %v533
    %v5824 = vand.u32 %v5820, 3
    %vm5825 = vcmp.lt.s32.totalorder %v5824, 2
    %vm5826 = vcmp.eq.s32.totalorder %v5824, 0
    %v5827 = vxor.u32 %v5822, 2147483648
    %v5828 = vsel %vm5826, %v5821, %v5827
    %vm5829 = vcmp.eq.s32.totalorder %v5824, 2
    %v5830 = vxor.u32 %v5821, 2147483648
    %v5831 = vsel %vm5829, %v5830, %v5822
    %v5832 = vsel %vm5825, %v5828, %v5831
    %v5833 = vsel %vm5823, nan, %v5832
    %v5834 = vand.u32 2147483647, %v534
    %vm5835 = vcmp.le.f32.partialorder %v5834, 0.7853982
    %vm5836 = vcmp.lt.s32.totalorder %v534, 0
    %v5837 = vand.u32 %v534, 2139095040
    %v5838 = vshrl.u32 %v5837, 23
    %v5839 = vsub.s32 %v5838, 127
    %v5840 = vand.u32 2147483647, %v534
    %v5841 = vand.u32 %v5840, 8388607
    %v5842 = vor.u32 %v5841, 8388608
    %v5843 = vsub.s32 0, %v5842
    %v5844 = vadd.s32 %v5839, 1
    %vm5845 = vcmp.gt.s32.totalorder %v5844, 0
    %v5846 = vsel %vm5845, %v5844, 0
    %v5847 = vshrl.u32 %v5846, 5
    %v5848 = vand.u32 %v5846, 31
    %v5849 = vsub.s32 32, %v5848
    %v5850 = vshrl.u32 683565275, %v5849
    %v5851 = vshll.u32 683565275, %v5848
    %v5852 = vshrl.u32 2475754826, %v5849
    %v5853 = vor.u32 %v5851, %v5852
    %v5854 = vshll.u32 2475754826, %v5848
    %v5855 = vshrl.u32 2131351028, %v5849
    %v5856 = vor.u32 %v5854, %v5855
    %v5857 = vshll.u32 2131351028, %v5848
    %v5858 = vshrl.u32 2102212464, %v5849
    %v5859 = vor.u32 %v5857, %v5858
    %v5860 = vshll.u32 2102212464, %v5848
    %v5861 = vshrl.u32 920167782, %v5849
    %v5862 = vor.u32 %v5860, %v5861
    %v5863 = vshll.u32 920167782, %v5848
    %v5864 = vshrl.u32 1326507024, %v5849
    %v5865 = vor.u32 %v5863, %v5864
    %vm5866 = vcmp.lt.s32.totalorder %v5847, 1
    %vm5867 = vcmp.lt.s32.totalorder %v5847, 2
    %vm5868 = vcmp.lt.s32.totalorder %v5847, 3
    %vm5869 = vcmp.lt.s32.totalorder %v5847, 4
    %v5870 = vsel %vm5866, %v5850, %v5853
    %v5871 = vsel %vm5869, %v5859, 2102212464
    %v5872 = vsel %vm5868, %v5856, %v5871
    %v5873 = vsel %vm5867, %v5870, %v5872
    %v5874 = vsel %vm5866, %v5853, %v5856
    %v5875 = vsel %vm5869, %v5862, 920167782
    %v5876 = vsel %vm5868, %v5859, %v5875
    %v5877 = vsel %vm5867, %v5874, %v5876
    %v5878 = vsel %vm5866, %v5856, %v5859
    %v5879 = vsel %vm5869, %v5865, 1326507024
    %v5880 = vsel %vm5868, %v5862, %v5879
    %v5881 = vsel %vm5867, %v5878, %v5880
    %v5882 = vshll.u32 %v5842, 8
    %v5883 = vmul.u32.u64.compose %v5882, %v5881
    %v5884 = vextract.low.u32 %v5883
    %v5885 = vextract.high.u32 %v5883
    %v5886 = vmul.u32.u64.compose %v5882, %v5877
    %v5887 = vextract.low.u32 %v5886
    %v5888 = vextract.high.u32 %v5886
    %v5889 = vmul.u32 %v5882, %v5873
    %v5890 = vadd.s32 %v5885, %v5887
    %vm5891 = vc.u32 %v5885, %v5887
    %v5892 = vadd.s32 %v5888, 1
    %v5893 = vsel %vm5891, %v5892, %v5888
    %v5894 = vadd.s32 %v5889, %v5893
    %v5895 = vadd.s32 %v5894, 536870912
    %v5896 = vshrl.u32 %v5895, 30
    %v5897 = vshll.u32 %v5896, 30
    %v5898 = vsub.s32 %v5894, %v5897
    %vm5899 = vcmp.lt.s32.totalorder %v5898, 0
    %v5900 = vsub.s32 0, %v5898
    %v5901 = vsel %vm5899, %v5900, %v5898
    %v5902 = vclz %v5901
    %v5903 = vsub.s32 %v5902, 2
    %vm5904 = vcmp.gt.s32.totalorder 0, %v5903
    %v5905 = vsel %vm5904, 0, %v5903
    %v5906 = vsub.s32 32, %v5905
    %v5907 = vshll.u32 %v5898, %v5905
    %v5908 = vshrl.u32 %v5890, %v5906
    %v5909 = vor.u32 %v5907, %v5908
    %v5910 = vsub.s32 4294967266, %v5905
    %v5911 = vadd.s32 %v5910, 127
    %v5912 = vshll.u32 %v5911, 23
    %v5913 = vor.u32 4788187, %v5912
    %v5914 = vand.u32 2147483647, %v5913
    %v5916 = vcvt.s32.f32 %v5909
    %v5917 = vmul.f32 %v5916, %v5914
    %v5918 = vxor.u32 %v5917, 2147483648
    %v5919 = vsel %vm5836, %v5918, %v5917
    %v5920 = vsub.s32 4, %v5896
    %v5921 = vsel %vm5836, %v5920, %v5896
    %v5922 = vsel %vm5835, %v534, %v5919
    %v5923 = vsel %vm5835, 0, %v5921
    %v5924 = vcosq.f32.pop %v5922
    %v5925 = vsinq.f32.pop %v5922
    %vm5926 = vweird.f32 %v534
    %v5927 = vand.u32 %v5923, 3
    %vm5928 = vcmp.lt.s32.totalorder %v5927, 2
    %vm5929 = vcmp.eq.s32.totalorder %v5927, 0
    %v5930 = vxor.u32 %v5925, 2147483648
    %v5931 = vsel %vm5929, %v5924, %v5930
    %vm5932 = vcmp.eq.s32.totalorder %v5927, 2
    %v5933 = vxor.u32 %v5924, 2147483648
    %v5934 = vsel %vm5932, %v5933, %v5925
    %v5935 = vsel %vm5928, %v5931, %v5934
    %v5936 = vsel %vm5926, nan, %v5935
    %v5937 = vand.u32 2147483647, %v535
    %vm5938 = vcmp.le.f32.partialorder %v5937, 0.7853982
    %vm5939 = vcmp.lt.s32.totalorder %v535, 0
    %v5940 = vand.u32 %v535, 2139095040
    %v5941 = vshrl.u32 %v5940, 23
    %v5942 = vsub.s32 %v5941, 127
    %v5943 = vand.u32 2147483647, %v535
    %v5944 = vand.u32 %v5943, 8388607
    %v5945 = vor.u32 %v5944, 8388608
    %v5946 = vsub.s32 0, %v5945
    %v5947 = vadd.s32 %v5942, 1
    %vm5948 = vcmp.gt.s32.totalorder %v5947, 0
    %v5949 = vsel %vm5948, %v5947, 0
    %v5950 = vshrl.u32 %v5949, 5
    %v5951 = vand.u32 %v5949, 31
    %v5952 = vsub.s32 32, %v5951
    %v5953 = vshrl.u32 683565275, %v5952
    %v5954 = vshll.u32 683565275, %v5951
    %v5955 = vshrl.u32 2475754826, %v5952
    %v5956 = vor.u32 %v5954, %v5955
    %v5957 = vshll.u32 2475754826, %v5951
    %v5958 = vshrl.u32 2131351028, %v5952
    %v5959 = vor.u32 %v5957, %v5958
    %v5960 = vshll.u32 2131351028, %v5951
    %v5961 = vshrl.u32 2102212464, %v5952
    %v5962 = vor.u32 %v5960, %v5961
    %v5963 = vshll.u32 2102212464, %v5951
    %v5964 = vshrl.u32 920167782, %v5952
    %v5965 = vor.u32 %v5963, %v5964
    %v5966 = vshll.u32 920167782, %v5951
    %v5967 = vshrl.u32 1326507024, %v5952
    %v5968 = vor.u32 %v5966, %v5967
    %vm5969 = vcmp.lt.s32.totalorder %v5950, 1
    %vm5970 = vcmp.lt.s32.totalorder %v5950, 2
    %vm5971 = vcmp.lt.s32.totalorder %v5950, 3
    %vm5972 = vcmp.lt.s32.totalorder %v5950, 4
    %v5973 = vsel %vm5969, %v5953, %v5956
    %v5974 = vsel %vm5972, %v5962, 2102212464
    %v5975 = vsel %vm5971, %v5959, %v5974
    %v5976 = vsel %vm5970, %v5973, %v5975
    %v5977 = vsel %vm5969, %v5956, %v5959
    %v5978 = vsel %vm5972, %v5965, 920167782
    %v5979 = vsel %vm5971, %v5962, %v5978
    %v5980 = vsel %vm5970, %v5977, %v5979
    %v5981 = vsel %vm5969, %v5959, %v5962
    %v5982 = vsel %vm5972, %v5968, 1326507024
    %v5983 = vsel %vm5971, %v5965, %v5982
    %v5984 = vsel %vm5970, %v5981, %v5983
    %v5985 = vshll.u32 %v5945, 8
    %v5986 = vmul.u32.u64.compose %v5985, %v5984
    %v5987 = vextract.low.u32 %v5986
    %v5988 = vextract.high.u32 %v5986
    %v5989 = vmul.u32.u64.compose %v5985, %v5980
    %v5990 = vextract.low.u32 %v5989
    %v5991 = vextract.high.u32 %v5989
    %v5992 = vmul.u32 %v5985, %v5976
    %v5993 = vadd.s32 %v5988, %v5990
    %vm5994 = vc.u32 %v5988, %v5990
    %v5995 = vadd.s32 %v5991, 1
    %v5996 = vsel %vm5994, %v5995, %v5991
    %v5997 = vadd.s32 %v5992, %v5996
    %v5998 = vadd.s32 %v5997, 536870912
    %v5999 = vshrl.u32 %v5998, 30
    %v6000 = vshll.u32 %v5999, 30
    %v6001 = vsub.s32 %v5997, %v6000
    %vm6002 = vcmp.lt.s32.totalorder %v6001, 0
    %v6003 = vsub.s32 0, %v6001
    %v6004 = vsel %vm6002, %v6003, %v6001
    %v6005 = vclz %v6004
    %v6006 = vsub.s32 %v6005, 2
    %vm6007 = vcmp.gt.s32.totalorder 0, %v6006
    %v6008 = vsel %vm6007, 0, %v6006
    %v6009 = vsub.s32 32, %v6008
    %v6010 = vshll.u32 %v6001, %v6008
    %v6011 = vshrl.u32 %v5993, %v6009
    %v6012 = vor.u32 %v6010, %v6011
    %v6013 = vsub.s32 4294967266, %v6008
    %v6014 = vadd.s32 %v6013, 127
    %v6015 = vshll.u32 %v6014, 23
    %v6016 = vor.u32 4788187, %v6015
    %v6017 = vand.u32 2147483647, %v6016
    %v6019 = vcvt.s32.f32 %v6012
    %v6020 = vmul.f32 %v6019, %v6017
    %v6021 = vxor.u32 %v6020, 2147483648
    %v6022 = vsel %vm5939, %v6021, %v6020
    %v6023 = vsub.s32 4, %v5999
    %v6024 = vsel %vm5939, %v6023, %v5999
    %v6025 = vsel %vm5938, %v535, %v6022
    %v6026 = vsel %vm5938, 0, %v6024
    %v6027 = vcosq.f32.pop %v6025
    %v6028 = vsinq.f32.pop %v6025
    %vm6029 = vweird.f32 %v535
    %v6030 = vand.u32 %v6026, 3
    %vm6031 = vcmp.lt.s32.totalorder %v6030, 2
    %vm6032 = vcmp.eq.s32.totalorder %v6030, 0
    %v6033 = vxor.u32 %v6028, 2147483648
    %v6034 = vsel %vm6032, %v6027, %v6033
    %vm6035 = vcmp.eq.s32.totalorder %v6030, 2
    %v6036 = vxor.u32 %v6027, 2147483648
    %v6037 = vsel %vm6035, %v6036, %v6028
    %v6038 = vsel %vm6031, %v6034, %v6037
    %v6039 = vsel %vm6029, nan, %v6038
    %v6040 = vand.u32 2147483647, %v536
    %vm6041 = vcmp.le.f32.partialorder %v6040, 0.7853982
    %vm6042 = vcmp.lt.s32.totalorder %v536, 0
    %v6043 = vand.u32 %v536, 2139095040
    %v6044 = vshrl.u32 %v6043, 23
    %v6045 = vsub.s32 %v6044, 127
    %v6046 = vand.u32 2147483647, %v536
    %v6047 = vand.u32 %v6046, 8388607
    %v6048 = vor.u32 %v6047, 8388608
    %v6049 = vsub.s32 0, %v6048
    %v6050 = vadd.s32 %v6045, 1
    %vm6051 = vcmp.gt.s32.totalorder %v6050, 0
    %v6052 = vsel %vm6051, %v6050, 0
    %v6053 = vshrl.u32 %v6052, 5
    %v6054 = vand.u32 %v6052, 31
    %v6055 = vsub.s32 32, %v6054
    %v6056 = vshrl.u32 683565275, %v6055
    %v6057 = vshll.u32 683565275, %v6054
    %v6058 = vshrl.u32 2475754826, %v6055
    %v6059 = vor.u32 %v6057, %v6058
    %v6060 = vshll.u32 2475754826, %v6054
    %v6061 = vshrl.u32 2131351028, %v6055
    %v6062 = vor.u32 %v6060, %v6061
    %v6063 = vshll.u32 2131351028, %v6054
    %v6064 = vshrl.u32 2102212464, %v6055
    %v6065 = vor.u32 %v6063, %v6064
    %v6066 = vshll.u32 2102212464, %v6054
    %v6067 = vshrl.u32 920167782, %v6055
    %v6068 = vor.u32 %v6066, %v6067
    %v6069 = vshll.u32 920167782, %v6054
    %v6070 = vshrl.u32 1326507024, %v6055
    %v6071 = vor.u32 %v6069, %v6070
    %vm6072 = vcmp.lt.s32.totalorder %v6053, 1
    %vm6073 = vcmp.lt.s32.totalorder %v6053, 2
    %vm6074 = vcmp.lt.s32.totalorder %v6053, 3
    %vm6075 = vcmp.lt.s32.totalorder %v6053, 4
    %v6076 = vsel %vm6072, %v6056, %v6059
    %v6077 = vsel %vm6075, %v6065, 2102212464
    %v6078 = vsel %vm6074, %v6062, %v6077
    %v6079 = vsel %vm6073, %v6076, %v6078
    %v6080 = vsel %vm6072, %v6059, %v6062
    %v6081 = vsel %vm6075, %v6068, 920167782
    %v6082 = vsel %vm6074, %v6065, %v6081
    %v6083 = vsel %vm6073, %v6080, %v6082
    %v6084 = vsel %vm6072, %v6062, %v6065
    %v6085 = vsel %vm6075, %v6071, 1326507024
    %v6086 = vsel %vm6074, %v6068, %v6085
    %v6087 = vsel %vm6073, %v6084, %v6086
    %v6088 = vshll.u32 %v6048, 8
    %v6089 = vmul.u32.u64.compose %v6088, %v6087
    %v6090 = vextract.low.u32 %v6089
    %v6091 = vextract.high.u32 %v6089
    %v6092 = vmul.u32.u64.compose %v6088, %v6083
    %v6093 = vextract.low.u32 %v6092
    %v6094 = vextract.high.u32 %v6092
    %v6095 = vmul.u32 %v6088, %v6079
    %v6096 = vadd.s32 %v6091, %v6093
    %vm6097 = vc.u32 %v6091, %v6093
    %v6098 = vadd.s32 %v6094, 1
    %v6099 = vsel %vm6097, %v6098, %v6094
    %v6100 = vadd.s32 %v6095, %v6099
    %v6101 = vadd.s32 %v6100, 536870912
    %v6102 = vshrl.u32 %v6101, 30
    %v6103 = vshll.u32 %v6102, 30
    %v6104 = vsub.s32 %v6100, %v6103
    %vm6105 = vcmp.lt.s32.totalorder %v6104, 0
    %v6106 = vsub.s32 0, %v6104
    %v6107 = vsel %vm6105, %v6106, %v6104
    %v6108 = vclz %v6107
    %v6109 = vsub.s32 %v6108, 2
    %vm6110 = vcmp.gt.s32.totalorder 0, %v6109
    %v6111 = vsel %vm6110, 0, %v6109
    %v6112 = vsub.s32 32, %v6111
    %v6113 = vshll.u32 %v6104, %v6111
    %v6114 = vshrl.u32 %v6096, %v6112
    %v6115 = vor.u32 %v6113, %v6114
    %v6116 = vsub.s32 4294967266, %v6111
    %v6117 = vadd.s32 %v6116, 127
    %v6118 = vshll.u32 %v6117, 23
    %v6119 = vor.u32 4788187, %v6118
    %v6120 = vand.u32 2147483647, %v6119
    %v6122 = vcvt.s32.f32 %v6115
    %v6123 = vmul.f32 %v6122, %v6120
    %v6124 = vxor.u32 %v6123, 2147483648
    %v6125 = vsel %vm6042, %v6124, %v6123
    %v6126 = vsub.s32 4, %v6102
    %v6127 = vsel %vm6042, %v6126, %v6102
    %v6128 = vsel %vm6041, %v536, %v6125
    %v6129 = vsel %vm6041, 0, %v6127
    %v6130 = vcosq.f32.pop %v6128
    %v6131 = vsinq.f32.pop %v6128
    %vm6132 = vweird.f32 %v536
    %v6133 = vand.u32 %v6129, 3
    %vm6134 = vcmp.lt.s32.totalorder %v6133, 2
    %vm6135 = vcmp.eq.s32.totalorder %v6133, 0
    %v6136 = vxor.u32 %v6131, 2147483648
    %v6137 = vsel %vm6135, %v6130, %v6136
    %vm6138 = vcmp.eq.s32.totalorder %v6133, 2
    %v6139 = vxor.u32 %v6130, 2147483648
    %v6140 = vsel %vm6138, %v6139, %v6131
    %v6141 = vsel %vm6134, %v6137, %v6140
    %v6142 = vsel %vm6132, nan, %v6141
    %v6143 = vand.u32 2147483647, %v537
    %vm6144 = vcmp.le.f32.partialorder %v6143, 0.7853982
    %vm6145 = vcmp.lt.s32.totalorder %v537, 0
    %v6146 = vand.u32 %v537, 2139095040
    %v6147 = vshrl.u32 %v6146, 23
    %v6148 = vsub.s32 %v6147, 127
    %v6149 = vand.u32 2147483647, %v537
    %v6150 = vand.u32 %v6149, 8388607
    %v6151 = vor.u32 %v6150, 8388608
    %v6152 = vsub.s32 0, %v6151
    %v6153 = vadd.s32 %v6148, 1
    %vm6154 = vcmp.gt.s32.totalorder %v6153, 0
    %v6155 = vsel %vm6154, %v6153, 0
    %v6156 = vshrl.u32 %v6155, 5
    %v6157 = vand.u32 %v6155, 31
    %v6158 = vsub.s32 32, %v6157
    %v6159 = vshrl.u32 683565275, %v6158
    %v6160 = vshll.u32 683565275, %v6157
    %v6161 = vshrl.u32 2475754826, %v6158
    %v6162 = vor.u32 %v6160, %v6161
    %v6163 = vshll.u32 2475754826, %v6157
    %v6164 = vshrl.u32 2131351028, %v6158
    %v6165 = vor.u32 %v6163, %v6164
    %v6166 = vshll.u32 2131351028, %v6157
    %v6167 = vshrl.u32 2102212464, %v6158
    %v6168 = vor.u32 %v6166, %v6167
    %v6169 = vshll.u32 2102212464, %v6157
    %v6170 = vshrl.u32 920167782, %v6158
    %v6171 = vor.u32 %v6169, %v6170
    %v6172 = vshll.u32 920167782, %v6157
    %v6173 = vshrl.u32 1326507024, %v6158
    %v6174 = vor.u32 %v6172, %v6173
    %vm6175 = vcmp.lt.s32.totalorder %v6156, 1
    %vm6176 = vcmp.lt.s32.totalorder %v6156, 2
    %vm6177 = vcmp.lt.s32.totalorder %v6156, 3
    %vm6178 = vcmp.lt.s32.totalorder %v6156, 4
    %v6179 = vsel %vm6175, %v6159, %v6162
    %v6180 = vsel %vm6178, %v6168, 2102212464
    %v6181 = vsel %vm6177, %v6165, %v6180
    %v6182 = vsel %vm6176, %v6179, %v6181
    %v6183 = vsel %vm6175, %v6162, %v6165
    %v6184 = vsel %vm6178, %v6171, 920167782
    %v6185 = vsel %vm6177, %v6168, %v6184
    %v6186 = vsel %vm6176, %v6183, %v6185
    %v6187 = vsel %vm6175, %v6165, %v6168
    %v6188 = vsel %vm6178, %v6174, 1326507024
    %v6189 = vsel %vm6177, %v6171, %v6188
    %v6190 = vsel %vm6176, %v6187, %v6189
    %v6191 = vshll.u32 %v6151, 8
    %v6192 = vmul.u32.u64.compose %v6191, %v6190
    %v6193 = vextract.low.u32 %v6192
    %v6194 = vextract.high.u32 %v6192
    %v6195 = vmul.u32.u64.compose %v6191, %v6186
    %v6196 = vextract.low.u32 %v6195
    %v6197 = vextract.high.u32 %v6195
    %v6198 = vmul.u32 %v6191, %v6182
    %v6199 = vadd.s32 %v6194, %v6196
    %vm6200 = vc.u32 %v6194, %v6196
    %v6201 = vadd.s32 %v6197, 1
    %v6202 = vsel %vm6200, %v6201, %v6197
    %v6203 = vadd.s32 %v6198, %v6202
    %v6204 = vadd.s32 %v6203, 536870912
    %v6205 = vshrl.u32 %v6204, 30
    %v6206 = vshll.u32 %v6205, 30
    %v6207 = vsub.s32 %v6203, %v6206
    %vm6208 = vcmp.lt.s32.totalorder %v6207, 0
    %v6209 = vsub.s32 0, %v6207
    %v6210 = vsel %vm6208, %v6209, %v6207
    %v6211 = vclz %v6210
    %v6212 = vsub.s32 %v6211, 2
    %vm6213 = vcmp.gt.s32.totalorder 0, %v6212
    %v6214 = vsel %vm6213, 0, %v6212
    %v6215 = vsub.s32 32, %v6214
    %v6216 = vshll.u32 %v6207, %v6214
    %v6217 = vshrl.u32 %v6199, %v6215
    %v6218 = vor.u32 %v6216, %v6217
    %v6219 = vsub.s32 4294967266, %v6214
    %v6220 = vadd.s32 %v6219, 127
    %v6221 = vshll.u32 %v6220, 23
    %v6222 = vor.u32 4788187, %v6221
    %v6223 = vand.u32 2147483647, %v6222
    %v6225 = vcvt.s32.f32 %v6218
    %v6226 = vmul.f32 %v6225, %v6223
    %v6227 = vxor.u32 %v6226, 2147483648
    %v6228 = vsel %vm6145, %v6227, %v6226
    %v6229 = vsub.s32 4, %v6205
    %v6230 = vsel %vm6145, %v6229, %v6205
    %v6231 = vsel %vm6144, %v537, %v6228
    %v6232 = vsel %vm6144, 0, %v6230
    %v6233 = vcosq.f32.pop %v6231
    %v6234 = vsinq.f32.pop %v6231
    %vm6235 = vweird.f32 %v537
    %v6236 = vand.u32 %v6232, 3
    %vm6237 = vcmp.lt.s32.totalorder %v6236, 2
    %vm6238 = vcmp.eq.s32.totalorder %v6236, 0
    %v6239 = vxor.u32 %v6234, 2147483648
    %v6240 = vsel %vm6238, %v6233, %v6239
    %vm6241 = vcmp.eq.s32.totalorder %v6236, 2
    %v6242 = vxor.u32 %v6233, 2147483648
    %v6243 = vsel %vm6241, %v6242, %v6234
    %v6244 = vsel %vm6237, %v6240, %v6243
    %v6245 = vsel %vm6235, nan, %v6244
    %v6246 = vand.u32 2147483647, %v538
    %vm6247 = vcmp.le.f32.partialorder %v6246, 0.7853982
    %vm6248 = vcmp.lt.s32.totalorder %v538, 0
    %v6249 = vand.u32 %v538, 2139095040
    %v6250 = vshrl.u32 %v6249, 23
    %v6251 = vsub.s32 %v6250, 127
    %v6252 = vand.u32 2147483647, %v538
    %v6253 = vand.u32 %v6252, 8388607
    %v6254 = vor.u32 %v6253, 8388608
    %v6255 = vsub.s32 0, %v6254
    %v6256 = vadd.s32 %v6251, 1
    %vm6257 = vcmp.gt.s32.totalorder %v6256, 0
    %v6258 = vsel %vm6257, %v6256, 0
    %v6259 = vshrl.u32 %v6258, 5
    %v6260 = vand.u32 %v6258, 31
    %v6261 = vsub.s32 32, %v6260
    %v6262 = vshrl.u32 683565275, %v6261
    %v6263 = vshll.u32 683565275, %v6260
    %v6264 = vshrl.u32 2475754826, %v6261
    %v6265 = vor.u32 %v6263, %v6264
    %v6266 = vshll.u32 2475754826, %v6260
    %v6267 = vshrl.u32 2131351028, %v6261
    %v6268 = vor.u32 %v6266, %v6267
    %v6269 = vshll.u32 2131351028, %v6260
    %v6270 = vshrl.u32 2102212464, %v6261
    %v6271 = vor.u32 %v6269, %v6270
    %v6272 = vshll.u32 2102212464, %v6260
    %v6273 = vshrl.u32 920167782, %v6261
    %v6274 = vor.u32 %v6272, %v6273
    %v6275 = vshll.u32 920167782, %v6260
    %v6276 = vshrl.u32 1326507024, %v6261
    %v6277 = vor.u32 %v6275, %v6276
    %vm6278 = vcmp.lt.s32.totalorder %v6259, 1
    %vm6279 = vcmp.lt.s32.totalorder %v6259, 2
    %vm6280 = vcmp.lt.s32.totalorder %v6259, 3
    %vm6281 = vcmp.lt.s32.totalorder %v6259, 4
    %v6282 = vsel %vm6278, %v6262, %v6265
    %v6283 = vsel %vm6281, %v6271, 2102212464
    %v6284 = vsel %vm6280, %v6268, %v6283
    %v6285 = vsel %vm6279, %v6282, %v6284
    %v6286 = vsel %vm6278, %v6265, %v6268
    %v6287 = vsel %vm6281, %v6274, 920167782
    %v6288 = vsel %vm6280, %v6271, %v6287
    %v6289 = vsel %vm6279, %v6286, %v6288
    %v6290 = vsel %vm6278, %v6268, %v6271
    %v6291 = vsel %vm6281, %v6277, 1326507024
    %v6292 = vsel %vm6280, %v6274, %v6291
    %v6293 = vsel %vm6279, %v6290, %v6292
    %v6294 = vshll.u32 %v6254, 8
    %v6295 = vmul.u32.u64.compose %v6294, %v6293
    %v6296 = vextract.low.u32 %v6295
    %v6297 = vextract.high.u32 %v6295
    %v6298 = vmul.u32.u64.compose %v6294, %v6289
    %v6299 = vextract.low.u32 %v6298
    %v6300 = vextract.high.u32 %v6298
    %v6301 = vmul.u32 %v6294, %v6285
    %v6302 = vadd.s32 %v6297, %v6299
    %vm6303 = vc.u32 %v6297, %v6299
    %v6304 = vadd.s32 %v6300, 1
    %v6305 = vsel %vm6303, %v6304, %v6300
    %v6306 = vadd.s32 %v6301, %v6305
    %v6307 = vadd.s32 %v6306, 536870912
    %v6308 = vshrl.u32 %v6307, 30
    %v6309 = vshll.u32 %v6308, 30
    %v6310 = vsub.s32 %v6306, %v6309
    %vm6311 = vcmp.lt.s32.totalorder %v6310, 0
    %v6312 = vsub.s32 0, %v6310
    %v6313 = vsel %vm6311, %v6312, %v6310
    %v6314 = vclz %v6313
    %v6315 = vsub.s32 %v6314, 2
    %vm6316 = vcmp.gt.s32.totalorder 0, %v6315
    %v6317 = vsel %vm6316, 0, %v6315
    %v6318 = vsub.s32 32, %v6317
    %v6319 = vshll.u32 %v6310, %v6317
    %v6320 = vshrl.u32 %v6302, %v6318
    %v6321 = vor.u32 %v6319, %v6320
    %v6322 = vsub.s32 4294967266, %v6317
    %v6323 = vadd.s32 %v6322, 127
    %v6324 = vshll.u32 %v6323, 23
    %v6325 = vor.u32 4788187, %v6324
    %v6326 = vand.u32 2147483647, %v6325
    %v6328 = vcvt.s32.f32 %v6321
    %v6329 = vmul.f32 %v6328, %v6326
    %v6330 = vxor.u32 %v6329, 2147483648
    %v6331 = vsel %vm6248, %v6330, %v6329
    %v6332 = vsub.s32 4, %v6308
    %v6333 = vsel %vm6248, %v6332, %v6308
    %v6334 = vsel %vm6247, %v538, %v6331
    %v6335 = vsel %vm6247, 0, %v6333
    %v6336 = vcosq.f32.pop %v6334
    %v6337 = vsinq.f32.pop %v6334
    %vm6338 = vweird.f32 %v538
    %v6339 = vand.u32 %v6335, 3
    %vm6340 = vcmp.lt.s32.totalorder %v6339, 2
    %vm6341 = vcmp.eq.s32.totalorder %v6339, 0
    %v6342 = vxor.u32 %v6337, 2147483648
    %v6343 = vsel %vm6341, %v6336, %v6342
    %vm6344 = vcmp.eq.s32.totalorder %v6339, 2
    %v6345 = vxor.u32 %v6336, 2147483648
    %v6346 = vsel %vm6344, %v6345, %v6337
    %v6347 = vsel %vm6340, %v6343, %v6346
    %v6348 = vsel %vm6338, nan, %v6347
    %v6349 = vand.u32 2147483647, %v539
    %vm6350 = vcmp.le.f32.partialorder %v6349, 0.7853982
    %vm6351 = vcmp.lt.s32.totalorder %v539, 0
    %v6352 = vand.u32 %v539, 2139095040
    %v6353 = vshrl.u32 %v6352, 23
    %v6354 = vsub.s32 %v6353, 127
    %v6355 = vand.u32 2147483647, %v539
    %v6356 = vand.u32 %v6355, 8388607
    %v6357 = vor.u32 %v6356, 8388608
    %v6358 = vsub.s32 0, %v6357
    %v6359 = vadd.s32 %v6354, 1
    %vm6360 = vcmp.gt.s32.totalorder %v6359, 0
    %v6361 = vsel %vm6360, %v6359, 0
    %v6362 = vshrl.u32 %v6361, 5
    %v6363 = vand.u32 %v6361, 31
    %v6364 = vsub.s32 32, %v6363
    %v6365 = vshrl.u32 683565275, %v6364
    %v6366 = vshll.u32 683565275, %v6363
    %v6367 = vshrl.u32 2475754826, %v6364
    %v6368 = vor.u32 %v6366, %v6367
    %v6369 = vshll.u32 2475754826, %v6363
    %v6370 = vshrl.u32 2131351028, %v6364
    %v6371 = vor.u32 %v6369, %v6370
    %v6372 = vshll.u32 2131351028, %v6363
    %v6373 = vshrl.u32 2102212464, %v6364
    %v6374 = vor.u32 %v6372, %v6373
    %v6375 = vshll.u32 2102212464, %v6363
    %v6376 = vshrl.u32 920167782, %v6364
    %v6377 = vor.u32 %v6375, %v6376
    %v6378 = vshll.u32 920167782, %v6363
    %v6379 = vshrl.u32 1326507024, %v6364
    %v6380 = vor.u32 %v6378, %v6379
    %vm6381 = vcmp.lt.s32.totalorder %v6362, 1
    %vm6382 = vcmp.lt.s32.totalorder %v6362, 2
    %vm6383 = vcmp.lt.s32.totalorder %v6362, 3
    %vm6384 = vcmp.lt.s32.totalorder %v6362, 4
    %v6385 = vsel %vm6381, %v6365, %v6368
    %v6386 = vsel %vm6384, %v6374, 2102212464
    %v6387 = vsel %vm6383, %v6371, %v6386
    %v6388 = vsel %vm6382, %v6385, %v6387
    %v6389 = vsel %vm6381, %v6368, %v6371
    %v6390 = vsel %vm6384, %v6377, 920167782
    %v6391 = vsel %vm6383, %v6374, %v6390
    %v6392 = vsel %vm6382, %v6389, %v6391
    %v6393 = vsel %vm6381, %v6371, %v6374
    %v6394 = vsel %vm6384, %v6380, 1326507024
    %v6395 = vsel %vm6383, %v6377, %v6394
    %v6396 = vsel %vm6382, %v6393, %v6395
    %v6397 = vshll.u32 %v6357, 8
    %v6398 = vmul.u32.u64.compose %v6397, %v6396
    %v6399 = vextract.low.u32 %v6398
    %v6400 = vextract.high.u32 %v6398
    %v6401 = vmul.u32.u64.compose %v6397, %v6392
    %v6402 = vextract.low.u32 %v6401
    %v6403 = vextract.high.u32 %v6401
    %v6404 = vmul.u32 %v6397, %v6388
    %v6405 = vadd.s32 %v6400, %v6402
    %vm6406 = vc.u32 %v6400, %v6402
    %v6407 = vadd.s32 %v6403, 1
    %v6408 = vsel %vm6406, %v6407, %v6403
    %v6409 = vadd.s32 %v6404, %v6408
    %v6410 = vadd.s32 %v6409, 536870912
    %v6411 = vshrl.u32 %v6410, 30
    %v6412 = vshll.u32 %v6411, 30
    %v6413 = vsub.s32 %v6409, %v6412
    %vm6414 = vcmp.lt.s32.totalorder %v6413, 0
    %v6415 = vsub.s32 0, %v6413
    %v6416 = vsel %vm6414, %v6415, %v6413
    %v6417 = vclz %v6416
    %v6418 = vsub.s32 %v6417, 2
    %vm6419 = vcmp.gt.s32.totalorder 0, %v6418
    %v6420 = vsel %vm6419, 0, %v6418
    %v6421 = vsub.s32 32, %v6420
    %v6422 = vshll.u32 %v6413, %v6420
    %v6423 = vshrl.u32 %v6405, %v6421
    %v6424 = vor.u32 %v6422, %v6423
    %v6425 = vsub.s32 4294967266, %v6420
    %v6426 = vadd.s32 %v6425, 127
    %v6427 = vshll.u32 %v6426, 23
    %v6428 = vor.u32 4788187, %v6427
    %v6429 = vand.u32 2147483647, %v6428
    %v6431 = vcvt.s32.f32 %v6424
    %v6432 = vmul.f32 %v6431, %v6429
    %v6433 = vxor.u32 %v6432, 2147483648
    %v6434 = vsel %vm6351, %v6433, %v6432
    %v6435 = vsub.s32 4, %v6411
    %v6436 = vsel %vm6351, %v6435, %v6411
    %v6437 = vsel %vm6350, %v539, %v6434
    %v6438 = vsel %vm6350, 0, %v6436
    %v6439 = vcosq.f32.pop %v6437
    %v6440 = vsinq.f32.pop %v6437
    %vm6441 = vweird.f32 %v539
    %v6442 = vand.u32 %v6438, 3
    %vm6443 = vcmp.lt.s32.totalorder %v6442, 2
    %vm6444 = vcmp.eq.s32.totalorder %v6442, 0
    %v6445 = vxor.u32 %v6440, 2147483648
    %v6446 = vsel %vm6444, %v6439, %v6445
    %vm6447 = vcmp.eq.s32.totalorder %v6442, 2
    %v6448 = vxor.u32 %v6439, 2147483648
    %v6449 = vsel %vm6447, %v6448, %v6440
    %v6450 = vsel %vm6443, %v6446, %v6449
    %v6451 = vsel %vm6441, nan, %v6450
    %v6452 = vand.u32 2147483647, %v540
    %vm6453 = vcmp.le.f32.partialorder %v6452, 0.7853982
    %vm6454 = vcmp.lt.s32.totalorder %v540, 0
    %v6455 = vand.u32 %v540, 2139095040
    %v6456 = vshrl.u32 %v6455, 23
    %v6457 = vsub.s32 %v6456, 127
    %v6458 = vand.u32 2147483647, %v540
    %v6459 = vand.u32 %v6458, 8388607
    %v6460 = vor.u32 %v6459, 8388608
    %v6461 = vsub.s32 0, %v6460
    %v6462 = vadd.s32 %v6457, 1
    %vm6463 = vcmp.gt.s32.totalorder %v6462, 0
    %v6464 = vsel %vm6463, %v6462, 0
    %v6465 = vshrl.u32 %v6464, 5
    %v6466 = vand.u32 %v6464, 31
    %v6467 = vsub.s32 32, %v6466
    %v6468 = vshrl.u32 683565275, %v6467
    %v6469 = vshll.u32 683565275, %v6466
    %v6470 = vshrl.u32 2475754826, %v6467
    %v6471 = vor.u32 %v6469, %v6470
    %v6472 = vshll.u32 2475754826, %v6466
    %v6473 = vshrl.u32 2131351028, %v6467
    %v6474 = vor.u32 %v6472, %v6473
    %v6475 = vshll.u32 2131351028, %v6466
    %v6476 = vshrl.u32 2102212464, %v6467
    %v6477 = vor.u32 %v6475, %v6476
    %v6478 = vshll.u32 2102212464, %v6466
    %v6479 = vshrl.u32 920167782, %v6467
    %v6480 = vor.u32 %v6478, %v6479
    %v6481 = vshll.u32 920167782, %v6466
    %v6482 = vshrl.u32 1326507024, %v6467
    %v6483 = vor.u32 %v6481, %v6482
    %vm6484 = vcmp.lt.s32.totalorder %v6465, 1
    %vm6485 = vcmp.lt.s32.totalorder %v6465, 2
    %vm6486 = vcmp.lt.s32.totalorder %v6465, 3
    %vm6487 = vcmp.lt.s32.totalorder %v6465, 4
    %v6488 = vsel %vm6484, %v6468, %v6471
    %v6489 = vsel %vm6487, %v6477, 2102212464
    %v6490 = vsel %vm6486, %v6474, %v6489
    %v6491 = vsel %vm6485, %v6488, %v6490
    %v6492 = vsel %vm6484, %v6471, %v6474
    %v6493 = vsel %vm6487, %v6480, 920167782
    %v6494 = vsel %vm6486, %v6477, %v6493
    %v6495 = vsel %vm6485, %v6492, %v6494
    %v6496 = vsel %vm6484, %v6474, %v6477
    %v6497 = vsel %vm6487, %v6483, 1326507024
    %v6498 = vsel %vm6486, %v6480, %v6497
    %v6499 = vsel %vm6485, %v6496, %v6498
    %v6500 = vshll.u32 %v6460, 8
    %v6501 = vmul.u32.u64.compose %v6500, %v6499
    %v6502 = vextract.low.u32 %v6501
    %v6503 = vextract.high.u32 %v6501
    %v6504 = vmul.u32.u64.compose %v6500, %v6495
    %v6505 = vextract.low.u32 %v6504
    %v6506 = vextract.high.u32 %v6504
    %v6507 = vmul.u32 %v6500, %v6491
    %v6508 = vadd.s32 %v6503, %v6505
    %vm6509 = vc.u32 %v6503, %v6505
    %v6510 = vadd.s32 %v6506, 1
    %v6511 = vsel %vm6509, %v6510, %v6506
    %v6512 = vadd.s32 %v6507, %v6511
    %v6513 = vadd.s32 %v6512, 536870912
    %v6514 = vshrl.u32 %v6513, 30
    %v6515 = vshll.u32 %v6514, 30
    %v6516 = vsub.s32 %v6512, %v6515
    %vm6517 = vcmp.lt.s32.totalorder %v6516, 0
    %v6518 = vsub.s32 0, %v6516
    %v6519 = vsel %vm6517, %v6518, %v6516
    %v6520 = vclz %v6519
    %v6521 = vsub.s32 %v6520, 2
    %vm6522 = vcmp.gt.s32.totalorder 0, %v6521
    %v6523 = vsel %vm6522, 0, %v6521
    %v6524 = vsub.s32 32, %v6523
    %v6525 = vshll.u32 %v6516, %v6523
    %v6526 = vshrl.u32 %v6508, %v6524
    %v6527 = vor.u32 %v6525, %v6526
    %v6528 = vsub.s32 4294967266, %v6523
    %v6529 = vadd.s32 %v6528, 127
    %v6530 = vshll.u32 %v6529, 23
    %v6531 = vor.u32 4788187, %v6530
    %v6532 = vand.u32 2147483647, %v6531
    %v6534 = vcvt.s32.f32 %v6527
    %v6535 = vmul.f32 %v6534, %v6532
    %v6536 = vxor.u32 %v6535, 2147483648
    %v6537 = vsel %vm6454, %v6536, %v6535
    %v6538 = vsub.s32 4, %v6514
    %v6539 = vsel %vm6454, %v6538, %v6514
    %v6540 = vsel %vm6453, %v540, %v6537
    %v6541 = vsel %vm6453, 0, %v6539
    %v6542 = vcosq.f32.pop %v6540
    %v6543 = vsinq.f32.pop %v6540
    %vm6544 = vweird.f32 %v540
    %v6545 = vand.u32 %v6541, 3
    %vm6546 = vcmp.lt.s32.totalorder %v6545, 2
    %vm6547 = vcmp.eq.s32.totalorder %v6545, 0
    %v6548 = vxor.u32 %v6543, 2147483648
    %v6549 = vsel %vm6547, %v6542, %v6548
    %vm6550 = vcmp.eq.s32.totalorder %v6545, 2
    %v6551 = vxor.u32 %v6542, 2147483648
    %v6552 = vsel %vm6550, %v6551, %v6543
    %v6553 = vsel %vm6546, %v6549, %v6552
    %v6554 = vsel %vm6544, nan, %v6553
    %v6555 = vand.u32 2147483647, %v541
    %vm6556 = vcmp.le.f32.partialorder %v6555, 0.7853982
    %vm6557 = vcmp.lt.s32.totalorder %v541, 0
    %v6558 = vand.u32 %v541, 2139095040
    %v6559 = vshrl.u32 %v6558, 23
    %v6560 = vsub.s32 %v6559, 127
    %v6561 = vand.u32 2147483647, %v541
    %v6562 = vand.u32 %v6561, 8388607
    %v6563 = vor.u32 %v6562, 8388608
    %v6564 = vsub.s32 0, %v6563
    %v6565 = vadd.s32 %v6560, 1
    %vm6566 = vcmp.gt.s32.totalorder %v6565, 0
    %v6567 = vsel %vm6566, %v6565, 0
    %v6568 = vshrl.u32 %v6567, 5
    %v6569 = vand.u32 %v6567, 31
    %v6570 = vsub.s32 32, %v6569
    %v6571 = vshrl.u32 683565275, %v6570
    %v6572 = vshll.u32 683565275, %v6569
    %v6573 = vshrl.u32 2475754826, %v6570
    %v6574 = vor.u32 %v6572, %v6573
    %v6575 = vshll.u32 2475754826, %v6569
    %v6576 = vshrl.u32 2131351028, %v6570
    %v6577 = vor.u32 %v6575, %v6576
    %v6578 = vshll.u32 2131351028, %v6569
    %v6579 = vshrl.u32 2102212464, %v6570
    %v6580 = vor.u32 %v6578, %v6579
    %v6581 = vshll.u32 2102212464, %v6569
    %v6582 = vshrl.u32 920167782, %v6570
    %v6583 = vor.u32 %v6581, %v6582
    %v6584 = vshll.u32 920167782, %v6569
    %v6585 = vshrl.u32 1326507024, %v6570
    %v6586 = vor.u32 %v6584, %v6585
    %vm6587 = vcmp.lt.s32.totalorder %v6568, 1
    %vm6588 = vcmp.lt.s32.totalorder %v6568, 2
    %vm6589 = vcmp.lt.s32.totalorder %v6568, 3
    %vm6590 = vcmp.lt.s32.totalorder %v6568, 4
    %v6591 = vsel %vm6587, %v6571, %v6574
    %v6592 = vsel %vm6590, %v6580, 2102212464
    %v6593 = vsel %vm6589, %v6577, %v6592
    %v6594 = vsel %vm6588, %v6591, %v6593
    %v6595 = vsel %vm6587, %v6574, %v6577
    %v6596 = vsel %vm6590, %v6583, 920167782
    %v6597 = vsel %vm6589, %v6580, %v6596
    %v6598 = vsel %vm6588, %v6595, %v6597
    %v6599 = vsel %vm6587, %v6577, %v6580
    %v6600 = vsel %vm6590, %v6586, 1326507024
    %v6601 = vsel %vm6589, %v6583, %v6600
    %v6602 = vsel %vm6588, %v6599, %v6601
    %v6603 = vshll.u32 %v6563, 8
    %v6604 = vmul.u32.u64.compose %v6603, %v6602
    %v6605 = vextract.low.u32 %v6604
    %v6606 = vextract.high.u32 %v6604
    %v6607 = vmul.u32.u64.compose %v6603, %v6598
    %v6608 = vextract.low.u32 %v6607
    %v6609 = vextract.high.u32 %v6607
    %v6610 = vmul.u32 %v6603, %v6594
    %v6611 = vadd.s32 %v6606, %v6608
    %vm6612 = vc.u32 %v6606, %v6608
    %v6613 = vadd.s32 %v6609, 1
    %v6614 = vsel %vm6612, %v6613, %v6609
    %v6615 = vadd.s32 %v6610, %v6614
    %v6616 = vadd.s32 %v6615, 536870912
    %v6617 = vshrl.u32 %v6616, 30
    %v6618 = vshll.u32 %v6617, 30
    %v6619 = vsub.s32 %v6615, %v6618
    %vm6620 = vcmp.lt.s32.totalorder %v6619, 0
    %v6621 = vsub.s32 0, %v6619
    %v6622 = vsel %vm6620, %v6621, %v6619
    %v6623 = vclz %v6622
    %v6624 = vsub.s32 %v6623, 2
    %vm6625 = vcmp.gt.s32.totalorder 0, %v6624
    %v6626 = vsel %vm6625, 0, %v6624
    %v6627 = vsub.s32 32, %v6626
    %v6628 = vshll.u32 %v6619, %v6626
    %v6629 = vshrl.u32 %v6611, %v6627
    %v6630 = vor.u32 %v6628, %v6629
    %v6631 = vsub.s32 4294967266, %v6626
    %v6632 = vadd.s32 %v6631, 127
    %v6633 = vshll.u32 %v6632, 23
    %v6634 = vor.u32 4788187, %v6633
    %v6635 = vand.u32 2147483647, %v6634
    %v6637 = vcvt.s32.f32 %v6630
    %v6638 = vmul.f32 %v6637, %v6635
    %v6639 = vxor.u32 %v6638, 2147483648
    %v6640 = vsel %vm6557, %v6639, %v6638
    %v6641 = vsub.s32 4, %v6617
    %v6642 = vsel %vm6557, %v6641, %v6617
    %v6643 = vsel %vm6556, %v541, %v6640
    %v6644 = vsel %vm6556, 0, %v6642
    %v6645 = vcosq.f32.pop %v6643
    %v6646 = vsinq.f32.pop %v6643
    %vm6647 = vweird.f32 %v541
    %v6648 = vand.u32 %v6644, 3
    %vm6649 = vcmp.lt.s32.totalorder %v6648, 2
    %vm6650 = vcmp.eq.s32.totalorder %v6648, 0
    %v6651 = vxor.u32 %v6646, 2147483648
    %v6652 = vsel %vm6650, %v6645, %v6651
    %vm6653 = vcmp.eq.s32.totalorder %v6648, 2
    %v6654 = vxor.u32 %v6645, 2147483648
    %v6655 = vsel %vm6653, %v6654, %v6646
    %v6656 = vsel %vm6649, %v6652, %v6655
    %v6657 = vsel %vm6647, nan, %v6656
    %v6658 = vand.u32 2147483647, %v542
    %vm6659 = vcmp.le.f32.partialorder %v6658, 0.7853982
    %vm6660 = vcmp.lt.s32.totalorder %v542, 0
    %v6661 = vand.u32 %v542, 2139095040
    %v6662 = vshrl.u32 %v6661, 23
    %v6663 = vsub.s32 %v6662, 127
    %v6664 = vand.u32 2147483647, %v542
    %v6665 = vand.u32 %v6664, 8388607
    %v6666 = vor.u32 %v6665, 8388608
    %v6667 = vsub.s32 0, %v6666
    %v6668 = vadd.s32 %v6663, 1
    %vm6669 = vcmp.gt.s32.totalorder %v6668, 0
    %v6670 = vsel %vm6669, %v6668, 0
    %v6671 = vshrl.u32 %v6670, 5
    %v6672 = vand.u32 %v6670, 31
    %v6673 = vsub.s32 32, %v6672
    %v6674 = vshrl.u32 683565275, %v6673
    %v6675 = vshll.u32 683565275, %v6672
    %v6676 = vshrl.u32 2475754826, %v6673
    %v6677 = vor.u32 %v6675, %v6676
    %v6678 = vshll.u32 2475754826, %v6672
    %v6679 = vshrl.u32 2131351028, %v6673
    %v6680 = vor.u32 %v6678, %v6679
    %v6681 = vshll.u32 2131351028, %v6672
    %v6682 = vshrl.u32 2102212464, %v6673
    %v6683 = vor.u32 %v6681, %v6682
    %v6684 = vshll.u32 2102212464, %v6672
    %v6685 = vshrl.u32 920167782, %v6673
    %v6686 = vor.u32 %v6684, %v6685
    %v6687 = vshll.u32 920167782, %v6672
    %v6688 = vshrl.u32 1326507024, %v6673
    %v6689 = vor.u32 %v6687, %v6688
    %vm6690 = vcmp.lt.s32.totalorder %v6671, 1
    %vm6691 = vcmp.lt.s32.totalorder %v6671, 2
    %vm6692 = vcmp.lt.s32.totalorder %v6671, 3
    %vm6693 = vcmp.lt.s32.totalorder %v6671, 4
    %v6694 = vsel %vm6690, %v6674, %v6677
    %v6695 = vsel %vm6693, %v6683, 2102212464
    %v6696 = vsel %vm6692, %v6680, %v6695
    %v6697 = vsel %vm6691, %v6694, %v6696
    %v6698 = vsel %vm6690, %v6677, %v6680
    %v6699 = vsel %vm6693, %v6686, 920167782
    %v6700 = vsel %vm6692, %v6683, %v6699
    %v6701 = vsel %vm6691, %v6698, %v6700
    %v6702 = vsel %vm6690, %v6680, %v6683
    %v6703 = vsel %vm6693, %v6689, 1326507024
    %v6704 = vsel %vm6692, %v6686, %v6703
    %v6705 = vsel %vm6691, %v6702, %v6704
    %v6706 = vshll.u32 %v6666, 8
    %v6707 = vmul.u32.u64.compose %v6706, %v6705
    %v6708 = vextract.low.u32 %v6707
    %v6709 = vextract.high.u32 %v6707
    %v6710 = vmul.u32.u64.compose %v6706, %v6701
    %v6711 = vextract.low.u32 %v6710
    %v6712 = vextract.high.u32 %v6710
    %v6713 = vmul.u32 %v6706, %v6697
    %v6714 = vadd.s32 %v6709, %v6711
    %vm6715 = vc.u32 %v6709, %v6711
    %v6716 = vadd.s32 %v6712, 1
    %v6717 = vsel %vm6715, %v6716, %v6712
    %v6718 = vadd.s32 %v6713, %v6717
    %v6719 = vadd.s32 %v6718, 536870912
    %v6720 = vshrl.u32 %v6719, 30
    %v6721 = vshll.u32 %v6720, 30
    %v6722 = vsub.s32 %v6718, %v6721
    %vm6723 = vcmp.lt.s32.totalorder %v6722, 0
    %v6724 = vsub.s32 0, %v6722
    %v6725 = vsel %vm6723, %v6724, %v6722
    %v6726 = vclz %v6725
    %v6727 = vsub.s32 %v6726, 2
    %vm6728 = vcmp.gt.s32.totalorder 0, %v6727
    %v6729 = vsel %vm6728, 0, %v6727
    %v6730 = vsub.s32 32, %v6729
    %v6731 = vshll.u32 %v6722, %v6729
    %v6732 = vshrl.u32 %v6714, %v6730
    %v6733 = vor.u32 %v6731, %v6732
    %v6734 = vsub.s32 4294967266, %v6729
    %v6735 = vadd.s32 %v6734, 127
    %v6736 = vshll.u32 %v6735, 23
    %v6737 = vor.u32 4788187, %v6736
    %v6738 = vand.u32 2147483647, %v6737
    %v6740 = vcvt.s32.f32 %v6733
    %v6741 = vmul.f32 %v6740, %v6738
    %v6742 = vxor.u32 %v6741, 2147483648
    %v6743 = vsel %vm6660, %v6742, %v6741
    %v6744 = vsub.s32 4, %v6720
    %v6745 = vsel %vm6660, %v6744, %v6720
    %v6746 = vsel %vm6659, %v542, %v6743
    %v6747 = vsel %vm6659, 0, %v6745
    %v6748 = vcosq.f32.pop %v6746
    %v6749 = vsinq.f32.pop %v6746
    %vm6750 = vweird.f32 %v542
    %v6751 = vand.u32 %v6747, 3
    %vm6752 = vcmp.lt.s32.totalorder %v6751, 2
    %vm6753 = vcmp.eq.s32.totalorder %v6751, 0
    %v6754 = vxor.u32 %v6749, 2147483648
    %v6755 = vsel %vm6753, %v6748, %v6754
    %vm6756 = vcmp.eq.s32.totalorder %v6751, 2
    %v6757 = vxor.u32 %v6748, 2147483648
    %v6758 = vsel %vm6756, %v6757, %v6749
    %v6759 = vsel %vm6752, %v6755, %v6758
    %v6760 = vsel %vm6750, nan, %v6759
    %v6761 = vand.u32 2147483647, %v543
    %vm6762 = vcmp.le.f32.partialorder %v6761, 0.7853982
    %vm6763 = vcmp.lt.s32.totalorder %v543, 0
    %v6764 = vand.u32 %v543, 2139095040
    %v6765 = vshrl.u32 %v6764, 23
    %v6766 = vsub.s32 %v6765, 127
    %v6767 = vand.u32 2147483647, %v543
    %v6768 = vand.u32 %v6767, 8388607
    %v6769 = vor.u32 %v6768, 8388608
    %v6770 = vsub.s32 0, %v6769
    %v6771 = vadd.s32 %v6766, 1
    %vm6772 = vcmp.gt.s32.totalorder %v6771, 0
    %v6773 = vsel %vm6772, %v6771, 0
    %v6774 = vshrl.u32 %v6773, 5
    %v6775 = vand.u32 %v6773, 31
    %v6776 = vsub.s32 32, %v6775
    %v6777 = vshrl.u32 683565275, %v6776
    %v6778 = vshll.u32 683565275, %v6775
    %v6779 = vshrl.u32 2475754826, %v6776
    %v6780 = vor.u32 %v6778, %v6779
    %v6781 = vshll.u32 2475754826, %v6775
    %v6782 = vshrl.u32 2131351028, %v6776
    %v6783 = vor.u32 %v6781, %v6782
    %v6784 = vshll.u32 2131351028, %v6775
    %v6785 = vshrl.u32 2102212464, %v6776
    %v6786 = vor.u32 %v6784, %v6785
    %v6787 = vshll.u32 2102212464, %v6775
    %v6788 = vshrl.u32 920167782, %v6776
    %v6789 = vor.u32 %v6787, %v6788
    %v6790 = vshll.u32 920167782, %v6775
    %v6791 = vshrl.u32 1326507024, %v6776
    %v6792 = vor.u32 %v6790, %v6791
    %vm6793 = vcmp.lt.s32.totalorder %v6774, 1
    %vm6794 = vcmp.lt.s32.totalorder %v6774, 2
    %vm6795 = vcmp.lt.s32.totalorder %v6774, 3
    %vm6796 = vcmp.lt.s32.totalorder %v6774, 4
    %v6797 = vsel %vm6793, %v6777, %v6780
    %v6798 = vsel %vm6796, %v6786, 2102212464
    %v6799 = vsel %vm6795, %v6783, %v6798
    %v6800 = vsel %vm6794, %v6797, %v6799
    %v6801 = vsel %vm6793, %v6780, %v6783
    %v6802 = vsel %vm6796, %v6789, 920167782
    %v6803 = vsel %vm6795, %v6786, %v6802
    %v6804 = vsel %vm6794, %v6801, %v6803
    %v6805 = vsel %vm6793, %v6783, %v6786
    %v6806 = vsel %vm6796, %v6792, 1326507024
    %v6807 = vsel %vm6795, %v6789, %v6806
    %v6808 = vsel %vm6794, %v6805, %v6807
    %v6809 = vshll.u32 %v6769, 8
    %v6810 = vmul.u32.u64.compose %v6809, %v6808
    %v6811 = vextract.low.u32 %v6810
    %v6812 = vextract.high.u32 %v6810
    %v6813 = vmul.u32.u64.compose %v6809, %v6804
    %v6814 = vextract.low.u32 %v6813
    %v6815 = vextract.high.u32 %v6813
    %v6816 = vmul.u32 %v6809, %v6800
    %v6817 = vadd.s32 %v6812, %v6814
    %vm6818 = vc.u32 %v6812, %v6814
    %v6819 = vadd.s32 %v6815, 1
    %v6820 = vsel %vm6818, %v6819, %v6815
    %v6821 = vadd.s32 %v6816, %v6820
    %v6822 = vadd.s32 %v6821, 536870912
    %v6823 = vshrl.u32 %v6822, 30
    %v6824 = vshll.u32 %v6823, 30
    %v6825 = vsub.s32 %v6821, %v6824
    %vm6826 = vcmp.lt.s32.totalorder %v6825, 0
    %v6827 = vsub.s32 0, %v6825
    %v6828 = vsel %vm6826, %v6827, %v6825
    %v6829 = vclz %v6828
    %v6830 = vsub.s32 %v6829, 2
    %vm6831 = vcmp.gt.s32.totalorder 0, %v6830
    %v6832 = vsel %vm6831, 0, %v6830
    %v6833 = vsub.s32 32, %v6832
    %v6834 = vshll.u32 %v6825, %v6832
    %v6835 = vshrl.u32 %v6817, %v6833
    %v6836 = vor.u32 %v6834, %v6835
    %v6837 = vsub.s32 4294967266, %v6832
    %v6838 = vadd.s32 %v6837, 127
    %v6839 = vshll.u32 %v6838, 23
    %v6840 = vor.u32 4788187, %v6839
    %v6841 = vand.u32 2147483647, %v6840
    %v6843 = vcvt.s32.f32 %v6836
    %v6844 = vmul.f32 %v6843, %v6841
    %v6845 = vxor.u32 %v6844, 2147483648
    %v6846 = vsel %vm6763, %v6845, %v6844
    %v6847 = vsub.s32 4, %v6823
    %v6848 = vsel %vm6763, %v6847, %v6823
    %v6849 = vsel %vm6762, %v543, %v6846
    %v6850 = vsel %vm6762, 0, %v6848
    %v6851 = vcosq.f32.pop %v6849
    %v6852 = vsinq.f32.pop %v6849
    %vm6853 = vweird.f32 %v543
    %v6854 = vand.u32 %v6850, 3
    %vm6855 = vcmp.lt.s32.totalorder %v6854, 2
    %vm6856 = vcmp.eq.s32.totalorder %v6854, 0
    %v6857 = vxor.u32 %v6852, 2147483648
    %v6858 = vsel %vm6856, %v6851, %v6857
    %vm6859 = vcmp.eq.s32.totalorder %v6854, 2
    %v6860 = vxor.u32 %v6851, 2147483648
    %v6861 = vsel %vm6859, %v6860, %v6852
    %v6862 = vsel %vm6855, %v6858, %v6861
    %v6863 = vsel %vm6853, nan, %v6862
    %v6864 = vand.u32 2147483647, %v544
    %vm6865 = vcmp.le.f32.partialorder %v6864, 0.7853982
    %vm6866 = vcmp.lt.s32.totalorder %v544, 0
    %v6867 = vand.u32 %v544, 2139095040
    %v6868 = vshrl.u32 %v6867, 23
    %v6869 = vsub.s32 %v6868, 127
    %v6870 = vand.u32 2147483647, %v544
    %v6871 = vand.u32 %v6870, 8388607
    %v6872 = vor.u32 %v6871, 8388608
    %v6873 = vsub.s32 0, %v6872
    %v6874 = vadd.s32 %v6869, 1
    %vm6875 = vcmp.gt.s32.totalorder %v6874, 0
    %v6876 = vsel %vm6875, %v6874, 0
    %v6877 = vshrl.u32 %v6876, 5
    %v6878 = vand.u32 %v6876, 31
    %v6879 = vsub.s32 32, %v6878
    %v6880 = vshrl.u32 683565275, %v6879
    %v6881 = vshll.u32 683565275, %v6878
    %v6882 = vshrl.u32 2475754826, %v6879
    %v6883 = vor.u32 %v6881, %v6882
    %v6884 = vshll.u32 2475754826, %v6878
    %v6885 = vshrl.u32 2131351028, %v6879
    %v6886 = vor.u32 %v6884, %v6885
    %v6887 = vshll.u32 2131351028, %v6878
    %v6888 = vshrl.u32 2102212464, %v6879
    %v6889 = vor.u32 %v6887, %v6888
    %v6890 = vshll.u32 2102212464, %v6878
    %v6891 = vshrl.u32 920167782, %v6879
    %v6892 = vor.u32 %v6890, %v6891
    %v6893 = vshll.u32 920167782, %v6878
    %v6894 = vshrl.u32 1326507024, %v6879
    %v6895 = vor.u32 %v6893, %v6894
    %vm6896 = vcmp.lt.s32.totalorder %v6877, 1
    %vm6897 = vcmp.lt.s32.totalorder %v6877, 2
    %vm6898 = vcmp.lt.s32.totalorder %v6877, 3
    %vm6899 = vcmp.lt.s32.totalorder %v6877, 4
    %v6900 = vsel %vm6896, %v6880, %v6883
    %v6901 = vsel %vm6899, %v6889, 2102212464
    %v6902 = vsel %vm6898, %v6886, %v6901
    %v6903 = vsel %vm6897, %v6900, %v6902
    %v6904 = vsel %vm6896, %v6883, %v6886
    %v6905 = vsel %vm6899, %v6892, 920167782
    %v6906 = vsel %vm6898, %v6889, %v6905
    %v6907 = vsel %vm6897, %v6904, %v6906
    %v6908 = vsel %vm6896, %v6886, %v6889
    %v6909 = vsel %vm6899, %v6895, 1326507024
    %v6910 = vsel %vm6898, %v6892, %v6909
    %v6911 = vsel %vm6897, %v6908, %v6910
    %v6912 = vshll.u32 %v6872, 8
    %v6913 = vmul.u32.u64.compose %v6912, %v6911
    %v6914 = vextract.low.u32 %v6913
    %v6915 = vextract.high.u32 %v6913
    %v6916 = vmul.u32.u64.compose %v6912, %v6907
    %v6917 = vextract.low.u32 %v6916
    %v6918 = vextract.high.u32 %v6916
    %v6919 = vmul.u32 %v6912, %v6903
    %v6920 = vadd.s32 %v6915, %v6917
    %vm6921 = vc.u32 %v6915, %v6917
    %v6922 = vadd.s32 %v6918, 1
    %v6923 = vsel %vm6921, %v6922, %v6918
    %v6924 = vadd.s32 %v6919, %v6923
    %v6925 = vadd.s32 %v6924, 536870912
    %v6926 = vshrl.u32 %v6925, 30
    %v6927 = vshll.u32 %v6926, 30
    %v6928 = vsub.s32 %v6924, %v6927
    %vm6929 = vcmp.lt.s32.totalorder %v6928, 0
    %v6930 = vsub.s32 0, %v6928
    %v6931 = vsel %vm6929, %v6930, %v6928
    %v6932 = vclz %v6931
    %v6933 = vsub.s32 %v6932, 2
    %vm6934 = vcmp.gt.s32.totalorder 0, %v6933
    %v6935 = vsel %vm6934, 0, %v6933
    %v6936 = vsub.s32 32, %v6935
    %v6937 = vshll.u32 %v6928, %v6935
    %v6938 = vshrl.u32 %v6920, %v6936
    %v6939 = vor.u32 %v6937, %v6938
    %v6940 = vsub.s32 4294967266, %v6935
    %v6941 = vadd.s32 %v6940, 127
    %v6942 = vshll.u32 %v6941, 23
    %v6943 = vor.u32 4788187, %v6942
    %v6944 = vand.u32 2147483647, %v6943
    %v6946 = vcvt.s32.f32 %v6939
    %v6947 = vmul.f32 %v6946, %v6944
    %v6948 = vxor.u32 %v6947, 2147483648
    %v6949 = vsel %vm6866, %v6948, %v6947
    %v6950 = vsub.s32 4, %v6926
    %v6951 = vsel %vm6866, %v6950, %v6926
    %v6952 = vsel %vm6865, %v544, %v6949
    %v6953 = vsel %vm6865, 0, %v6951
    %v6954 = vcosq.f32.pop %v6952
    %v6955 = vsinq.f32.pop %v6952
    %vm6956 = vweird.f32 %v544
    %v6957 = vand.u32 %v6953, 3
    %vm6958 = vcmp.lt.s32.totalorder %v6957, 2
    %vm6959 = vcmp.eq.s32.totalorder %v6957, 0
    %v6960 = vxor.u32 %v6955, 2147483648
    %v6961 = vsel %vm6959, %v6954, %v6960
    %vm6962 = vcmp.eq.s32.totalorder %v6957, 2
    %v6963 = vxor.u32 %v6954, 2147483648
    %v6964 = vsel %vm6962, %v6963, %v6955
    %v6965 = vsel %vm6958, %v6961, %v6964
    %v6966 = vsel %vm6956, nan, %v6965
    %v6967 = vand.u32 2147483647, %v545
    %vm6968 = vcmp.le.f32.partialorder %v6967, 0.7853982
    %vm6969 = vcmp.lt.s32.totalorder %v545, 0
    %v6970 = vand.u32 %v545, 2139095040
    %v6971 = vshrl.u32 %v6970, 23
    %v6972 = vsub.s32 %v6971, 127
    %v6973 = vand.u32 2147483647, %v545
    %v6974 = vand.u32 %v6973, 8388607
    %v6975 = vor.u32 %v6974, 8388608
    %v6976 = vsub.s32 0, %v6975
    %v6977 = vadd.s32 %v6972, 1
    %vm6978 = vcmp.gt.s32.totalorder %v6977, 0
    %v6979 = vsel %vm6978, %v6977, 0
    %v6980 = vshrl.u32 %v6979, 5
    %v6981 = vand.u32 %v6979, 31
    %v6982 = vsub.s32 32, %v6981
    %v6983 = vshrl.u32 683565275, %v6982
    %v6984 = vshll.u32 683565275, %v6981
    %v6985 = vshrl.u32 2475754826, %v6982
    %v6986 = vor.u32 %v6984, %v6985
    %v6987 = vshll.u32 2475754826, %v6981
    %v6988 = vshrl.u32 2131351028, %v6982
    %v6989 = vor.u32 %v6987, %v6988
    %v6990 = vshll.u32 2131351028, %v6981
    %v6991 = vshrl.u32 2102212464, %v6982
    %v6992 = vor.u32 %v6990, %v6991
    %v6993 = vshll.u32 2102212464, %v6981
    %v6994 = vshrl.u32 920167782, %v6982
    %v6995 = vor.u32 %v6993, %v6994
    %v6996 = vshll.u32 920167782, %v6981
    %v6997 = vshrl.u32 1326507024, %v6982
    %v6998 = vor.u32 %v6996, %v6997
    %vm6999 = vcmp.lt.s32.totalorder %v6980, 1
    %vm7000 = vcmp.lt.s32.totalorder %v6980, 2
    %vm7001 = vcmp.lt.s32.totalorder %v6980, 3
    %vm7002 = vcmp.lt.s32.totalorder %v6980, 4
    %v7003 = vsel %vm6999, %v6983, %v6986
    %v7004 = vsel %vm7002, %v6992, 2102212464
    %v7005 = vsel %vm7001, %v6989, %v7004
    %v7006 = vsel %vm7000, %v7003, %v7005
    %v7007 = vsel %vm6999, %v6986, %v6989
    %v7008 = vsel %vm7002, %v6995, 920167782
    %v7009 = vsel %vm7001, %v6992, %v7008
    %v7010 = vsel %vm7000, %v7007, %v7009
    %v7011 = vsel %vm6999, %v6989, %v6992
    %v7012 = vsel %vm7002, %v6998, 1326507024
    %v7013 = vsel %vm7001, %v6995, %v7012
    %v7014 = vsel %vm7000, %v7011, %v7013
    %v7015 = vshll.u32 %v6975, 8
    %v7016 = vmul.u32.u64.compose %v7015, %v7014
    %v7017 = vextract.low.u32 %v7016
    %v7018 = vextract.high.u32 %v7016
    %v7019 = vmul.u32.u64.compose %v7015, %v7010
    %v7020 = vextract.low.u32 %v7019
    %v7021 = vextract.high.u32 %v7019
    %v7022 = vmul.u32 %v7015, %v7006
    %v7023 = vadd.s32 %v7018, %v7020
    %vm7024 = vc.u32 %v7018, %v7020
    %v7025 = vadd.s32 %v7021, 1
    %v7026 = vsel %vm7024, %v7025, %v7021
    %v7027 = vadd.s32 %v7022, %v7026
    %v7028 = vadd.s32 %v7027, 536870912
    %v7029 = vshrl.u32 %v7028, 30
    %v7030 = vshll.u32 %v7029, 30
    %v7031 = vsub.s32 %v7027, %v7030
    %vm7032 = vcmp.lt.s32.totalorder %v7031, 0
    %v7033 = vsub.s32 0, %v7031
    %v7034 = vsel %vm7032, %v7033, %v7031
    %v7035 = vclz %v7034
    %v7036 = vsub.s32 %v7035, 2
    %vm7037 = vcmp.gt.s32.totalorder 0, %v7036
    %v7038 = vsel %vm7037, 0, %v7036
    %v7039 = vsub.s32 32, %v7038
    %v7040 = vshll.u32 %v7031, %v7038
    %v7041 = vshrl.u32 %v7023, %v7039
    %v7042 = vor.u32 %v7040, %v7041
    %v7043 = vsub.s32 4294967266, %v7038
    %v7044 = vadd.s32 %v7043, 127
    %v7045 = vshll.u32 %v7044, 23
    %v7046 = vor.u32 4788187, %v7045
    %v7047 = vand.u32 2147483647, %v7046
    %v7049 = vcvt.s32.f32 %v7042
    %v7050 = vmul.f32 %v7049, %v7047
    %v7051 = vxor.u32 %v7050, 2147483648
    %v7052 = vsel %vm6969, %v7051, %v7050
    %v7053 = vsub.s32 4, %v7029
    %v7054 = vsel %vm6969, %v7053, %v7029
    %v7055 = vsel %vm6968, %v545, %v7052
    %v7056 = vsel %vm6968, 0, %v7054
    %v7057 = vcosq.f32.pop %v7055
    %v7058 = vsinq.f32.pop %v7055
    %vm7059 = vweird.f32 %v545
    %v7060 = vand.u32 %v7056, 3
    %vm7061 = vcmp.lt.s32.totalorder %v7060, 2
    %vm7062 = vcmp.eq.s32.totalorder %v7060, 0
    %v7063 = vxor.u32 %v7058, 2147483648
    %v7064 = vsel %vm7062, %v7057, %v7063
    %vm7065 = vcmp.eq.s32.totalorder %v7060, 2
    %v7066 = vxor.u32 %v7057, 2147483648
    %v7067 = vsel %vm7065, %v7066, %v7058
    %v7068 = vsel %vm7061, %v7064, %v7067
    %v7069 = vsel %vm7059, nan, %v7068
    %v7070 = vand.u32 2147483647, %v546
    %vm7071 = vcmp.le.f32.partialorder %v7070, 0.7853982
    %vm7072 = vcmp.lt.s32.totalorder %v546, 0
    %v7073 = vand.u32 %v546, 2139095040
    %v7074 = vshrl.u32 %v7073, 23
    %v7075 = vsub.s32 %v7074, 127
    %v7076 = vand.u32 2147483647, %v546
    %v7077 = vand.u32 %v7076, 8388607
    %v7078 = vor.u32 %v7077, 8388608
    %v7079 = vsub.s32 0, %v7078
    %v7080 = vadd.s32 %v7075, 1
    %vm7081 = vcmp.gt.s32.totalorder %v7080, 0
    %v7082 = vsel %vm7081, %v7080, 0
    %v7083 = vshrl.u32 %v7082, 5
    %v7084 = vand.u32 %v7082, 31
    %v7085 = vsub.s32 32, %v7084
    %v7086 = vshrl.u32 683565275, %v7085
    %v7087 = vshll.u32 683565275, %v7084
    %v7088 = vshrl.u32 2475754826, %v7085
    %v7089 = vor.u32 %v7087, %v7088
    %v7090 = vshll.u32 2475754826, %v7084
    %v7091 = vshrl.u32 2131351028, %v7085
    %v7092 = vor.u32 %v7090, %v7091
    %v7093 = vshll.u32 2131351028, %v7084
    %v7094 = vshrl.u32 2102212464, %v7085
    %v7095 = vor.u32 %v7093, %v7094
    %v7096 = vshll.u32 2102212464, %v7084
    %v7097 = vshrl.u32 920167782, %v7085
    %v7098 = vor.u32 %v7096, %v7097
    %v7099 = vshll.u32 920167782, %v7084
    %v7100 = vshrl.u32 1326507024, %v7085
    %v7101 = vor.u32 %v7099, %v7100
    %vm7102 = vcmp.lt.s32.totalorder %v7083, 1
    %vm7103 = vcmp.lt.s32.totalorder %v7083, 2
    %vm7104 = vcmp.lt.s32.totalorder %v7083, 3
    %vm7105 = vcmp.lt.s32.totalorder %v7083, 4
    %v7106 = vsel %vm7102, %v7086, %v7089
    %v7107 = vsel %vm7105, %v7095, 2102212464
    %v7108 = vsel %vm7104, %v7092, %v7107
    %v7109 = vsel %vm7103, %v7106, %v7108
    %v7110 = vsel %vm7102, %v7089, %v7092
    %v7111 = vsel %vm7105, %v7098, 920167782
    %v7112 = vsel %vm7104, %v7095, %v7111
    %v7113 = vsel %vm7103, %v7110, %v7112
    %v7114 = vsel %vm7102, %v7092, %v7095
    %v7115 = vsel %vm7105, %v7101, 1326507024
    %v7116 = vsel %vm7104, %v7098, %v7115
    %v7117 = vsel %vm7103, %v7114, %v7116
    %v7118 = vshll.u32 %v7078, 8
    %v7119 = vmul.u32.u64.compose %v7118, %v7117
    %v7120 = vextract.low.u32 %v7119
    %v7121 = vextract.high.u32 %v7119
    %v7122 = vmul.u32.u64.compose %v7118, %v7113
    %v7123 = vextract.low.u32 %v7122
    %v7124 = vextract.high.u32 %v7122
    %v7125 = vmul.u32 %v7118, %v7109
    %v7126 = vadd.s32 %v7121, %v7123
    %vm7127 = vc.u32 %v7121, %v7123
    %v7128 = vadd.s32 %v7124, 1
    %v7129 = vsel %vm7127, %v7128, %v7124
    %v7130 = vadd.s32 %v7125, %v7129
    %v7131 = vadd.s32 %v7130, 536870912
    %v7132 = vshrl.u32 %v7131, 30
    %v7133 = vshll.u32 %v7132, 30
    %v7134 = vsub.s32 %v7130, %v7133
    %vm7135 = vcmp.lt.s32.totalorder %v7134, 0
    %v7136 = vsub.s32 0, %v7134
    %v7137 = vsel %vm7135, %v7136, %v7134
    %v7138 = vclz %v7137
    %v7139 = vsub.s32 %v7138, 2
    %vm7140 = vcmp.gt.s32.totalorder 0, %v7139
    %v7141 = vsel %vm7140, 0, %v7139
    %v7142 = vsub.s32 32, %v7141
    %v7143 = vshll.u32 %v7134, %v7141
    %v7144 = vshrl.u32 %v7126, %v7142
    %v7145 = vor.u32 %v7143, %v7144
    %v7146 = vsub.s32 4294967266, %v7141
    %v7147 = vadd.s32 %v7146, 127
    %v7148 = vshll.u32 %v7147, 23
    %v7149 = vor.u32 4788187, %v7148
    %v7150 = vand.u32 2147483647, %v7149
    %v7152 = vcvt.s32.f32 %v7145
    %v7153 = vmul.f32 %v7152, %v7150
    %v7154 = vxor.u32 %v7153, 2147483648
    %v7155 = vsel %vm7072, %v7154, %v7153
    %v7156 = vsub.s32 4, %v7132
    %v7157 = vsel %vm7072, %v7156, %v7132
    %v7158 = vsel %vm7071, %v546, %v7155
    %v7159 = vsel %vm7071, 0, %v7157
    %v7160 = vcosq.f32.pop %v7158
    %v7161 = vsinq.f32.pop %v7158
    %vm7162 = vweird.f32 %v546
    %v7163 = vand.u32 %v7159, 3
    %vm7164 = vcmp.lt.s32.totalorder %v7163, 2
    %vm7165 = vcmp.eq.s32.totalorder %v7163, 0
    %v7166 = vxor.u32 %v7161, 2147483648
    %v7167 = vsel %vm7165, %v7160, %v7166
    %vm7168 = vcmp.eq.s32.totalorder %v7163, 2
    %v7169 = vxor.u32 %v7160, 2147483648
    %v7170 = vsel %vm7168, %v7169, %v7161
    %v7171 = vsel %vm7164, %v7167, %v7170
    %v7172 = vsel %vm7162, nan, %v7171
    %v7173 = vld [vmem:[%s8] sm:$0xff]
    %v7174 = vld [vmem:[%s8 + $0x8] sm:$0xff]
    %v7176 = vsel %vm68, %v3979, 0
    %v7179 = vsel %vm68, %v4082, 0
    %v7182 = vsel %vm68, %v4185, 0
    %v7185 = vsel %vm68, %v4288, 0
    %v7188 = vsel %vm68, %v4391, 0
    %v7191 = vsel %vm68, %v4494, 0
    %v7194 = vsel %vm68, %v4597, 0
    %v7197 = vsel %vm68, %v4700, 0
    %v7200 = vsel %vm68, %v4803, 0
    %v7203 = vsel %vm68, %v4906, 0
    %v7206 = vsel %vm68, %v5009, 0
    %v7209 = vsel %vm68, %v5112, 0
    %v7212 = vsel %vm68, %v5215, 0
    %v7215 = vsel %vm68, %v5318, 0
    %v7218 = vsel %vm68, %v5421, 0
    %v7221 = vsel %vm68, %v5524, 0
    %v7224 = vsel %vm68, %v5627, 0
    %v7227 = vsel %vm68, %v5730, 0
    %v7230 = vsel %vm68, %v5833, 0
    %v7233 = vsel %vm68, %v5936, 0
    %v7236 = vsel %vm68, %v6039, 0
    %v7239 = vsel %vm68, %v6142, 0
    %v7242 = vsel %vm68, %v6245, 0
    %v7245 = vsel %vm68, %v6348, 0
    %v7248 = vsel %vm68, %v6451, 0
    %v7251 = vsel %vm68, %v6554, 0
    %v7254 = vsel %vm68, %v6657, 0
    %v7257 = vsel %vm68, %v6760, 0
    %v7260 = vsel %vm68, %v6863, 0
    %v7263 = vsel %vm68, %v6966, 0
    %v7266 = vsel %vm68, %v7069, 0
    %v7269 = vsel %vm68, %v7172, 0
    %7271 = vmatprep.subr.mxu0 0.0
    %7272 = vmatpush1.msra.mxu0 %v7173
    %7273 = vmatprep.subr.mxu0 0.0
    %7274 = vmatpush1.msra.mxu0 %v7174
    %7275 = vmatprep.subr.mxu0 0.0
    %7276 = vmatpush1.msra.mxu0 0.0
    %7277 = vmatprep.subr.mxu0 0.0
    %7278 = vmatpush1.msra.mxu0 0.0
    %7279 = vmatprep.subr.mxu0 0.0
    %7280 = vmatpush1.msra.mxu0 0.0
    %7281 = vmatprep.subr.mxu0 0.0
    %7282 = vmatpush1.msra.mxu0 0.0
    %7283 = vmatprep.subr.mxu0 0.0
    %7284 = vmatpush1.msra.mxu0 0.0
    %7285 = vmatprep.subr.mxu0 0.0
    %7286 = vmatpush1.msra.mxu0 0.0
    %7287 = vmatprep.subr.mxu0 0.0
    %7288 = vmatpush1.msra.mxu0 0.0
    %7289 = vmatprep.subr.mxu0 0.0
    %7290 = vmatpush1.msra.mxu0 0.0
    %7291 = vmatprep.subr.mxu0 0.0
    %7292 = vmatpush1.msra.mxu0 0.0
    %7293 = vmatprep.subr.mxu0 0.0
    %7294 = vmatpush1.msra.mxu0 0.0
    %7295 = vmatprep.subr.mxu0 0.0
    %7296 = vmatpush1.msra.mxu0 0.0
    %7297 = vmatprep.subr.mxu0 0.0
    %7298 = vmatpush1.msra.mxu0 0.0
    %7299 = vmatprep.subr.mxu0 0.0
    %7300 = vmatpush1.msra.mxu0 0.0
    %7301 = vmatprep.subr.mxu0 0.0
    %7302 = vmatpush1.msra.mxu0 0.0
    %7303 = vmatprep.subr.mxu0 0.0
    %7304 = vmatpush1.msra.mxu0 0.0
    %7305 = vmatprep.subr.mxu0 0.0
    %7306 = vmatpush1.msra.mxu0 0.0
    %7307 = vmatprep.subr.mxu0 0.0
    %7308 = vmatpush1.msra.mxu0 0.0
    %7309 = vmatprep.subr.mxu0 0.0
    %7310 = vmatpush1.msra.mxu0 0.0
    %7311 = vmatprep.subr.mxu0 0.0
    %7312 = vmatpush1.msra.mxu0 0.0
    %7313 = vmatprep.subr.mxu0 0.0
    %7314 = vmatpush1.msra.mxu0 0.0
    %7315 = vmatprep.subr.mxu0 0.0
    %7316 = vmatpush1.msra.mxu0 0.0
    %7317 = vmatprep.subr.mxu0 0.0
    %7318 = vmatpush1.msra.mxu0 0.0
    %7319 = vmatprep.subr.mxu0 0.0
    %7320 = vmatpush1.msra.mxu0 0.0
    %7321 = vmatprep.subr.mxu0 0.0
    %7322 = vmatpush1.msra.mxu0 0.0
    %7323 = vmatprep.subr.mxu0 0.0
    %7324 = vmatpush1.msra.mxu0 0.0
    %7325 = vmatprep.subr.mxu0 0.0
    %7326 = vmatpush1.msra.mxu0 0.0
    %7327 = vmatprep.subr.mxu0 0.0
    %7328 = vmatpush1.msra.mxu0 0.0
    %7329 = vmatprep.subr.mxu0 0.0
    %7330 = vmatpush1.msra.mxu0 0.0
    %7331 = vmatprep.subr.mxu0 0.0
    %7332 = vmatpush1.msra.mxu0 0.0
    %7333 = vmatprep.subr.mxu0 0.0
    %7334 = vmatpush1.msra.mxu0 0.0
    %7335 = vmatprep.mubr.f32.mxu0 0.0
    %7336 = vmatmul.mubr.f32.gmra.mrb[0].mxu0 %v7176
    %v7337 = vpop.f32.mrb[0].mxu0
    %v7338 = vadd.f32 0.0, %v7337
    %v7339 = vpop.f32.mrb[0].mxu0
    %7340 = vmatprep.mubr.f32.mxu0 0.0
    %7341 = vmatmul.mubr.f32.gmra.mrb[0].mxu0 %v7179
    %v7342 = vpop.f32.mrb[0].mxu0
    %v7343 = vadd.f32 0.0, %v7342
    %v7344 = vpop.f32.mrb[0].mxu0
    %7345 = vmatprep.mubr.f32.mxu0 0.0
    %7346 = vmatmul.mubr.f32.gmra.mrb[0].mxu0 %v7182
    %v7347 = vpop.f32.mrb[0].mxu0
    %v7348 = vadd.f32 0.0, %v7347
    %v7349 = vpop.f32.mrb[0].mxu0
    %7350 = vmatprep.mubr.f32.mxu0 0.0
    %7351 = vmatmul.mubr.f32.gmra.mrb[0].mxu0 %v7185
    %v7352 = vpop.f32.mrb[0].mxu0
    %v7353 = vadd.f32 0.0, %v7352
    %v7354 = vpop.f32.mrb[0].mxu0
    %7355 = vmatprep.mubr.f32.mxu0 0.0
    %7356 = vmatmul.mubr.f32.gmra.mrb[0].mxu0 %v7188
    %v7357 = vpop.f32.mrb[0].mxu0
    %v7358 = vadd.f32 0.0, %v7357
    %v7359 = vpop.f32.mrb[0].mxu0
    %7360 = vmatprep.mubr.f32.mxu0 0.0
    %7361 = vmatmul.mubr.f32.gmra.mrb[0].mxu0 %v7191
    %v7362 = vpop.f32.mrb[0].mxu0
    %v7363 = vadd.f32 0.0, %v7362
    %v7364 = vpop.f32.mrb[0].mxu0
    %7365 = vmatprep.mubr.f32.mxu0 0.0
    %7366 = vmatmul.mubr.f32.gmra.mrb[0].mxu0 %v7194
    %v7367 = vpop.f32.mrb[0].mxu0
    %v7368 = vadd.f32 0.0, %v7367
    %v7369 = vpop.f32.mrb[0].mxu0
    %7370 = vmatprep.mubr.f32.mxu0 0.0
    %7371 = vmatmul.mubr.f32.gmra.mrb[0].mxu0 %v7197
    %v7372 = vpop.f32.mrb[0].mxu0
    %v7373 = vadd.f32 0.0, %v7372
    %v7374 = vpop.f32.mrb[0].mxu0
    %7375 = vmatprep.mubr.f32.mxu0 0.0
    %7376 = vmatmul.mubr.f32.gmra.mrb[0].mxu0 %v7200
    %v7377 = vpop.f32.mrb[0].mxu0
    %v7378 = vadd.f32 0.0, %v7377
    %v7379 = vpop.f32.mrb[0].mxu0
    %7380 = vmatprep.mubr.f32.mxu0 0.0
    %7381 = vmatmul.mubr.f32.gmra.mrb[0].mxu0 %v7203
    %v7382 = vpop.f32.mrb[0].mxu0
    %v7383 = vadd.f32 0.0, %v7382
    %v7384 = vpop.f32.mrb[0].mxu0
    %7385 = vmatprep.mubr.f32.mxu0 0.0
    %7386 = vmatmul.mubr.f32.gmra.mrb[0].mxu0 %v7206
    %v7387 = vpop.f32.mrb[0].mxu0
    %v7388 = vadd.f32 0.0, %v7387
    %v7389 = vpop.f32.mrb[0].mxu0
    %7390 = vmatprep.mubr.f32.mxu0 0.0
    %7391 = vmatmul.mubr.f32.gmra.mrb[0].mxu0 %v7209
    %v7392 = vpop.f32.mrb[0].mxu0
    %v7393 = vadd.f32 0.0, %v7392
    %v7394 = vpop.f32.mrb[0].mxu0
    %7395 = vmatprep.mubr.f32.mxu0 0.0
    %7396 = vmatmul.mubr.f32.gmra.mrb[0].mxu0 %v7212
    %v7397 = vpop.f32.mrb[0].mxu0
    %v7398 = vadd.f32 0.0, %v7397
    %v7399 = vpop.f32.mrb[0].mxu0
    %7400 = vmatprep.mubr.f32.mxu0 0.0
    %7401 = vmatmul.mubr.f32.gmra.mrb[0].mxu0 %v7215
    %v7402 = vpop.f32.mrb[0].mxu0
    %v7403 = vadd.f32 0.0, %v7402
    %v7404 = vpop.f32.mrb[0].mxu0
    %7405 = vmatprep.mubr.f32.mxu0 0.0
    %7406 = vmatmul.mubr.f32.gmra.mrb[0].mxu0 %v7218
    %v7407 = vpop.f32.mrb[0].mxu0
    %v7408 = vadd.f32 0.0, %v7407
    %v7409 = vpop.f32.mrb[0].mxu0
    %7410 = vmatprep.mubr.f32.mxu0 0.0
    %7411 = vmatmul.mubr.f32.gmra.mrb[0].mxu0 %v7221
    %v7412 = vpop.f32.mrb[0].mxu0
    %v7413 = vadd.f32 0.0, %v7412
    %v7414 = vpop.f32.mrb[0].mxu0
    %7415 = vmatprep.mubr.f32.mxu0 0.0
    %7416 = vmatmul.mubr.f32.gmra.mrb[0].mxu0 %v7224
    %v7417 = vpop.f32.mrb[0].mxu0
    %v7418 = vadd.f32 0.0, %v7417
    %v7419 = vpop.f32.mrb[0].mxu0
    %7420 = vmatprep.mubr.f32.mxu0 0.0
    %7421 = vmatmul.mubr.f32.gmra.mrb[0].mxu0 %v7227
    %v7422 = vpop.f32.mrb[0].mxu0
    %v7423 = vadd.f32 0.0, %v7422
    %v7424 = vpop.f32.mrb[0].mxu0
    %7425 = vmatprep.mubr.f32.mxu0 0.0
    %7426 = vmatmul.mubr.f32.gmra.mrb[0].mxu0 %v7230
    %v7427 = vpop.f32.mrb[0].mxu0
    %v7428 = vadd.f32 0.0, %v7427
    %v7429 = vpop.f32.mrb[0].mxu0
    %7430 = vmatprep.mubr.f32.mxu0 0.0
    %7431 = vmatmul.mubr.f32.gmra.mrb[0].mxu0 %v7233
    %v7432 = vpop.f32.mrb[0].mxu0
    %v7433 = vadd.f32 0.0, %v7432
    %v7434 = vpop.f32.mrb[0].mxu0
    %7435 = vmatprep.mubr.f32.mxu0 0.0
    %7436 = vmatmul.mubr.f32.gmra.mrb[0].mxu0 %v7236
    %v7437 = vpop.f32.mrb[0].mxu0
    %v7438 = vadd.f32 0.0, %v7437
    %v7439 = vpop.f32.mrb[0].mxu0
    %7440 = vmatprep.mubr.f32.mxu0 0.0
    %7441 = vmatmul.mubr.f32.gmra.mrb[0].mxu0 %v7239
    %v7442 = vpop.f32.mrb[0].mxu0
    %v7443 = vadd.f32 0.0, %v7442
    %v7444 = vpop.f32.mrb[0].mxu0
    %7445 = vmatprep.mubr.f32.mxu0 0.0
    %7446 = vmatmul.mubr.f32.gmra.mrb[0].mxu0 %v7242
    %v7447 = vpop.f32.mrb[0].mxu0
    %v7448 = vadd.f32 0.0, %v7447
    %v7449 = vpop.f32.mrb[0].mxu0
    %7450 = vmatprep.mubr.f32.mxu0 0.0
    %7451 = vmatmul.mubr.f32.gmra.mrb[0].mxu0 %v7245
    %v7452 = vpop.f32.mrb[0].mxu0
    %v7453 = vadd.f32 0.0, %v7452
    %v7454 = vpop.f32.mrb[0].mxu0
    %7455 = vmatprep.mubr.f32.mxu0 0.0
    %7456 = vmatmul.mubr.f32.gmra.mrb[0].mxu0 %v7248
    %v7457 = vpop.f32.mrb[0].mxu0
    %v7458 = vadd.f32 0.0, %v7457
    %v7459 = vpop.f32.mrb[0].mxu0
    %7460 = vmatprep.mubr.f32.mxu0 0.0
    %7461 = vmatmul.mubr.f32.gmra.mrb[0].mxu0 %v7251
    %v7462 = vpop.f32.mrb[0].mxu0
    %v7463 = vadd.f32 0.0, %v7462
    %v7464 = vpop.f32.mrb[0].mxu0
    %7465 = vmatprep.mubr.f32.mxu0 0.0
    %7466 = vmatmul.mubr.f32.gmra.mrb[0].mxu0 %v7254
    %v7467 = vpop.f32.mrb[0].mxu0
    %v7468 = vadd.f32 0.0, %v7467
    %v7469 = vpop.f32.mrb[0].mxu0
    %7470 = vmatprep.mubr.f32.mxu0 0.0
    %7471 = vmatmul.mubr.f32.gmra.mrb[0].mxu0 %v7257
    %v7472 = vpop.f32.mrb[0].mxu0
    %v7473 = vadd.f32 0.0, %v7472
    %v7474 = vpop.f32.mrb[0].mxu0
    %7475 = vmatprep.mubr.f32.mxu0 0.0
    %7476 = vmatmul.mubr.f32.gmra.mrb[0].mxu0 %v7260
    %v7477 = vpop.f32.mrb[0].mxu0
    %v7478 = vadd.f32 0.0, %v7477
    %v7479 = vpop.f32.mrb[0].mxu0
    %7480 = vmatprep.mubr.f32.mxu0 0.0
    %7481 = vmatmul.mubr.f32.gmra.mrb[0].mxu0 %v7263
    %v7482 = vpop.f32.mrb[0].mxu0
    %v7483 = vadd.f32 0.0, %v7482
    %v7484 = vpop.f32.mrb[0].mxu0
    %7485 = vmatprep.mubr.f32.mxu0 0.0
    %7486 = vmatmul.mubr.f32.gmra.mrb[0].mxu0 %v7266
    %v7487 = vpop.f32.mrb[0].mxu0
    %v7488 = vadd.f32 0.0, %v7487
    %v7489 = vpop.f32.mrb[0].mxu0
    %7490 = vmatprep.mubr.f32.mxu0 0.0
    %7491 = vmatmul.mubr.f32.gmra.mrb[0].mxu0 %v7269
    %v7492 = vpop.f32.mrb[0].mxu0
    %v7493 = vadd.f32 0.0, %v7492
    %v7494 = vpop.f32.mrb[0].mxu0
    %7495 = vdwg.mxu0
    %v7497 = vsel %vm68, %v650, 0
    %v7500 = vsel %vm68, %v754, 0
    %v7503 = vsel %vm68, %v858, 0
    %v7506 = vsel %vm68, %v962, 0
    %v7509 = vsel %vm68, %v1066, 0
    %v7512 = vsel %vm68, %v1170, 0
    %v7515 = vsel %vm68, %v1274, 0
    %v7518 = vsel %vm68, %v1378, 0
    %v7521 = vsel %vm68, %v1482, 0
    %v7524 = vsel %vm68, %v1586, 0
    %v7527 = vsel %vm68, %v1690, 0
    %v7530 = vsel %vm68, %v1794, 0
    %v7533 = vsel %vm68, %v1898, 0
    %v7536 = vsel %vm68, %v2002, 0
    %v7539 = vsel %vm68, %v2106, 0
    %v7542 = vsel %vm68, %v2210, 0
    %v7545 = vsel %vm68, %v2314, 0
    %v7548 = vsel %vm68, %v2418, 0
    %v7551 = vsel %vm68, %v2522, 0
    %v7554 = vsel %vm68, %v2626, 0
    %v7557 = vsel %vm68, %v2730, 0
    %v7560 = vsel %vm68, %v2834, 0
    %v7563 = vsel %vm68, %v2938, 0
    %v7566 = vsel %vm68, %v3042, 0
    %v7569 = vsel %vm68, %v3146, 0
    %v7572 = vsel %vm68, %v3250, 0
    %v7575 = vsel %vm68, %v3354, 0
    %v7578 = vsel %vm68, %v3458, 0
    %v7581 = vsel %vm68, %v3562, 0
    %v7584 = vsel %vm68, %v3666, 0
    %v7587 = vsel %vm68, %v3770, 0
    %v7590 = vsel %vm68, %v3874, 0
    %7592 = vmatprep.subr.mxu0 0.0
    %7593 = vmatpush1.msra.mxu0 %v3875
    %7594 = vmatprep.subr.mxu0 0.0
    %7595 = vmatpush1.msra.mxu0 %v3876
    %7596 = vmatprep.subr.mxu0 0.0
    %7597 = vmatpush1.msra.mxu0 0.0
    %7598 = vmatprep.subr.mxu0 0.0
    %7599 = vmatpush1.msra.mxu0 0.0
    %7600 = vmatprep.subr.mxu0 0.0
    %7601 = vmatpush1.msra.mxu0 0.0
    %7602 = vmatprep.subr.mxu0 0.0
    %7603 = vmatpush1.msra.mxu0 0.0
    %7604 = vmatprep.subr.mxu0 0.0
    %7605 = vmatpush1.msra.mxu0 0.0
    %7606 = vmatprep.subr.mxu0 0.0
    %7607 = vmatpush1.msra.mxu0 0.0
    %7608 = vmatprep.subr.mxu0 0.0
    %7609 = vmatpush1.msra.mxu0 0.0
    %7610 = vmatprep.subr.mxu0 0.0
    %7611 = vmatpush1.msra.mxu0 0.0
    %7612 = vmatprep.subr.mxu0 0.0
    %7613 = vmatpush1.msra.mxu0 0.0
    %7614 = vmatprep.subr.mxu0 0.0
    %7615 = vmatpush1.msra.mxu0 0.0
    %7616 = vmatprep.subr.mxu0 0.0
    %7617 = vmatpush1.msra.mxu0 0.0
    %7618 = vmatprep.subr.mxu0 0.0
    %7619 = vmatpush1.msra.mxu0 0.0
    %7620 = vmatprep.subr.mxu0 0.0
    %7621 = vmatpush1.msra.mxu0 0.0
    %7622 = vmatprep.subr.mxu0 0.0
    %7623 = vmatpush1.msra.mxu0 0.0
    %7624 = vmatprep.subr.mxu0 0.0
    %7625 = vmatpush1.msra.mxu0 0.0
    %7626 = vmatprep.subr.mxu0 0.0
    %7627 = vmatpush1.msra.mxu0 0.0
    %7628 = vmatprep.subr.mxu0 0.0
    %7629 = vmatpush1.msra.mxu0 0.0
    %7630 = vmatprep.subr.mxu0 0.0
    %7631 = vmatpush1.msra.mxu0 0.0
    %7632 = vmatprep.subr.mxu0 0.0
    %7633 = vmatpush1.msra.mxu0 0.0
    %7634 = vmatprep.subr.mxu0 0.0
    %7635 = vmatpush1.msra.mxu0 0.0
    %7636 = vmatprep.subr.mxu0 0.0
    %7637 = vmatpush1.msra.mxu0 0.0
    %7638 = vmatprep.subr.mxu0 0.0
    %7639 = vmatpush1.msra.mxu0 0.0
    %7640 = vmatprep.subr.mxu0 0.0
    %7641 = vmatpush1.msra.mxu0 0.0
    %7642 = vmatprep.subr.mxu0 0.0
    %7643 = vmatpush1.msra.mxu0 0.0
    %7644 = vmatprep.subr.mxu0 0.0
    %7645 = vmatpush1.msra.mxu0 0.0
    %7646 = vmatprep.subr.mxu0 0.0
    %7647 = vmatpush1.msra.mxu0 0.0
    %7648 = vmatprep.subr.mxu0 0.0
    %7649 = vmatpush1.msra.mxu0 0.0
    %7650 = vmatprep.subr.mxu0 0.0
    %7651 = vmatpush1.msra.mxu0 0.0
    %7652 = vmatprep.subr.mxu0 0.0
    %7653 = vmatpush1.msra.mxu0 0.0
    %7654 = vmatprep.subr.mxu0 0.0
    %7655 = vmatpush1.msra.mxu0 0.0
    %7656 = vmatprep.mubr.f32.mxu0 0.0
    %7657 = vmatmul.mubr.f32.gmra.mrb[0].mxu0 %v7497
    %v7658 = vpop.f32.mrb[0].mxu0
    %v7659 = vadd.f32 %v7338, %v7658
    %v7660 = vpop.f32.mrb[0].mxu0
    %7661 = vmatprep.mubr.f32.mxu0 0.0
    %7662 = vmatmul.mubr.f32.gmra.mrb[0].mxu0 %v7500
    %v7663 = vpop.f32.mrb[0].mxu0
    %v7664 = vadd.f32 %v7343, %v7663
    %v7665 = vpop.f32.mrb[0].mxu0
    %7666 = vmatprep.mubr.f32.mxu0 0.0
    %7667 = vmatmul.mubr.f32.gmra.mrb[0].mxu0 %v7503
    %v7668 = vpop.f32.mrb[0].mxu0
    %v7669 = vadd.f32 %v7348, %v7668
    %v7670 = vpop.f32.mrb[0].mxu0
    %7671 = vmatprep.mubr.f32.mxu0 0.0
    %7672 = vmatmul.mubr.f32.gmra.mrb[0].mxu0 %v7506
    %v7673 = vpop.f32.mrb[0].mxu0
    %v7674 = vadd.f32 %v7353, %v7673
    %v7675 = vpop.f32.mrb[0].mxu0
    %7676 = vmatprep.mubr.f32.mxu0 0.0
    %7677 = vmatmul.mubr.f32.gmra.mrb[0].mxu0 %v7509
    %v7678 = vpop.f32.mrb[0].mxu0
    %v7679 = vadd.f32 %v7358, %v7678
    %v7680 = vpop.f32.mrb[0].mxu0
    %7681 = vmatprep.mubr.f32.mxu0 0.0
    %7682 = vmatmul.mubr.f32.gmra.mrb[0].mxu0 %v7512
    %v7683 = vpop.f32.mrb[0].mxu0
    %v7684 = vadd.f32 %v7363, %v7683
    %v7685 = vpop.f32.mrb[0].mxu0
    %7686 = vmatprep.mubr.f32.mxu0 0.0
    %7687 = vmatmul.mubr.f32.gmra.mrb[0].mxu0 %v7515
    %v7688 = vpop.f32.mrb[0].mxu0
    %v7689 = vadd.f32 %v7368, %v7688
    %v7690 = vpop.f32.mrb[0].mxu0
    %7691 = vmatprep.mubr.f32.mxu0 0.0
    %7692 = vmatmul.mubr.f32.gmra.mrb[0].mxu0 %v7518
    %v7693 = vpop.f32.mrb[0].mxu0
    %v7694 = vadd.f32 %v7373, %v7693
    %v7695 = vpop.f32.mrb[0].mxu0
    %7696 = vmatprep.mubr.f32.mxu0 0.0
    %7697 = vmatmul.mubr.f32.gmra.mrb[0].mxu0 %v7521
    %v7698 = vpop.f32.mrb[0].mxu0
    %v7699 = vadd.f32 %v7378, %v7698
    %v7700 = vpop.f32.mrb[0].mxu0
    %7701 = vmatprep.mubr.f32.mxu0 0.0
    %7702 = vmatmul.mubr.f32.gmra.mrb[0].mxu0 %v7524
    %v7703 = vpop.f32.mrb[0].mxu0
    %v7704 = vadd.f32 %v7383, %v7703
    %v7705 = vpop.f32.mrb[0].mxu0
    %7706 = vmatprep.mubr.f32.mxu0 0.0
    %7707 = vmatmul.mubr.f32.gmra.mrb[0].mxu0 %v7527
    %v7708 = vpop.f32.mrb[0].mxu0
    %v7709 = vadd.f32 %v7388, %v7708
    %v7710 = vpop.f32.mrb[0].mxu0
    %7711 = vmatprep.mubr.f32.mxu0 0.0
    %7712 = vmatmul.mubr.f32.gmra.mrb[0].mxu0 %v7530
    %v7713 = vpop.f32.mrb[0].mxu0
    %v7714 = vadd.f32 %v7393, %v7713
    %v7715 = vpop.f32.mrb[0].mxu0
    %7716 = vmatprep.mubr.f32.mxu0 0.0
    %7717 = vmatmul.mubr.f32.gmra.mrb[0].mxu0 %v7533
    %v7718 = vpop.f32.mrb[0].mxu0
    %v7719 = vadd.f32 %v7398, %v7718
    %v7720 = vpop.f32.mrb[0].mxu0
    %7721 = vmatprep.mubr.f32.mxu0 0.0
    %7722 = vmatmul.mubr.f32.gmra.mrb[0].mxu0 %v7536
    %v7723 = vpop.f32.mrb[0].mxu0
    %v7724 = vadd.f32 %v7403, %v7723
    %v7725 = vpop.f32.mrb[0].mxu0
    %7726 = vmatprep.mubr.f32.mxu0 0.0
    %7727 = vmatmul.mubr.f32.gmra.mrb[0].mxu0 %v7539
    %v7728 = vpop.f32.mrb[0].mxu0
    %v7729 = vadd.f32 %v7408, %v7728
    %v7730 = vpop.f32.mrb[0].mxu0
    %7731 = vmatprep.mubr.f32.mxu0 0.0
    %7732 = vmatmul.mubr.f32.gmra.mrb[0].mxu0 %v7542
    %v7733 = vpop.f32.mrb[0].mxu0
    %v7734 = vadd.f32 %v7413, %v7733
    %v7735 = vpop.f32.mrb[0].mxu0
    %7736 = vmatprep.mubr.f32.mxu0 0.0
    %7737 = vmatmul.mubr.f32.gmra.mrb[0].mxu0 %v7545
    %v7738 = vpop.f32.mrb[0].mxu0
    %v7739 = vadd.f32 %v7418, %v7738
    %v7740 = vpop.f32.mrb[0].mxu0
    %7741 = vmatprep.mubr.f32.mxu0 0.0
    %7742 = vmatmul.mubr.f32.gmra.mrb[0].mxu0 %v7548
    %v7743 = vpop.f32.mrb[0].mxu0
    %v7744 = vadd.f32 %v7423, %v7743
    %v7745 = vpop.f32.mrb[0].mxu0
    %7746 = vmatprep.mubr.f32.mxu0 0.0
    %7747 = vmatmul.mubr.f32.gmra.mrb[0].mxu0 %v7551
    %v7748 = vpop.f32.mrb[0].mxu0
    %v7749 = vadd.f32 %v7428, %v7748
    %v7750 = vpop.f32.mrb[0].mxu0
    %7751 = vmatprep.mubr.f32.mxu0 0.0
    %7752 = vmatmul.mubr.f32.gmra.mrb[0].mxu0 %v7554
    %v7753 = vpop.f32.mrb[0].mxu0
    %v7754 = vadd.f32 %v7433, %v7753
    %v7755 = vpop.f32.mrb[0].mxu0
    %7756 = vmatprep.mubr.f32.mxu0 0.0
    %7757 = vmatmul.mubr.f32.gmra.mrb[0].mxu0 %v7557
    %v7758 = vpop.f32.mrb[0].mxu0
    %v7759 = vadd.f32 %v7438, %v7758
    %v7760 = vpop.f32.mrb[0].mxu0
    %7761 = vmatprep.mubr.f32.mxu0 0.0
    %7762 = vmatmul.mubr.f32.gmra.mrb[0].mxu0 %v7560
    %v7763 = vpop.f32.mrb[0].mxu0
    %v7764 = vadd.f32 %v7443, %v7763
    %v7765 = vpop.f32.mrb[0].mxu0
    %7766 = vmatprep.mubr.f32.mxu0 0.0
    %7767 = vmatmul.mubr.f32.gmra.mrb[0].mxu0 %v7563
    %v7768 = vpop.f32.mrb[0].mxu0
    %v7769 = vadd.f32 %v7448, %v7768
    %v7770 = vpop.f32.mrb[0].mxu0
    %7771 = vmatprep.mubr.f32.mxu0 0.0
    %7772 = vmatmul.mubr.f32.gmra.mrb[0].mxu0 %v7566
    %v7773 = vpop.f32.mrb[0].mxu0
    %v7774 = vadd.f32 %v7453, %v7773
    %v7775 = vpop.f32.mrb[0].mxu0
    %7776 = vmatprep.mubr.f32.mxu0 0.0
    %7777 = vmatmul.mubr.f32.gmra.mrb[0].mxu0 %v7569
    %v7778 = vpop.f32.mrb[0].mxu0
    %v7779 = vadd.f32 %v7458, %v7778
    %v7780 = vpop.f32.mrb[0].mxu0
    %7781 = vmatprep.mubr.f32.mxu0 0.0
    %7782 = vmatmul.mubr.f32.gmra.mrb[0].mxu0 %v7572
    %v7783 = vpop.f32.mrb[0].mxu0
    %v7784 = vadd.f32 %v7463, %v7783
    %v7785 = vpop.f32.mrb[0].mxu0
    %7786 = vmatprep.mubr.f32.mxu0 0.0
    %7787 = vmatmul.mubr.f32.gmra.mrb[0].mxu0 %v7575
    %v7788 = vpop.f32.mrb[0].mxu0
    %v7789 = vadd.f32 %v7468, %v7788
    %v7790 = vpop.f32.mrb[0].mxu0
    %7791 = vmatprep.mubr.f32.mxu0 0.0
    %7792 = vmatmul.mubr.f32.gmra.mrb[0].mxu0 %v7578
    %v7793 = vpop.f32.mrb[0].mxu0
    %v7794 = vadd.f32 %v7473, %v7793
    %v7795 = vpop.f32.mrb[0].mxu0
    %7796 = vmatprep.mubr.f32.mxu0 0.0
    %7797 = vmatmul.mubr.f32.gmra.mrb[0].mxu0 %v7581
    %v7798 = vpop.f32.mrb[0].mxu0
    %v7799 = vadd.f32 %v7478, %v7798
    %v7800 = vpop.f32.mrb[0].mxu0
    %7801 = vmatprep.mubr.f32.mxu0 0.0
    %7802 = vmatmul.mubr.f32.gmra.mrb[0].mxu0 %v7584
    %v7803 = vpop.f32.mrb[0].mxu0
    %v7804 = vadd.f32 %v7483, %v7803
    %v7805 = vpop.f32.mrb[0].mxu0
    %7806 = vmatprep.mubr.f32.mxu0 0.0
    %7807 = vmatmul.mubr.f32.gmra.mrb[0].mxu0 %v7587
    %v7808 = vpop.f32.mrb[0].mxu0
    %v7809 = vadd.f32 %v7488, %v7808
    %v7810 = vpop.f32.mrb[0].mxu0
    %7811 = vmatprep.mubr.f32.mxu0 0.0
    %7812 = vmatmul.mubr.f32.gmra.mrb[0].mxu0 %v7590
    %v7813 = vpop.f32.mrb[0].mxu0
    %v7814 = vadd.f32 %v7493, %v7813
    %v7815 = vpop.f32.mrb[0].mxu0
    %7816 = vdwg.mxu0
    %v7817 = vld [vmem:[%s9] sm:$0x1]
    %v7819 = vlaneseq
    %v7820 = vshrl.u32 %v7819, 7
    %v7821 = vsub.s32 0, %v7820
    %v7822 = vrot.slane %v7817, %v7821
    %v7824 = vadd.f32 %v7659, %v7822
    %v7825 = vadd.f32 %v7664, %v7822
    %v7826 = vadd.f32 %v7669, %v7822
    %v7827 = vadd.f32 %v7674, %v7822
    %v7828 = vadd.f32 %v7679, %v7822
    %v7829 = vadd.f32 %v7684, %v7822
    %v7830 = vadd.f32 %v7689, %v7822
    %v7831 = vadd.f32 %v7694, %v7822
    %v7832 = vadd.f32 %v7699, %v7822
    %v7833 = vadd.f32 %v7704, %v7822
    %v7834 = vadd.f32 %v7709, %v7822
    %v7835 = vadd.f32 %v7714, %v7822
    %v7836 = vadd.f32 %v7719, %v7822
    %v7837 = vadd.f32 %v7724, %v7822
    %v7838 = vadd.f32 %v7729, %v7822
    %v7839 = vadd.f32 %v7734, %v7822
    %v7840 = vadd.f32 %v7739, %v7822
    %v7841 = vadd.f32 %v7744, %v7822
    %v7842 = vadd.f32 %v7749, %v7822
    %v7843 = vadd.f32 %v7754, %v7822
    %v7844 = vadd.f32 %v7759, %v7822
    %v7845 = vadd.f32 %v7764, %v7822
    %v7846 = vadd.f32 %v7769, %v7822
    %v7847 = vadd.f32 %v7774, %v7822
    %v7848 = vadd.f32 %v7779, %v7822
    %v7849 = vadd.f32 %v7784, %v7822
    %v7850 = vadd.f32 %v7789, %v7822
    %v7851 = vadd.f32 %v7794, %v7822
    %v7852 = vadd.f32 %v7799, %v7822
    %v7853 = vadd.f32 %v7804, %v7822
    %v7854 = vadd.f32 %v7809, %v7822
    %v7855 = vadd.f32 %v7814, %v7822
    %v7856 = vld [vmem:[%s4] sm:$0xff]
    %v7857 = vld [vmem:[%s4 + $0x8] sm:$0xff]
    %v7858 = vld [vmem:[%s4 + $0x10] sm:$0xff]
    %v7859 = vld [vmem:[%s4 + $0x18] sm:$0xff]
    %v7860 = vld [vmem:[%s4 + $0x20] sm:$0xff]
    %v7861 = vld [vmem:[%s4 + $0x28] sm:$0xff]
    %v7862 = vld [vmem:[%s4 + $0x30] sm:$0xff]
    %v7863 = vld [vmem:[%s4 + $0x38] sm:$0xff]
    %v7864 = vld [vmem:[%s4 + $0x40] sm:$0xff]
    %v7865 = vld [vmem:[%s4 + $0x48] sm:$0xff]
    %v7866 = vld [vmem:[%s4 + $0x50] sm:$0xff]
    %v7867 = vld [vmem:[%s4 + $0x58] sm:$0xff]
    %v7868 = vld [vmem:[%s4 + $0x60] sm:$0xff]
    %v7869 = vld [vmem:[%s4 + $0x68] sm:$0xff]
    %v7870 = vld [vmem:[%s4 + $0x70] sm:$0xff]
    %v7871 = vld [vmem:[%s4 + $0x78] sm:$0xff]
    %v7872 = vld [vmem:[%s4 + $0x80] sm:$0xff]
    %v7873 = vld [vmem:[%s4 + $0x88] sm:$0xff]
    %v7874 = vld [vmem:[%s4 + $0x90] sm:$0xff]
    %v7875 = vld [vmem:[%s4 + $0x98] sm:$0xff]
    %v7876 = vld [vmem:[%s4 + $0xa0] sm:$0xff]
    %v7877 = vld [vmem:[%s4 + $0xa8] sm:$0xff]
    %v7878 = vld [vmem:[%s4 + $0xb0] sm:$0xff]
    %v7879 = vld [vmem:[%s4 + $0xb8] sm:$0xff]
    %v7880 = vld [vmem:[%s4 + $0xc0] sm:$0xff]
    %v7881 = vld [vmem:[%s4 + $0xc8] sm:$0xff]
    %v7882 = vld [vmem:[%s4 + $0xd0] sm:$0xff]
    %v7883 = vld [vmem:[%s4 + $0xd8] sm:$0xff]
    %v7884 = vld [vmem:[%s4 + $0xe0] sm:$0xff]
    %v7885 = vld [vmem:[%s4 + $0xe8] sm:$0xff]
    %v7886 = vld [vmem:[%s4 + $0xf0] sm:$0xff]
    %v7887 = vld [vmem:[%s4 + $0xf8] sm:$0xff]
    %v7888 = vmul.f32 %v7824, %v7856
    %v7889 = vmul.f32 %v7825, %v7857
    %v7890 = vmul.f32 %v7826, %v7858
    %v7891 = vmul.f32 %v7827, %v7859
    %v7892 = vmul.f32 %v7828, %v7860
    %v7893 = vmul.f32 %v7829, %v7861
    %v7894 = vmul.f32 %v7830, %v7862
    %v7895 = vmul.f32 %v7831, %v7863
    %v7896 = vmul.f32 %v7832, %v7864
    %v7897 = vmul.f32 %v7833, %v7865
    %v7898 = vmul.f32 %v7834, %v7866
    %v7899 = vmul.f32 %v7835, %v7867
    %v7900 = vmul.f32 %v7836, %v7868
    %v7901 = vmul.f32 %v7837, %v7869
    %v7902 = vmul.f32 %v7838, %v7870
    %v7903 = vmul.f32 %v7839, %v7871
    %v7904 = vmul.f32 %v7840, %v7872
    %v7905 = vmul.f32 %v7841, %v7873
    %v7906 = vmul.f32 %v7842, %v7874
    %v7907 = vmul.f32 %v7843, %v7875
    %v7908 = vmul.f32 %v7844, %v7876
    %v7909 = vmul.f32 %v7845, %v7877
    %v7910 = vmul.f32 %v7846, %v7878
    %v7911 = vmul.f32 %v7847, %v7879
    %v7912 = vmul.f32 %v7848, %v7880
    %v7913 = vmul.f32 %v7849, %v7881
    %v7914 = vmul.f32 %v7850, %v7882
    %v7915 = vmul.f32 %v7851, %v7883
    %v7916 = vmul.f32 %v7852, %v7884
    %v7917 = vmul.f32 %v7853, %v7885
    %v7918 = vmul.f32 %v7854, %v7886
    %v7919 = vmul.f32 %v7855, %v7887
    %v7920 = vld [vmem:[%s5] sm:$0xff]
    %v7921 = vld [vmem:[%s5 + $0x8] sm:$0xff]
    %v7922 = vld [vmem:[%s5 + $0x10] sm:$0xff]
    %v7923 = vld [vmem:[%s5 + $0x18] sm:$0xff]
    %v7924 = vld [vmem:[%s5 + $0x20] sm:$0xff]
    %v7925 = vld [vmem:[%s5 + $0x28] sm:$0xff]
    %v7926 = vld [vmem:[%s5 + $0x30] sm:$0xff]
    %v7927 = vld [vmem:[%s5 + $0x38] sm:$0xff]
    %v7928 = vld [vmem:[%s5 + $0x40] sm:$0xff]
    %v7929 = vld [vmem:[%s5 + $0x48] sm:$0xff]
    %v7930 = vld [vmem:[%s5 + $0x50] sm:$0xff]
    %v7931 = vld [vmem:[%s5 + $0x58] sm:$0xff]
    %v7932 = vld [vmem:[%s5 + $0x60] sm:$0xff]
    %v7933 = vld [vmem:[%s5 + $0x68] sm:$0xff]
    %v7934 = vld [vmem:[%s5 + $0x70] sm:$0xff]
    %v7935 = vld [vmem:[%s5 + $0x78] sm:$0xff]
    %v7936 = vld [vmem:[%s5 + $0x80] sm:$0xff]
    %v7937 = vld [vmem:[%s5 + $0x88] sm:$0xff]
    %v7938 = vld [vmem:[%s5 + $0x90] sm:$0xff]
    %v7939 = vld [vmem:[%s5 + $0x98] sm:$0xff]
    %v7940 = vld [vmem:[%s5 + $0xa0] sm:$0xff]
    %v7941 = vld [vmem:[%s5 + $0xa8] sm:$0xff]
    %v7942 = vld [vmem:[%s5 + $0xb0] sm:$0xff]
    %v7943 = vld [vmem:[%s5 + $0xb8] sm:$0xff]
    %v7944 = vld [vmem:[%s5 + $0xc0] sm:$0xff]
    %v7945 = vld [vmem:[%s5 + $0xc8] sm:$0xff]
    %v7946 = vld [vmem:[%s5 + $0xd0] sm:$0xff]
    %v7947 = vld [vmem:[%s5 + $0xd8] sm:$0xff]
    %v7948 = vld [vmem:[%s5 + $0xe0] sm:$0xff]
    %v7949 = vld [vmem:[%s5 + $0xe8] sm:$0xff]
    %v7950 = vld [vmem:[%s5 + $0xf0] sm:$0xff]
    %v7951 = vld [vmem:[%s5 + $0xf8] sm:$0xff]
    %v7952 = vadd.f32 %v7888, %v7920
    %v7953 = vadd.f32 %v7889, %v7921
    %v7954 = vadd.f32 %v7890, %v7922
    %v7955 = vadd.f32 %v7891, %v7923
    %v7956 = vadd.f32 %v7892, %v7924
    %v7957 = vadd.f32 %v7893, %v7925
    %v7958 = vadd.f32 %v7894, %v7926
    %v7959 = vadd.f32 %v7895, %v7927
    %v7960 = vadd.f32 %v7896, %v7928
    %v7961 = vadd.f32 %v7897, %v7929
    %v7962 = vadd.f32 %v7898, %v7930
    %v7963 = vadd.f32 %v7899, %v7931
    %v7964 = vadd.f32 %v7900, %v7932
    %v7965 = vadd.f32 %v7901, %v7933
    %v7966 = vadd.f32 %v7902, %v7934
    %v7967 = vadd.f32 %v7903, %v7935
    %v7968 = vadd.f32 %v7904, %v7936
    %v7969 = vadd.f32 %v7905, %v7937
    %v7970 = vadd.f32 %v7906, %v7938
    %v7971 = vadd.f32 %v7907, %v7939
    %v7972 = vadd.f32 %v7908, %v7940
    %v7973 = vadd.f32 %v7909, %v7941
    %v7974 = vadd.f32 %v7910, %v7942
    %v7975 = vadd.f32 %v7911, %v7943
    %v7976 = vadd.f32 %v7912, %v7944
    %v7977 = vadd.f32 %v7913, %v7945
    %v7978 = vadd.f32 %v7914, %v7946
    %v7979 = vadd.f32 %v7915, %v7947
    %v7980 = vadd.f32 %v7916, %v7948
    %v7981 = vadd.f32 %v7917, %v7949
    %v7982 = vadd.f32 %v7918, %v7950
    %v7983 = vadd.f32 %v7919, %v7951
    %v7984 = vmul.f32 %v7952, 0.5
    %v7985 = vmul.f32 %v7953, 0.5
    %v7986 = vmul.f32 %v7954, 0.5
    %v7987 = vmul.f32 %v7955, 0.5
    %v7988 = vmul.f32 %v7956, 0.5
    %v7989 = vmul.f32 %v7957, 0.5
    %v7990 = vmul.f32 %v7958, 0.5
    %v7991 = vmul.f32 %v7959, 0.5
    %v7992 = vmul.f32 %v7960, 0.5
    %v7993 = vmul.f32 %v7961, 0.5
    %v7994 = vmul.f32 %v7962, 0.5
    %v7995 = vmul.f32 %v7963, 0.5
    %v7996 = vmul.f32 %v7964, 0.5
    %v7997 = vmul.f32 %v7965, 0.5
    %v7998 = vmul.f32 %v7966, 0.5
    %v7999 = vmul.f32 %v7967, 0.5
    %v8000 = vmul.f32 %v7968, 0.5
    %v8001 = vmul.f32 %v7969, 0.5
    %v8002 = vmul.f32 %v7970, 0.5
    %v8003 = vmul.f32 %v7971, 0.5
    %v8004 = vmul.f32 %v7972, 0.5
    %v8005 = vmul.f32 %v7973, 0.5
    %v8006 = vmul.f32 %v7974, 0.5
    %v8007 = vmul.f32 %v7975, 0.5
    %v8008 = vmul.f32 %v7976, 0.5
    %v8009 = vmul.f32 %v7977, 0.5
    %v8010 = vmul.f32 %v7978, 0.5
    %v8011 = vmul.f32 %v7979, 0.5
    %v8012 = vmul.f32 %v7980, 0.5
    %v8013 = vmul.f32 %v7981, 0.5
    %v8014 = vmul.f32 %v7982, 0.5
    %v8015 = vmul.f32 %v7983, 0.5
    %v8016 = vmul.f32 %v7952, 0.70710677
    %v8017 = vmul.f32 %v7953, 0.70710677
    %v8018 = vmul.f32 %v7954, 0.70710677
    %v8019 = vmul.f32 %v7955, 0.70710677
    %v8020 = vmul.f32 %v7956, 0.70710677
    %v8021 = vmul.f32 %v7957, 0.70710677
    %v8022 = vmul.f32 %v7958, 0.70710677
    %v8023 = vmul.f32 %v7959, 0.70710677
    %v8024 = vmul.f32 %v7960, 0.70710677
    %v8025 = vmul.f32 %v7961, 0.70710677
    %v8026 = vmul.f32 %v7962, 0.70710677
    %v8027 = vmul.f32 %v7963, 0.70710677
    %v8028 = vmul.f32 %v7964, 0.70710677
    %v8029 = vmul.f32 %v7965, 0.70710677
    %v8030 = vmul.f32 %v7966, 0.70710677
    %v8031 = vmul.f32 %v7967, 0.70710677
    %v8032 = vmul.f32 %v7968, 0.70710677
    %v8033 = vmul.f32 %v7969, 0.70710677
    %v8034 = vmul.f32 %v7970, 0.70710677
    %v8035 = vmul.f32 %v7971, 0.70710677
    %v8036 = vmul.f32 %v7972, 0.70710677
    %v8037 = vmul.f32 %v7973, 0.70710677
    %v8038 = vmul.f32 %v7974, 0.70710677
    %v8039 = vmul.f32 %v7975, 0.70710677
    %v8040 = vmul.f32 %v7976, 0.70710677
    %v8041 = vmul.f32 %v7977, 0.70710677
    %v8042 = vmul.f32 %v7978, 0.70710677
    %v8043 = vmul.f32 %v7979, 0.70710677
    %v8044 = vmul.f32 %v7980, 0.70710677
    %v8045 = vmul.f32 %v7981, 0.70710677
    %v8046 = vmul.f32 %v7982, 0.70710677
    %v8047 = vmul.f32 %v7983, 0.70710677
    %v8048 = verf.f32.pop %v8016
    %v8049 = verf.f32.pop %v8017
    %v8050 = verf.f32.pop %v8018
    %v8051 = verf.f32.pop %v8019
    %v8052 = verf.f32.pop %v8020
    %v8053 = verf.f32.pop %v8021
    %v8054 = verf.f32.pop %v8022
    %v8055 = verf.f32.pop %v8023
    %v8056 = verf.f32.pop %v8024
    %v8057 = verf.f32.pop %v8025
    %v8058 = verf.f32.pop %v8026
    %v8059 = verf.f32.pop %v8027
    %v8060 = verf.f32.pop %v8028
    %v8061 = verf.f32.pop %v8029
    %v8062 = verf.f32.pop %v8030
    %v8063 = verf.f32.pop %v8031
    %v8064 = verf.f32.pop %v8032
    %v8065 = verf.f32.pop %v8033
    %v8066 = verf.f32.pop %v8034
    %v8067 = verf.f32.pop %v8035
    %v8068 = verf.f32.pop %v8036
    %v8069 = verf.f32.pop %v8037
    %v8070 = verf.f32.pop %v8038
    %v8071 = verf.f32.pop %v8039
    %v8072 = verf.f32.pop %v8040
    %v8073 = verf.f32.pop %v8041
    %v8074 = verf.f32.pop %v8042
    %v8075 = verf.f32.pop %v8043
    %v8076 = verf.f32.pop %v8044
    %v8077 = verf.f32.pop %v8045
    %v8078 = verf.f32.pop %v8046
    %v8079 = verf.f32.pop %v8047
    %v8080 = vadd.f32 %v8048, 1.0
    %v8081 = vadd.f32 %v8049, 1.0
    %v8082 = vadd.f32 %v8050, 1.0
    %v8083 = vadd.f32 %v8051, 1.0
    %v8084 = vadd.f32 %v8052, 1.0
    %v8085 = vadd.f32 %v8053, 1.0
    %v8086 = vadd.f32 %v8054, 1.0
    %v8087 = vadd.f32 %v8055, 1.0
    %v8088 = vadd.f32 %v8056, 1.0
    %v8089 = vadd.f32 %v8057, 1.0
    %v8090 = vadd.f32 %v8058, 1.0
    %v8091 = vadd.f32 %v8059, 1.0
    %v8092 = vadd.f32 %v8060, 1.0
    %v8093 = vadd.f32 %v8061, 1.0
    %v8094 = vadd.f32 %v8062, 1.0
    %v8095 = vadd.f32 %v8063, 1.0
    %v8096 = vadd.f32 %v8064, 1.0
    %v8097 = vadd.f32 %v8065, 1.0
    %v8098 = vadd.f32 %v8066, 1.0
    %v8099 = vadd.f32 %v8067, 1.0
    %v8100 = vadd.f32 %v8068, 1.0
    %v8101 = vadd.f32 %v8069, 1.0
    %v8102 = vadd.f32 %v8070, 1.0
    %v8103 = vadd.f32 %v8071, 1.0
    %v8104 = vadd.f32 %v8072, 1.0
    %v8105 = vadd.f32 %v8073, 1.0
    %v8106 = vadd.f32 %v8074, 1.0
    %v8107 = vadd.f32 %v8075, 1.0
    %v8108 = vadd.f32 %v8076, 1.0
    %v8109 = vadd.f32 %v8077, 1.0
    %v8110 = vadd.f32 %v8078, 1.0
    %v8111 = vadd.f32 %v8079, 1.0
    %v8112 = vmul.f32 %v7984, %v8080
    %v8113 = vmul.f32 %v7985, %v8081
    %v8114 = vmul.f32 %v7986, %v8082
    %v8115 = vmul.f32 %v7987, %v8083
    %v8116 = vmul.f32 %v7988, %v8084
    %v8117 = vmul.f32 %v7989, %v8085
    %v8118 = vmul.f32 %v7990, %v8086
    %v8119 = vmul.f32 %v7991, %v8087
    %v8120 = vmul.f32 %v7992, %v8088
    %v8121 = vmul.f32 %v7993, %v8089
    %v8122 = vmul.f32 %v7994, %v8090
    %v8123 = vmul.f32 %v7995, %v8091
    %v8124 = vmul.f32 %v7996, %v8092
    %v8125 = vmul.f32 %v7997, %v8093
    %v8126 = vmul.f32 %v7998, %v8094
    %v8127 = vmul.f32 %v7999, %v8095
    %v8128 = vmul.f32 %v8000, %v8096
    %v8129 = vmul.f32 %v8001, %v8097
    %v8130 = vmul.f32 %v8002, %v8098
    %v8131 = vmul.f32 %v8003, %v8099
    %v8132 = vmul.f32 %v8004, %v8100
    %v8133 = vmul.f32 %v8005, %v8101
    %v8134 = vmul.f32 %v8006, %v8102
    %v8135 = vmul.f32 %v8007, %v8103
    %v8136 = vmul.f32 %v8008, %v8104
    %v8137 = vmul.f32 %v8009, %v8105
    %v8138 = vmul.f32 %v8010, %v8106
    %v8139 = vmul.f32 %v8011, %v8107
    %v8140 = vmul.f32 %v8012, %v8108
    %v8141 = vmul.f32 %v8013, %v8109
    %v8142 = vmul.f32 %v8014, %v8110
    %v8143 = vmul.f32 %v8015, %v8111
    %v8144 = vld [vmem:[%s10] sm:$0xff]
    %v8145 = vld [vmem:[%s10 + $0x8] sm:$0xff]
    %v8146 = vld [vmem:[%s10 + $0x10] sm:$0xff]
    %v8147 = vld [vmem:[%s10 + $0x18] sm:$0xff]
    %v8148 = vld [vmem:[%s11] sm:$0x1]
    %v8150 = vlaneseq
    %v8151 = vshrl.u32 %v8150, 7
    %v8152 = vsub.s32 0, %v8151
    %v8153 = vrot.slane %v8148, %v8152
    %vm8155 = vcmask 261120
    %v8157 = vsel %vm8155, %v8112, 0
    %v8160 = vsel %vm8155, %v8113, 0
    %v8163 = vsel %vm8155, %v8114, 0
    %v8166 = vsel %vm8155, %v8115, 0
    %v8169 = vsel %vm8155, %v8116, 0
    %v8172 = vsel %vm8155, %v8117, 0
    %v8175 = vsel %vm8155, %v8118, 0
    %v8178 = vsel %vm8155, %v8119, 0
    %v8181 = vsel %vm8155, %v8120, 0
    %v8184 = vsel %vm8155, %v8121, 0
    %v8187 = vsel %vm8155, %v8122, 0
    %v8190 = vsel %vm8155, %v8123, 0
    %v8193 = vsel %vm8155, %v8124, 0
    %v8196 = vsel %vm8155, %v8125, 0
    %v8199 = vsel %vm8155, %v8126, 0
    %v8202 = vsel %vm8155, %v8127, 0
    %v8205 = vsel %vm8155, %v8128, 0
    %v8208 = vsel %vm8155, %v8129, 0
    %v8211 = vsel %vm8155, %v8130, 0
    %v8214 = vsel %vm8155, %v8131, 0
    %v8217 = vsel %vm8155, %v8132, 0
    %v8220 = vsel %vm8155, %v8133, 0
    %v8223 = vsel %vm8155, %v8134, 0
    %v8226 = vsel %vm8155, %v8135, 0
    %v8229 = vsel %vm8155, %v8136, 0
    %v8232 = vsel %vm8155, %v8137, 0
    %v8235 = vsel %vm8155, %v8138, 0
    %v8238 = vsel %vm8155, %v8139, 0
    %v8241 = vsel %vm8155, %v8140, 0
    %v8244 = vsel %vm8155, %v8141, 0
    %v8247 = vsel %vm8155, %v8142, 0
    %v8250 = vsel %vm8155, %v8143, 0
    %8252 = vmatprep.subr.mxu0 0.0
    %8253 = vmatpush1.msra.mxu0 %v8144
    %8254 = vmatprep.subr.mxu0 0.0
    %8255 = vmatpush1.msra.mxu0 %v8145
    %8256 = vmatprep.subr.mxu0 0.0
    %8257 = vmatpush1.msra.mxu0 %v8146
    %8258 = vmatprep.subr.mxu0 0.0
    %8259 = vmatpush1.msra.mxu0 %v8147
    %8260 = vmatprep.subr.mxu0 0.0
    %8261 = vmatpush1.msra.mxu0 0.0
    %8262 = vmatprep.subr.mxu0 0.0
    %8263 = vmatpush1.msra.mxu0 0.0
    %8264 = vmatprep.subr.mxu0 0.0
    %8265 = vmatpush1.msra.mxu0 0.0
    %8266 = vmatprep.subr.mxu0 0.0
    %8267 = vmatpush1.msra.mxu0 0.0
    %8268 = vmatprep.subr.mxu0 0.0
    %8269 = vmatpush1.msra.mxu0 0.0
    %8270 = vmatprep.subr.mxu0 0.0
    %8271 = vmatpush1.msra.mxu0 0.0
    %8272 = vmatprep.subr.mxu0 0.0
    %8273 = vmatpush1.msra.mxu0 0.0
    %8274 = vmatprep.subr.mxu0 0.0
    %8275 = vmatpush1.msra.mxu0 0.0
    %8276 = vmatprep.subr.mxu0 0.0
    %8277 = vmatpush1.msra.mxu0 0.0
    %8278 = vmatprep.subr.mxu0 0.0
    %8279 = vmatpush1.msra.mxu0 0.0
    %8280 = vmatprep.subr.mxu0 0.0
    %8281 = vmatpush1.msra.mxu0 0.0
    %8282 = vmatprep.subr.mxu0 0.0
    %8283 = vmatpush1.msra.mxu0 0.0
    %8284 = vmatprep.subr.mxu0 0.0
    %8285 = vmatpush1.msra.mxu0 0.0
    %8286 = vmatprep.subr.mxu0 0.0
    %8287 = vmatpush1.msra.mxu0 0.0
    %8288 = vmatprep.subr.mxu0 0.0
    %8289 = vmatpush1.msra.mxu0 0.0
    %8290 = vmatprep.subr.mxu0 0.0
    %8291 = vmatpush1.msra.mxu0 0.0
    %8292 = vmatprep.subr.mxu0 0.0
    %8293 = vmatpush1.msra.mxu0 0.0
    %8294 = vmatprep.subr.mxu0 0.0
    %8295 = vmatpush1.msra.mxu0 0.0
    %8296 = vmatprep.subr.mxu0 0.0
    %8297 = vmatpush1.msra.mxu0 0.0
    %8298 = vmatprep.subr.mxu0 0.0
    %8299 = vmatpush1.msra.mxu0 0.0
    %8300 = vmatprep.subr.mxu0 0.0
    %8301 = vmatpush1.msra.mxu0 0.0
    %8302 = vmatprep.subr.mxu0 0.0
    %8303 = vmatpush1.msra.mxu0 0.0
    %8304 = vmatprep.subr.mxu0 0.0
    %8305 = vmatpush1.msra.mxu0 0.0
    %8306 = vmatprep.subr.mxu0 0.0
    %8307 = vmatpush1.msra.mxu0 0.0
    %8308 = vmatprep.subr.mxu0 0.0
    %8309 = vmatpush1.msra.mxu0 0.0
    %8310 = vmatprep.subr.mxu0 0.0
    %8311 = vmatpush1.msra.mxu0 0.0
    %8312 = vmatprep.subr.mxu0 0.0
    %8313 = vmatpush1.msra.mxu0 0.0
    %8314 = vmatprep.subr.mxu0 0.0
    %8315 = vmatpush1.msra.mxu0 0.0
    %8316 = vmatprep.mubr.f32.mxu0 0.0
    %8317 = vmatmul.mubr.f32.gmra.mrb[0].mxu0 %v8157
    %v8318 = vpop.f32.mrb[0].mxu0
    %v8319 = vadd.f32 %v8153, %v8318
    %v8320 = vpop.f32.mrb[0].mxu0
    %8321 = vmatprep.mubr.f32.mxu0 0.0
    %8322 = vmatmul.mubr.f32.gmra.mrb[0].mxu0 %v8160
    %v8323 = vpop.f32.mrb[0].mxu0
    %v8324 = vadd.f32 %v8153, %v8323
    %v8325 = vpop.f32.mrb[0].mxu0
    %8326 = vmatprep.mubr.f32.mxu0 0.0
    %8327 = vmatmul.mubr.f32.gmra.mrb[0].mxu0 %v8163
    %v8328 = vpop.f32.mrb[0].mxu0
    %v8329 = vadd.f32 %v8153, %v8328
    %v8330 = vpop.f32.mrb[0].mxu0
    %8331 = vmatprep.mubr.f32.mxu0 0.0
    %8332 = vmatmul.mubr.f32.gmra.mrb[0].mxu0 %v8166
    %v8333 = vpop.f32.mrb[0].mxu0
    %v8334 = vadd.f32 %v8153, %v8333
    %v8335 = vpop.f32.mrb[0].mxu0
    %8336 = vmatprep.mubr.f32.mxu0 0.0
    %8337 = vmatmul.mubr.f32.gmra.mrb[0].mxu0 %v8169
    %v8338 = vpop.f32.mrb[0].mxu0
    %v8339 = vadd.f32 %v8153, %v8338
    %v8340 = vpop.f32.mrb[0].mxu0
    %8341 = vmatprep.mubr.f32.mxu0 0.0
    %8342 = vmatmul.mubr.f32.gmra.mrb[0].mxu0 %v8172
    %v8343 = vpop.f32.mrb[0].mxu0
    %v8344 = vadd.f32 %v8153, %v8343
    %v8345 = vpop.f32.mrb[0].mxu0
    %8346 = vmatprep.mubr.f32.mxu0 0.0
    %8347 = vmatmul.mubr.f32.gmra.mrb[0].mxu0 %v8175
    %v8348 = vpop.f32.mrb[0].mxu0
    %v8349 = vadd.f32 %v8153, %v8348
    %v8350 = vpop.f32.mrb[0].mxu0
    %8351 = vmatprep.mubr.f32.mxu0 0.0
    %8352 = vmatmul.mubr.f32.gmra.mrb[0].mxu0 %v8178
    %v8353 = vpop.f32.mrb[0].mxu0
    %v8354 = vadd.f32 %v8153, %v8353
    %v8355 = vpop.f32.mrb[0].mxu0
    %8356 = vmatprep.mubr.f32.mxu0 0.0
    %8357 = vmatmul.mubr.f32.gmra.mrb[0].mxu0 %v8181
    %v8358 = vpop.f32.mrb[0].mxu0
    %v8359 = vadd.f32 %v8153, %v8358
    %v8360 = vpop.f32.mrb[0].mxu0
    %8361 = vmatprep.mubr.f32.mxu0 0.0
    %8362 = vmatmul.mubr.f32.gmra.mrb[0].mxu0 %v8184
    %v8363 = vpop.f32.mrb[0].mxu0
    %v8364 = vadd.f32 %v8153, %v8363
    %v8365 = vpop.f32.mrb[0].mxu0
    %8366 = vmatprep.mubr.f32.mxu0 0.0
    %8367 = vmatmul.mubr.f32.gmra.mrb[0].mxu0 %v8187
    %v8368 = vpop.f32.mrb[0].mxu0
    %v8369 = vadd.f32 %v8153, %v8368
    %v8370 = vpop.f32.mrb[0].mxu0
    %8371 = vmatprep.mubr.f32.mxu0 0.0
    %8372 = vmatmul.mubr.f32.gmra.mrb[0].mxu0 %v8190
    %v8373 = vpop.f32.mrb[0].mxu0
    %v8374 = vadd.f32 %v8153, %v8373
    %v8375 = vpop.f32.mrb[0].mxu0
    %8376 = vmatprep.mubr.f32.mxu0 0.0
    %8377 = vmatmul.mubr.f32.gmra.mrb[0].mxu0 %v8193
    %v8378 = vpop.f32.mrb[0].mxu0
    %v8379 = vadd.f32 %v8153, %v8378
    %v8380 = vpop.f32.mrb[0].mxu0
    %8381 = vmatprep.mubr.f32.mxu0 0.0
    %8382 = vmatmul.mubr.f32.gmra.mrb[0].mxu0 %v8196
    %v8383 = vpop.f32.mrb[0].mxu0
    %v8384 = vadd.f32 %v8153, %v8383
    %v8385 = vpop.f32.mrb[0].mxu0
    %8386 = vmatprep.mubr.f32.mxu0 0.0
    %8387 = vmatmul.mubr.f32.gmra.mrb[0].mxu0 %v8199
    %v8388 = vpop.f32.mrb[0].mxu0
    %v8389 = vadd.f32 %v8153, %v8388
    %v8390 = vpop.f32.mrb[0].mxu0
    %8391 = vmatprep.mubr.f32.mxu0 0.0
    %8392 = vmatmul.mubr.f32.gmra.mrb[0].mxu0 %v8202
    %v8393 = vpop.f32.mrb[0].mxu0
    %v8394 = vadd.f32 %v8153, %v8393
    %v8395 = vpop.f32.mrb[0].mxu0
    %8396 = vmatprep.mubr.f32.mxu0 0.0
    %8397 = vmatmul.mubr.f32.gmra.mrb[0].mxu0 %v8205
    %v8398 = vpop.f32.mrb[0].mxu0
    %v8399 = vadd.f32 %v8153, %v8398
    %v8400 = vpop.f32.mrb[0].mxu0
    %8401 = vmatprep.mubr.f32.mxu0 0.0
    %8402 = vmatmul.mubr.f32.gmra.mrb[0].mxu0 %v8208
    %v8403 = vpop.f32.mrb[0].mxu0
    %v8404 = vadd.f32 %v8153, %v8403
    %v8405 = vpop.f32.mrb[0].mxu0
    %8406 = vmatprep.mubr.f32.mxu0 0.0
    %8407 = vmatmul.mubr.f32.gmra.mrb[0].mxu0 %v8211
    %v8408 = vpop.f32.mrb[0].mxu0
    %v8409 = vadd.f32 %v8153, %v8408
    %v8410 = vpop.f32.mrb[0].mxu0
    %8411 = vmatprep.mubr.f32.mxu0 0.0
    %8412 = vmatmul.mubr.f32.gmra.mrb[0].mxu0 %v8214
    %v8413 = vpop.f32.mrb[0].mxu0
    %v8414 = vadd.f32 %v8153, %v8413
    %v8415 = vpop.f32.mrb[0].mxu0
    %8416 = vmatprep.mubr.f32.mxu0 0.0
    %8417 = vmatmul.mubr.f32.gmra.mrb[0].mxu0 %v8217
    %v8418 = vpop.f32.mrb[0].mxu0
    %v8419 = vadd.f32 %v8153, %v8418
    %v8420 = vpop.f32.mrb[0].mxu0
    %8421 = vmatprep.mubr.f32.mxu0 0.0
    %8422 = vmatmul.mubr.f32.gmra.mrb[0].mxu0 %v8220
    %v8423 = vpop.f32.mrb[0].mxu0
    %v8424 = vadd.f32 %v8153, %v8423
    %v8425 = vpop.f32.mrb[0].mxu0
    %8426 = vmatprep.mubr.f32.mxu0 0.0
    %8427 = vmatmul.mubr.f32.gmra.mrb[0].mxu0 %v8223
    %v8428 = vpop.f32.mrb[0].mxu0
    %v8429 = vadd.f32 %v8153, %v8428
    %v8430 = vpop.f32.mrb[0].mxu0
    %8431 = vmatprep.mubr.f32.mxu0 0.0
    %8432 = vmatmul.mubr.f32.gmra.mrb[0].mxu0 %v8226
    %v8433 = vpop.f32.mrb[0].mxu0
    %v8434 = vadd.f32 %v8153, %v8433
    %v8435 = vpop.f32.mrb[0].mxu0
    %8436 = vmatprep.mubr.f32.mxu0 0.0
    %8437 = vmatmul.mubr.f32.gmra.mrb[0].mxu0 %v8229
    %v8438 = vpop.f32.mrb[0].mxu0
    %v8439 = vadd.f32 %v8153, %v8438
    %v8440 = vpop.f32.mrb[0].mxu0
    %8441 = vmatprep.mubr.f32.mxu0 0.0
    %8442 = vmatmul.mubr.f32.gmra.mrb[0].mxu0 %v8232
    %v8443 = vpop.f32.mrb[0].mxu0
    %v8444 = vadd.f32 %v8153, %v8443
    %v8445 = vpop.f32.mrb[0].mxu0
    %8446 = vmatprep.mubr.f32.mxu0 0.0
    %8447 = vmatmul.mubr.f32.gmra.mrb[0].mxu0 %v8235
    %v8448 = vpop.f32.mrb[0].mxu0
    %v8449 = vadd.f32 %v8153, %v8448
    %v8450 = vpop.f32.mrb[0].mxu0
    %8451 = vmatprep.mubr.f32.mxu0 0.0
    %8452 = vmatmul.mubr.f32.gmra.mrb[0].mxu0 %v8238
    %v8453 = vpop.f32.mrb[0].mxu0
    %v8454 = vadd.f32 %v8153, %v8453
    %v8455 = vpop.f32.mrb[0].mxu0
    %8456 = vmatprep.mubr.f32.mxu0 0.0
    %8457 = vmatmul.mubr.f32.gmra.mrb[0].mxu0 %v8241
    %v8458 = vpop.f32.mrb[0].mxu0
    %v8459 = vadd.f32 %v8153, %v8458
    %v8460 = vpop.f32.mrb[0].mxu0
    %8461 = vmatprep.mubr.f32.mxu0 0.0
    %8462 = vmatmul.mubr.f32.gmra.mrb[0].mxu0 %v8244
    %v8463 = vpop.f32.mrb[0].mxu0
    %v8464 = vadd.f32 %v8153, %v8463
    %v8465 = vpop.f32.mrb[0].mxu0
    %8466 = vmatprep.mubr.f32.mxu0 0.0
    %8467 = vmatmul.mubr.f32.gmra.mrb[0].mxu0 %v8247
    %v8468 = vpop.f32.mrb[0].mxu0
    %v8469 = vadd.f32 %v8153, %v8468
    %v8470 = vpop.f32.mrb[0].mxu0
    %8471 = vmatprep.mubr.f32.mxu0 0.0
    %8472 = vmatmul.mubr.f32.gmra.mrb[0].mxu0 %v8250
    %v8473 = vpop.f32.mrb[0].mxu0
    %v8474 = vadd.f32 %v8153, %v8473
    %v8475 = vpop.f32.mrb[0].mxu0
    %8476 = vdwg.mxu0
    %v8477 = vlaneseq
    %v8478 = vshrl.u32 %v8477, 7
    %v8479 = vsub.s32 0, %v8478
    %v8480 = vrot.slane %v119, %v8479
    %8482 = vbcast.lane.b32.xlu0 %v8480, 256
    %v8483 = vpop.permute.xlu0 %8482
    %s8485 = sor.u32 256, 8
    %8486 = vbcast.lane.b32.xlu0 %v8480, %s8485
    %v8487 = vpop.permute.xlu0 %8486
    %v8488 = vlaneseq
    %v8489 = vshrl.u32 %v8488, 7
    %v8490 = vsub.s32 1, %v8489
    %v8491 = vrot.slane %v119, %v8490
    %8493 = vbcast.lane.b32.xlu0 %v8491, 256
    %v8494 = vpop.permute.xlu0 %8493
    %s8496 = sor.u32 256, 8
    %8497 = vbcast.lane.b32.xlu0 %v8491, %s8496
    %v8498 = vpop.permute.xlu0 %8497
    %v8499 = vlaneseq
    %v8500 = vshrl.u32 %v8499, 7
    %v8501 = vsub.s32 2, %v8500
    %v8502 = vrot.slane %v119, %v8501
    %8504 = vbcast.lane.b32.xlu0 %v8502, 256
    %v8505 = vpop.permute.xlu0 %8504
    %s8507 = sor.u32 256, 8
    %8508 = vbcast.lane.b32.xlu0 %v8502, %s8507
    %v8509 = vpop.permute.xlu0 %8508
    %v8510 = vlaneseq
    %v8511 = vshrl.u32 %v8510, 7
    %v8512 = vsub.s32 3, %v8511
    %v8513 = vrot.slane %v119, %v8512
    %8515 = vbcast.lane.b32.xlu0 %v8513, 256
    %v8516 = vpop.permute.xlu0 %8515
    %s8518 = sor.u32 256, 8
    %8519 = vbcast.lane.b32.xlu0 %v8513, %s8518
    %v8520 = vpop.permute.xlu0 %8519
    %v8521 = vlaneseq
    %v8522 = vshrl.u32 %v8521, 7
    %v8523 = vsub.s32 4, %v8522
    %v8524 = vrot.slane %v119, %v8523
    %8526 = vbcast.lane.b32.xlu0 %v8524, 256
    %v8527 = vpop.permute.xlu0 %8526
    %s8529 = sor.u32 256, 8
    %8530 = vbcast.lane.b32.xlu0 %v8524, %s8529
    %v8531 = vpop.permute.xlu0 %8530
    %v8532 = vlaneseq
    %v8533 = vshrl.u32 %v8532, 7
    %v8534 = vsub.s32 5, %v8533
    %v8535 = vrot.slane %v119, %v8534
    %8537 = vbcast.lane.b32.xlu0 %v8535, 256
    %v8538 = vpop.permute.xlu0 %8537
    %s8540 = sor.u32 256, 8
    %8541 = vbcast.lane.b32.xlu0 %v8535, %s8540
    %v8542 = vpop.permute.xlu0 %8541
    %v8543 = vlaneseq
    %v8544 = vshrl.u32 %v8543, 7
    %v8545 = vsub.s32 6, %v8544
    %v8546 = vrot.slane %v119, %v8545
    %8548 = vbcast.lane.b32.xlu0 %v8546, 256
    %v8549 = vpop.permute.xlu0 %8548
    %s8551 = sor.u32 256, 8
    %8552 = vbcast.lane.b32.xlu0 %v8546, %s8551
    %v8553 = vpop.permute.xlu0 %8552
    %v8554 = vlaneseq
    %v8555 = vshrl.u32 %v8554, 7
    %v8556 = vsub.s32 7, %v8555
    %v8557 = vrot.slane %v119, %v8556
    %8559 = vbcast.lane.b32.xlu0 %v8557, 256
    %v8560 = vpop.permute.xlu0 %8559
    %s8562 = sor.u32 256, 8
    %8563 = vbcast.lane.b32.xlu0 %v8557, %s8562
    %v8564 = vpop.permute.xlu0 %8563
    %v8565 = vlaneseq
    %v8566 = vshrl.u32 %v8565, 7
    %v8567 = vsub.s32 0, %v8566
    %v8568 = vrot.slane %v120, %v8567
    %8570 = vbcast.lane.b32.xlu0 %v8568, 256
    %v8571 = vpop.permute.xlu0 %8570
    %s8573 = sor.u32 256, 8
    %8574 = vbcast.lane.b32.xlu0 %v8568, %s8573
    %v8575 = vpop.permute.xlu0 %8574
    %v8576 = vlaneseq
    %v8577 = vshrl.u32 %v8576, 7
    %v8578 = vsub.s32 1, %v8577
    %v8579 = vrot.slane %v120, %v8578
    %8581 = vbcast.lane.b32.xlu0 %v8579, 256
    %v8582 = vpop.permute.xlu0 %8581
    %s8584 = sor.u32 256, 8
    %8585 = vbcast.lane.b32.xlu0 %v8579, %s8584
    %v8586 = vpop.permute.xlu0 %8585
    %v8587 = vlaneseq
    %v8588 = vshrl.u32 %v8587, 7
    %v8589 = vsub.s32 2, %v8588
    %v8590 = vrot.slane %v120, %v8589
    %8592 = vbcast.lane.b32.xlu0 %v8590, 256
    %v8593 = vpop.permute.xlu0 %8592
    %s8595 = sor.u32 256, 8
    %8596 = vbcast.lane.b32.xlu0 %v8590, %s8595
    %v8597 = vpop.permute.xlu0 %8596
    %v8598 = vlaneseq
    %v8599 = vshrl.u32 %v8598, 7
    %v8600 = vsub.s32 3, %v8599
    %v8601 = vrot.slane %v120, %v8600
    %8603 = vbcast.lane.b32.xlu0 %v8601, 256
    %v8604 = vpop.permute.xlu0 %8603
    %s8606 = sor.u32 256, 8
    %8607 = vbcast.lane.b32.xlu0 %v8601, %s8606
    %v8608 = vpop.permute.xlu0 %8607
    %v8609 = vlaneseq
    %v8610 = vshrl.u32 %v8609, 7
    %v8611 = vsub.s32 4, %v8610
    %v8612 = vrot.slane %v120, %v8611
    %8614 = vbcast.lane.b32.xlu0 %v8612, 256
    %v8615 = vpop.permute.xlu0 %8614
    %s8617 = sor.u32 256, 8
    %8618 = vbcast.lane.b32.xlu0 %v8612, %s8617
    %v8619 = vpop.permute.xlu0 %8618
    %v8620 = vlaneseq
    %v8621 = vshrl.u32 %v8620, 7
    %v8622 = vsub.s32 5, %v8621
    %v8623 = vrot.slane %v120, %v8622
    %8625 = vbcast.lane.b32.xlu0 %v8623, 256
    %v8626 = vpop.permute.xlu0 %8625
    %s8628 = sor.u32 256, 8
    %8629 = vbcast.lane.b32.xlu0 %v8623, %s8628
    %v8630 = vpop.permute.xlu0 %8629
    %v8631 = vlaneseq
    %v8632 = vshrl.u32 %v8631, 7
    %v8633 = vsub.s32 6, %v8632
    %v8634 = vrot.slane %v120, %v8633
    %8636 = vbcast.lane.b32.xlu0 %v8634, 256
    %v8637 = vpop.permute.xlu0 %8636
    %s8639 = sor.u32 256, 8
    %8640 = vbcast.lane.b32.xlu0 %v8634, %s8639
    %v8641 = vpop.permute.xlu0 %8640
    %v8642 = vlaneseq
    %v8643 = vshrl.u32 %v8642, 7
    %v8644 = vsub.s32 7, %v8643
    %v8645 = vrot.slane %v120, %v8644
    %8647 = vbcast.lane.b32.xlu0 %v8645, 256
    %v8648 = vpop.permute.xlu0 %8647
    %s8650 = sor.u32 256, 8
    %8651 = vbcast.lane.b32.xlu0 %v8645, %s8650
    %v8652 = vpop.permute.xlu0 %8651
    %v8653 = vmul.f32 %v8319, %v8483
    %v8654 = vmul.f32 %v8324, %v8487
    %v8655 = vmul.f32 %v8329, %v8494
    %v8656 = vmul.f32 %v8334, %v8498
    %v8657 = vmul.f32 %v8339, %v8505
    %v8658 = vmul.f32 %v8344, %v8509
    %v8659 = vmul.f32 %v8349, %v8516
    %v8660 = vmul.f32 %v8354, %v8520
    %v8661 = vmul.f32 %v8359, %v8527
    %v8662 = vmul.f32 %v8364, %v8531
    %v8663 = vmul.f32 %v8369, %v8538
    %v8664 = vmul.f32 %v8374, %v8542
    %v8665 = vmul.f32 %v8379, %v8549
    %v8666 = vmul.f32 %v8384, %v8553
    %v8667 = vmul.f32 %v8389, %v8560
    %v8668 = vmul.f32 %v8394, %v8564
    %v8669 = vmul.f32 %v8399, %v8571
    %v8670 = vmul.f32 %v8404, %v8575
    %v8671 = vmul.f32 %v8409, %v8582
    %v8672 = vmul.f32 %v8414, %v8586
    %v8673 = vmul.f32 %v8419, %v8593
    %v8674 = vmul.f32 %v8424, %v8597
    %v8675 = vmul.f32 %v8429, %v8604
    %v8676 = vmul.f32 %v8434, %v8608
    %v8677 = vmul.f32 %v8439, %v8615
    %v8678 = vmul.f32 %v8444, %v8619
    %v8679 = vmul.f32 %v8449, %v8626
    %v8680 = vmul.f32 %v8454, %v8630
    %v8681 = vmul.f32 %v8459, %v8637
    %v8682 = vmul.f32 %v8464, %v8641
    %v8683 = vmul.f32 %v8469, %v8648
    %v8684 = vmul.f32 %v8474, %v8652
    %v8685 = vld [vmem:[%s3] sm:$0xff]
    %v8686 = vld [vmem:[%s3 + $0x8] sm:$0xff]
    %v8687 = vld [vmem:[%s3 + $0x10] sm:$0xff]
    %v8688 = vld [vmem:[%s3 + $0x18] sm:$0xff]
    %v8689 = vld [vmem:[%s3 + $0x20] sm:$0xff]
    %v8690 = vld [vmem:[%s3 + $0x28] sm:$0xff]
    %v8691 = vld [vmem:[%s3 + $0x30] sm:$0xff]
    %v8692 = vld [vmem:[%s3 + $0x38] sm:$0xff]
    %v8693 = vld [vmem:[%s3 + $0x40] sm:$0xff]
    %v8694 = vld [vmem:[%s3 + $0x48] sm:$0xff]
    %v8695 = vld [vmem:[%s3 + $0x50] sm:$0xff]
    %v8696 = vld [vmem:[%s3 + $0x58] sm:$0xff]
    %v8697 = vld [vmem:[%s3 + $0x60] sm:$0xff]
    %v8698 = vld [vmem:[%s3 + $0x68] sm:$0xff]
    %v8699 = vld [vmem:[%s3 + $0x70] sm:$0xff]
    %v8700 = vld [vmem:[%s3 + $0x78] sm:$0xff]
    %v8701 = vld [vmem:[%s3 + $0x80] sm:$0xff]
    %v8702 = vld [vmem:[%s3 + $0x88] sm:$0xff]
    %v8703 = vld [vmem:[%s3 + $0x90] sm:$0xff]
    %v8704 = vld [vmem:[%s3 + $0x98] sm:$0xff]
    %v8705 = vld [vmem:[%s3 + $0xa0] sm:$0xff]
    %v8706 = vld [vmem:[%s3 + $0xa8] sm:$0xff]
    %v8707 = vld [vmem:[%s3 + $0xb0] sm:$0xff]
    %v8708 = vld [vmem:[%s3 + $0xb8] sm:$0xff]
    %v8709 = vld [vmem:[%s3 + $0xc0] sm:$0xff]
    %v8710 = vld [vmem:[%s3 + $0xc8] sm:$0xff]
    %v8711 = vld [vmem:[%s3 + $0xd0] sm:$0xff]
    %v8712 = vld [vmem:[%s3 + $0xd8] sm:$0xff]
    %v8713 = vld [vmem:[%s3 + $0xe0] sm:$0xff]
    %v8714 = vld [vmem:[%s3 + $0xe8] sm:$0xff]
    %v8715 = vld [vmem:[%s3 + $0xf0] sm:$0xff]
    %v8716 = vld [vmem:[%s3 + $0xf8] sm:$0xff]
    %v8717 = vld [vmem:[%s3 + $0x100] sm:$0xff]
    %v8718 = vld [vmem:[%s3 + $0x108] sm:$0xff]
    %v8719 = vld [vmem:[%s3 + $0x110] sm:$0xff]
    %v8720 = vld [vmem:[%s3 + $0x118] sm:$0xff]
    %v8721 = vld [vmem:[%s3 + $0x120] sm:$0xff]
    %v8722 = vld [vmem:[%s3 + $0x128] sm:$0xff]
    %v8723 = vld [vmem:[%s3 + $0x130] sm:$0xff]
    %v8724 = vld [vmem:[%s3 + $0x138] sm:$0xff]
    %v8725 = vld [vmem:[%s3 + $0x140] sm:$0xff]
    %v8726 = vld [vmem:[%s3 + $0x148] sm:$0xff]
    %v8727 = vld [vmem:[%s3 + $0x150] sm:$0xff]
    %v8728 = vld [vmem:[%s3 + $0x158] sm:$0xff]
    %v8729 = vld [vmem:[%s3 + $0x160] sm:$0xff]
    %v8730 = vld [vmem:[%s3 + $0x168] sm:$0xff]
    %v8731 = vld [vmem:[%s3 + $0x170] sm:$0xff]
    %v8732 = vld [vmem:[%s3 + $0x178] sm:$0xff]
    %v8733 = vld [vmem:[%s3 + $0x180] sm:$0xff]
    %v8734 = vld [vmem:[%s3 + $0x188] sm:$0xff]
    %v8735 = vld [vmem:[%s3 + $0x190] sm:$0xff]
    %v8736 = vld [vmem:[%s3 + $0x198] sm:$0xff]
    %v8737 = vld [vmem:[%s3 + $0x1a0] sm:$0xff]
    %v8738 = vld [vmem:[%s3 + $0x1a8] sm:$0xff]
    %v8739 = vld [vmem:[%s3 + $0x1b0] sm:$0xff]
    %v8740 = vld [vmem:[%s3 + $0x1b8] sm:$0xff]
    %v8741 = vld [vmem:[%s3 + $0x1c0] sm:$0xff]
    %v8742 = vld [vmem:[%s3 + $0x1c8] sm:$0xff]
    %v8743 = vld [vmem:[%s3 + $0x1d0] sm:$0xff]
    %v8744 = vld [vmem:[%s3 + $0x1d8] sm:$0xff]
    %v8745 = vld [vmem:[%s3 + $0x1e0] sm:$0xff]
    %v8746 = vld [vmem:[%s3 + $0x1e8] sm:$0xff]
    %v8747 = vld [vmem:[%s3 + $0x1f0] sm:$0xff]
    %v8748 = vld [vmem:[%s3 + $0x1f8] sm:$0xff]
    %v8749 = vmul.f32 %v8685, %v8653
    %v8750 = vmul.f32 %v8686, %v8654
    %v8751 = vmul.f32 %v8687, %v8655
    %v8752 = vmul.f32 %v8688, %v8656
    %v8753 = vmul.f32 %v8689, %v8657
    %v8754 = vmul.f32 %v8690, %v8658
    %v8755 = vmul.f32 %v8691, %v8659
    %v8756 = vmul.f32 %v8692, %v8660
    %v8757 = vmul.f32 %v8693, %v8661
    %v8758 = vmul.f32 %v8694, %v8662
    %v8759 = vmul.f32 %v8695, %v8663
    %v8760 = vmul.f32 %v8696, %v8664
    %v8761 = vmul.f32 %v8697, %v8665
    %v8762 = vmul.f32 %v8698, %v8666
    %v8763 = vmul.f32 %v8699, %v8667
    %v8764 = vmul.f32 %v8700, %v8668
    %v8765 = vmul.f32 %v8701, %v8669
    %v8766 = vmul.f32 %v8702, %v8670
    %v8767 = vmul.f32 %v8703, %v8671
    %v8768 = vmul.f32 %v8704, %v8672
    %v8769 = vmul.f32 %v8705, %v8673
    %v8770 = vmul.f32 %v8706, %v8674
    %v8771 = vmul.f32 %v8707, %v8675
    %v8772 = vmul.f32 %v8708, %v8676
    %v8773 = vmul.f32 %v8709, %v8677
    %v8774 = vmul.f32 %v8710, %v8678
    %v8775 = vmul.f32 %v8711, %v8679
    %v8776 = vmul.f32 %v8712, %v8680
    %v8777 = vmul.f32 %v8713, %v8681
    %v8778 = vmul.f32 %v8714, %v8682
    %v8779 = vmul.f32 %v8715, %v8683
    %v8780 = vmul.f32 %v8716, %v8684
    %v8781 = vmul.f32 %v8717, %v8653
    %v8782 = vmul.f32 %v8718, %v8654
    %v8783 = vmul.f32 %v8719, %v8655
    %v8784 = vmul.f32 %v8720, %v8656
    %v8785 = vmul.f32 %v8721, %v8657
    %v8786 = vmul.f32 %v8722, %v8658
    %v8787 = vmul.f32 %v8723, %v8659
    %v8788 = vmul.f32 %v8724, %v8660
    %v8789 = vmul.f32 %v8725, %v8661
    %v8790 = vmul.f32 %v8726, %v8662
    %v8791 = vmul.f32 %v8727, %v8663
    %v8792 = vmul.f32 %v8728, %v8664
    %v8793 = vmul.f32 %v8729, %v8665
    %v8794 = vmul.f32 %v8730, %v8666
    %v8795 = vmul.f32 %v8731, %v8667
    %v8796 = vmul.f32 %v8732, %v8668
    %v8797 = vmul.f32 %v8733, %v8669
    %v8798 = vmul.f32 %v8734, %v8670
    %v8799 = vmul.f32 %v8735, %v8671
    %v8800 = vmul.f32 %v8736, %v8672
    %v8801 = vmul.f32 %v8737, %v8673
    %v8802 = vmul.f32 %v8738, %v8674
    %v8803 = vmul.f32 %v8739, %v8675
    %v8804 = vmul.f32 %v8740, %v8676
    %v8805 = vmul.f32 %v8741, %v8677
    %v8806 = vmul.f32 %v8742, %v8678
    %v8807 = vmul.f32 %v8743, %v8679
    %v8808 = vmul.f32 %v8744, %v8680
    %v8809 = vmul.f32 %v8745, %v8681
    %v8810 = vmul.f32 %v8746, %v8682
    %v8811 = vmul.f32 %v8747, %v8683
    %v8812 = vmul.f32 %v8748, %v8684
    %v8813 = vadd.f32 %v8749, %v8750
    %v8814 = vrot.slane %v8813, 4
    %v8815 = vadd.f32 %v8813, %v8814
    %v8816 = vrot.slane %v8815, 2
    %v8817 = vadd.f32 %v8815, %v8816
    %v8818 = vrot.slane %v8817, 1
    %v8819 = vadd.f32 %v8817, %v8818
    %v8820 = vadd.f32 %v8751, %v8752
    %v8821 = vrot.slane %v8820, 4
    %v8822 = vadd.f32 %v8820, %v8821
    %v8823 = vrot.slane %v8822, 2
    %v8824 = vadd.f32 %v8822, %v8823
    %v8825 = vrot.slane %v8824, 1
    %v8826 = vadd.f32 %v8824, %v8825
    %v8827 = vadd.f32 %v8753, %v8754
    %v8828 = vrot.slane %v8827, 4
    %v8829 = vadd.f32 %v8827, %v8828
    %v8830 = vrot.slane %v8829, 2
    %v8831 = vadd.f32 %v8829, %v8830
    %v8832 = vrot.slane %v8831, 1
    %v8833 = vadd.f32 %v8831, %v8832
    %v8834 = vadd.f32 %v8755, %v8756
    %v8835 = vrot.slane %v8834, 4
    %v8836 = vadd.f32 %v8834, %v8835
    %v8837 = vrot.slane %v8836, 2
    %v8838 = vadd.f32 %v8836, %v8837
    %v8839 = vrot.slane %v8838, 1
    %v8840 = vadd.f32 %v8838, %v8839
    %v8841 = vadd.f32 %v8757, %v8758
    %v8842 = vrot.slane %v8841, 4
    %v8843 = vadd.f32 %v8841, %v8842
    %v8844 = vrot.slane %v8843, 2
    %v8845 = vadd.f32 %v8843, %v8844
    %v8846 = vrot.slane %v8845, 1
    %v8847 = vadd.f32 %v8845, %v8846
    %v8848 = vadd.f32 %v8759, %v8760
    %v8849 = vrot.slane %v8848, 4
    %v8850 = vadd.f32 %v8848, %v8849
    %v8851 = vrot.slane %v8850, 2
    %v8852 = vadd.f32 %v8850, %v8851
    %v8853 = vrot.slane %v8852, 1
    %v8854 = vadd.f32 %v8852, %v8853
    %v8855 = vadd.f32 %v8761, %v8762
    %v8856 = vrot.slane %v8855, 4
    %v8857 = vadd.f32 %v8855, %v8856
    %v8858 = vrot.slane %v8857, 2
    %v8859 = vadd.f32 %v8857, %v8858
    %v8860 = vrot.slane %v8859, 1
    %v8861 = vadd.f32 %v8859, %v8860
    %v8862 = vadd.f32 %v8763, %v8764
    %v8863 = vrot.slane %v8862, 4
    %v8864 = vadd.f32 %v8862, %v8863
    %v8865 = vrot.slane %v8864, 2
    %v8866 = vadd.f32 %v8864, %v8865
    %v8867 = vrot.slane %v8866, 1
    %v8868 = vadd.f32 %v8866, %v8867
    %v8869 = vadd.f32 %v8765, %v8766
    %v8870 = vrot.slane %v8869, 4
    %v8871 = vadd.f32 %v8869, %v8870
    %v8872 = vrot.slane %v8871, 2
    %v8873 = vadd.f32 %v8871, %v8872
    %v8874 = vrot.slane %v8873, 1
    %v8875 = vadd.f32 %v8873, %v8874
    %v8876 = vadd.f32 %v8767, %v8768
    %v8877 = vrot.slane %v8876, 4
    %v8878 = vadd.f32 %v8876, %v8877
    %v8879 = vrot.slane %v8878, 2
    %v8880 = vadd.f32 %v8878, %v8879
    %v8881 = vrot.slane %v8880, 1
    %v8882 = vadd.f32 %v8880, %v8881
    %v8883 = vadd.f32 %v8769, %v8770
    %v8884 = vrot.slane %v8883, 4
    %v8885 = vadd.f32 %v8883, %v8884
    %v8886 = vrot.slane %v8885, 2
    %v8887 = vadd.f32 %v8885, %v8886
    %v8888 = vrot.slane %v8887, 1
    %v8889 = vadd.f32 %v8887, %v8888
    %v8890 = vadd.f32 %v8771, %v8772
    %v8891 = vrot.slane %v8890, 4
    %v8892 = vadd.f32 %v8890, %v8891
    %v8893 = vrot.slane %v8892, 2
    %v8894 = vadd.f32 %v8892, %v8893
    %v8895 = vrot.slane %v8894, 1
    %v8896 = vadd.f32 %v8894, %v8895
    %v8897 = vadd.f32 %v8773, %v8774
    %v8898 = vrot.slane %v8897, 4
    %v8899 = vadd.f32 %v8897, %v8898
    %v8900 = vrot.slane %v8899, 2
    %v8901 = vadd.f32 %v8899, %v8900
    %v8902 = vrot.slane %v8901, 1
    %v8903 = vadd.f32 %v8901, %v8902
    %v8904 = vadd.f32 %v8775, %v8776
    %v8905 = vrot.slane %v8904, 4
    %v8906 = vadd.f32 %v8904, %v8905
    %v8907 = vrot.slane %v8906, 2
    %v8908 = vadd.f32 %v8906, %v8907
    %v8909 = vrot.slane %v8908, 1
    %v8910 = vadd.f32 %v8908, %v8909
    %v8911 = vadd.f32 %v8777, %v8778
    %v8912 = vrot.slane %v8911, 4
    %v8913 = vadd.f32 %v8911, %v8912
    %v8914 = vrot.slane %v8913, 2
    %v8915 = vadd.f32 %v8913, %v8914
    %v8916 = vrot.slane %v8915, 1
    %v8917 = vadd.f32 %v8915, %v8916
    %v8918 = vadd.f32 %v8779, %v8780
    %v8919 = vrot.slane %v8918, 4
    %v8920 = vadd.f32 %v8918, %v8919
    %v8921 = vrot.slane %v8920, 2
    %v8922 = vadd.f32 %v8920, %v8921
    %v8923 = vrot.slane %v8922, 1
    %v8924 = vadd.f32 %v8922, %v8923
    %v8925 = vadd.f32 %v8781, %v8782
    %v8926 = vrot.slane %v8925, 4
    %v8927 = vadd.f32 %v8925, %v8926
    %v8928 = vrot.slane %v8927, 2
    %v8929 = vadd.f32 %v8927, %v8928
    %v8930 = vrot.slane %v8929, 1
    %v8931 = vadd.f32 %v8929, %v8930
    %v8932 = vadd.f32 %v8783, %v8784
    %v8933 = vrot.slane %v8932, 4
    %v8934 = vadd.f32 %v8932, %v8933
    %v8935 = vrot.slane %v8934, 2
    %v8936 = vadd.f32 %v8934, %v8935
    %v8937 = vrot.slane %v8936, 1
    %v8938 = vadd.f32 %v8936, %v8937
    %v8939 = vadd.f32 %v8785, %v8786
    %v8940 = vrot.slane %v8939, 4
    %v8941 = vadd.f32 %v8939, %v8940
    %v8942 = vrot.slane %v8941, 2
    %v8943 = vadd.f32 %v8941, %v8942
    %v8944 = vrot.slane %v8943, 1
    %v8945 = vadd.f32 %v8943, %v8944
    %v8946 = vadd.f32 %v8787, %v8788
    %v8947 = vrot.slane %v8946, 4
    %v8948 = vadd.f32 %v8946, %v8947
    %v8949 = vrot.slane %v8948, 2
    %v8950 = vadd.f32 %v8948, %v8949
    %v8951 = vrot.slane %v8950, 1
    %v8952 = vadd.f32 %v8950, %v8951
    %v8953 = vadd.f32 %v8789, %v8790
    %v8954 = vrot.slane %v8953, 4
    %v8955 = vadd.f32 %v8953, %v8954
    %v8956 = vrot.slane %v8955, 2
    %v8957 = vadd.f32 %v8955, %v8956
    %v8958 = vrot.slane %v8957, 1
    %v8959 = vadd.f32 %v8957, %v8958
    %v8960 = vadd.f32 %v8791, %v8792
    %v8961 = vrot.slane %v8960, 4
    %v8962 = vadd.f32 %v8960, %v8961
    %v8963 = vrot.slane %v8962, 2
    %v8964 = vadd.f32 %v8962, %v8963
    %v8965 = vrot.slane %v8964, 1
    %v8966 = vadd.f32 %v8964, %v8965
    %v8967 = vadd.f32 %v8793, %v8794
    %v8968 = vrot.slane %v8967, 4
    %v8969 = vadd.f32 %v8967, %v8968
    %v8970 = vrot.slane %v8969, 2
    %v8971 = vadd.f32 %v8969, %v8970
    %v8972 = vrot.slane %v8971, 1
    %v8973 = vadd.f32 %v8971, %v8972
    %v8974 = vadd.f32 %v8795, %v8796
    %v8975 = vrot.slane %v8974, 4
    %v8976 = vadd.f32 %v8974, %v8975
    %v8977 = vrot.slane %v8976, 2
    %v8978 = vadd.f32 %v8976, %v8977
    %v8979 = vrot.slane %v8978, 1
    %v8980 = vadd.f32 %v8978, %v8979
    %v8981 = vadd.f32 %v8797, %v8798
    %v8982 = vrot.slane %v8981, 4
    %v8983 = vadd.f32 %v8981, %v8982
    %v8984 = vrot.slane %v8983, 2
    %v8985 = vadd.f32 %v8983, %v8984
    %v8986 = vrot.slane %v8985, 1
    %v8987 = vadd.f32 %v8985, %v8986
    %v8988 = vadd.f32 %v8799, %v8800
    %v8989 = vrot.slane %v8988, 4
    %v8990 = vadd.f32 %v8988, %v8989
    %v8991 = vrot.slane %v8990, 2
    %v8992 = vadd.f32 %v8990, %v8991
    %v8993 = vrot.slane %v8992, 1
    %v8994 = vadd.f32 %v8992, %v8993
    %v8995 = vadd.f32 %v8801, %v8802
    %v8996 = vrot.slane %v8995, 4
    %v8997 = vadd.f32 %v8995, %v8996
    %v8998 = vrot.slane %v8997, 2
    %v8999 = vadd.f32 %v8997, %v8998
    %v9000 = vrot.slane %v8999, 1
    %v9001 = vadd.f32 %v8999, %v9000
    %v9002 = vadd.f32 %v8803, %v8804
    %v9003 = vrot.slane %v9002, 4
    %v9004 = vadd.f32 %v9002, %v9003
    %v9005 = vrot.slane %v9004, 2
    %v9006 = vadd.f32 %v9004, %v9005
    %v9007 = vrot.slane %v9006, 1
    %v9008 = vadd.f32 %v9006, %v9007
    %v9009 = vadd.f32 %v8805, %v8806
    %v9010 = vrot.slane %v9009, 4
    %v9011 = vadd.f32 %v9009, %v9010
    %v9012 = vrot.slane %v9011, 2
    %v9013 = vadd.f32 %v9011, %v9012
    %v9014 = vrot.slane %v9013, 1
    %v9015 = vadd.f32 %v9013, %v9014
    %v9016 = vadd.f32 %v8807, %v8808
    %v9017 = vrot.slane %v9016, 4
    %v9018 = vadd.f32 %v9016, %v9017
    %v9019 = vrot.slane %v9018, 2
    %v9020 = vadd.f32 %v9018, %v9019
    %v9021 = vrot.slane %v9020, 1
    %v9022 = vadd.f32 %v9020, %v9021
    %v9023 = vadd.f32 %v8809, %v8810
    %v9024 = vrot.slane %v9023, 4
    %v9025 = vadd.f32 %v9023, %v9024
    %v9026 = vrot.slane %v9025, 2
    %v9027 = vadd.f32 %v9025, %v9026
    %v9028 = vrot.slane %v9027, 1
    %v9029 = vadd.f32 %v9027, %v9028
    %v9030 = vadd.f32 %v8811, %v8812
    %v9031 = vrot.slane %v9030, 4
    %v9032 = vadd.f32 %v9030, %v9031
    %v9033 = vrot.slane %v9032, 2
    %v9034 = vadd.f32 %v9032, %v9033
    %v9035 = vrot.slane %v9034, 1
    %v9036 = vadd.f32 %v9034, %v9035
    %v9037 = vld [vmem:[%s12] sm:$0xff]
    %v9038 = vld [vmem:[%s12 + $0x8] sm:$0xff]
    %v9039 = vld [vmem:[%s12 + $0x10] sm:$0xff]
    %v9040 = vld [vmem:[%s12 + $0x18] sm:$0xff]
    %v9041 = vld [vmem:[%s12 + $0x20] sm:$0xff]
    %v9042 = vld [vmem:[%s12 + $0x28] sm:$0xff]
    %v9043 = vld [vmem:[%s12 + $0x30] sm:$0xff]
    %v9044 = vld [vmem:[%s12 + $0x38] sm:$0xff]
    %v9045 = vld [vmem:[%s12 + $0x40] sm:$0xff]
    %v9046 = vld [vmem:[%s12 + $0x48] sm:$0xff]
    %v9047 = vld [vmem:[%s12 + $0x50] sm:$0xff]
    %v9048 = vld [vmem:[%s12 + $0x58] sm:$0xff]
    %v9049 = vld [vmem:[%s12 + $0x60] sm:$0xff]
    %v9050 = vld [vmem:[%s12 + $0x68] sm:$0xff]
    %v9051 = vld [vmem:[%s12 + $0x70] sm:$0xff]
    %v9052 = vld [vmem:[%s12 + $0x78] sm:$0xff]
    %v9053 = vld [vmem:[%s13] sm:$0x1]
    %v9055 = vlaneseq
    %v9056 = vshrl.u32 %v9055, 7
    %v9057 = vsub.s32 0, %v9056
    %v9058 = vrot.slane %v9053, %v9057
    %vm9092 = vcmask 1041409
    %v9093 = vsel %vm9092, %v8826, %v8819
    %vm9094 = vcmask 1042434
    %v9095 = vsel %vm9094, %v8833, %v9093
    %vm9096 = vcmask 1043459
    %v9097 = vsel %vm9096, %v8840, %v9095
    %vm9098 = vcmask 1044484
    %v9099 = vsel %vm9098, %v8847, %v9097
    %vm9100 = vcmask 1045509
    %v9101 = vsel %vm9100, %v8854, %v9099
    %vm9102 = vcmask 1046534
    %v9103 = vsel %vm9102, %v8861, %v9101
    %vm9104 = vcmask 1047559
    %v9105 = vsel %vm9104, %v8868, %v9103
    %v9106 = vsel %vm9092, %v8882, %v8875
    %v9107 = vsel %vm9094, %v8889, %v9106
    %v9108 = vsel %vm9096, %v8896, %v9107
    %v9109 = vsel %vm9098, %v8903, %v9108
    %v9110 = vsel %vm9100, %v8910, %v9109
    %v9111 = vsel %vm9102, %v8917, %v9110
    %v9112 = vsel %vm9104, %v8924, %v9111
    %v9113 = vsel %vm9092, %v8938, %v8931
    %v9114 = vsel %vm9094, %v8945, %v9113
    %v9115 = vsel %vm9096, %v8952, %v9114
    %v9116 = vsel %vm9098, %v8959, %v9115
    %v9117 = vsel %vm9100, %v8966, %v9116
    %v9118 = vsel %vm9102, %v8973, %v9117
    %v9119 = vsel %vm9104, %v8980, %v9118
    %v9120 = vsel %vm9092, %v8994, %v8987
    %v9121 = vsel %vm9094, %v9001, %v9120
    %v9122 = vsel %vm9096, %v9008, %v9121
    %v9123 = vsel %vm9098, %v9015, %v9122
    %v9124 = vsel %vm9100, %v9022, %v9123
    %v9125 = vsel %vm9102, %v9029, %v9124
    %v9126 = vsel %vm9104, %v9036, %v9125
    %9131 = vmatprep.subr.mxu0 0.0
    %9132 = vmatpush1.msra.mxu0 %v9037
    %9133 = vmatprep.subr.mxu0 0.0
    %9134 = vmatpush1.msra.mxu0 %v9038
    %9135 = vmatprep.subr.mxu0 0.0
    %9136 = vmatpush1.msra.mxu0 %v9039
    %9137 = vmatprep.subr.mxu0 0.0
    %9138 = vmatpush1.msra.mxu0 %v9040
    %9139 = vmatprep.subr.mxu0 0.0
    %9140 = vmatpush1.msra.mxu0 %v9041
    %9141 = vmatprep.subr.mxu0 0.0
    %9142 = vmatpush1.msra.mxu0 %v9042
    %9143 = vmatprep.subr.mxu0 0.0
    %9144 = vmatpush1.msra.mxu0 %v9043
    %9145 = vmatprep.subr.mxu0 0.0
    %9146 = vmatpush1.msra.mxu0 %v9044
    %9147 = vmatprep.subr.mxu0 0.0
    %9148 = vmatpush1.msra.mxu0 %v9045
    %9149 = vmatprep.subr.mxu0 0.0
    %9150 = vmatpush1.msra.mxu0 %v9046
    %9151 = vmatprep.subr.mxu0 0.0
    %9152 = vmatpush1.msra.mxu0 %v9047
    %9153 = vmatprep.subr.mxu0 0.0
    %9154 = vmatpush1.msra.mxu0 %v9048
    %9155 = vmatprep.subr.mxu0 0.0
    %9156 = vmatpush1.msra.mxu0 %v9049
    %9157 = vmatprep.subr.mxu0 0.0
    %9158 = vmatpush1.msra.mxu0 %v9050
    %9159 = vmatprep.subr.mxu0 0.0
    %9160 = vmatpush1.msra.mxu0 %v9051
    %9161 = vmatprep.subr.mxu0 0.0
    %9162 = vmatpush1.msra.mxu0 %v9052
    %9163 = vmatprep.subr.mxu0 0.0
    %9164 = vmatpush1.msra.mxu0 0.0
    %9165 = vmatprep.subr.mxu0 0.0
    %9166 = vmatpush1.msra.mxu0 0.0
    %9167 = vmatprep.subr.mxu0 0.0
    %9168 = vmatpush1.msra.mxu0 0.0
    %9169 = vmatprep.subr.mxu0 0.0
    %9170 = vmatpush1.msra.mxu0 0.0
    %9171 = vmatprep.subr.mxu0 0.0
    %9172 = vmatpush1.msra.mxu0 0.0
    %9173 = vmatprep.subr.mxu0 0.0
    %9174 = vmatpush1.msra.mxu0 0.0
    %9175 = vmatprep.subr.mxu0 0.0
    %9176 = vmatpush1.msra.mxu0 0.0
    %9177 = vmatprep.subr.mxu0 0.0
    %9178 = vmatpush1.msra.mxu0 0.0
    %9179 = vmatprep.subr.mxu0 0.0
    %9180 = vmatpush1.msra.mxu0 0.0
    %9181 = vmatprep.subr.mxu0 0.0
    %9182 = vmatpush1.msra.mxu0 0.0
    %9183 = vmatprep.subr.mxu0 0.0
    %9184 = vmatpush1.msra.mxu0 0.0
    %9185 = vmatprep.subr.mxu0 0.0
    %9186 = vmatpush1.msra.mxu0 0.0
    %9187 = vmatprep.subr.mxu0 0.0
    %9188 = vmatpush1.msra.mxu0 0.0
    %9189 = vmatprep.subr.mxu0 0.0
    %9190 = vmatpush1.msra.mxu0 0.0
    %9191 = vmatprep.subr.mxu0 0.0
    %9192 = vmatpush1.msra.mxu0 0.0
    %9193 = vmatprep.subr.mxu0 0.0
    %9194 = vmatpush1.msra.mxu0 0.0
    %9195 = vmatprep.mubr.f32.mxu0 0.0
    %9196 = vmatmul.mubr.f32.gmra.mrb[0].mxu0 %v9105
    %v9197 = vpop.f32.mrb[0].mxu0
    %v9198 = vadd.f32 %v9058, %v9197
    %v9199 = vpop.f32.mrb[0].mxu0
    %9200 = vmatprep.mubr.f32.mxu0 0.0
    %9201 = vmatmul.mubr.f32.gmra.mrb[0].mxu0 %v9112
    %v9202 = vpop.f32.mrb[0].mxu0
    %v9203 = vadd.f32 %v9058, %v9202
    %v9204 = vpop.f32.mrb[0].mxu0
    %9205 = vmatprep.mubr.f32.mxu0 0.0
    %9206 = vmatmul.mubr.f32.gmra.mrb[0].mxu0 %v9119
    %v9207 = vpop.f32.mrb[0].mxu0
    %v9208 = vadd.f32 %v9058, %v9207
    %v9209 = vpop.f32.mrb[0].mxu0
    %9210 = vmatprep.mubr.f32.mxu0 0.0
    %9211 = vmatmul.mubr.f32.gmra.mrb[0].mxu0 %v9126
    %v9212 = vpop.f32.mrb[0].mxu0
    %v9213 = vadd.f32 %v9058, %v9212
    %v9214 = vpop.f32.mrb[0].mxu0
    %9215 = vdwg.mxu0
    %v9216 = vmul.f32 %v9198, 0.5
    %v9217 = vmul.f32 %v9203, 0.5
    %v9218 = vmul.f32 %v9208, 0.5
    %v9219 = vmul.f32 %v9213, 0.5
    %v9220 = vmul.f32 %v9198, 0.70710677
    %v9221 = vmul.f32 %v9203, 0.70710677
    %v9222 = vmul.f32 %v9208, 0.70710677
    %v9223 = vmul.f32 %v9213, 0.70710677
    %v9224 = verf.f32.pop %v9220
    %v9225 = verf.f32.pop %v9221
    %v9226 = verf.f32.pop %v9222
    %v9227 = verf.f32.pop %v9223
    %v9228 = vadd.f32 %v9224, 1.0
    %v9229 = vadd.f32 %v9225, 1.0
    %v9230 = vadd.f32 %v9226, 1.0
    %v9231 = vadd.f32 %v9227, 1.0
    %v9232 = vmul.f32 %v9216, %v9228
    %v9233 = vmul.f32 %v9217, %v9229
    %v9234 = vmul.f32 %v9218, %v9230
    %v9235 = vmul.f32 %v9219, %v9231
    %v9236 = vld [vmem:[%s14] sm:$0xff]
    %v9237 = vld [vmem:[%s14 + $0x8] sm:$0xff]
    %v9238 = vld [vmem:[%s15] sm:$0x1]
    %v9240 = vlaneseq
    %v9241 = vshrl.u32 %v9240, 7
    %v9242 = vsub.s32 0, %v9241
    %v9243 = vrot.slane %v9238, %v9242
    %v9246 = vsel %vm68, %v9232, 0
    %v9249 = vsel %vm68, %v9233, 0
    %v9252 = vsel %vm68, %v9234, 0
    %v9255 = vsel %vm68, %v9235, 0
    %9257 = vmatprep.subr.mxu0 0.0
    %9258 = vmatpush1.msra.mxu0 %v9236
    %9259 = vmatprep.subr.mxu0 0.0
    %9260 = vmatpush1.msra.mxu0 %v9237
    %9261 = vmatprep.subr.mxu0 0.0
    %9262 = vmatpush1.msra.mxu0 0.0
    %9263 = vmatprep.subr.mxu0 0.0
    %9264 = vmatpush1.msra.mxu0 0.0
    %9265 = vmatprep.subr.mxu0 0.0
    %9266 = vmatpush1.msra.mxu0 0.0
    %9267 = vmatprep.subr.mxu0 0.0
    %9268 = vmatpush1.msra.mxu0 0.0
    %9269 = vmatprep.subr.mxu0 0.0
    %9270 = vmatpush1.msra.mxu0 0.0
    %9271 = vmatprep.subr.mxu0 0.0
    %9272 = vmatpush1.msra.mxu0 0.0
    %9273 = vmatprep.subr.mxu0 0.0
    %9274 = vmatpush1.msra.mxu0 0.0
    %9275 = vmatprep.subr.mxu0 0.0
    %9276 = vmatpush1.msra.mxu0 0.0
    %9277 = vmatprep.subr.mxu0 0.0
    %9278 = vmatpush1.msra.mxu0 0.0
    %9279 = vmatprep.subr.mxu0 0.0
    %9280 = vmatpush1.msra.mxu0 0.0
    %9281 = vmatprep.subr.mxu0 0.0
    %9282 = vmatpush1.msra.mxu0 0.0
    %9283 = vmatprep.subr.mxu0 0.0
    %9284 = vmatpush1.msra.mxu0 0.0
    %9285 = vmatprep.subr.mxu0 0.0
    %9286 = vmatpush1.msra.mxu0 0.0
    %9287 = vmatprep.subr.mxu0 0.0
    %9288 = vmatpush1.msra.mxu0 0.0
    %9289 = vmatprep.subr.mxu0 0.0
    %9290 = vmatpush1.msra.mxu0 0.0
    %9291 = vmatprep.subr.mxu0 0.0
    %9292 = vmatpush1.msra.mxu0 0.0
    %9293 = vmatprep.subr.mxu0 0.0
    %9294 = vmatpush1.msra.mxu0 0.0
    %9295 = vmatprep.subr.mxu0 0.0
    %9296 = vmatpush1.msra.mxu0 0.0
    %9297 = vmatprep.subr.mxu0 0.0
    %9298 = vmatpush1.msra.mxu0 0.0
    %9299 = vmatprep.subr.mxu0 0.0
    %9300 = vmatpush1.msra.mxu0 0.0
    %9301 = vmatprep.subr.mxu0 0.0
    %9302 = vmatpush1.msra.mxu0 0.0
    %9303 = vmatprep.subr.mxu0 0.0
    %9304 = vmatpush1.msra.mxu0 0.0
    %9305 = vmatprep.subr.mxu0 0.0
    %9306 = vmatpush1.msra.mxu0 0.0
    %9307 = vmatprep.subr.mxu0 0.0
    %9308 = vmatpush1.msra.mxu0 0.0
    %9309 = vmatprep.subr.mxu0 0.0
    %9310 = vmatpush1.msra.mxu0 0.0
    %9311 = vmatprep.subr.mxu0 0.0
    %9312 = vmatpush1.msra.mxu0 0.0
    %9313 = vmatprep.subr.mxu0 0.0
    %9314 = vmatpush1.msra.mxu0 0.0
    %9315 = vmatprep.subr.mxu0 0.0
    %9316 = vmatpush1.msra.mxu0 0.0
    %9317 = vmatprep.subr.mxu0 0.0
    %9318 = vmatpush1.msra.mxu0 0.0
    %9319 = vmatprep.subr.mxu0 0.0
    %9320 = vmatpush1.msra.mxu0 0.0
    %9321 = vmatprep.mubr.f32.mxu0 0.0
    %9322 = vmatmul.mubr.f32.gmra.mrb[0].mxu0 %v9246
    %v9323 = vpop.f32.mrb[0].mxu0
    %v9324 = vadd.f32 %v9243, %v9323
    %v9325 = vpop.f32.mrb[0].mxu0
    %9326 = vmatprep.mubr.f32.mxu0 0.0
    %9327 = vmatmul.mubr.f32.gmra.mrb[0].mxu0 %v9249
    %v9328 = vpop.f32.mrb[0].mxu0
    %v9329 = vadd.f32 %v9243, %v9328
    %v9330 = vpop.f32.mrb[0].mxu0
    %9331 = vmatprep.mubr.f32.mxu0 0.0
    %9332 = vmatmul.mubr.f32.gmra.mrb[0].mxu0 %v9252
    %v9333 = vpop.f32.mrb[0].mxu0
    %v9334 = vadd.f32 %v9243, %v9333
    %v9335 = vpop.f32.mrb[0].mxu0
    %9336 = vmatprep.mubr.f32.mxu0 0.0
    %9337 = vmatmul.mubr.f32.gmra.mrb[0].mxu0 %v9255
    %v9338 = vpop.f32.mrb[0].mxu0
    %v9339 = vadd.f32 %v9243, %v9338
    %v9340 = vpop.f32.mrb[0].mxu0
    %9341 = vdwg.mxu0
    %v9342 = vmul.f32 %v9324, 0.5
    %v9343 = vmul.f32 %v9329, 0.5
    %v9344 = vmul.f32 %v9334, 0.5
    %v9345 = vmul.f32 %v9339, 0.5
    %v9346 = vmul.f32 %v9324, 0.70710677
    %v9347 = vmul.f32 %v9329, 0.70710677
    %v9348 = vmul.f32 %v9334, 0.70710677
    %v9349 = vmul.f32 %v9339, 0.70710677
    %v9350 = verf.f32.pop %v9346
    %v9351 = verf.f32.pop %v9347
    %v9352 = verf.f32.pop %v9348
    %v9353 = verf.f32.pop %v9349
    %v9354 = vadd.f32 %v9350, 1.0
    %v9355 = vadd.f32 %v9351, 1.0
    %v9356 = vadd.f32 %v9352, 1.0
    %v9357 = vadd.f32 %v9353, 1.0
    %v9358 = vmul.f32 %v9342, %v9354
    %v9359 = vmul.f32 %v9343, %v9355
    %v9360 = vmul.f32 %v9344, %v9356
    %v9361 = vmul.f32 %v9345, %v9357
    %v9362 = vld [vmem:[%s16] sm:$0xff]
    %v9363 = vld [vmem:[%s16 + $0x8] sm:$0xff]
    %v9364 = vld [vmem:[%s16 + $0x10] sm:$0xff]
    %v9365 = vld [vmem:[%s16 + $0x18] sm:$0xff]
    %v9366 = vld [vmem:[%s16 + $0x20] sm:$0xff]
    %v9367 = vld [vmem:[%s16 + $0x28] sm:$0xff]
    %v9368 = vld [vmem:[%s16 + $0x30] sm:$0xff]
    %v9369 = vld [vmem:[%s16 + $0x38] sm:$0xff]
    %v9370 = vld [vmem:[%s17] sm:$0x1]
    %v9372 = vlaneseq
    %v9373 = vshrl.u32 %v9372, 7
    %v9374 = vsub.s32 0, %v9373
    %v9375 = vrot.slane %v9370, %v9374
    %vm9377 = vcmask 523264
    %v9379 = vsel %vm9377, %v9358, 0
    %v9382 = vsel %vm9377, %v9359, 0
    %v9385 = vsel %vm9377, %v9360, 0
    %v9388 = vsel %vm9377, %v9361, 0
    %9390 = vmatprep.subr.mxu0 0.0
    %9391 = vmatpush1.msra.mxu0 %v9362
    %9392 = vmatprep.subr.mxu0 0.0
    %9393 = vmatpush1.msra.mxu0 %v9363
    %9394 = vmatprep.subr.mxu0 0.0
    %9395 = vmatpush1.msra.mxu0 %v9364
    %9396 = vmatprep.subr.mxu0 0.0
    %9397 = vmatpush1.msra.mxu0 %v9365
    %9398 = vmatprep.subr.mxu0 0.0
    %9399 = vmatpush1.msra.mxu0 %v9366
    %9400 = vmatprep.subr.mxu0 0.0
    %9401 = vmatpush1.msra.mxu0 %v9367
    %9402 = vmatprep.subr.mxu0 0.0
    %9403 = vmatpush1.msra.mxu0 %v9368
    %9404 = vmatprep.subr.mxu0 0.0
    %9405 = vmatpush1.msra.mxu0 %v9369
    %9406 = vmatprep.subr.mxu0 0.0
    %9407 = vmatpush1.msra.mxu0 0.0
    %9408 = vmatprep.subr.mxu0 0.0
    %9409 = vmatpush1.msra.mxu0 0.0
    %9410 = vmatprep.subr.mxu0 0.0
    %9411 = vmatpush1.msra.mxu0 0.0
    %9412 = vmatprep.subr.mxu0 0.0
    %9413 = vmatpush1.msra.mxu0 0.0
    %9414 = vmatprep.subr.mxu0 0.0
    %9415 = vmatpush1.msra.mxu0 0.0
    %9416 = vmatprep.subr.mxu0 0.0
    %9417 = vmatpush1.msra.mxu0 0.0
    %9418 = vmatprep.subr.mxu0 0.0
    %9419 = vmatpush1.msra.mxu0 0.0
    %9420 = vmatprep.subr.mxu0 0.0
    %9421 = vmatpush1.msra.mxu0 0.0
    %9422 = vmatprep.subr.mxu0 0.0
    %9423 = vmatpush1.msra.mxu0 0.0
    %9424 = vmatprep.subr.mxu0 0.0
    %9425 = vmatpush1.msra.mxu0 0.0
    %9426 = vmatprep.subr.mxu0 0.0
    %9427 = vmatpush1.msra.mxu0 0.0
    %9428 = vmatprep.subr.mxu0 0.0
    %9429 = vmatpush1.msra.mxu0 0.0
    %9430 = vmatprep.subr.mxu0 0.0
    %9431 = vmatpush1.msra.mxu0 0.0
    %9432 = vmatprep.subr.mxu0 0.0
    %9433 = vmatpush1.msra.mxu0 0.0
    %9434 = vmatprep.subr.mxu0 0.0
    %9435 = vmatpush1.msra.mxu0 0.0
    %9436 = vmatprep.subr.mxu0 0.0
    %9437 = vmatpush1.msra.mxu0 0.0
    %9438 = vmatprep.subr.mxu0 0.0
    %9439 = vmatpush1.msra.mxu0 0.0
    %9440 = vmatprep.subr.mxu0 0.0
    %9441 = vmatpush1.msra.mxu0 0.0
    %9442 = vmatprep.subr.mxu0 0.0
    %9443 = vmatpush1.msra.mxu0 0.0
    %9444 = vmatprep.subr.mxu0 0.0
    %9445 = vmatpush1.msra.mxu0 0.0
    %9446 = vmatprep.subr.mxu0 0.0
    %9447 = vmatpush1.msra.mxu0 0.0
    %9448 = vmatprep.subr.mxu0 0.0
    %9449 = vmatpush1.msra.mxu0 0.0
    %9450 = vmatprep.subr.mxu0 0.0
    %9451 = vmatpush1.msra.mxu0 0.0
    %9452 = vmatprep.subr.mxu0 0.0
    %9453 = vmatpush1.msra.mxu0 0.0
    %9454 = vmatprep.mubr.f32.mxu0 0.0
    %9455 = vmatmul.mubr.f32.gmra.mrb[0].mxu0 %v9379
    %v9456 = vpop.f32.mrb[0].mxu0
    %v9457 = vadd.f32 %v9375, %v9456
    %v9458 = vpop.f32.mrb[0].mxu0
    %9459 = vmatprep.mubr.f32.mxu0 0.0
    %9460 = vmatmul.mubr.f32.gmra.mrb[0].mxu0 %v9382
    %v9461 = vpop.f32.mrb[0].mxu0
    %v9462 = vadd.f32 %v9375, %v9461
    %v9463 = vpop.f32.mrb[0].mxu0
    %9464 = vmatprep.mubr.f32.mxu0 0.0
    %9465 = vmatmul.mubr.f32.gmra.mrb[0].mxu0 %v9385
    %v9466 = vpop.f32.mrb[0].mxu0
    %v9467 = vadd.f32 %v9375, %v9466
    %v9468 = vpop.f32.mrb[0].mxu0
    %9469 = vmatprep.mubr.f32.mxu0 0.0
    %9470 = vmatmul.mubr.f32.gmra.mrb[0].mxu0 %v9388
    %v9471 = vpop.f32.mrb[0].mxu0
    %v9472 = vadd.f32 %v9375, %v9471
    %v9473 = vpop.f32.mrb[0].mxu0
    %9474 = vdwg.mxu0
    %v9475 = vadd.f32 %v9457, %v9232
    %v9476 = vadd.f32 %v9462, %v9233
    %v9477 = vadd.f32 %v9467, %v9234
    %v9478 = vadd.f32 %v9472, %v9235
    %9479 = vst.msk [vmem:[#allocation4] sm:$0xff] %vm68, %v9475
    %9480 = vst.msk [vmem:[#allocation4 + $0x8] sm:$0xff] %vm68, %v9476
    %9481 = vst.msk [vmem:[#allocation4 + $0x10] sm:$0xff] %vm68, %v9477
    %9482 = vst.msk [vmem:[#allocation4 + $0x18] sm:$0xff] %vm68, %v9478
    // Predicated region
    $region70: #{calm_encoder_forward.1} parent=1 // pred_check
      _
    $region71: #{calm_encoder_forward.1} parent=1 // pred_check_branch
      %9484 = sbr.rel (0) target = $region73
    $region72: #{calm_encoder_forward.1} parent=1 // pred_region
      %s9486 = ssub.s32 512, 512
      %9487 = vsyncadd [#allocation5], %s9486
      %s9488 = sshll.u32 [#allocation4], 4
      %s9489 = int_to_ptr.vmem [resolvable:$true] %s9488
      %9494 = dma.vmem_to_hbm [thread:$0]  %s9489, 512, %s18, [#allocation5], 128, 128, 8
    $region73: #{calm_encoder_forward.1} parent=1 // pred_fallthru
      _
    // Predicated region
    $region74: #{calm_encoder_forward.1} parent=1 // pred_check
      _
    $region75: #{calm_encoder_forward.1} parent=1 // pred_check_branch
      %9496 = sbr.rel (0) target = $region77
    $region76: #{calm_encoder_forward.1} parent=1 // pred_region
      %9497 = dma.done [#allocation5], 512
    $region77: #{calm_encoder_forward.1} parent=1 // pred_fallthru
      _
    %9498 = vsyncpa [#allocation5], 1

</llo_original>
